<compile_context>
chip_gen: v5e
topology: v5e:2x2
jax: 0.10.0
libtpu: 0.0.40
codegen_flags: <defaults>
</compile_context>

<pallas_src>
import jax
import jax.numpy as jnp
from jax.experimental import pallas as pl
from jax.experimental.pallas import tpu as pltpu


# ----------------------------- Pallas kernel ------------------------------- #

def _fused_net_kernel(x_ref,
                      rp1_ref, lt1_ref, b1_ref,
                      rp2_ref, lt2_ref, b2_ref,
                      rp3_ref, lt3_ref, b3_ref,
                      wh_ref, bh_ref,
                      out_ref):
    """Whole network for ONE image (batch dim is the grid).

    Activations are kept width-major: acts[w, c*H + h].  Each fused
    Conv2d + AvgPool2d + ReLU stage is
        acts <- relu(bias + sum_kx (Rp[kx-block] @ acts) @ LT[kx])
    where the first matmul is a single merged (3*Wout_pad, Win) @ (Win, C*H) product.
    """
    acts = x_ref[...]                                  # (W0, C0*H0), bf16
    acts_f = acts                                      # overwritten below (keeps linters calm)
    for rp_ref, lt_ref, b_ref in ((rp1_ref, lt1_ref, b1_ref),
                                  (rp2_ref, lt2_ref, b2_ref),
                                  (rp3_ref, lt3_ref, b3_ref)):
        wop = rp_ref.shape[0] // 3                     # padded output-width rows per kx block
        # Merged first matmul over all three kx taps (f32 accumulate, bf16 operands).
        u = jnp.dot(rp_ref[...], acts,
                    preferred_element_type=jnp.float32).astype(jnp.bfloat16)
        # Three wide second matmuls (N = C_out*H_out), sublane-aligned slices of u.
        acc = jnp.dot(u[0 * wop:1 * wop, :], lt_ref[0],
                      preferred_element_type=jnp.float32)
        acc = acc + jnp.dot(u[1 * wop:2 * wop, :], lt_ref[1],
                            preferred_element_type=jnp.float32)
        acc = acc + jnp.dot(u[2 * wop:3 * wop, :], lt_ref[2],
                            preferred_element_type=jnp.float32)
        acts_f = jnp.maximum(acc + b_ref[...], 0.0)    # fused Conv + AvgPool + ReLU (f32)
        acts = acts_f.astype(jnp.bfloat16)             # bf16 feed for the next stage

    # acts_f is the final feature map: rows = ow (0..3 valid), cols = co*3 + oh  -> 192 feats.
    # Merged value+advantage head as 4 small MXU dots; y = [sv | adv(108) | 0-pad] (1, 128).
    y = bh_ref[...]                                    # (1, 128) f32
    for ow in range(wh_ref.shape[0]):
        y = y + jnp.dot(acts_f[ow:ow + 1, :], wh_ref[ow],
                        preferred_element_type=jnp.float32)
    out_ref[...] = y


# ---------------------- weight folding (done once, in XLA) ------------------ #

def _fold_stage(w, b, pool, stride, h_in, w_in, w_in_pad):
    """Fold Conv2d(k=3, stride) + AvgPool2d(pool) into (Rp, LT, bias) for the width-major form.

    For a width-major activation A[w, ci*Hin + h]:
        out[ow, co*Hout + oh] = sum_kx (Rp_kx @ A @ LT_kx)[ow, co*Hout+oh]
      Rp_kx[ow, w]                  = (1/p) * |{dw : w == s*p*ow + s*dw + kx}|   (rows ow>=Wout zeroed)
      LT_kx[(ci*Hin+h),(co*Hout+oh)] = (1/p) * sum_{ky,dh : s*p*oh + s*dh + ky == h} w[co,ci,ky,kx]
    which is exactly Conv2d(VALID) followed by AvgPool2d(pool) (floor mode), transposed.
    Padded input columns (w >= w_in) are always zero for valid output rows (VALID conv),
    so junk rows in a padded activation never reach valid outputs.
    """
    c_out, c_in, k, _ = w.shape
    h_conv = (h_in - k) // stride + 1
    w_conv = (w_in - k) // stride + 1
    h_out = h_conv // pool
    w_out = w_conv // pool
    w_out_pad = ((w_out + 7) // 8) * 8                 # sublane-aligned kx blocks
    sp = stride * pool

    hh = jnp.arange(h_in)[None, :]                     # (1, h_in)
    oh = jnp.arange(h_out)[:, None]                    # (h_out, 1)
    ww = jnp.arange(w_in_pad)[None, :]                 # (1, w_in_pad)
    ow = jnp.arange(w_out_pad)[:, None]                # (w_out_pad, 1)

    lt_blocks, rp_blocks = [], []
    for kx in range(k):
        l_mat = jnp.zeros((c_out * h_out, c_in * h_in), jnp.float32)
        for ky in range(k):
            for dh in range(pool):
                mask = (hh == sp * oh + (stride * dh + ky)).astype(jnp.float32)
                l_mat = l_mat + jnp.kron(w[:, :, ky, kx], mask) / pool
        lt_blocks.append(l_mat.T)                      # (c_in*h_in, c_out*h_out)

        r_mat = jnp.zeros((w_out_pad, w_in_pad), jnp.float32)
        for dw in range(pool):
            r_mat = r_mat + (ww == sp * ow + (stride * dw + kx)).astype(jnp.float32)
        r_mat = jnp.where(ow < w_out, r_mat, 0.0) / pool
        rp_blocks.append(r_mat)                        # (w_out_pad, w_in_pad)

    rp = jnp.concatenate(rp_blocks, axis=0)            # (3*w_out_pad, w_in_pad)
    lt = jnp.stack(lt_blocks)                          # (3, c_in*h_in, c_out*h_out)
    bias_t = jnp.repeat(b, h_out)[None, :]             # (1, c_out*h_out)
    return rp, lt, bias_t, h_out, w_out, w_out_pad


def precompute_constants(params, height, width):
    rp1, lt1, b1t, h1, w1, w1p = _fold_stage(params["w1"], params["b1"], 2, 2, height, width, width)
    rp2, lt2, b2t, h2, w2, w2p = _fold_stage(params["w2"], params["b2"], 2, 2, h1, w1, w1p)
    rp3, lt3, b3t, h3, w3, w3p = _fold_stage(params["w3"], params["b3"], 4, 1, h2, w2, w2p)

    c3 = params["w3"].shape[0]
    n_head = 1 + params["wa"].shape[1]                 # 1 value + 108 advantages = 109
    head_pad = 128                                     # lane-dense output row
    # torch flatten order is (co, oh, ow); kernel's last-stage layout is [ow, co*h3 + oh].
    wcat = jnp.concatenate([params["wv"], params["wa"]], axis=1)            # (192, 109)
    wh = wcat.reshape(c3, h3, w3, n_head).transpose(2, 0, 1, 3)
    wh = wh.reshape(w3, c3 * h3, n_head)                                    # (4, 48, 109)
    wh = jnp.pad(wh, ((0, 0), (0, 0), (0, head_pad - n_head)))              # (4, 48, 128)
    bh = jnp.pad(jnp.concatenate([params["bv"], params["ba"]]),
                 (0, head_pad - n_head))[None, :]                           # (1, 128)

    bf = jnp.bfloat16
    return {
        "rp1": rp1.astype(bf), "lt1": lt1.astype(bf), "b1": b1t,
        "rp2": rp2.astype(bf), "lt2": lt2.astype(bf), "b2": b2t,
        "rp3": rp3.astype(bf), "lt3": lt3.astype(bf), "b3": b3t,
        "wh": wh, "bh": bh,                            # head stays f32 (tiny)
    }


# --------------------------------- forward --------------------------------- #

_CONST_ORDER = ("rp1", "lt1", "b1", "rp2", "lt2", "b2", "rp3", "lt3", "b3", "wh", "bh")


def forward(x, consts, n_adv=108):
    n, c, h, w = x.shape
    # Width-major, channel-stacked input: xt[n, w, c*h + hh] = x[n, c, hh, w]  (bf16 halves DMA).
    xt = jnp.transpose(x.astype(jnp.bfloat16), (0, 3, 1, 2)).reshape(n, w, c * h)

    const_arrays = [consts[k] for k in _CONST_ORDER]

    def const_spec(a):
        nd = a.ndim
        return pl.BlockSpec(a.shape, lambda i, _nd=nd: (0,) * _nd)

    out = pl.pallas_call(
        _fused_net_kernel,
        out_shape=jax.ShapeDtypeStruct((n, 1, 128), jnp.float32),
        grid=(n,),
        in_specs=[pl.BlockSpec((None, w, c * h), lambda i: (i, 0, 0))]
                 + [const_spec(a) for a in const_arrays],
        out_specs=pl.BlockSpec((None, 1, 128), lambda i: (i, 0, 0)),
        compiler_params=pltpu.CompilerParams(
            dimension_semantics=("parallel",),
            vmem_limit_bytes=24 * 1024 * 1024,
        ),
    )(xt, *const_arrays)

    sv = out[:, 0, 0:1]                                # (N, 1)
    adv = out[:, 0, 1:1 + n_adv]                       # (N, 108)
    # torch: q = state_value + (advantage - advantage.mean())  (global mean over the tensor).
    q = sv + (adv - jnp.mean(adv))                     # plain jnp; XLA fuses this for free
    return sv, adv, q


# ------------------------------ reference (XLA) ----------------------------- #

def reference_forward(x, params):
    dn = ("NCHW", "OIHW", "NCHW")
    prec = jax.lax.Precision.HIGHEST

    def stage(h, w, b, stride, pool):
        y = jax.lax.conv_general_dilated(h, w, (stride, stride), "VALID",
                                         dimension_numbers=dn, precision=prec)
        y = y + b[None, :, None, None]
        y = jax.lax.reduce_window(y, 0.0, jax.lax.add,
                                  (1, 1, pool, pool), (1, 1, pool, pool), "VALID")
        return jnp.maximum(y / (pool * pool), 0.0)

    h = stage(x, params["w1"], params["b1"], 2, 2)
    h = stage(h, params["w2"], params["b2"], 2, 2)
    h = stage(h, params["w3"], params["b3"], 1, 4)
    feats = h.reshape(x.shape[0], -1)
    sv = jnp.dot(feats, params["wv"], precision=prec) + params["bv"]
    adv = jnp.dot(feats, params["wa"], precision=prec) + params["ba"]
    q = sv + (adv - jnp.mean(adv))
    return sv, adv, q


# --------------------------------- driver ---------------------------------- #

def init_params(key):
    ks = jax.random.split(key, 10)
    s = 0.1
    return {
        "w1": s * jax.random.normal(ks[0], (8, 4, 3, 3), jnp.float32),    # OIHW (torch layout)
        "b1": s * jax.random.normal(ks[1], (8,), jnp.float32),
        "w2": s * jax.random.normal(ks[2], (8, 8, 3, 3), jnp.float32),
        "b2": s * jax.random.normal(ks[3], (8,), jnp.float32),
        "w3": s * jax.random.normal(ks[4], (16, 8, 3, 3), jnp.float32),
        "b3": s * jax.random.normal(ks[5], (16,), jnp.float32),
        "wv": s * jax.random.normal(ks[6], (192, 1), jnp.float32),
        "bv": s * jax.random.normal(ks[7], (1,), jnp.float32),
        "wa": s * jax.random.normal(ks[8], (192, 108), jnp.float32),
        "ba": s * jax.random.normal(ks[9], (108,), jnp.float32),
    }


if __name__ == "__main__":
    key = jax.random.PRNGKey(0)
    k_x, k_p = jax.random.split(key)
    # (231, 293) is the smallest-ish spatial size consistent with the module: the
    # Linear(192, .) heads require the final 16-channel feature map to be 3 x 4.
    x = jax.random.normal(k_x, (2, 4, 231, 293), jnp.float32)
    params = init_params(k_p)

    consts = precompute_constants(params, x.shape[2], x.shape[3])   # once per weight set
    fwd = jax.jit(forward)
    state_value, advantage, q_value = fwd(x, consts)
    jax.block_until_ready((state_value, advantage, q_value))

    assert state_value.shape == (2, 1)
    assert advantage.shape == (2, 108)
    assert q_value.shape == (2, 108)

    # sanity check against a plain-XLA f32 implementation of the same module (kernel is bf16)
    ref_sv, ref_adv, ref_q = jax.jit(reference_forward)(x, params)
    for got, want in ((state_value, ref_sv), (advantage, ref_adv), (q_value, ref_q)):
        assert jnp.allclose(got, want, rtol=5e-2, atol=5e-2), \
            float(jnp.max(jnp.abs(got - want)))

    print("KERNEL_OK")
</pallas_src>

<mosaic_0001>
module attributes {stable_mosaic.version = 11 : i64} {
  func.func @_fused_net_kernel(%arg0: i32, %arg1: memref<1x293x924xbf16, #tpu.memory_space<vmem>>, %arg2: memref<240x293xbf16, #tpu.memory_space<vmem>>, %arg3: memref<3x924x456xbf16, #tpu.memory_space<vmem>>, %arg4: memref<1x456xf32, #tpu.memory_space<vmem>>, %arg5: memref<72x80xbf16, #tpu.memory_space<vmem>>, %arg6: memref<3x456x112xbf16, #tpu.memory_space<vmem>>, %arg7: memref<1x112xf32, #tpu.memory_space<vmem>>, %arg8: memref<24x24xbf16, #tpu.memory_space<vmem>>, %arg9: memref<3x112x48xbf16, #tpu.memory_space<vmem>>, %arg10: memref<1x48xf32, #tpu.memory_space<vmem>>, %arg11: memref<4x48x128xf32, #tpu.memory_space<vmem>>, %arg12: memref<1x128xf32, #tpu.memory_space<vmem>>, %arg13: memref<1x1x128xf32, #tpu.memory_space<vmem>>) attributes {dimension_semantics = [#tpu.dimension_semantics<parallel>], iteration_bounds = array<i64: 2>, scalar_prefetch = 0 : i64, scratch_operands = 0 : i64, tpu.core_type = #tpu.core_type<tc>, window_params = [{transform_indices = @transform_0, window_bounds = array<i64: 1, 293, 924>}, {pipeline_mode = #tpu.pipeline_mode<synchronous>, transform_indices = @transform_1, window_bounds = array<i64: 240, 293>}, {pipeline_mode = #tpu.pipeline_mode<synchronous>, transform_indices = @transform_2, window_bounds = array<i64: 3, 924, 456>}, {pipeline_mode = #tpu.pipeline_mode<synchronous>, transform_indices = @transform_3, window_bounds = array<i64: 1, 456>}, {pipeline_mode = #tpu.pipeline_mode<synchronous>, transform_indices = @transform_4, window_bounds = array<i64: 72, 80>}, {pipeline_mode = #tpu.pipeline_mode<synchronous>, transform_indices = @transform_5, window_bounds = array<i64: 3, 456, 112>}, {pipeline_mode = #tpu.pipeline_mode<synchronous>, transform_indices = @transform_6, window_bounds = array<i64: 1, 112>}, {pipeline_mode = #tpu.pipeline_mode<synchronous>, transform_indices = @transform_7, window_bounds = array<i64: 24, 24>}, {pipeline_mode = #tpu.pipeline_mode<synchronous>, transform_indices = @transform_8, window_bounds = array<i64: 3, 112, 48>}, {pipeline_mode = #tpu.pipeline_mode<synchronous>, transform_indices = @transform_9, window_bounds = array<i64: 1, 48>}, {pipeline_mode = #tpu.pipeline_mode<synchronous>, transform_indices = @transform_10, window_bounds = array<i64: 4, 48, 128>}, {pipeline_mode = #tpu.pipeline_mode<synchronous>, transform_indices = @transform_11, window_bounds = array<i64: 1, 128>}, {transform_indices = @transform_12, window_bounds = array<i64: 1, 1, 128>}]} {
    %c0 = arith.constant 0 : index
    %c0_0 = arith.constant 0 : index
    %c0_1 = arith.constant 0 : index
    %0 = vector.load %arg1[%c0, %c0_0, %c0_1] : memref<1x293x924xbf16, #tpu.memory_space<vmem>>, vector<1x293x924xbf16>
    %1 = vector.shape_cast %0 : vector<1x293x924xbf16> to vector<293x924xbf16>
    %c0_2 = arith.constant 0 : index
    %c0_3 = arith.constant 0 : index
    %2 = vector.load %arg2[%c0_2, %c0_3] : memref<240x293xbf16, #tpu.memory_space<vmem>>, vector<240x293xbf16>
    %cst = arith.constant dense<0.000000e+00> : vector<240x924xf32>
    %3 = tpu.matmul %2, %1, %cst {dimension_numbers = #tpu.dot_dimension_numbers<[1], [0], [0], [1], [0, 0, 1, 1], [], []>} : vector<240x293xbf16>, vector<293x924xbf16>, vector<240x924xf32> -> vector<240x924xf32>
    %4 = arith.truncf %3 : vector<240x924xf32> to vector<240x924xbf16>
    %5 = vector.extract_strided_slice %4 {offsets = [0, 0], sizes = [80, 924], strides = [1, 1]} : vector<240x924xbf16> to vector<80x924xbf16>
    %c0_4 = arith.constant 0 : index
    %c0_5 = arith.constant 0 : index
    %c0_6 = arith.constant 0 : index
    %6 = vector.load %arg3[%c0_4, %c0_5, %c0_6] : memref<3x924x456xbf16, #tpu.memory_space<vmem>>, vector<1x924x456xbf16>
    %7 = vector.shape_cast %6 : vector<1x924x456xbf16> to vector<924x456xbf16>
    %cst_7 = arith.constant dense<0.000000e+00> : vector<80x456xf32>
    %8 = tpu.matmul %5, %7, %cst_7 {dimension_numbers = #tpu.dot_dimension_numbers<[1], [0], [0], [1], [0, 0, 1, 1], [], []>} : vector<80x924xbf16>, vector<924x456xbf16>, vector<80x456xf32> -> vector<80x456xf32>
    %9 = vector.extract_strided_slice %4 {offsets = [80, 0], sizes = [80, 924], strides = [1, 1]} : vector<240x924xbf16> to vector<80x924xbf16>
    %c1 = arith.constant 1 : index
    %c0_8 = arith.constant 0 : index
    %c0_9 = arith.constant 0 : index
    %10 = vector.load %arg3[%c1, %c0_8, %c0_9] : memref<3x924x456xbf16, #tpu.memory_space<vmem>>, vector<1x924x456xbf16>
    %11 = vector.shape_cast %10 : vector<1x924x456xbf16> to vector<924x456xbf16>
    %cst_10 = arith.constant dense<0.000000e+00> : vector<80x456xf32>
    %12 = tpu.matmul %9, %11, %cst_10 {dimension_numbers = #tpu.dot_dimension_numbers<[1], [0], [0], [1], [0, 0, 1, 1], [], []>} : vector<80x924xbf16>, vector<924x456xbf16>, vector<80x456xf32> -> vector<80x456xf32>
    %13 = arith.addf %8, %12 : vector<80x456xf32>
    %14 = vector.extract_strided_slice %4 {offsets = [160, 0], sizes = [80, 924], strides = [1, 1]} : vector<240x924xbf16> to vector<80x924xbf16>
    %c2 = arith.constant 2 : index
    %c0_11 = arith.constant 0 : index
    %c0_12 = arith.constant 0 : index
    %15 = vector.load %arg3[%c2, %c0_11, %c0_12] : memref<3x924x456xbf16, #tpu.memory_space<vmem>>, vector<1x924x456xbf16>
    %16 = vector.shape_cast %15 : vector<1x924x456xbf16> to vector<924x456xbf16>
    %cst_13 = arith.constant dense<0.000000e+00> : vector<80x456xf32>
    %17 = tpu.matmul %14, %16, %cst_13 {dimension_numbers = #tpu.dot_dimension_numbers<[1], [0], [0], [1], [0, 0, 1, 1], [], []>} : vector<80x924xbf16>, vector<924x456xbf16>, vector<80x456xf32> -> vector<80x456xf32>
    %18 = arith.addf %13, %17 : vector<80x456xf32>
    %c0_14 = arith.constant 0 : index
    %c0_15 = arith.constant 0 : index
    %19 = vector.load %arg4[%c0_14, %c0_15] : memref<1x456xf32, #tpu.memory_space<vmem>>, vector<1x456xf32>
    %20 = vector.broadcast %19 : vector<1x456xf32> to vector<80x456xf32>
    %21 = arith.addf %18, %20 : vector<80x456xf32>
    %cst_16 = arith.constant 0.000000e+00 : f32
    %22 = vector.broadcast %cst_16 : f32 to vector<80x456xf32>
    %23 = arith.maximumf %21, %22 : vector<80x456xf32>
    %24 = arith.truncf %23 : vector<80x456xf32> to vector<80x456xbf16>
    %c0_17 = arith.constant 0 : index
    %c0_18 = arith.constant 0 : index
    %25 = vector.load %arg5[%c0_17, %c0_18] : memref<72x80xbf16, #tpu.memory_space<vmem>>, vector<72x80xbf16>
    %cst_19 = arith.constant dense<0.000000e+00> : vector<72x456xf32>
    %26 = tpu.matmul %25, %24, %cst_19 {dimension_numbers = #tpu.dot_dimension_numbers<[1], [0], [0], [1], [0, 0, 1, 1], [], []>} : vector<72x80xbf16>, vector<80x456xbf16>, vector<72x456xf32> -> vector<72x456xf32>
    %27 = arith.truncf %26 : vector<72x456xf32> to vector<72x456xbf16>
    %28 = vector.extract_strided_slice %27 {offsets = [0, 0], sizes = [24, 456], strides = [1, 1]} : vector<72x456xbf16> to vector<24x456xbf16>
    %c0_20 = arith.constant 0 : index
    %c0_21 = arith.constant 0 : index
    %c0_22 = arith.constant 0 : index
    %29 = vector.load %arg6[%c0_20, %c0_21, %c0_22] : memref<3x456x112xbf16, #tpu.memory_space<vmem>>, vector<1x456x112xbf16>
    %30 = vector.shape_cast %29 : vector<1x456x112xbf16> to vector<456x112xbf16>
    %cst_23 = arith.constant dense<0.000000e+00> : vector<24x112xf32>
    %31 = tpu.matmul %28, %30, %cst_23 {dimension_numbers = #tpu.dot_dimension_numbers<[1], [0], [0], [1], [0, 0, 1, 1], [], []>} : vector<24x456xbf16>, vector<456x112xbf16>, vector<24x112xf32> -> vector<24x112xf32>
    %32 = vector.extract_strided_slice %27 {offsets = [24, 0], sizes = [24, 456], strides = [1, 1]} : vector<72x456xbf16> to vector<24x456xbf16>
    %c1_24 = arith.constant 1 : index
    %c0_25 = arith.constant 0 : index
    %c0_26 = arith.constant 0 : index
    %33 = vector.load %arg6[%c1_24, %c0_25, %c0_26] : memref<3x456x112xbf16, #tpu.memory_space<vmem>>, vector<1x456x112xbf16>
    %34 = vector.shape_cast %33 : vector<1x456x112xbf16> to vector<456x112xbf16>
    %cst_27 = arith.constant dense<0.000000e+00> : vector<24x112xf32>
    %35 = tpu.matmul %32, %34, %cst_27 {dimension_numbers = #tpu.dot_dimension_numbers<[1], [0], [0], [1], [0, 0, 1, 1], [], []>} : vector<24x456xbf16>, vector<456x112xbf16>, vector<24x112xf32> -> vector<24x112xf32>
    %36 = arith.addf %31, %35 : vector<24x112xf32>
    %37 = vector.extract_strided_slice %27 {offsets = [48, 0], sizes = [24, 456], strides = [1, 1]} : vector<72x456xbf16> to vector<24x456xbf16>
    %c2_28 = arith.constant 2 : index
    %c0_29 = arith.constant 0 : index
    %c0_30 = arith.constant 0 : index
    %38 = vector.load %arg6[%c2_28, %c0_29, %c0_30] : memref<3x456x112xbf16, #tpu.memory_space<vmem>>, vector<1x456x112xbf16>
    %39 = vector.shape_cast %38 : vector<1x456x112xbf16> to vector<456x112xbf16>
    %cst_31 = arith.constant dense<0.000000e+00> : vector<24x112xf32>
    %40 = tpu.matmul %37, %39, %cst_31 {dimension_numbers = #tpu.dot_dimension_numbers<[1], [0], [0], [1], [0, 0, 1, 1], [], []>} : vector<24x456xbf16>, vector<456x112xbf16>, vector<24x112xf32> -> vector<24x112xf32>
    %41 = arith.addf %36, %40 : vector<24x112xf32>
    %c0_32 = arith.constant 0 : index
    %c0_33 = arith.constant 0 : index
    %42 = vector.load %arg7[%c0_32, %c0_33] : memref<1x112xf32, #tpu.memory_space<vmem>>, vector<1x112xf32>
    %43 = vector.broadcast %42 : vector<1x112xf32> to vector<24x112xf32>
    %44 = arith.addf %41, %43 : vector<24x112xf32>
    %cst_34 = arith.constant 0.000000e+00 : f32
    %45 = vector.broadcast %cst_34 : f32 to vector<24x112xf32>
    %46 = arith.maximumf %44, %45 : vector<24x112xf32>
    %47 = arith.truncf %46 : vector<24x112xf32> to vector<24x112xbf16>
    %c0_35 = arith.constant 0 : index
    %c0_36 = arith.constant 0 : index
    %48 = vector.load %arg8[%c0_35, %c0_36] : memref<24x24xbf16, #tpu.memory_space<vmem>>, vector<24x24xbf16>
    %cst_37 = arith.constant dense<0.000000e+00> : vector<24x112xf32>
    %49 = tpu.matmul %48, %47, %cst_37 {dimension_numbers = #tpu.dot_dimension_numbers<[1], [0], [0], [1], [0, 0, 1, 1], [], []>} : vector<24x24xbf16>, vector<24x112xbf16>, vector<24x112xf32> -> vector<24x112xf32>
    %50 = arith.truncf %49 : vector<24x112xf32> to vector<24x112xbf16>
    %51 = vector.extract_strided_slice %50 {offsets = [0, 0], sizes = [8, 112], strides = [1, 1]} : vector<24x112xbf16> to vector<8x112xbf16>
    %c0_38 = arith.constant 0 : index
    %c0_39 = arith.constant 0 : index
    %c0_40 = arith.constant 0 : index
    %52 = vector.load %arg9[%c0_38, %c0_39, %c0_40] : memref<3x112x48xbf16, #tpu.memory_space<vmem>>, vector<1x112x48xbf16>
    %53 = vector.shape_cast %52 : vector<1x112x48xbf16> to vector<112x48xbf16>
    %cst_41 = arith.constant dense<0.000000e+00> : vector<8x48xf32>
    %54 = tpu.matmul %51, %53, %cst_41 {dimension_numbers = #tpu.dot_dimension_numbers<[1], [0], [0], [1], [0, 0, 1, 1], [], []>} : vector<8x112xbf16>, vector<112x48xbf16>, vector<8x48xf32> -> vector<8x48xf32>
    %55 = vector.extract_strided_slice %50 {offsets = [8, 0], sizes = [8, 112], strides = [1, 1]} : vector<24x112xbf16> to vector<8x112xbf16>
    %c1_42 = arith.constant 1 : index
    %c0_43 = arith.constant 0 : index
    %c0_44 = arith.constant 0 : index
    %56 = vector.load %arg9[%c1_42, %c0_43, %c0_44] : memref<3x112x48xbf16, #tpu.memory_space<vmem>>, vector<1x112x48xbf16>
    %57 = vector.shape_cast %56 : vector<1x112x48xbf16> to vector<112x48xbf16>
    %cst_45 = arith.constant dense<0.000000e+00> : vector<8x48xf32>
    %58 = tpu.matmul %55, %57, %cst_45 {dimension_numbers = #tpu.dot_dimension_numbers<[1], [0], [0], [1], [0, 0, 1, 1], [], []>} : vector<8x112xbf16>, vector<112x48xbf16>, vector<8x48xf32> -> vector<8x48xf32>
    %59 = arith.addf %54, %58 : vector<8x48xf32>
    %60 = vector.extract_strided_slice %50 {offsets = [16, 0], sizes = [8, 112], strides = [1, 1]} : vector<24x112xbf16> to vector<8x112xbf16>
    %c2_46 = arith.constant 2 : index
    %c0_47 = arith.constant 0 : index
    %c0_48 = arith.constant 0 : index
    %61 = vector.load %arg9[%c2_46, %c0_47, %c0_48] : memref<3x112x48xbf16, #tpu.memory_space<vmem>>, vector<1x112x48xbf16>
    %62 = vector.shape_cast %61 : vector<1x112x48xbf16> to vector<112x48xbf16>
    %cst_49 = arith.constant dense<0.000000e+00> : vector<8x48xf32>
    %63 = tpu.matmul %60, %62, %cst_49 {dimension_numbers = #tpu.dot_dimension_numbers<[1], [0], [0], [1], [0, 0, 1, 1], [], []>} : vector<8x112xbf16>, vector<112x48xbf16>, vector<8x48xf32> -> vector<8x48xf32>
    %64 = arith.addf %59, %63 : vector<8x48xf32>
    %c0_50 = arith.constant 0 : index
    %c0_51 = arith.constant 0 : index
    %65 = vector.load %arg10[%c0_50, %c0_51] : memref<1x48xf32, #tpu.memory_space<vmem>>, vector<1x48xf32>
    %66 = vector.broadcast %65 : vector<1x48xf32> to vector<8x48xf32>
    %67 = arith.addf %64, %66 : vector<8x48xf32>
    %cst_52 = arith.constant 0.000000e+00 : f32
    %68 = vector.broadcast %cst_52 : f32 to vector<8x48xf32>
    %69 = arith.maximumf %67, %68 : vector<8x48xf32>
    %c0_53 = arith.constant 0 : index
    %c0_54 = arith.constant 0 : index
    %70 = vector.load %arg12[%c0_53, %c0_54] : memref<1x128xf32, #tpu.memory_space<vmem>>, vector<1x128xf32>
    %71 = vector.extract_strided_slice %69 {offsets = [0, 0], sizes = [1, 48], strides = [1, 1]} : vector<8x48xf32> to vector<1x48xf32>
    %c0_55 = arith.constant 0 : index
    %c0_56 = arith.constant 0 : index
    %c0_57 = arith.constant 0 : index
    %72 = vector.load %arg11[%c0_55, %c0_56, %c0_57] : memref<4x48x128xf32, #tpu.memory_space<vmem>>, vector<1x48x128xf32>
    %73 = vector.shape_cast %72 : vector<1x48x128xf32> to vector<48x128xf32>
    %cst_58 = arith.constant dense<0.000000e+00> : vector<1x128xf32>
    %74 = tpu.matmul %71, %73, %cst_58 {dimension_numbers = #tpu.dot_dimension_numbers<[1], [0], [0], [1], [0, 0, 1, 1], [], []>} : vector<1x48xf32>, vector<48x128xf32>, vector<1x128xf32> -> vector<1x128xf32>
    %75 = arith.addf %70, %74 : vector<1x128xf32>
    %76 = vector.extract_strided_slice %69 {offsets = [1, 0], sizes = [1, 48], strides = [1, 1]} : vector<8x48xf32> to vector<1x48xf32>
    %c1_59 = arith.constant 1 : index
    %c0_60 = arith.constant 0 : index
    %c0_61 = arith.constant 0 : index
    %77 = vector.load %arg11[%c1_59, %c0_60, %c0_61] : memref<4x48x128xf32, #tpu.memory_space<vmem>>, vector<1x48x128xf32>
    %78 = vector.shape_cast %77 : vector<1x48x128xf32> to vector<48x128xf32>
    %cst_62 = arith.constant dense<0.000000e+00> : vector<1x128xf32>
    %79 = tpu.matmul %76, %78, %cst_62 {dimension_numbers = #tpu.dot_dimension_numbers<[1], [0], [0], [1], [0, 0, 1, 1], [], []>} : vector<1x48xf32>, vector<48x128xf32>, vector<1x128xf32> -> vector<1x128xf32>
    %80 = arith.addf %75, %79 : vector<1x128xf32>
    %81 = vector.extract_strided_slice %69 {offsets = [2, 0], sizes = [1, 48], strides = [1, 1]} : vector<8x48xf32> to vector<1x48xf32>
    %c2_63 = arith.constant 2 : index
    %c0_64 = arith.constant 0 : index
    %c0_65 = arith.constant 0 : index
    %82 = vector.load %arg11[%c2_63, %c0_64, %c0_65] : memref<4x48x128xf32, #tpu.memory_space<vmem>>, vector<1x48x128xf32>
    %83 = vector.shape_cast %82 : vector<1x48x128xf32> to vector<48x128xf32>
    %cst_66 = arith.constant dense<0.000000e+00> : vector<1x128xf32>
    %84 = tpu.matmul %81, %83, %cst_66 {dimension_numbers = #tpu.dot_dimension_numbers<[1], [0], [0], [1], [0, 0, 1, 1], [], []>} : vector<1x48xf32>, vector<48x128xf32>, vector<1x128xf32> -> vector<1x128xf32>
    %85 = arith.addf %80, %84 : vector<1x128xf32>
    %86 = vector.extract_strided_slice %69 {offsets = [3, 0], sizes = [1, 48], strides = [1, 1]} : vector<8x48xf32> to vector<1x48xf32>
    %c3 = arith.constant 3 : index
    %c0_67 = arith.constant 0 : index
    %c0_68 = arith.constant 0 : index
    %87 = vector.load %arg11[%c3, %c0_67, %c0_68] : memref<4x48x128xf32, #tpu.memory_space<vmem>>, vector<1x48x128xf32>
    %88 = vector.shape_cast %87 : vector<1x48x128xf32> to vector<48x128xf32>
    %cst_69 = arith.constant dense<0.000000e+00> : vector<1x128xf32>
    %89 = tpu.matmul %86, %88, %cst_69 {dimension_numbers = #tpu.dot_dimension_numbers<[1], [0], [0], [1], [0, 0, 1, 1], [], []>} : vector<1x48xf32>, vector<48x128xf32>, vector<1x128xf32> -> vector<1x128xf32>
    %90 = arith.addf %85, %89 : vector<1x128xf32>
    %c0_70 = arith.constant 0 : index
    %c0_71 = arith.constant 0 : index
    %c0_72 = arith.constant 0 : index
    %91 = vector.load %arg13[%c0_70, %c0_71, %c0_72] : memref<1x1x128xf32, #tpu.memory_space<vmem>>, vector<1x1x128xf32>
    %92 = vector.shape_cast %91 : vector<1x1x128xf32> to vector<1x128xf32>
    %93 = vector.shape_cast %90 : vector<1x128xf32> to vector<1x1x128xf32>
    tpu.vector_store %arg13[%c0_70, %c0_71, %c0_72], %93 {strides = array<i32>} : memref<1x1x128xf32, #tpu.memory_space<vmem>>, vector<1x1x128xf32>,
    return
  }
  func.func @transform_0(%arg0: i32) -> (i32, i32, i32) {
    %c0_i32 = arith.constant 0 : i32
    %c0_i32_0 = arith.constant 0 : i32
    %c0_i32_1 = arith.constant 0 : i32
    return %arg0, %c0_i32, %c0_i32_0 : i32, i32, i32
  }
  func.func @transform_1(%arg0: i32) -> (i32, i32) {
    %c0_i32 = arith.constant 0 : i32
    %c0_i32_0 = arith.constant 0 : i32
    %c0_i32_1 = arith.constant 0 : i32
    return %c0_i32, %c0_i32_0 : i32, i32
  }
  func.func @transform_2(%arg0: i32) -> (i32, i32, i32) {
    %c0_i32 = arith.constant 0 : i32
    %c0_i32_0 = arith.constant 0 : i32
    %c0_i32_1 = arith.constant 0 : i32
    %c0_i32_2 = arith.constant 0 : i32
    return %c0_i32, %c0_i32_0, %c0_i32_1 : i32, i32, i32
  }
  func.func @transform_3(%arg0: i32) -> (i32, i32) {
    %c0_i32 = arith.constant 0 : i32
    %c0_i32_0 = arith.constant 0 : i32
    %c0_i32_1 = arith.constant 0 : i32
    return %c0_i32, %c0_i32_0 : i32, i32
  }
  func.func @transform_4(%arg0: i32) -> (i32, i32) {
    %c0_i32 = arith.constant 0 : i32
    %c0_i32_0 = arith.constant 0 : i32
    %c0_i32_1 = arith.constant 0 : i32
    return %c0_i32, %c0_i32_0 : i32, i32
  }
  func.func @transform_5(%arg0: i32) -> (i32, i32, i32) {
    %c0_i32 = arith.constant 0 : i32
    %c0_i32_0 = arith.constant 0 : i32
    %c0_i32_1 = arith.constant 0 : i32
    %c0_i32_2 = arith.constant 0 : i32
    return %c0_i32, %c0_i32_0, %c0_i32_1 : i32, i32, i32
  }
  func.func @transform_6(%arg0: i32) -> (i32, i32) {
    %c0_i32 = arith.constant 0 : i32
    %c0_i32_0 = arith.constant 0 : i32
    %c0_i32_1 = arith.constant 0 : i32
    return %c0_i32, %c0_i32_0 : i32, i32
  }
  func.func @transform_7(%arg0: i32) -> (i32, i32) {
    %c0_i32 = arith.constant 0 : i32
    %c0_i32_0 = arith.constant 0 : i32
    %c0_i32_1 = arith.constant 0 : i32
    return %c0_i32, %c0_i32_0 : i32, i32
  }
  func.func @transform_8(%arg0: i32) -> (i32, i32, i32) {
    %c0_i32 = arith.constant 0 : i32
    %c0_i32_0 = arith.constant 0 : i32
    %c0_i32_1 = arith.constant 0 : i32
    %c0_i32_2 = arith.constant 0 : i32
    return %c0_i32, %c0_i32_0, %c0_i32_1 : i32, i32, i32
  }
  func.func @transform_9(%arg0: i32) -> (i32, i32) {
    %c0_i32 = arith.constant 0 : i32
    %c0_i32_0 = arith.constant 0 : i32
    %c0_i32_1 = arith.constant 0 : i32
    return %c0_i32, %c0_i32_0 : i32, i32
  }
  func.func @transform_10(%arg0: i32) -> (i32, i32, i32) {
    %c0_i32 = arith.constant 0 : i32
    %c0_i32_0 = arith.constant 0 : i32
    %c0_i32_1 = arith.constant 0 : i32
    %c0_i32_2 = arith.constant 0 : i32
    return %c0_i32, %c0_i32_0, %c0_i32_1 : i32, i32, i32
  }
  func.func @transform_11(%arg0: i32) -> (i32, i32) {
    %c0_i32 = arith.constant 0 : i32
    %c0_i32_0 = arith.constant 0 : i32
    %c0_i32_1 = arith.constant 0 : i32
    return %c0_i32, %c0_i32_0 : i32, i32
  }
  func.func @transform_12(%arg0: i32) -> (i32, i32, i32) {
    %c0_i32 = arith.constant 0 : i32
    %c0_i32_0 = arith.constant 0 : i32
    %c0_i32_1 = arith.constant 0 : i32
    return %arg0, %c0_i32, %c0_i32_0 : i32, i32, i32
  }
}

</mosaic_0001>

<llo_original>
// kernel: forward.1
$region0: #{forward.1}
  #allocation0 [shape = 'u32[]', space=smem, size = 0x4, offset = 0x4, fixed_abs, tag = 'smem constant byte address 0x4 - core index']
  #allocation1 [shape = 'u32[72,128]{1,0:T(1,128)}', space=vmem, size = 0x9000, scoped, tag = 'internal scratch']
  %s0 = inlined_call_operand.vmem [shape: bf16[2,293,924], index: 0, kind: input, shape index: {}]
  %s1 = inlined_call_operand.vmem [shape: bf16[240,293], index: 1, kind: input, shape index: {}]
  %s2 = inlined_call_operand.vmem [shape: bf16[3,924,456], index: 2, kind: input, shape index: {}]
  %s3 = inlined_call_operand.vmem [shape: f32[1,456], index: 3, kind: input, shape index: {}]
  %s4 = inlined_call_operand.vmem [shape: bf16[72,80], index: 4, kind: input, shape index: {}]
  %s5 = inlined_call_operand.vmem [shape: bf16[3,456,112], index: 5, kind: input, shape index: {}]
  %s6 = inlined_call_operand.vmem [shape: f32[1,112], index: 6, kind: input, shape index: {}]
  %s7 = inlined_call_operand.vmem [shape: bf16[24,24], index: 7, kind: input, shape index: {}]
  %s8 = inlined_call_operand.vmem [shape: bf16[3,112,48], index: 8, kind: input, shape index: {}]
  %s9 = inlined_call_operand.vmem [shape: f32[1,48], index: 9, kind: input, shape index: {}]
  %s10 = inlined_call_operand.vmem [shape: f32[4,48,128], index: 10, kind: input, shape index: {}]
  %s11 = inlined_call_operand.vmem [shape: f32[1,128], index: 11, kind: input, shape index: {}]
  %s12 = inlined_call_operand.vmem [shape: f32[2,1,128], index: 12, kind: output, shape index: {}]
  %s13 = sld [smem:[#allocation0]]
  $region81: #{forward.1} parent=0
    _
  %s15 = ssub.s32 1, %s13
  %s16 = scalar_select 0, %s15, %s13
  loop: start=0, step=1, limit=4
  $region2: #{forward.1} parent=0 // loop_pre_header
    _
  $region3: #{forward.1} parent=0 // loop_header
    %s18 = sphi 0, %s22
    %p19 = scmp.ge.s32.totalorder %s18, 4
    %s28 = sphi 0, %s30
    %s31 = sphi 0, %s28
    %s32 = sphi 0, %s31
    %s48 = sphi 0, %s32
    %s52 = sphi 0, %s52
    %s54 = sphi 0, %s52
    %s55 = sphi 0, %s54
    %s69 = sphi 0, %s55
    %s73 = sphi 0, %s73
    %s75 = sphi 0, %s73
    %s76 = sphi 0, %s75
    %s90 = sphi 0, %s76
    %s94 = sphi 0, %s94
    %s96 = sphi 0, %s94
    %s97 = sphi 0, %s96
    %s111 = sphi 0, %s97
    %s115 = sphi 0, %s115
    %s117 = sphi 0, %s115
    %s118 = sphi 0, %s117
    %s132 = sphi 0, %s118
    %s136 = sphi 0, %s136
    %s138 = sphi 0, %s136
    %s139 = sphi 0, %s138
    %s153 = sphi 0, %s139
    %s157 = sphi 0, %s157
    %s159 = sphi 0, %s157
    %s160 = sphi 0, %s159
    %s174 = sphi 0, %s160
    %s178 = sphi 0, %s178
    %s180 = sphi 0, %s178
    %s181 = sphi 0, %s180
    %s195 = sphi 0, %s181
    %s199 = sphi 0, %s199
    %s201 = sphi 0, %s199
    %s202 = sphi 0, %s201
    %s216 = sphi 0, %s202
    %s220 = sphi 0, %s220
    %s222 = sphi 0, %s220
    %s223 = sphi 0, %s222
    %s237 = sphi 0, %s223
    %s241 = sphi 0, %s241
    %s243 = sphi 0, %s241
    %s244 = sphi 0, %s243
    %s258 = sphi 0, %s244
    %s262 = sphi 0, %s262
    %s264 = sphi 0, %s262
    %s265 = sphi 0, %s264
    %s279 = sphi 0, %s265
    %s285 = sphi 0, %s287
    %s288 = sphi 0, %s285
    %s289 = sphi 0, %s288
    %s305 = sphi 0, %s289
  $region4: #{forward.1} parent=0 // loop_header_branch
    %21 = sbr.rel (%p19) target = $region8
  $region5: #{forward.1} parent=0 // loop_body
    %s23 = ssub.s32 %s18, 1
    %s24 = ssub.s32 %s18, 2
    %s25 = sadd.s32 %s18, 1
    %s26 = ssub.s32 %s18, %s25
    %p27 = scmp.eq.s32.totalorder %s26, 0
    %s29 = sadd.s32 %s28, 1
    %s30 = scalar_select %p27, %s28, %s29
    %p33 = pneg %p27
    %p34 = scmp.eq.s32.totalorder %s18, 1
    %p35 = por %p33, %p34
    %p36 = scmp.ne.s32.totalorder %s28, %s31
    %p37 = scmp.eq.s32.totalorder %s18, 0
    %p38 = por %p36, %p37
    %p39 = scmp.ne.s32.totalorder %s28, %s31
    %p40 = scmp.eq.s32.totalorder %s23, 1
    %p41 = por %p39, %p40
    %p42 = scmp.ne.s32.totalorder %s31, %s32
    %p43 = scmp.eq.s32.totalorder %s23, 0
    %p44 = por %p42, %p43
    %p45 = scmp.ne.s32.totalorder %s31, %s32
    %p46 = scmp.eq.s32.totalorder %s24, 1
    %p47 = por %p45, %p46
    %p49 = scmp.ne.s32.totalorder %s32, %s48
    %p50 = scmp.eq.s32.totalorder %s24, 0
    %p51 = por %p49, %p50
    %s53 = sadd.s32 %s52, 1
    %p56 = scmp.eq.s32.totalorder %s18, 1
    %p57 = scmp.ne.s32.totalorder %s52, %s54
    %p58 = scmp.eq.s32.totalorder %s18, 0
    %p59 = por %p57, %p58
    %p60 = scmp.ne.s32.totalorder %s52, %s54
    %p61 = scmp.eq.s32.totalorder %s23, 1
    %p62 = por %p60, %p61
    %p63 = scmp.ne.s32.totalorder %s54, %s55
    %p64 = scmp.eq.s32.totalorder %s23, 0
    %p65 = por %p63, %p64
    %p66 = scmp.ne.s32.totalorder %s54, %s55
    %p67 = scmp.eq.s32.totalorder %s24, 1
    %p68 = por %p66, %p67
    %p70 = scmp.ne.s32.totalorder %s55, %s69
    %p71 = scmp.eq.s32.totalorder %s24, 0
    %p72 = por %p70, %p71
    %s74 = sadd.s32 %s73, 1
    %p77 = scmp.eq.s32.totalorder %s18, 1
    %p78 = scmp.ne.s32.totalorder %s73, %s75
    %p79 = scmp.eq.s32.totalorder %s18, 0
    %p80 = por %p78, %p79
    %p81 = scmp.ne.s32.totalorder %s73, %s75
    %p82 = scmp.eq.s32.totalorder %s23, 1
    %p83 = por %p81, %p82
    %p84 = scmp.ne.s32.totalorder %s75, %s76
    %p85 = scmp.eq.s32.totalorder %s23, 0
    %p86 = por %p84, %p85
    %p87 = scmp.ne.s32.totalorder %s75, %s76
    %p88 = scmp.eq.s32.totalorder %s24, 1
    %p89 = por %p87, %p88
    %p91 = scmp.ne.s32.totalorder %s76, %s90
    %p92 = scmp.eq.s32.totalorder %s24, 0
    %p93 = por %p91, %p92
    %s95 = sadd.s32 %s94, 1
    %p98 = scmp.eq.s32.totalorder %s18, 1
    %p99 = scmp.ne.s32.totalorder %s94, %s96
    %p100 = scmp.eq.s32.totalorder %s18, 0
    %p101 = por %p99, %p100
    %p102 = scmp.ne.s32.totalorder %s94, %s96
    %p103 = scmp.eq.s32.totalorder %s23, 1
    %p104 = por %p102, %p103
    %p105 = scmp.ne.s32.totalorder %s96, %s97
    %p106 = scmp.eq.s32.totalorder %s23, 0
    %p107 = por %p105, %p106
    %p108 = scmp.ne.s32.totalorder %s96, %s97
    %p109 = scmp.eq.s32.totalorder %s24, 1
    %p110 = por %p108, %p109
    %p112 = scmp.ne.s32.totalorder %s97, %s111
    %p113 = scmp.eq.s32.totalorder %s24, 0
    %p114 = por %p112, %p113
    %s116 = sadd.s32 %s115, 1
    %p119 = scmp.eq.s32.totalorder %s18, 1
    %p120 = scmp.ne.s32.totalorder %s115, %s117
    %p121 = scmp.eq.s32.totalorder %s18, 0
    %p122 = por %p120, %p121
    %p123 = scmp.ne.s32.totalorder %s115, %s117
    %p124 = scmp.eq.s32.totalorder %s23, 1
    %p125 = por %p123, %p124
    %p126 = scmp.ne.s32.totalorder %s117, %s118
    %p127 = scmp.eq.s32.totalorder %s23, 0
    %p128 = por %p126, %p127
    %p129 = scmp.ne.s32.totalorder %s117, %s118
    %p130 = scmp.eq.s32.totalorder %s24, 1
    %p131 = por %p129, %p130
    %p133 = scmp.ne.s32.totalorder %s118, %s132
    %p134 = scmp.eq.s32.totalorder %s24, 0
    %p135 = por %p133, %p134
    %s137 = sadd.s32 %s136, 1
    %p140 = scmp.eq.s32.totalorder %s18, 1
    %p141 = scmp.ne.s32.totalorder %s136, %s138
    %p142 = scmp.eq.s32.totalorder %s18, 0
    %p143 = por %p141, %p142
    %p144 = scmp.ne.s32.totalorder %s136, %s138
    %p145 = scmp.eq.s32.totalorder %s23, 1
    %p146 = por %p144, %p145
    %p147 = scmp.ne.s32.totalorder %s138, %s139
    %p148 = scmp.eq.s32.totalorder %s23, 0
    %p149 = por %p147, %p148
    %p150 = scmp.ne.s32.totalorder %s138, %s139
    %p151 = scmp.eq.s32.totalorder %s24, 1
    %p152 = por %p150, %p151
    %p154 = scmp.ne.s32.totalorder %s139, %s153
    %p155 = scmp.eq.s32.totalorder %s24, 0
    %p156 = por %p154, %p155
    %s158 = sadd.s32 %s157, 1
    %p161 = scmp.eq.s32.totalorder %s18, 1
    %p162 = scmp.ne.s32.totalorder %s157, %s159
    %p163 = scmp.eq.s32.totalorder %s18, 0
    %p164 = por %p162, %p163
    %p165 = scmp.ne.s32.totalorder %s157, %s159
    %p166 = scmp.eq.s32.totalorder %s23, 1
    %p167 = por %p165, %p166
    %p168 = scmp.ne.s32.totalorder %s159, %s160
    %p169 = scmp.eq.s32.totalorder %s23, 0
    %p170 = por %p168, %p169
    %p171 = scmp.ne.s32.totalorder %s159, %s160
    %p172 = scmp.eq.s32.totalorder %s24, 1
    %p173 = por %p171, %p172
    %p175 = scmp.ne.s32.totalorder %s160, %s174
    %p176 = scmp.eq.s32.totalorder %s24, 0
    %p177 = por %p175, %p176
    %s179 = sadd.s32 %s178, 1
    %p182 = scmp.eq.s32.totalorder %s18, 1
    %p183 = scmp.ne.s32.totalorder %s178, %s180
    %p184 = scmp.eq.s32.totalorder %s18, 0
    %p185 = por %p183, %p184
    %p186 = scmp.ne.s32.totalorder %s178, %s180
    %p187 = scmp.eq.s32.totalorder %s23, 1
    %p188 = por %p186, %p187
    %p189 = scmp.ne.s32.totalorder %s180, %s181
    %p190 = scmp.eq.s32.totalorder %s23, 0
    %p191 = por %p189, %p190
    %p192 = scmp.ne.s32.totalorder %s180, %s181
    %p193 = scmp.eq.s32.totalorder %s24, 1
    %p194 = por %p192, %p193
    %p196 = scmp.ne.s32.totalorder %s181, %s195
    %p197 = scmp.eq.s32.totalorder %s24, 0
    %p198 = por %p196, %p197
    %s200 = sadd.s32 %s199, 1
    %p203 = scmp.eq.s32.totalorder %s18, 1
    %p204 = scmp.ne.s32.totalorder %s199, %s201
    %p205 = scmp.eq.s32.totalorder %s18, 0
    %p206 = por %p204, %p205
    %p207 = scmp.ne.s32.totalorder %s199, %s201
    %p208 = scmp.eq.s32.totalorder %s23, 1
    %p209 = por %p207, %p208
    %p210 = scmp.ne.s32.totalorder %s201, %s202
    %p211 = scmp.eq.s32.totalorder %s23, 0
    %p212 = por %p210, %p211
    %p213 = scmp.ne.s32.totalorder %s201, %s202
    %p214 = scmp.eq.s32.totalorder %s24, 1
    %p215 = por %p213, %p214
    %p217 = scmp.ne.s32.totalorder %s202, %s216
    %p218 = scmp.eq.s32.totalorder %s24, 0
    %p219 = por %p217, %p218
    %s221 = sadd.s32 %s220, 1
    %p224 = scmp.eq.s32.totalorder %s18, 1
    %p225 = scmp.ne.s32.totalorder %s220, %s222
    %p226 = scmp.eq.s32.totalorder %s18, 0
    %p227 = por %p225, %p226
    %p228 = scmp.ne.s32.totalorder %s220, %s222
    %p229 = scmp.eq.s32.totalorder %s23, 1
    %p230 = por %p228, %p229
    %p231 = scmp.ne.s32.totalorder %s222, %s223
    %p232 = scmp.eq.s32.totalorder %s23, 0
    %p233 = por %p231, %p232
    %p234 = scmp.ne.s32.totalorder %s222, %s223
    %p235 = scmp.eq.s32.totalorder %s24, 1
    %p236 = por %p234, %p235
    %p238 = scmp.ne.s32.totalorder %s223, %s237
    %p239 = scmp.eq.s32.totalorder %s24, 0
    %p240 = por %p238, %p239
    %s242 = sadd.s32 %s241, 1
    %p245 = scmp.eq.s32.totalorder %s18, 1
    %p246 = scmp.ne.s32.totalorder %s241, %s243
    %p247 = scmp.eq.s32.totalorder %s18, 0
    %p248 = por %p246, %p247
    %p249 = scmp.ne.s32.totalorder %s241, %s243
    %p250 = scmp.eq.s32.totalorder %s23, 1
    %p251 = por %p249, %p250
    %p252 = scmp.ne.s32.totalorder %s243, %s244
    %p253 = scmp.eq.s32.totalorder %s23, 0
    %p254 = por %p252, %p253
    %p255 = scmp.ne.s32.totalorder %s243, %s244
    %p256 = scmp.eq.s32.totalorder %s24, 1
    %p257 = por %p255, %p256
    %p259 = scmp.ne.s32.totalorder %s244, %s258
    %p260 = scmp.eq.s32.totalorder %s24, 0
    %p261 = por %p259, %p260
    %s263 = sadd.s32 %s262, 1
    %p266 = scmp.eq.s32.totalorder %s18, 1
    %p267 = scmp.ne.s32.totalorder %s262, %s264
    %p268 = scmp.eq.s32.totalorder %s18, 0
    %p269 = por %p267, %p268
    %p270 = scmp.ne.s32.totalorder %s262, %s264
    %p271 = scmp.eq.s32.totalorder %s23, 1
    %p272 = por %p270, %p271
    %p273 = scmp.ne.s32.totalorder %s264, %s265
    %p274 = scmp.eq.s32.totalorder %s23, 0
    %p275 = por %p273, %p274
    %p276 = scmp.ne.s32.totalorder %s264, %s265
    %p277 = scmp.eq.s32.totalorder %s24, 1
    %p278 = por %p276, %p277
    %p280 = scmp.ne.s32.totalorder %s265, %s279
    %p281 = scmp.eq.s32.totalorder %s24, 0
    %p282 = por %p280, %p281
    %s283 = ssub.s32 %s18, %s25
    %p284 = scmp.eq.s32.totalorder %s283, 0
    %s286 = sadd.s32 %s285, 1
    %s287 = scalar_select %p284, %s285, %s286
    %p290 = pneg %p284
    %p291 = scmp.eq.s32.totalorder %s18, 1
    %p292 = por %p290, %p291
    %p293 = scmp.ne.s32.totalorder %s285, %s288
    %p294 = scmp.eq.s32.totalorder %s18, 0
    %p295 = por %p293, %p294
    %p296 = scmp.ne.s32.totalorder %s285, %s288
    %p297 = scmp.eq.s32.totalorder %s23, 1
    %p298 = por %p296, %p297
    %p299 = scmp.ne.s32.totalorder %s288, %s289
    %p300 = scmp.eq.s32.totalorder %s23, 0
    %p301 = por %p299, %p300
    %p302 = scmp.ne.s32.totalorder %s288, %s289
    %p303 = scmp.eq.s32.totalorder %s24, 1
    %p304 = por %p302, %p303
    %p306 = scmp.ne.s32.totalorder %s289, %s305
    %p307 = scmp.eq.s32.totalorder %s24, 0
    %p308 = por %p306, %p307
    %p309 = scmp.le.s32.totalorder 1, %s18
    %p310 = scmp.lt.s32.totalorder %s18, 3
    %p311 = pnand %p309, %p310
    %p312 = pneg %p311
    // Predicated region
    $region9: #{forward.1} parent=5 // pred_check
      _
    $region10: #{forward.1} parent=5 // pred_check_branch
      %314 = sbr.rel (%p311) target = $region12
    $region11: #{forward.1} parent=5 // pred_region
      %s315 = ssub.s32 %s18, 1
      // Predicated region
      $region13: #{forward.1} parent=11 // pred_check
        %p316 = pneg %p65
      $region14: #{forward.1} parent=11 // pred_check_branch
        %318 = sbr.rel (%p316) target = $region16
      $region15: #{forward.1} parent=11 // pred_region
        _
      $region16: #{forward.1} parent=11 // pred_fallthru
        _
      // Predicated region
      $region17: #{forward.1} parent=11 // pred_check
        %p319 = pneg %p86
      $region18: #{forward.1} parent=11 // pred_check_branch
        %321 = sbr.rel (%p319) target = $region20
      $region19: #{forward.1} parent=11 // pred_region
        _
      $region20: #{forward.1} parent=11 // pred_fallthru
        _
      // Predicated region
      $region21: #{forward.1} parent=11 // pred_check
        %p322 = pneg %p107
      $region22: #{forward.1} parent=11 // pred_check_branch
        %324 = sbr.rel (%p322) target = $region24
      $region23: #{forward.1} parent=11 // pred_region
        _
      $region24: #{forward.1} parent=11 // pred_fallthru
        _
      // Predicated region
      $region25: #{forward.1} parent=11 // pred_check
        %p325 = pneg %p128
      $region26: #{forward.1} parent=11 // pred_check_branch
        %327 = sbr.rel (%p325) target = $region28
      $region27: #{forward.1} parent=11 // pred_region
        _
      $region28: #{forward.1} parent=11 // pred_fallthru
        _
      // Predicated region
      $region29: #{forward.1} parent=11 // pred_check
        %p328 = pneg %p149
      $region30: #{forward.1} parent=11 // pred_check_branch
        %330 = sbr.rel (%p328) target = $region32
      $region31: #{forward.1} parent=11 // pred_region
        _
      $region32: #{forward.1} parent=11 // pred_fallthru
        _
      // Predicated region
      $region33: #{forward.1} parent=11 // pred_check
        %p331 = pneg %p170
      $region34: #{forward.1} parent=11 // pred_check_branch
        %333 = sbr.rel (%p331) target = $region36
      $region35: #{forward.1} parent=11 // pred_region
        _
      $region36: #{forward.1} parent=11 // pred_fallthru
        _
      // Predicated region
      $region37: #{forward.1} parent=11 // pred_check
        %p334 = pneg %p191
      $region38: #{forward.1} parent=11 // pred_check_branch
        %336 = sbr.rel (%p334) target = $region40
      $region39: #{forward.1} parent=11 // pred_region
        _
      $region40: #{forward.1} parent=11 // pred_fallthru
        _
      // Predicated region
      $region41: #{forward.1} parent=11 // pred_check
        %p337 = pneg %p212
      $region42: #{forward.1} parent=11 // pred_check_branch
        %339 = sbr.rel (%p337) target = $region44
      $region43: #{forward.1} parent=11 // pred_region
        _
      $region44: #{forward.1} parent=11 // pred_fallthru
        _
      // Predicated region
      $region45: #{forward.1} parent=11 // pred_check
        %p340 = pneg %p233
      $region46: #{forward.1} parent=11 // pred_check_branch
        %342 = sbr.rel (%p340) target = $region48
      $region47: #{forward.1} parent=11 // pred_region
        _
      $region48: #{forward.1} parent=11 // pred_fallthru
        _
      // Predicated region
      $region49: #{forward.1} parent=11 // pred_check
        %p343 = pneg %p254
      $region50: #{forward.1} parent=11 // pred_check_branch
        %345 = sbr.rel (%p343) target = $region52
      $region51: #{forward.1} parent=11 // pred_region
        _
      $region52: #{forward.1} parent=11 // pred_fallthru
        _
      // Predicated region
      $region53: #{forward.1} parent=11 // pred_check
        %p346 = pneg %p275
      $region54: #{forward.1} parent=11 // pred_check_branch
        %348 = sbr.rel (%p346) target = $region56
      $region55: #{forward.1} parent=11 // pred_region
        _
      $region56: #{forward.1} parent=11 // pred_fallthru
        _
    $region12: #{forward.1} parent=5 // pred_fallthru
      _
    %p349 = scmp.lt.s32.totalorder %s18, 2
    // Predicated region
    $region57: #{forward.1} parent=5 // pred_check
      %p350 = pneg %p349
    $region58: #{forward.1} parent=5 // pred_check_branch
      %352 = sbr.rel (%p350) target = $region60
    $region59: #{forward.1} parent=5 // pred_region
      // Predicated region
      $region61: #{forward.1} parent=59 // pred_check
        %p353 = pneg %p38
      $region62: #{forward.1} parent=59 // pred_check_branch
        %355 = sbr.rel (%p353) target = $region64
      $region63: #{forward.1} parent=59 // pred_region
        %p356 = scmp.lt.s32.totalorder %s18, 1
        %s357 = scalar_select %p356, %s18, 1
        %s358 = smul.addr %s357, 296
        %s359 = smul.addr %s358, 4
        %s360 = scalar_lea.vmem %s0, %s359
      $region64: #{forward.1} parent=59 // pred_fallthru
        _
    $region60: #{forward.1} parent=5 // pred_fallthru
      _
    %p361 = scmp.le.s32.totalorder 1, %s18
    %p362 = scmp.lt.s32.totalorder %s18, 3
    %p363 = pnand %p361, %p362
    %p364 = pneg %p363
    // Predicated region
    $region65: #{forward.1} parent=5 // pred_check
      _
    $region66: #{forward.1} parent=5 // pred_check_branch
      %366 = sbr.rel (%p363) target = $region68
    $region67: #{forward.1} parent=5 // pred_region
      %s367 = ssub.s32 %s18, 1
      %p368 = scmp.lt.s32.totalorder %s23, 1
      %s369 = scalar_select %p368, %s23, 1
      %s370 = smul.addr %s369, 296
      %s371 = smul.addr %s370, 4
      %s372 = scalar_lea.vmem %s0, %s371
      %p373 = pneg %p44
      %p374 = pneg %p41
      %p375 = pneg %p65
      %p376 = pneg %p62
      %p377 = pneg %p86
      %p378 = pneg %p83
      %p379 = pneg %p107
      %p380 = pneg %p104
      %p381 = pneg %p128
      %p382 = pneg %p125
      %p383 = pneg %p149
      %p384 = pneg %p146
      %p385 = pneg %p170
      %p386 = pneg %p167
      %p387 = pneg %p191
      %p388 = pneg %p188
      %p389 = pneg %p212
      %p390 = pneg %p209
      %p391 = pneg %p233
      %p392 = pneg %p230
      %p393 = pneg %p254
      %p394 = pneg %p251
      %p395 = pneg %p275
      %p396 = pneg %p272
      %p397 = pneg %p301
      %p398 = pneg %p298
      %p399 = scmp.lt.s32.totalorder %s23, 1
      %s400 = scalar_select %p399, %s23, 1
      %s401 = scalar_lea.vmem %s12, %s400
      %p402 = scmp.lt.s32.totalorder %s23, 1
      %s403 = scalar_select %p402, %s23, 1
      %s404 = smul.addr %s403, 296
      %s405 = smul.addr %s404, 4
      %s406 = scalar_lea.vmem %s0, %s405
      %p407 = scmp.lt.s32.totalorder %s23, 1
      %s408 = scalar_select %p407, %s23, 1
      %s409 = scalar_lea.vmem %s12, %s408
      %v411 = vld [vmem:[%s406] sm:$0xff]
      %v412 = vld [vmem:[%s406 + $0x8] sm:$0xff]
      %v413 = vld [vmem:[%s406 + $0x10] sm:$0xff]
      %v414 = vld [vmem:[%s406 + $0x18] sm:$0xff]
      %v415 = vld [vmem:[%s406 + $0x20] sm:$0xff]
      %v416 = vld [vmem:[%s406 + $0x28] sm:$0xff]
      %v417 = vld [vmem:[%s406 + $0x30] sm:$0xff]
      %v418 = vld [vmem:[%s406 + $0x38] sm:$0xff]
      %v419 = vld [vmem:[%s406 + $0x40] sm:$0xff]
      %v420 = vld [vmem:[%s406 + $0x48] sm:$0xff]
      %v421 = vld [vmem:[%s406 + $0x50] sm:$0xff]
      %v422 = vld [vmem:[%s406 + $0x58] sm:$0xff]
      %v423 = vld [vmem:[%s406 + $0x60] sm:$0xff]
      %v424 = vld [vmem:[%s406 + $0x68] sm:$0xff]
      %v425 = vld [vmem:[%s406 + $0x70] sm:$0xff]
      %v426 = vld [vmem:[%s406 + $0x78] sm:$0xff]
      %v427 = vld [vmem:[%s406 + $0x80] sm:$0xff]
      %v428 = vld [vmem:[%s406 + $0x88] sm:$0xff]
      %v429 = vld [vmem:[%s406 + $0x90] sm:$0xff]
      %v430 = vld [vmem:[%s406 + $0x98] sm:$0xff]
      %v431 = vld [vmem:[%s406 + $0xa0] sm:$0xff]
      %v432 = vld [vmem:[%s406 + $0xa8] sm:$0xff]
      %v433 = vld [vmem:[%s406 + $0xb0] sm:$0xff]
      %v434 = vld [vmem:[%s406 + $0xb8] sm:$0xff]
      %v435 = vld [vmem:[%s406 + $0xc0] sm:$0xff]
      %v436 = vld [vmem:[%s406 + $0xc8] sm:$0xff]
      %v437 = vld [vmem:[%s406 + $0xd0] sm:$0xff]
      %v438 = vld [vmem:[%s406 + $0xd8] sm:$0xff]
      %v439 = vld [vmem:[%s406 + $0xe0] sm:$0xff]
      %v440 = vld [vmem:[%s406 + $0xe8] sm:$0xff]
      %v441 = vld [vmem:[%s406 + $0xf0] sm:$0xff]
      %v442 = vld [vmem:[%s406 + $0xf8] sm:$0xff]
      %v443 = vld [vmem:[%s406 + $0x100] sm:$0xff]
      %v444 = vld [vmem:[%s406 + $0x108] sm:$0xff]
      %v445 = vld [vmem:[%s406 + $0x110] sm:$0xff]
      %v446 = vld [vmem:[%s406 + $0x118] sm:$0xff]
      %v447 = vld [vmem:[%s406 + $0x120] sm:$0xff]
      %v448 = vld [vmem:[%s406 + $0x128] sm:$0xff]
      %v449 = vld [vmem:[%s406 + $0x130] sm:$0xff]
      %v450 = vld [vmem:[%s406 + $0x138] sm:$0xff]
      %v451 = vld [vmem:[%s406 + $0x140] sm:$0xff]
      %v452 = vld [vmem:[%s406 + $0x148] sm:$0xff]
      %v453 = vld [vmem:[%s406 + $0x150] sm:$0xff]
      %v454 = vld [vmem:[%s406 + $0x158] sm:$0xff]
      %v455 = vld [vmem:[%s406 + $0x160] sm:$0xff]
      %v456 = vld [vmem:[%s406 + $0x168] sm:$0xff]
      %v457 = vld [vmem:[%s406 + $0x170] sm:$0xff]
      %v458 = vld [vmem:[%s406 + $0x178] sm:$0xff]
      %v459 = vld [vmem:[%s406 + $0x180] sm:$0xff]
      %v460 = vld [vmem:[%s406 + $0x188] sm:$0xff]
      %v461 = vld [vmem:[%s406 + $0x190] sm:$0xff]
      %v462 = vld [vmem:[%s406 + $0x198] sm:$0xff]
      %v463 = vld [vmem:[%s406 + $0x1a0] sm:$0xff]
      %v464 = vld [vmem:[%s406 + $0x1a8] sm:$0xff]
      %v465 = vld [vmem:[%s406 + $0x1b0] sm:$0xff]
      %v466 = vld [vmem:[%s406 + $0x1b8] sm:$0xff]
      %v467 = vld [vmem:[%s406 + $0x1c0] sm:$0xff]
      %v468 = vld [vmem:[%s406 + $0x1c8] sm:$0xff]
      %v469 = vld [vmem:[%s406 + $0x1d0] sm:$0xff]
      %v470 = vld [vmem:[%s406 + $0x1d8] sm:$0xff]
      %v471 = vld [vmem:[%s406 + $0x1e0] sm:$0xff]
      %v472 = vld [vmem:[%s406 + $0x1e8] sm:$0xff]
      %v473 = vld [vmem:[%s406 + $0x1f0] sm:$0xff]
      %v474 = vld [vmem:[%s406 + $0x1f8] sm:$0xff]
      %v475 = vld [vmem:[%s406 + $0x200] sm:$0xff]
      %v476 = vld [vmem:[%s406 + $0x208] sm:$0xff]
      %v477 = vld [vmem:[%s406 + $0x210] sm:$0xff]
      %v478 = vld [vmem:[%s406 + $0x218] sm:$0xff]
      %v479 = vld [vmem:[%s406 + $0x220] sm:$0xff]
      %v480 = vld [vmem:[%s406 + $0x228] sm:$0xff]
      %v481 = vld [vmem:[%s406 + $0x230] sm:$0xff]
      %v482 = vld [vmem:[%s406 + $0x238] sm:$0xff]
      %v483 = vld [vmem:[%s406 + $0x240] sm:$0xff]
      %v484 = vld [vmem:[%s406 + $0x248] sm:$0xff]
      %v485 = vld [vmem:[%s406 + $0x250] sm:$0xff]
      %v486 = vld [vmem:[%s406 + $0x258] sm:$0xff]
      %v487 = vld [vmem:[%s406 + $0x260] sm:$0xff]
      %v488 = vld [vmem:[%s406 + $0x268] sm:$0xff]
      %v489 = vld [vmem:[%s406 + $0x270] sm:$0xff]
      %v490 = vld [vmem:[%s406 + $0x278] sm:$0xff]
      %v491 = vld [vmem:[%s406 + $0x280] sm:$0xff]
      %v492 = vld [vmem:[%s406 + $0x288] sm:$0xff]
      %v493 = vld [vmem:[%s406 + $0x290] sm:$0xff]
      %v494 = vld [vmem:[%s406 + $0x298] sm:$0xff]
      %v495 = vld [vmem:[%s406 + $0x2a0] sm:$0xff]
      %v496 = vld [vmem:[%s406 + $0x2a8] sm:$0xff]
      %v497 = vld [vmem:[%s406 + $0x2b0] sm:$0xff]
      %v498 = vld [vmem:[%s406 + $0x2b8] sm:$0xff]
      %v499 = vld [vmem:[%s406 + $0x2c0] sm:$0xff]
      %v500 = vld [vmem:[%s406 + $0x2c8] sm:$0xff]
      %v501 = vld [vmem:[%s406 + $0x2d0] sm:$0xff]
      %v502 = vld [vmem:[%s406 + $0x2d8] sm:$0xff]
      %v503 = vld [vmem:[%s406 + $0x2e0] sm:$0xff]
      %v504 = vld [vmem:[%s406 + $0x2e8] sm:$0xff]
      %v505 = vld [vmem:[%s406 + $0x2f0] sm:$0xff]
      %v506 = vld [vmem:[%s406 + $0x2f8] sm:$0xff]
      %v507 = vld [vmem:[%s406 + $0x300] sm:$0xff]
      %v508 = vld [vmem:[%s406 + $0x308] sm:$0xff]
      %v509 = vld [vmem:[%s406 + $0x310] sm:$0xff]
      %v510 = vld [vmem:[%s406 + $0x318] sm:$0xff]
      %v511 = vld [vmem:[%s406 + $0x320] sm:$0xff]
      %v512 = vld [vmem:[%s406 + $0x328] sm:$0xff]
      %v513 = vld [vmem:[%s406 + $0x330] sm:$0xff]
      %v514 = vld [vmem:[%s406 + $0x338] sm:$0xff]
      %v515 = vld [vmem:[%s406 + $0x340] sm:$0xff]
      %v516 = vld [vmem:[%s406 + $0x348] sm:$0xff]
      %v517 = vld [vmem:[%s406 + $0x350] sm:$0xff]
      %v518 = vld [vmem:[%s406 + $0x358] sm:$0xff]
      %v519 = vld [vmem:[%s406 + $0x360] sm:$0xff]
      %v520 = vld [vmem:[%s406 + $0x368] sm:$0xff]
      %v521 = vld [vmem:[%s406 + $0x370] sm:$0xff]
      %v522 = vld [vmem:[%s406 + $0x378] sm:$0xff]
      %v523 = vld [vmem:[%s406 + $0x380] sm:$0xff]
      %v524 = vld [vmem:[%s406 + $0x388] sm:$0xff]
      %v525 = vld [vmem:[%s406 + $0x390] sm:$0xff]
      %v526 = vld [vmem:[%s406 + $0x398] sm:$0xff]
      %v527 = vld [vmem:[%s406 + $0x3a0] sm:$0xff]
      %v528 = vld [vmem:[%s406 + $0x3a8] sm:$0xff]
      %v529 = vld [vmem:[%s406 + $0x3b0] sm:$0xff]
      %v530 = vld [vmem:[%s406 + $0x3b8] sm:$0xff]
      %v531 = vld [vmem:[%s406 + $0x3c0] sm:$0xff]
      %v532 = vld [vmem:[%s406 + $0x3c8] sm:$0xff]
      %v533 = vld [vmem:[%s406 + $0x3d0] sm:$0xff]
      %v534 = vld [vmem:[%s406 + $0x3d8] sm:$0xff]
      %v535 = vld [vmem:[%s406 + $0x3e0] sm:$0xff]
      %v536 = vld [vmem:[%s406 + $0x3e8] sm:$0xff]
      %v537 = vld [vmem:[%s406 + $0x3f0] sm:$0xff]
      %v538 = vld [vmem:[%s406 + $0x3f8] sm:$0xff]
      %v539 = vld [vmem:[%s406 + $0x400] sm:$0xff]
      %v540 = vld [vmem:[%s406 + $0x408] sm:$0xff]
      %v541 = vld [vmem:[%s406 + $0x410] sm:$0xff]
      %v542 = vld [vmem:[%s406 + $0x418] sm:$0xff]
      %v543 = vld [vmem:[%s406 + $0x420] sm:$0xff]
      %v544 = vld [vmem:[%s406 + $0x428] sm:$0xff]
      %v545 = vld [vmem:[%s406 + $0x430] sm:$0xff]
      %v546 = vld [vmem:[%s406 + $0x438] sm:$0xff]
      %v547 = vld [vmem:[%s406 + $0x440] sm:$0xff]
      %v548 = vld [vmem:[%s406 + $0x448] sm:$0xff]
      %v549 = vld [vmem:[%s406 + $0x450] sm:$0xff]
      %v550 = vld [vmem:[%s406 + $0x458] sm:$0xff]
      %v551 = vld [vmem:[%s406 + $0x460] sm:$0xff]
      %v552 = vld [vmem:[%s406 + $0x468] sm:$0xff]
      %v553 = vld [vmem:[%s406 + $0x470] sm:$0xff]
      %v554 = vld [vmem:[%s406 + $0x478] sm:$0xff]
      %v555 = vld [vmem:[%s406 + $0x480] sm:$0x77]
      %v556 = vld [vmem:[%s406 + $0x488] sm:$0x77]
      %v557 = vld [vmem:[%s406 + $0x490] sm:$0x77]
      %v558 = vld [vmem:[%s406 + $0x498] sm:$0x77]
      %v559 = vld [vmem:[%s1] sm:$0xff]
      %v560 = vld [vmem:[%s1 + $0x8] sm:$0xf]
      %v561 = vld [vmem:[%s1 + $0xc] sm:$0xff]
      %v562 = vld [vmem:[%s1 + $0x14] sm:$0xf]
      %v563 = vld [vmem:[%s1 + $0x18] sm:$0xff]
      %v564 = vld [vmem:[%s1 + $0x20] sm:$0xf]
      %v565 = vld [vmem:[%s1 + $0x24] sm:$0xff]
      %v566 = vld [vmem:[%s1 + $0x2c] sm:$0xf]
      %v567 = vld [vmem:[%s1 + $0x30] sm:$0xff]
      %v568 = vld [vmem:[%s1 + $0x38] sm:$0xf]
      %v569 = vld [vmem:[%s1 + $0x3c] sm:$0xff]
      %v570 = vld [vmem:[%s1 + $0x44] sm:$0xf]
      %v571 = vld [vmem:[%s1 + $0x48] sm:$0xff]
      %v572 = vld [vmem:[%s1 + $0x50] sm:$0xf]
      %v573 = vld [vmem:[%s1 + $0x54] sm:$0xff]
      %v574 = vld [vmem:[%s1 + $0x5c] sm:$0xf]
      %v575 = vld [vmem:[%s1 + $0x60] sm:$0xff]
      %v576 = vld [vmem:[%s1 + $0x68] sm:$0xf]
      %v577 = vld [vmem:[%s1 + $0x6c] sm:$0xff]
      %v578 = vld [vmem:[%s1 + $0x74] sm:$0xf]
      %v579 = vld [vmem:[%s1 + $0x78] sm:$0xff]
      %v580 = vld [vmem:[%s1 + $0x80] sm:$0xf]
      %v581 = vld [vmem:[%s1 + $0x84] sm:$0xff]
      %v582 = vld [vmem:[%s1 + $0x8c] sm:$0xf]
      %v583 = vld [vmem:[%s1 + $0x90] sm:$0xff]
      %v584 = vld [vmem:[%s1 + $0x98] sm:$0xf]
      %v585 = vld [vmem:[%s1 + $0x9c] sm:$0xff]
      %v586 = vld [vmem:[%s1 + $0xa4] sm:$0xf]
      %v587 = vld [vmem:[%s1 + $0xa8] sm:$0xff]
      %v588 = vld [vmem:[%s1 + $0xb0] sm:$0xf]
      %v589 = vld [vmem:[%s1 + $0xb4] sm:$0xff]
      %v590 = vld [vmem:[%s1 + $0xbc] sm:$0xf]
      %v591 = vld [vmem:[%s1 + $0xc0] sm:$0xff]
      %v592 = vld [vmem:[%s1 + $0xc8] sm:$0xf]
      %v593 = vld [vmem:[%s1 + $0xcc] sm:$0xff]
      %v594 = vld [vmem:[%s1 + $0xd4] sm:$0xf]
      %v595 = vld [vmem:[%s1 + $0xd8] sm:$0xff]
      %v596 = vld [vmem:[%s1 + $0xe0] sm:$0xf]
      %v597 = vld [vmem:[%s1 + $0xe4] sm:$0xff]
      %v598 = vld [vmem:[%s1 + $0xec] sm:$0xf]
      %v599 = vld [vmem:[%s1 + $0xf0] sm:$0xff]
      %v600 = vld [vmem:[%s1 + $0xf8] sm:$0xf]
      %v601 = vld [vmem:[%s1 + $0xfc] sm:$0xff]
      %v602 = vld [vmem:[%s1 + $0x104] sm:$0xf]
      %v603 = vld [vmem:[%s1 + $0x108] sm:$0xff]
      %v604 = vld [vmem:[%s1 + $0x110] sm:$0xf]
      %v605 = vld [vmem:[%s1 + $0x114] sm:$0xff]
      %v606 = vld [vmem:[%s1 + $0x11c] sm:$0xf]
      %v607 = vld [vmem:[%s1 + $0x120] sm:$0xff]
      %v608 = vld [vmem:[%s1 + $0x128] sm:$0xf]
      %v609 = vld [vmem:[%s1 + $0x12c] sm:$0xff]
      %v610 = vld [vmem:[%s1 + $0x134] sm:$0xf]
      %v611 = vld [vmem:[%s1 + $0x138] sm:$0xff]
      %v612 = vld [vmem:[%s1 + $0x140] sm:$0xf]
      %v613 = vld [vmem:[%s1 + $0x144] sm:$0xff]
      %v614 = vld [vmem:[%s1 + $0x14c] sm:$0xf]
      %v615 = vld [vmem:[%s1 + $0x150] sm:$0xff]
      %v616 = vld [vmem:[%s1 + $0x158] sm:$0xf]
      %v617 = vld [vmem:[%s1 + $0x15c] sm:$0xff]
      %v618 = vld [vmem:[%s1 + $0x164] sm:$0xf]
      %v679 = vunpack.c.l.b16 %v559
      %v680 = vunpack.c.h.b16 %v559
      %v681 = vunpack.c.l.b16 %v560
      %v682 = vunpack.c.l.b16 %v561
      %v683 = vunpack.c.h.b16 %v561
      %v684 = vunpack.c.l.b16 %v562
      %v685 = vunpack.c.l.b16 %v563
      %v686 = vunpack.c.h.b16 %v563
      %v687 = vunpack.c.l.b16 %v564
      %v688 = vunpack.c.l.b16 %v565
      %v689 = vunpack.c.h.b16 %v565
      %v690 = vunpack.c.l.b16 %v566
      %v691 = vunpack.c.l.b16 %v567
      %v692 = vunpack.c.h.b16 %v567
      %v693 = vunpack.c.l.b16 %v568
      %v694 = vunpack.c.l.b16 %v569
      %v695 = vunpack.c.h.b16 %v569
      %v696 = vunpack.c.l.b16 %v570
      %v697 = vunpack.c.l.b16 %v571
      %v698 = vunpack.c.h.b16 %v571
      %v699 = vunpack.c.l.b16 %v572
      %v700 = vunpack.c.l.b16 %v573
      %v701 = vunpack.c.h.b16 %v573
      %v702 = vunpack.c.l.b16 %v574
      %v703 = vunpack.c.l.b16 %v575
      %v704 = vunpack.c.h.b16 %v575
      %v705 = vunpack.c.l.b16 %v576
      %v706 = vunpack.c.l.b16 %v577
      %v707 = vunpack.c.h.b16 %v577
      %v708 = vunpack.c.l.b16 %v578
      %v709 = vunpack.c.l.b16 %v579
      %v710 = vunpack.c.h.b16 %v579
      %v711 = vunpack.c.l.b16 %v580
      %v712 = vunpack.c.l.b16 %v581
      %v713 = vunpack.c.h.b16 %v581
      %v714 = vunpack.c.l.b16 %v582
      %v715 = vunpack.c.l.b16 %v583
      %v716 = vunpack.c.h.b16 %v583
      %v717 = vunpack.c.l.b16 %v584
      %v718 = vunpack.c.l.b16 %v585
      %v719 = vunpack.c.h.b16 %v585
      %v720 = vunpack.c.l.b16 %v586
      %v721 = vunpack.c.l.b16 %v587
      %v722 = vunpack.c.h.b16 %v587
      %v723 = vunpack.c.l.b16 %v588
      %v724 = vunpack.c.l.b16 %v589
      %v725 = vunpack.c.h.b16 %v589
      %v726 = vunpack.c.l.b16 %v590
      %v727 = vunpack.c.l.b16 %v591
      %v728 = vunpack.c.h.b16 %v591
      %v729 = vunpack.c.l.b16 %v592
      %v730 = vunpack.c.l.b16 %v593
      %v731 = vunpack.c.h.b16 %v593
      %v732 = vunpack.c.l.b16 %v594
      %v733 = vunpack.c.l.b16 %v595
      %v734 = vunpack.c.h.b16 %v595
      %v735 = vunpack.c.l.b16 %v596
      %v736 = vunpack.c.l.b16 %v597
      %v737 = vunpack.c.h.b16 %v597
      %v738 = vunpack.c.l.b16 %v598
      %v739 = vunpack.c.l.b16 %v599
      %v740 = vunpack.c.h.b16 %v599
      %v741 = vunpack.c.l.b16 %v600
      %v742 = vunpack.c.l.b16 %v601
      %v743 = vunpack.c.h.b16 %v601
      %v744 = vunpack.c.l.b16 %v602
      %v745 = vunpack.c.l.b16 %v603
      %v746 = vunpack.c.h.b16 %v603
      %v747 = vunpack.c.l.b16 %v604
      %v748 = vunpack.c.l.b16 %v605
      %v749 = vunpack.c.h.b16 %v605
      %v750 = vunpack.c.l.b16 %v606
      %v751 = vunpack.c.l.b16 %v607
      %v752 = vunpack.c.h.b16 %v607
      %v753 = vunpack.c.l.b16 %v608
      %v754 = vunpack.c.l.b16 %v609
      %v755 = vunpack.c.h.b16 %v609
      %v756 = vunpack.c.l.b16 %v610
      %v757 = vunpack.c.l.b16 %v611
      %v758 = vunpack.c.h.b16 %v611
      %v759 = vunpack.c.l.b16 %v612
      %v760 = vunpack.c.l.b16 %v613
      %v761 = vunpack.c.h.b16 %v613
      %v762 = vunpack.c.l.b16 %v614
      %v763 = vunpack.c.l.b16 %v615
      %v764 = vunpack.c.h.b16 %v615
      %v765 = vunpack.c.l.b16 %v616
      %v766 = vunpack.c.l.b16 %v617
      %v767 = vunpack.c.h.b16 %v617
      %v768 = vunpack.c.l.b16 %v618
      %v769 = vpack.c.b16 %v682, %v679
      %v770 = vpack.c.b16 %v683, %v680
      %v771 = vpack.c.b16 %v684, %v681
      %v772 = vpack.c.b16 %v688, %v685
      %v773 = vpack.c.b16 %v689, %v686
      %v774 = vpack.c.b16 %v690, %v687
      %v775 = vpack.c.b16 %v694, %v691
      %v776 = vpack.c.b16 %v695, %v692
      %v777 = vpack.c.b16 %v696, %v693
      %v778 = vpack.c.b16 %v700, %v697
      %v779 = vpack.c.b16 %v701, %v698
      %v780 = vpack.c.b16 %v702, %v699
      %v781 = vpack.c.b16 %v706, %v703
      %v782 = vpack.c.b16 %v707, %v704
      %v783 = vpack.c.b16 %v708, %v705
      %v784 = vpack.c.b16 %v712, %v709
      %v785 = vpack.c.b16 %v713, %v710
      %v786 = vpack.c.b16 %v714, %v711
      %v787 = vpack.c.b16 %v718, %v715
      %v788 = vpack.c.b16 %v719, %v716
      %v789 = vpack.c.b16 %v720, %v717
      %v790 = vpack.c.b16 %v724, %v721
      %v791 = vpack.c.b16 %v725, %v722
      %v792 = vpack.c.b16 %v726, %v723
      %v793 = vpack.c.b16 %v730, %v727
      %v794 = vpack.c.b16 %v731, %v728
      %v795 = vpack.c.b16 %v732, %v729
      %v796 = vpack.c.b16 %v736, %v733
      %v797 = vpack.c.b16 %v737, %v734
      %v798 = vpack.c.b16 %v738, %v735
      %v799 = vpack.c.b16 %v742, %v739
      %v800 = vpack.c.b16 %v743, %v740
      %v801 = vpack.c.b16 %v744, %v741
      %v802 = vpack.c.b16 %v748, %v745
      %v803 = vpack.c.b16 %v749, %v746
      %v804 = vpack.c.b16 %v750, %v747
      %v805 = vpack.c.b16 %v754, %v751
      %v806 = vpack.c.b16 %v755, %v752
      %v807 = vpack.c.b16 %v756, %v753
      %v808 = vpack.c.b16 %v760, %v757
      %v809 = vpack.c.b16 %v761, %v758
      %v810 = vpack.c.b16 %v762, %v759
      %v811 = vpack.c.b16 %v766, %v763
      %v812 = vpack.c.b16 %v767, %v764
      %v813 = vpack.c.b16 %v768, %v765
      %v992 = vunpack.c.l.b16 %v411
      %v993 = vunpack.c.h.b16 %v411
      %v994 = vunpack.c.l.b16 %v412
      %v995 = vunpack.c.h.b16 %v412
      %v996 = vunpack.c.l.b16 %v413
      %v997 = vunpack.c.h.b16 %v413
      %v998 = vunpack.c.l.b16 %v414
      %v999 = vunpack.c.h.b16 %v414
      %v1000 = vunpack.c.l.b16 %v415
      %v1001 = vunpack.c.h.b16 %v415
      %v1002 = vunpack.c.l.b16 %v416
      %v1003 = vunpack.c.h.b16 %v416
      %v1004 = vunpack.c.l.b16 %v417
      %v1005 = vunpack.c.h.b16 %v417
      %v1006 = vunpack.c.l.b16 %v418
      %v1007 = vunpack.c.h.b16 %v418
      %v1008 = vunpack.c.l.b16 %v419
      %v1009 = vunpack.c.h.b16 %v419
      %v1010 = vunpack.c.l.b16 %v420
      %v1011 = vunpack.c.h.b16 %v420
      %v1012 = vunpack.c.l.b16 %v421
      %v1013 = vunpack.c.h.b16 %v421
      %v1014 = vunpack.c.l.b16 %v422
      %v1015 = vunpack.c.h.b16 %v422
      %v1016 = vunpack.c.l.b16 %v423
      %v1017 = vunpack.c.h.b16 %v423
      %v1018 = vunpack.c.l.b16 %v424
      %v1019 = vunpack.c.h.b16 %v424
      %v1020 = vunpack.c.l.b16 %v425
      %v1021 = vunpack.c.h.b16 %v425
      %v1022 = vunpack.c.l.b16 %v426
      %v1023 = vunpack.c.h.b16 %v426
      %v1024 = vunpack.c.l.b16 %v427
      %v1025 = vunpack.c.h.b16 %v427
      %v1026 = vunpack.c.l.b16 %v428
      %v1027 = vunpack.c.h.b16 %v428
      %v1028 = vunpack.c.l.b16 %v429
      %v1029 = vunpack.c.h.b16 %v429
      %v1030 = vunpack.c.l.b16 %v430
      %v1031 = vunpack.c.h.b16 %v430
      %v1032 = vunpack.c.l.b16 %v431
      %v1033 = vunpack.c.h.b16 %v431
      %v1034 = vunpack.c.l.b16 %v432
      %v1035 = vunpack.c.h.b16 %v432
      %v1036 = vunpack.c.l.b16 %v433
      %v1037 = vunpack.c.h.b16 %v433
      %v1038 = vunpack.c.l.b16 %v434
      %v1039 = vunpack.c.h.b16 %v434
      %v1040 = vunpack.c.l.b16 %v435
      %v1041 = vunpack.c.h.b16 %v435
      %v1042 = vunpack.c.l.b16 %v436
      %v1043 = vunpack.c.h.b16 %v436
      %v1044 = vunpack.c.l.b16 %v437
      %v1045 = vunpack.c.h.b16 %v437
      %v1046 = vunpack.c.l.b16 %v438
      %v1047 = vunpack.c.h.b16 %v438
      %v1048 = vunpack.c.l.b16 %v439
      %v1049 = vunpack.c.h.b16 %v439
      %v1050 = vunpack.c.l.b16 %v440
      %v1051 = vunpack.c.h.b16 %v440
      %v1052 = vunpack.c.l.b16 %v441
      %v1053 = vunpack.c.h.b16 %v441
      %v1054 = vunpack.c.l.b16 %v442
      %v1055 = vunpack.c.h.b16 %v442
      %v1056 = vunpack.c.l.b16 %v443
      %v1057 = vunpack.c.h.b16 %v443
      %v1058 = vunpack.c.l.b16 %v444
      %v1059 = vunpack.c.h.b16 %v444
      %v1060 = vunpack.c.l.b16 %v445
      %v1061 = vunpack.c.h.b16 %v445
      %v1062 = vunpack.c.l.b16 %v446
      %v1063 = vunpack.c.h.b16 %v446
      %v1064 = vunpack.c.l.b16 %v447
      %v1065 = vunpack.c.h.b16 %v447
      %v1066 = vunpack.c.l.b16 %v448
      %v1067 = vunpack.c.h.b16 %v448
      %v1068 = vunpack.c.l.b16 %v449
      %v1069 = vunpack.c.h.b16 %v449
      %v1070 = vunpack.c.l.b16 %v450
      %v1071 = vunpack.c.h.b16 %v450
      %v1072 = vunpack.c.l.b16 %v451
      %v1073 = vunpack.c.h.b16 %v451
      %v1074 = vunpack.c.l.b16 %v452
      %v1075 = vunpack.c.h.b16 %v452
      %v1076 = vunpack.c.l.b16 %v453
      %v1077 = vunpack.c.h.b16 %v453
      %v1078 = vunpack.c.l.b16 %v454
      %v1079 = vunpack.c.h.b16 %v454
      %v1080 = vunpack.c.l.b16 %v455
      %v1081 = vunpack.c.h.b16 %v455
      %v1082 = vunpack.c.l.b16 %v456
      %v1083 = vunpack.c.h.b16 %v456
      %v1084 = vunpack.c.l.b16 %v457
      %v1085 = vunpack.c.h.b16 %v457
      %v1086 = vunpack.c.l.b16 %v458
      %v1087 = vunpack.c.h.b16 %v458
      %v1088 = vunpack.c.l.b16 %v459
      %v1089 = vunpack.c.h.b16 %v459
      %v1090 = vunpack.c.l.b16 %v460
      %v1091 = vunpack.c.h.b16 %v460
      %v1092 = vunpack.c.l.b16 %v461
      %v1093 = vunpack.c.h.b16 %v461
      %v1094 = vunpack.c.l.b16 %v462
      %v1095 = vunpack.c.h.b16 %v462
      %v1096 = vunpack.c.l.b16 %v463
      %v1097 = vunpack.c.h.b16 %v463
      %v1098 = vunpack.c.l.b16 %v464
      %v1099 = vunpack.c.h.b16 %v464
      %v1100 = vunpack.c.l.b16 %v465
      %v1101 = vunpack.c.h.b16 %v465
      %v1102 = vunpack.c.l.b16 %v466
      %v1103 = vunpack.c.h.b16 %v466
      %v1104 = vunpack.c.l.b16 %v467
      %v1105 = vunpack.c.h.b16 %v467
      %v1106 = vunpack.c.l.b16 %v468
      %v1107 = vunpack.c.h.b16 %v468
      %v1108 = vunpack.c.l.b16 %v469
      %v1109 = vunpack.c.h.b16 %v469
      %v1110 = vunpack.c.l.b16 %v470
      %v1111 = vunpack.c.h.b16 %v470
      %v1112 = vunpack.c.l.b16 %v471
      %v1113 = vunpack.c.h.b16 %v471
      %v1114 = vunpack.c.l.b16 %v472
      %v1115 = vunpack.c.h.b16 %v472
      %v1116 = vunpack.c.l.b16 %v473
      %v1117 = vunpack.c.h.b16 %v473
      %v1118 = vunpack.c.l.b16 %v474
      %v1119 = vunpack.c.h.b16 %v474
      %v1120 = vunpack.c.l.b16 %v475
      %v1121 = vunpack.c.h.b16 %v475
      %v1122 = vunpack.c.l.b16 %v476
      %v1123 = vunpack.c.h.b16 %v476
      %v1124 = vunpack.c.l.b16 %v477
      %v1125 = vunpack.c.h.b16 %v477
      %v1126 = vunpack.c.l.b16 %v478
      %v1127 = vunpack.c.h.b16 %v478
      %v1128 = vunpack.c.l.b16 %v479
      %v1129 = vunpack.c.h.b16 %v479
      %v1130 = vunpack.c.l.b16 %v480
      %v1131 = vunpack.c.h.b16 %v480
      %v1132 = vunpack.c.l.b16 %v481
      %v1133 = vunpack.c.h.b16 %v481
      %v1134 = vunpack.c.l.b16 %v482
      %v1135 = vunpack.c.h.b16 %v482
      %v1136 = vunpack.c.l.b16 %v483
      %v1137 = vunpack.c.h.b16 %v483
      %v1138 = vunpack.c.l.b16 %v484
      %v1139 = vunpack.c.h.b16 %v484
      %v1140 = vunpack.c.l.b16 %v485
      %v1141 = vunpack.c.h.b16 %v485
      %v1142 = vunpack.c.l.b16 %v486
      %v1143 = vunpack.c.h.b16 %v486
      %v1144 = vunpack.c.l.b16 %v487
      %v1145 = vunpack.c.h.b16 %v487
      %v1146 = vunpack.c.l.b16 %v488
      %v1147 = vunpack.c.h.b16 %v488
      %v1148 = vunpack.c.l.b16 %v489
      %v1149 = vunpack.c.h.b16 %v489
      %v1150 = vunpack.c.l.b16 %v490
      %v1151 = vunpack.c.h.b16 %v490
      %v1152 = vunpack.c.l.b16 %v491
      %v1153 = vunpack.c.h.b16 %v491
      %v1154 = vunpack.c.l.b16 %v492
      %v1155 = vunpack.c.h.b16 %v492
      %v1156 = vunpack.c.l.b16 %v493
      %v1157 = vunpack.c.h.b16 %v493
      %v1158 = vunpack.c.l.b16 %v494
      %v1159 = vunpack.c.h.b16 %v494
      %v1160 = vunpack.c.l.b16 %v495
      %v1161 = vunpack.c.h.b16 %v495
      %v1162 = vunpack.c.l.b16 %v496
      %v1163 = vunpack.c.h.b16 %v496
      %v1164 = vunpack.c.l.b16 %v497
      %v1165 = vunpack.c.h.b16 %v497
      %v1166 = vunpack.c.l.b16 %v498
      %v1167 = vunpack.c.h.b16 %v498
      %v1168 = vunpack.c.l.b16 %v499
      %v1169 = vunpack.c.h.b16 %v499
      %v1170 = vunpack.c.l.b16 %v500
      %v1171 = vunpack.c.h.b16 %v500
      %v1172 = vunpack.c.l.b16 %v501
      %v1173 = vunpack.c.h.b16 %v501
      %v1174 = vunpack.c.l.b16 %v502
      %v1175 = vunpack.c.h.b16 %v502
      %v1176 = vunpack.c.l.b16 %v503
      %v1177 = vunpack.c.h.b16 %v503
      %v1178 = vunpack.c.l.b16 %v504
      %v1179 = vunpack.c.h.b16 %v504
      %v1180 = vunpack.c.l.b16 %v505
      %v1181 = vunpack.c.h.b16 %v505
      %v1182 = vunpack.c.l.b16 %v506
      %v1183 = vunpack.c.h.b16 %v506
      %v1184 = vunpack.c.l.b16 %v507
      %v1185 = vunpack.c.h.b16 %v507
      %v1186 = vunpack.c.l.b16 %v508
      %v1187 = vunpack.c.h.b16 %v508
      %v1188 = vunpack.c.l.b16 %v509
      %v1189 = vunpack.c.h.b16 %v509
      %v1190 = vunpack.c.l.b16 %v510
      %v1191 = vunpack.c.h.b16 %v510
      %v1192 = vunpack.c.l.b16 %v511
      %v1193 = vunpack.c.h.b16 %v511
      %v1194 = vunpack.c.l.b16 %v512
      %v1195 = vunpack.c.h.b16 %v512
      %v1196 = vunpack.c.l.b16 %v513
      %v1197 = vunpack.c.h.b16 %v513
      %v1198 = vunpack.c.l.b16 %v514
      %v1199 = vunpack.c.h.b16 %v514
      %v1200 = vunpack.c.l.b16 %v515
      %v1201 = vunpack.c.h.b16 %v515
      %v1202 = vunpack.c.l.b16 %v516
      %v1203 = vunpack.c.h.b16 %v516
      %v1204 = vunpack.c.l.b16 %v517
      %v1205 = vunpack.c.h.b16 %v517
      %v1206 = vunpack.c.l.b16 %v518
      %v1207 = vunpack.c.h.b16 %v518
      %v1208 = vunpack.c.l.b16 %v519
      %v1209 = vunpack.c.h.b16 %v519
      %v1210 = vunpack.c.l.b16 %v520
      %v1211 = vunpack.c.h.b16 %v520
      %v1212 = vunpack.c.l.b16 %v521
      %v1213 = vunpack.c.h.b16 %v521
      %v1214 = vunpack.c.l.b16 %v522
      %v1215 = vunpack.c.h.b16 %v522
      %v1216 = vunpack.c.l.b16 %v523
      %v1217 = vunpack.c.h.b16 %v523
      %v1218 = vunpack.c.l.b16 %v524
      %v1219 = vunpack.c.h.b16 %v524
      %v1220 = vunpack.c.l.b16 %v525
      %v1221 = vunpack.c.h.b16 %v525
      %v1222 = vunpack.c.l.b16 %v526
      %v1223 = vunpack.c.h.b16 %v526
      %v1224 = vunpack.c.l.b16 %v527
      %v1225 = vunpack.c.h.b16 %v527
      %v1226 = vunpack.c.l.b16 %v528
      %v1227 = vunpack.c.h.b16 %v528
      %v1228 = vunpack.c.l.b16 %v529
      %v1229 = vunpack.c.h.b16 %v529
      %v1230 = vunpack.c.l.b16 %v530
      %v1231 = vunpack.c.h.b16 %v530
      %v1232 = vunpack.c.l.b16 %v531
      %v1233 = vunpack.c.h.b16 %v531
      %v1234 = vunpack.c.l.b16 %v532
      %v1235 = vunpack.c.h.b16 %v532
      %v1236 = vunpack.c.l.b16 %v533
      %v1237 = vunpack.c.h.b16 %v533
      %v1238 = vunpack.c.l.b16 %v534
      %v1239 = vunpack.c.h.b16 %v534
      %v1240 = vunpack.c.l.b16 %v535
      %v1241 = vunpack.c.h.b16 %v535
      %v1242 = vunpack.c.l.b16 %v536
      %v1243 = vunpack.c.h.b16 %v536
      %v1244 = vunpack.c.l.b16 %v537
      %v1245 = vunpack.c.h.b16 %v537
      %v1246 = vunpack.c.l.b16 %v538
      %v1247 = vunpack.c.h.b16 %v538
      %v1248 = vunpack.c.l.b16 %v539
      %v1249 = vunpack.c.h.b16 %v539
      %v1250 = vunpack.c.l.b16 %v540
      %v1251 = vunpack.c.h.b16 %v540
      %v1252 = vunpack.c.l.b16 %v541
      %v1253 = vunpack.c.h.b16 %v541
      %v1254 = vunpack.c.l.b16 %v542
      %v1255 = vunpack.c.h.b16 %v542
      %v1256 = vunpack.c.l.b16 %v543
      %v1257 = vunpack.c.h.b16 %v543
      %v1258 = vunpack.c.l.b16 %v544
      %v1259 = vunpack.c.h.b16 %v544
      %v1260 = vunpack.c.l.b16 %v545
      %v1261 = vunpack.c.h.b16 %v545
      %v1262 = vunpack.c.l.b16 %v546
      %v1263 = vunpack.c.h.b16 %v546
      %v1264 = vunpack.c.l.b16 %v547
      %v1265 = vunpack.c.h.b16 %v547
      %v1266 = vunpack.c.l.b16 %v548
      %v1267 = vunpack.c.h.b16 %v548
      %v1268 = vunpack.c.l.b16 %v549
      %v1269 = vunpack.c.h.b16 %v549
      %v1270 = vunpack.c.l.b16 %v550
      %v1271 = vunpack.c.h.b16 %v550
      %v1272 = vunpack.c.l.b16 %v551
      %v1273 = vunpack.c.h.b16 %v551
      %v1274 = vunpack.c.l.b16 %v552
      %v1275 = vunpack.c.h.b16 %v552
      %v1276 = vunpack.c.l.b16 %v553
      %v1277 = vunpack.c.h.b16 %v553
      %v1278 = vunpack.c.l.b16 %v554
      %v1279 = vunpack.c.h.b16 %v554
      %v1280 = vunpack.c.l.b16 %v555
      %v1281 = vunpack.c.h.b16 %v555
      %v1282 = vunpack.c.l.b16 %v556
      %v1283 = vunpack.c.h.b16 %v556
      %v1284 = vunpack.c.l.b16 %v557
      %v1285 = vunpack.c.h.b16 %v557
      %v1286 = vunpack.c.l.b16 %v558
      %v1287 = vunpack.c.h.b16 %v558
      %v1288 = vpack.c.b16 %v1000, %v992
      %v1289 = vpack.c.b16 %v1001, %v993
      %v1290 = vpack.c.b16 %v1002, %v994
      %v1291 = vpack.c.b16 %v1003, %v995
      %v1292 = vpack.c.b16 %v1004, %v996
      %v1293 = vpack.c.b16 %v1005, %v997
      %v1294 = vpack.c.b16 %v1006, %v998
      %v1295 = vpack.c.b16 %v1007, %v999
      %v1296 = vpack.c.b16 %v1016, %v1008
      %v1297 = vpack.c.b16 %v1017, %v1009
      %v1298 = vpack.c.b16 %v1018, %v1010
      %v1299 = vpack.c.b16 %v1019, %v1011
      %v1300 = vpack.c.b16 %v1020, %v1012
      %v1301 = vpack.c.b16 %v1021, %v1013
      %v1302 = vpack.c.b16 %v1022, %v1014
      %v1303 = vpack.c.b16 %v1023, %v1015
      %v1304 = vpack.c.b16 %v1032, %v1024
      %v1305 = vpack.c.b16 %v1033, %v1025
      %v1306 = vpack.c.b16 %v1034, %v1026
      %v1307 = vpack.c.b16 %v1035, %v1027
      %v1308 = vpack.c.b16 %v1036, %v1028
      %v1309 = vpack.c.b16 %v1037, %v1029
      %v1310 = vpack.c.b16 %v1038, %v1030
      %v1311 = vpack.c.b16 %v1039, %v1031
      %v1312 = vpack.c.b16 %v1048, %v1040
      %v1313 = vpack.c.b16 %v1049, %v1041
      %v1314 = vpack.c.b16 %v1050, %v1042
      %v1315 = vpack.c.b16 %v1051, %v1043
      %v1316 = vpack.c.b16 %v1052, %v1044
      %v1317 = vpack.c.b16 %v1053, %v1045
      %v1318 = vpack.c.b16 %v1054, %v1046
      %v1319 = vpack.c.b16 %v1055, %v1047
      %v1320 = vpack.c.b16 %v1064, %v1056
      %v1321 = vpack.c.b16 %v1065, %v1057
      %v1322 = vpack.c.b16 %v1066, %v1058
      %v1323 = vpack.c.b16 %v1067, %v1059
      %v1324 = vpack.c.b16 %v1068, %v1060
      %v1325 = vpack.c.b16 %v1069, %v1061
      %v1326 = vpack.c.b16 %v1070, %v1062
      %v1327 = vpack.c.b16 %v1071, %v1063
      %v1328 = vpack.c.b16 %v1080, %v1072
      %v1329 = vpack.c.b16 %v1081, %v1073
      %v1330 = vpack.c.b16 %v1082, %v1074
      %v1331 = vpack.c.b16 %v1083, %v1075
      %v1332 = vpack.c.b16 %v1084, %v1076
      %v1333 = vpack.c.b16 %v1085, %v1077
      %v1334 = vpack.c.b16 %v1086, %v1078
      %v1335 = vpack.c.b16 %v1087, %v1079
      %v1336 = vpack.c.b16 %v1096, %v1088
      %v1337 = vpack.c.b16 %v1097, %v1089
      %v1338 = vpack.c.b16 %v1098, %v1090
      %v1339 = vpack.c.b16 %v1099, %v1091
      %v1340 = vpack.c.b16 %v1100, %v1092
      %v1341 = vpack.c.b16 %v1101, %v1093
      %v1342 = vpack.c.b16 %v1102, %v1094
      %v1343 = vpack.c.b16 %v1103, %v1095
      %v1344 = vpack.c.b16 %v1112, %v1104
      %v1345 = vpack.c.b16 %v1113, %v1105
      %v1346 = vpack.c.b16 %v1114, %v1106
      %v1347 = vpack.c.b16 %v1115, %v1107
      %v1348 = vpack.c.b16 %v1116, %v1108
      %v1349 = vpack.c.b16 %v1117, %v1109
      %v1350 = vpack.c.b16 %v1118, %v1110
      %v1351 = vpack.c.b16 %v1119, %v1111
      %v1352 = vpack.c.b16 %v1128, %v1120
      %v1353 = vpack.c.b16 %v1129, %v1121
      %v1354 = vpack.c.b16 %v1130, %v1122
      %v1355 = vpack.c.b16 %v1131, %v1123
      %v1356 = vpack.c.b16 %v1132, %v1124
      %v1357 = vpack.c.b16 %v1133, %v1125
      %v1358 = vpack.c.b16 %v1134, %v1126
      %v1359 = vpack.c.b16 %v1135, %v1127
      %v1360 = vpack.c.b16 %v1144, %v1136
      %v1361 = vpack.c.b16 %v1145, %v1137
      %v1362 = vpack.c.b16 %v1146, %v1138
      %v1363 = vpack.c.b16 %v1147, %v1139
      %v1364 = vpack.c.b16 %v1148, %v1140
      %v1365 = vpack.c.b16 %v1149, %v1141
      %v1366 = vpack.c.b16 %v1150, %v1142
      %v1367 = vpack.c.b16 %v1151, %v1143
      %v1368 = vpack.c.b16 %v1160, %v1152
      %v1369 = vpack.c.b16 %v1161, %v1153
      %v1370 = vpack.c.b16 %v1162, %v1154
      %v1371 = vpack.c.b16 %v1163, %v1155
      %v1372 = vpack.c.b16 %v1164, %v1156
      %v1373 = vpack.c.b16 %v1165, %v1157
      %v1374 = vpack.c.b16 %v1166, %v1158
      %v1375 = vpack.c.b16 %v1167, %v1159
      %v1376 = vpack.c.b16 %v1176, %v1168
      %v1377 = vpack.c.b16 %v1177, %v1169
      %v1378 = vpack.c.b16 %v1178, %v1170
      %v1379 = vpack.c.b16 %v1179, %v1171
      %v1380 = vpack.c.b16 %v1180, %v1172
      %v1381 = vpack.c.b16 %v1181, %v1173
      %v1382 = vpack.c.b16 %v1182, %v1174
      %v1383 = vpack.c.b16 %v1183, %v1175
      %v1384 = vpack.c.b16 %v1192, %v1184
      %v1385 = vpack.c.b16 %v1193, %v1185
      %v1386 = vpack.c.b16 %v1194, %v1186
      %v1387 = vpack.c.b16 %v1195, %v1187
      %v1388 = vpack.c.b16 %v1196, %v1188
      %v1389 = vpack.c.b16 %v1197, %v1189
      %v1390 = vpack.c.b16 %v1198, %v1190
      %v1391 = vpack.c.b16 %v1199, %v1191
      %v1392 = vpack.c.b16 %v1208, %v1200
      %v1393 = vpack.c.b16 %v1209, %v1201
      %v1394 = vpack.c.b16 %v1210, %v1202
      %v1395 = vpack.c.b16 %v1211, %v1203
      %v1396 = vpack.c.b16 %v1212, %v1204
      %v1397 = vpack.c.b16 %v1213, %v1205
      %v1398 = vpack.c.b16 %v1214, %v1206
      %v1399 = vpack.c.b16 %v1215, %v1207
      %v1400 = vpack.c.b16 %v1224, %v1216
      %v1401 = vpack.c.b16 %v1225, %v1217
      %v1402 = vpack.c.b16 %v1226, %v1218
      %v1403 = vpack.c.b16 %v1227, %v1219
      %v1404 = vpack.c.b16 %v1228, %v1220
      %v1405 = vpack.c.b16 %v1229, %v1221
      %v1406 = vpack.c.b16 %v1230, %v1222
      %v1407 = vpack.c.b16 %v1231, %v1223
      %v1408 = vpack.c.b16 %v1240, %v1232
      %v1409 = vpack.c.b16 %v1241, %v1233
      %v1410 = vpack.c.b16 %v1242, %v1234
      %v1411 = vpack.c.b16 %v1243, %v1235
      %v1412 = vpack.c.b16 %v1244, %v1236
      %v1413 = vpack.c.b16 %v1245, %v1237
      %v1414 = vpack.c.b16 %v1246, %v1238
      %v1415 = vpack.c.b16 %v1247, %v1239
      %v1416 = vpack.c.b16 %v1256, %v1248
      %v1417 = vpack.c.b16 %v1257, %v1249
      %v1418 = vpack.c.b16 %v1258, %v1250
      %v1419 = vpack.c.b16 %v1259, %v1251
      %v1420 = vpack.c.b16 %v1260, %v1252
      %v1421 = vpack.c.b16 %v1261, %v1253
      %v1422 = vpack.c.b16 %v1262, %v1254
      %v1423 = vpack.c.b16 %v1263, %v1255
      %v1424 = vpack.c.b16 %v1272, %v1264
      %v1425 = vpack.c.b16 %v1273, %v1265
      %v1426 = vpack.c.b16 %v1274, %v1266
      %v1427 = vpack.c.b16 %v1275, %v1267
      %v1428 = vpack.c.b16 %v1276, %v1268
      %v1429 = vpack.c.b16 %v1277, %v1269
      %v1430 = vpack.c.b16 %v1278, %v1270
      %v1431 = vpack.c.b16 %v1279, %v1271
      %v1432 = vpack.c.b16 %v1280, %v1280
      %v1433 = vpack.c.b16 %v1281, %v1281
      %v1434 = vpack.c.b16 %v1282, %v1282
      %v1435 = vpack.c.b16 %v1283, %v1283
      %v1436 = vpack.c.b16 %v1284, %v1284
      %v1437 = vpack.c.b16 %v1285, %v1285
      %v1438 = vpack.c.b16 %v1286, %v1286
      %v1439 = vpack.c.b16 %v1287, %v1287
      %vm1584 = vcmask 302080
      %v1586 = vsel %vm1584, %v771, 0
      %v1589 = vsel %vm1584, %v774, 0
      %v1592 = vsel %vm1584, %v777, 0
      %v1595 = vsel %vm1584, %v780, 0
      %v1598 = vsel %vm1584, %v783, 0
      %v1601 = vsel %vm1584, %v786, 0
      %v1604 = vsel %vm1584, %v789, 0
      %v1607 = vsel %vm1584, %v792, 0
      %v1610 = vsel %vm1584, %v795, 0
      %v1613 = vsel %vm1584, %v798, 0
      %v1616 = vsel %vm1584, %v801, 0
      %v1619 = vsel %vm1584, %v804, 0
      %v1622 = vsel %vm1584, %v807, 0
      %v1625 = vsel %vm1584, %v810, 0
      %v1628 = vsel %vm1584, %v813, 0
      %vm1630 = vcmask 1041408
      %vm1631 = vcmask 1042432
      %v1632 = vsel %vm1630, 4294967295, 65535
      %v1633 = vsel %vm1631, %v1632, 0
      %v1635 = vand.u32 %v1432, %v1633
      %v1638 = vand.u32 %v1433, %v1633
      %v1641 = vand.u32 %v1434, %v1633
      %v1644 = vand.u32 %v1435, %v1633
      %v1647 = vand.u32 %v1436, %v1633
      %v1650 = vand.u32 %v1437, %v1633
      %v1653 = vand.u32 %v1438, %v1633
      %v1656 = vand.u32 %v1439, %v1633
      %1658 = vmatpush.bf16.msra.mxu0 %v1344
      %1659 = vmatpush.bf16.msra.mxu0 %v1336
      %1660 = vmatpush.bf16.msra.mxu0 %v1328
      %1661 = vmatpush.bf16.msra.mxu0 %v1320
      %1662 = vmatpush.bf16.msra.mxu0 %v1312
      %1663 = vmatpush.bf16.msra.mxu0 %v1304
      %1664 = vmatpush.bf16.msra.mxu0 %v1296
      %1665 = vmatpush.bf16.msra.mxu0 %v1288
      %1666 = vmatmul.bf16.gmra.mxu0 %v769
      %v1667 = vpop.f32.mrf.mxu0
      %v1668 = vadd.f32 0.0, %v1667
      %v1669 = vpop.f32.mrf.mxu0
      %v1670 = vadd.f32 0.0, %v1669
      %1671 = vmatmul.bf16.gmra.mxu0 %v772
      %v1672 = vpop.f32.mrf.mxu0
      %v1673 = vadd.f32 0.0, %v1672
      %v1674 = vpop.f32.mrf.mxu0
      %v1675 = vadd.f32 0.0, %v1674
      %1676 = vmatmul.bf16.gmra.mxu0 %v775
      %v1677 = vpop.f32.mrf.mxu0
      %v1678 = vadd.f32 0.0, %v1677
      %v1679 = vpop.f32.mrf.mxu0
      %v1680 = vadd.f32 0.0, %v1679
      %1681 = vmatmul.bf16.gmra.mxu0 %v778
      %v1682 = vpop.f32.mrf.mxu0
      %v1683 = vadd.f32 0.0, %v1682
      %v1684 = vpop.f32.mrf.mxu0
      %v1685 = vadd.f32 0.0, %v1684
      %1686 = vmatmul.bf16.gmra.mxu0 %v781
      %v1687 = vpop.f32.mrf.mxu0
      %v1688 = vadd.f32 0.0, %v1687
      %v1689 = vpop.f32.mrf.mxu0
      %v1690 = vadd.f32 0.0, %v1689
      %1691 = vmatmul.bf16.gmra.mxu0 %v784
      %v1692 = vpop.f32.mrf.mxu0
      %v1693 = vadd.f32 0.0, %v1692
      %v1694 = vpop.f32.mrf.mxu0
      %v1695 = vadd.f32 0.0, %v1694
      %1696 = vmatmul.bf16.gmra.mxu0 %v787
      %v1697 = vpop.f32.mrf.mxu0
      %v1698 = vadd.f32 0.0, %v1697
      %v1699 = vpop.f32.mrf.mxu0
      %v1700 = vadd.f32 0.0, %v1699
      %1701 = vmatmul.bf16.gmra.mxu0 %v790
      %v1702 = vpop.f32.mrf.mxu0
      %v1703 = vadd.f32 0.0, %v1702
      %v1704 = vpop.f32.mrf.mxu0
      %v1705 = vadd.f32 0.0, %v1704
      %1706 = vmatmul.bf16.gmra.mxu0 %v793
      %v1707 = vpop.f32.mrf.mxu0
      %v1708 = vadd.f32 0.0, %v1707
      %v1709 = vpop.f32.mrf.mxu0
      %v1710 = vadd.f32 0.0, %v1709
      %1711 = vmatmul.bf16.gmra.mxu0 %v796
      %v1712 = vpop.f32.mrf.mxu0
      %v1713 = vadd.f32 0.0, %v1712
      %v1714 = vpop.f32.mrf.mxu0
      %v1715 = vadd.f32 0.0, %v1714
      %1716 = vmatmul.bf16.gmra.mxu0 %v799
      %v1717 = vpop.f32.mrf.mxu0
      %v1718 = vadd.f32 0.0, %v1717
      %v1719 = vpop.f32.mrf.mxu0
      %v1720 = vadd.f32 0.0, %v1719
      %1721 = vmatmul.bf16.gmra.mxu0 %v802
      %v1722 = vpop.f32.mrf.mxu0
      %v1723 = vadd.f32 0.0, %v1722
      %v1724 = vpop.f32.mrf.mxu0
      %v1725 = vadd.f32 0.0, %v1724
      %1726 = vmatmul.bf16.gmra.mxu0 %v805
      %v1727 = vpop.f32.mrf.mxu0
      %v1728 = vadd.f32 0.0, %v1727
      %v1729 = vpop.f32.mrf.mxu0
      %v1730 = vadd.f32 0.0, %v1729
      %1731 = vmatmul.bf16.gmra.mxu0 %v808
      %v1732 = vpop.f32.mrf.mxu0
      %v1733 = vadd.f32 0.0, %v1732
      %v1734 = vpop.f32.mrf.mxu0
      %v1735 = vadd.f32 0.0, %v1734
      %1736 = vmatmul.bf16.gmra.mxu0 %v811
      %v1737 = vpop.f32.mrf.mxu0
      %v1738 = vadd.f32 0.0, %v1737
      %v1739 = vpop.f32.mrf.mxu0
      %v1740 = vadd.f32 0.0, %v1739
      %1741 = vdwg.mxu0
      %1742 = vmatpush.bf16.msra.mxu0 %v1408
      %1743 = vmatpush.bf16.msra.mxu0 %v1400
      %1744 = vmatpush.bf16.msra.mxu0 %v1392
      %1745 = vmatpush.bf16.msra.mxu0 %v1384
      %1746 = vmatpush.bf16.msra.mxu0 %v1376
      %1747 = vmatpush.bf16.msra.mxu0 %v1368
      %1748 = vmatpush.bf16.msra.mxu0 %v1360
      %1749 = vmatpush.bf16.msra.mxu0 %v1352
      %1750 = vmatmul.bf16.gmra.mxu0 %v770
      %v1751 = vpop.f32.mrf.mxu0
      %v1752 = vadd.f32 %v1668, %v1751
      %v1753 = vpop.f32.mrf.mxu0
      %v1754 = vadd.f32 %v1670, %v1753
      %1755 = vmatmul.bf16.gmra.mxu0 %v773
      %v1756 = vpop.f32.mrf.mxu0
      %v1757 = vadd.f32 %v1673, %v1756
      %v1758 = vpop.f32.mrf.mxu0
      %v1759 = vadd.f32 %v1675, %v1758
      %1760 = vmatmul.bf16.gmra.mxu0 %v776
      %v1761 = vpop.f32.mrf.mxu0
      %v1762 = vadd.f32 %v1678, %v1761
      %v1763 = vpop.f32.mrf.mxu0
      %v1764 = vadd.f32 %v1680, %v1763
      %1765 = vmatmul.bf16.gmra.mxu0 %v779
      %v1766 = vpop.f32.mrf.mxu0
      %v1767 = vadd.f32 %v1683, %v1766
      %v1768 = vpop.f32.mrf.mxu0
      %v1769 = vadd.f32 %v1685, %v1768
      %1770 = vmatmul.bf16.gmra.mxu0 %v782
      %v1771 = vpop.f32.mrf.mxu0
      %v1772 = vadd.f32 %v1688, %v1771
      %v1773 = vpop.f32.mrf.mxu0
      %v1774 = vadd.f32 %v1690, %v1773
      %1775 = vmatmul.bf16.gmra.mxu0 %v785
      %v1776 = vpop.f32.mrf.mxu0
      %v1777 = vadd.f32 %v1693, %v1776
      %v1778 = vpop.f32.mrf.mxu0
      %v1779 = vadd.f32 %v1695, %v1778
      %1780 = vmatmul.bf16.gmra.mxu0 %v788
      %v1781 = vpop.f32.mrf.mxu0
      %v1782 = vadd.f32 %v1698, %v1781
      %v1783 = vpop.f32.mrf.mxu0
      %v1784 = vadd.f32 %v1700, %v1783
      %1785 = vmatmul.bf16.gmra.mxu0 %v791
      %v1786 = vpop.f32.mrf.mxu0
      %v1787 = vadd.f32 %v1703, %v1786
      %v1788 = vpop.f32.mrf.mxu0
      %v1789 = vadd.f32 %v1705, %v1788
      %1790 = vmatmul.bf16.gmra.mxu0 %v794
      %v1791 = vpop.f32.mrf.mxu0
      %v1792 = vadd.f32 %v1708, %v1791
      %v1793 = vpop.f32.mrf.mxu0
      %v1794 = vadd.f32 %v1710, %v1793
      %1795 = vmatmul.bf16.gmra.mxu0 %v797
      %v1796 = vpop.f32.mrf.mxu0
      %v1797 = vadd.f32 %v1713, %v1796
      %v1798 = vpop.f32.mrf.mxu0
      %v1799 = vadd.f32 %v1715, %v1798
      %1800 = vmatmul.bf16.gmra.mxu0 %v800
      %v1801 = vpop.f32.mrf.mxu0
      %v1802 = vadd.f32 %v1718, %v1801
      %v1803 = vpop.f32.mrf.mxu0
      %v1804 = vadd.f32 %v1720, %v1803
      %1805 = vmatmul.bf16.gmra.mxu0 %v803
      %v1806 = vpop.f32.mrf.mxu0
      %v1807 = vadd.f32 %v1723, %v1806
      %v1808 = vpop.f32.mrf.mxu0
      %v1809 = vadd.f32 %v1725, %v1808
      %1810 = vmatmul.bf16.gmra.mxu0 %v806
      %v1811 = vpop.f32.mrf.mxu0
      %v1812 = vadd.f32 %v1728, %v1811
      %v1813 = vpop.f32.mrf.mxu0
      %v1814 = vadd.f32 %v1730, %v1813
      %1815 = vmatmul.bf16.gmra.mxu0 %v809
      %v1816 = vpop.f32.mrf.mxu0
      %v1817 = vadd.f32 %v1733, %v1816
      %v1818 = vpop.f32.mrf.mxu0
      %v1819 = vadd.f32 %v1735, %v1818
      %1820 = vmatmul.bf16.gmra.mxu0 %v812
      %v1821 = vpop.f32.mrf.mxu0
      %v1822 = vadd.f32 %v1738, %v1821
      %v1823 = vpop.f32.mrf.mxu0
      %v1824 = vadd.f32 %v1740, %v1823
      %1825 = vdwg.mxu0
      %1826 = vmatpush.bf16.msra.mxu0 0
      %1827 = vmatpush.bf16.msra.mxu0 0
      %1828 = vmatpush.bf16.msra.mxu0 0
      %1829 = vmatpush.bf16.msra.mxu0 0
      %1830 = vmatpush.bf16.msra.mxu0 0
      %1831 = vmatpush.bf16.msra.mxu0 %v1635
      %1832 = vmatpush.bf16.msra.mxu0 %v1424
      %1833 = vmatpush.bf16.msra.mxu0 %v1416
      %1834 = vmatmul.bf16.gmra.mxu0 %v1586
      %v1835 = vpop.f32.mrf.mxu0
      %v1836 = vadd.f32 %v1752, %v1835
      %v1837 = vpop.f32.mrf.mxu0
      %v1838 = vadd.f32 %v1754, %v1837
      %1839 = vmatmul.bf16.gmra.mxu0 %v1589
      %v1840 = vpop.f32.mrf.mxu0
      %v1841 = vadd.f32 %v1757, %v1840
      %v1842 = vpop.f32.mrf.mxu0
      %v1843 = vadd.f32 %v1759, %v1842
      %1844 = vmatmul.bf16.gmra.mxu0 %v1592
      %v1845 = vpop.f32.mrf.mxu0
      %v1846 = vadd.f32 %v1762, %v1845
      %v1847 = vpop.f32.mrf.mxu0
      %v1848 = vadd.f32 %v1764, %v1847
      %1849 = vmatmul.bf16.gmra.mxu0 %v1595
      %v1850 = vpop.f32.mrf.mxu0
      %v1851 = vadd.f32 %v1767, %v1850
      %v1852 = vpop.f32.mrf.mxu0
      %v1853 = vadd.f32 %v1769, %v1852
      %1854 = vmatmul.bf16.gmra.mxu0 %v1598
      %v1855 = vpop.f32.mrf.mxu0
      %v1856 = vadd.f32 %v1772, %v1855
      %v1857 = vpop.f32.mrf.mxu0
      %v1858 = vadd.f32 %v1774, %v1857
      %1859 = vmatmul.bf16.gmra.mxu0 %v1601
      %v1860 = vpop.f32.mrf.mxu0
      %v1861 = vadd.f32 %v1777, %v1860
      %v1862 = vpop.f32.mrf.mxu0
      %v1863 = vadd.f32 %v1779, %v1862
      %1864 = vmatmul.bf16.gmra.mxu0 %v1604
      %v1865 = vpop.f32.mrf.mxu0
      %v1866 = vadd.f32 %v1782, %v1865
      %v1867 = vpop.f32.mrf.mxu0
      %v1868 = vadd.f32 %v1784, %v1867
      %1869 = vmatmul.bf16.gmra.mxu0 %v1607
      %v1870 = vpop.f32.mrf.mxu0
      %v1871 = vadd.f32 %v1787, %v1870
      %v1872 = vpop.f32.mrf.mxu0
      %v1873 = vadd.f32 %v1789, %v1872
      %1874 = vmatmul.bf16.gmra.mxu0 %v1610
      %v1875 = vpop.f32.mrf.mxu0
      %v1876 = vadd.f32 %v1792, %v1875
      %v1877 = vpop.f32.mrf.mxu0
      %v1878 = vadd.f32 %v1794, %v1877
      %1879 = vmatmul.bf16.gmra.mxu0 %v1613
      %v1880 = vpop.f32.mrf.mxu0
      %v1881 = vadd.f32 %v1797, %v1880
      %v1882 = vpop.f32.mrf.mxu0
      %v1883 = vadd.f32 %v1799, %v1882
      %1884 = vmatmul.bf16.gmra.mxu0 %v1616
      %v1885 = vpop.f32.mrf.mxu0
      %v1886 = vadd.f32 %v1802, %v1885
      %v1887 = vpop.f32.mrf.mxu0
      %v1888 = vadd.f32 %v1804, %v1887
      %1889 = vmatmul.bf16.gmra.mxu0 %v1619
      %v1890 = vpop.f32.mrf.mxu0
      %v1891 = vadd.f32 %v1807, %v1890
      %v1892 = vpop.f32.mrf.mxu0
      %v1893 = vadd.f32 %v1809, %v1892
      %1894 = vmatmul.bf16.gmra.mxu0 %v1622
      %v1895 = vpop.f32.mrf.mxu0
      %v1896 = vadd.f32 %v1812, %v1895
      %v1897 = vpop.f32.mrf.mxu0
      %v1898 = vadd.f32 %v1814, %v1897
      %1899 = vmatmul.bf16.gmra.mxu0 %v1625
      %v1900 = vpop.f32.mrf.mxu0
      %v1901 = vadd.f32 %v1817, %v1900
      %v1902 = vpop.f32.mrf.mxu0
      %v1903 = vadd.f32 %v1819, %v1902
      %1904 = vmatmul.bf16.gmra.mxu0 %v1628
      %v1905 = vpop.f32.mrf.mxu0
      %v1906 = vadd.f32 %v1822, %v1905
      %v1907 = vpop.f32.mrf.mxu0
      %v1908 = vadd.f32 %v1824, %v1907
      %1909 = vdwg.mxu0
      %1910 = vmatpush.bf16.msra.mxu0 %v1345
      %1911 = vmatpush.bf16.msra.mxu0 %v1337
      %1912 = vmatpush.bf16.msra.mxu0 %v1329
      %1913 = vmatpush.bf16.msra.mxu0 %v1321
      %1914 = vmatpush.bf16.msra.mxu0 %v1313
      %1915 = vmatpush.bf16.msra.mxu0 %v1305
      %1916 = vmatpush.bf16.msra.mxu0 %v1297
      %1917 = vmatpush.bf16.msra.mxu0 %v1289
      %1918 = vmatmul.bf16.gmra.mxu0 %v769
      %v1919 = vpop.f32.mrf.mxu0
      %v1920 = vadd.f32 0.0, %v1919
      %v1921 = vpop.f32.mrf.mxu0
      %v1922 = vadd.f32 0.0, %v1921
      %1923 = vmatmul.bf16.gmra.mxu0 %v772
      %v1924 = vpop.f32.mrf.mxu0
      %v1925 = vadd.f32 0.0, %v1924
      %v1926 = vpop.f32.mrf.mxu0
      %v1927 = vadd.f32 0.0, %v1926
      %1928 = vmatmul.bf16.gmra.mxu0 %v775
      %v1929 = vpop.f32.mrf.mxu0
      %v1930 = vadd.f32 0.0, %v1929
      %v1931 = vpop.f32.mrf.mxu0
      %v1932 = vadd.f32 0.0, %v1931
      %1933 = vmatmul.bf16.gmra.mxu0 %v778
      %v1934 = vpop.f32.mrf.mxu0
      %v1935 = vadd.f32 0.0, %v1934
      %v1936 = vpop.f32.mrf.mxu0
      %v1937 = vadd.f32 0.0, %v1936
      %1938 = vmatmul.bf16.gmra.mxu0 %v781
      %v1939 = vpop.f32.mrf.mxu0
      %v1940 = vadd.f32 0.0, %v1939
      %v1941 = vpop.f32.mrf.mxu0
      %v1942 = vadd.f32 0.0, %v1941
      %1943 = vmatmul.bf16.gmra.mxu0 %v784
      %v1944 = vpop.f32.mrf.mxu0
      %v1945 = vadd.f32 0.0, %v1944
      %v1946 = vpop.f32.mrf.mxu0
      %v1947 = vadd.f32 0.0, %v1946
      %1948 = vmatmul.bf16.gmra.mxu0 %v787
      %v1949 = vpop.f32.mrf.mxu0
      %v1950 = vadd.f32 0.0, %v1949
      %v1951 = vpop.f32.mrf.mxu0
      %v1952 = vadd.f32 0.0, %v1951
      %1953 = vmatmul.bf16.gmra.mxu0 %v790
      %v1954 = vpop.f32.mrf.mxu0
      %v1955 = vadd.f32 0.0, %v1954
      %v1956 = vpop.f32.mrf.mxu0
      %v1957 = vadd.f32 0.0, %v1956
      %1958 = vmatmul.bf16.gmra.mxu0 %v793
      %v1959 = vpop.f32.mrf.mxu0
      %v1960 = vadd.f32 0.0, %v1959
      %v1961 = vpop.f32.mrf.mxu0
      %v1962 = vadd.f32 0.0, %v1961
      %1963 = vmatmul.bf16.gmra.mxu0 %v796
      %v1964 = vpop.f32.mrf.mxu0
      %v1965 = vadd.f32 0.0, %v1964
      %v1966 = vpop.f32.mrf.mxu0
      %v1967 = vadd.f32 0.0, %v1966
      %1968 = vmatmul.bf16.gmra.mxu0 %v799
      %v1969 = vpop.f32.mrf.mxu0
      %v1970 = vadd.f32 0.0, %v1969
      %v1971 = vpop.f32.mrf.mxu0
      %v1972 = vadd.f32 0.0, %v1971
      %1973 = vmatmul.bf16.gmra.mxu0 %v802
      %v1974 = vpop.f32.mrf.mxu0
      %v1975 = vadd.f32 0.0, %v1974
      %v1976 = vpop.f32.mrf.mxu0
      %v1977 = vadd.f32 0.0, %v1976
      %1978 = vmatmul.bf16.gmra.mxu0 %v805
      %v1979 = vpop.f32.mrf.mxu0
      %v1980 = vadd.f32 0.0, %v1979
      %v1981 = vpop.f32.mrf.mxu0
      %v1982 = vadd.f32 0.0, %v1981
      %1983 = vmatmul.bf16.gmra.mxu0 %v808
      %v1984 = vpop.f32.mrf.mxu0
      %v1985 = vadd.f32 0.0, %v1984
      %v1986 = vpop.f32.mrf.mxu0
      %v1987 = vadd.f32 0.0, %v1986
      %1988 = vmatmul.bf16.gmra.mxu0 %v811
      %v1989 = vpop.f32.mrf.mxu0
      %v1990 = vadd.f32 0.0, %v1989
      %v1991 = vpop.f32.mrf.mxu0
      %v1992 = vadd.f32 0.0, %v1991
      %1993 = vdwg.mxu0
      %1994 = vmatpush.bf16.msra.mxu0 %v1409
      %1995 = vmatpush.bf16.msra.mxu0 %v1401
      %1996 = vmatpush.bf16.msra.mxu0 %v1393
      %1997 = vmatpush.bf16.msra.mxu0 %v1385
      %1998 = vmatpush.bf16.msra.mxu0 %v1377
      %1999 = vmatpush.bf16.msra.mxu0 %v1369
      %2000 = vmatpush.bf16.msra.mxu0 %v1361
      %2001 = vmatpush.bf16.msra.mxu0 %v1353
      %2002 = vmatmul.bf16.gmra.mxu0 %v770
      %v2003 = vpop.f32.mrf.mxu0
      %v2004 = vadd.f32 %v1920, %v2003
      %v2005 = vpop.f32.mrf.mxu0
      %v2006 = vadd.f32 %v1922, %v2005
      %2007 = vmatmul.bf16.gmra.mxu0 %v773
      %v2008 = vpop.f32.mrf.mxu0
      %v2009 = vadd.f32 %v1925, %v2008
      %v2010 = vpop.f32.mrf.mxu0
      %v2011 = vadd.f32 %v1927, %v2010
      %2012 = vmatmul.bf16.gmra.mxu0 %v776
      %v2013 = vpop.f32.mrf.mxu0
      %v2014 = vadd.f32 %v1930, %v2013
      %v2015 = vpop.f32.mrf.mxu0
      %v2016 = vadd.f32 %v1932, %v2015
      %2017 = vmatmul.bf16.gmra.mxu0 %v779
      %v2018 = vpop.f32.mrf.mxu0
      %v2019 = vadd.f32 %v1935, %v2018
      %v2020 = vpop.f32.mrf.mxu0
      %v2021 = vadd.f32 %v1937, %v2020
      %2022 = vmatmul.bf16.gmra.mxu0 %v782
      %v2023 = vpop.f32.mrf.mxu0
      %v2024 = vadd.f32 %v1940, %v2023
      %v2025 = vpop.f32.mrf.mxu0
      %v2026 = vadd.f32 %v1942, %v2025
      %2027 = vmatmul.bf16.gmra.mxu0 %v785
      %v2028 = vpop.f32.mrf.mxu0
      %v2029 = vadd.f32 %v1945, %v2028
      %v2030 = vpop.f32.mrf.mxu0
      %v2031 = vadd.f32 %v1947, %v2030
      %2032 = vmatmul.bf16.gmra.mxu0 %v788
      %v2033 = vpop.f32.mrf.mxu0
      %v2034 = vadd.f32 %v1950, %v2033
      %v2035 = vpop.f32.mrf.mxu0
      %v2036 = vadd.f32 %v1952, %v2035
      %2037 = vmatmul.bf16.gmra.mxu0 %v791
      %v2038 = vpop.f32.mrf.mxu0
      %v2039 = vadd.f32 %v1955, %v2038
      %v2040 = vpop.f32.mrf.mxu0
      %v2041 = vadd.f32 %v1957, %v2040
      %2042 = vmatmul.bf16.gmra.mxu0 %v794
      %v2043 = vpop.f32.mrf.mxu0
      %v2044 = vadd.f32 %v1960, %v2043
      %v2045 = vpop.f32.mrf.mxu0
      %v2046 = vadd.f32 %v1962, %v2045
      %2047 = vmatmul.bf16.gmra.mxu0 %v797
      %v2048 = vpop.f32.mrf.mxu0
      %v2049 = vadd.f32 %v1965, %v2048
      %v2050 = vpop.f32.mrf.mxu0
      %v2051 = vadd.f32 %v1967, %v2050
      %2052 = vmatmul.bf16.gmra.mxu0 %v800
      %v2053 = vpop.f32.mrf.mxu0
      %v2054 = vadd.f32 %v1970, %v2053
      %v2055 = vpop.f32.mrf.mxu0
      %v2056 = vadd.f32 %v1972, %v2055
      %2057 = vmatmul.bf16.gmra.mxu0 %v803
      %v2058 = vpop.f32.mrf.mxu0
      %v2059 = vadd.f32 %v1975, %v2058
      %v2060 = vpop.f32.mrf.mxu0
      %v2061 = vadd.f32 %v1977, %v2060
      %2062 = vmatmul.bf16.gmra.mxu0 %v806
      %v2063 = vpop.f32.mrf.mxu0
      %v2064 = vadd.f32 %v1980, %v2063
      %v2065 = vpop.f32.mrf.mxu0
      %v2066 = vadd.f32 %v1982, %v2065
      %2067 = vmatmul.bf16.gmra.mxu0 %v809
      %v2068 = vpop.f32.mrf.mxu0
      %v2069 = vadd.f32 %v1985, %v2068
      %v2070 = vpop.f32.mrf.mxu0
      %v2071 = vadd.f32 %v1987, %v2070
      %2072 = vmatmul.bf16.gmra.mxu0 %v812
      %v2073 = vpop.f32.mrf.mxu0
      %v2074 = vadd.f32 %v1990, %v2073
      %v2075 = vpop.f32.mrf.mxu0
      %v2076 = vadd.f32 %v1992, %v2075
      %2077 = vdwg.mxu0
      %2078 = vmatpush.bf16.msra.mxu0 0
      %2079 = vmatpush.bf16.msra.mxu0 0
      %2080 = vmatpush.bf16.msra.mxu0 0
      %2081 = vmatpush.bf16.msra.mxu0 0
      %2082 = vmatpush.bf16.msra.mxu0 0
      %2083 = vmatpush.bf16.msra.mxu0 %v1638
      %2084 = vmatpush.bf16.msra.mxu0 %v1425
      %2085 = vmatpush.bf16.msra.mxu0 %v1417
      %2086 = vmatmul.bf16.gmra.mxu0 %v1586
      %v2087 = vpop.f32.mrf.mxu0
      %v2088 = vadd.f32 %v2004, %v2087
      %v2089 = vpop.f32.mrf.mxu0
      %v2090 = vadd.f32 %v2006, %v2089
      %2091 = vmatmul.bf16.gmra.mxu0 %v1589
      %v2092 = vpop.f32.mrf.mxu0
      %v2093 = vadd.f32 %v2009, %v2092
      %v2094 = vpop.f32.mrf.mxu0
      %v2095 = vadd.f32 %v2011, %v2094
      %2096 = vmatmul.bf16.gmra.mxu0 %v1592
      %v2097 = vpop.f32.mrf.mxu0
      %v2098 = vadd.f32 %v2014, %v2097
      %v2099 = vpop.f32.mrf.mxu0
      %v2100 = vadd.f32 %v2016, %v2099
      %2101 = vmatmul.bf16.gmra.mxu0 %v1595
      %v2102 = vpop.f32.mrf.mxu0
      %v2103 = vadd.f32 %v2019, %v2102
      %v2104 = vpop.f32.mrf.mxu0
      %v2105 = vadd.f32 %v2021, %v2104
      %2106 = vmatmul.bf16.gmra.mxu0 %v1598
      %v2107 = vpop.f32.mrf.mxu0
      %v2108 = vadd.f32 %v2024, %v2107
      %v2109 = vpop.f32.mrf.mxu0
      %v2110 = vadd.f32 %v2026, %v2109
      %2111 = vmatmul.bf16.gmra.mxu0 %v1601
      %v2112 = vpop.f32.mrf.mxu0
      %v2113 = vadd.f32 %v2029, %v2112
      %v2114 = vpop.f32.mrf.mxu0
      %v2115 = vadd.f32 %v2031, %v2114
      %2116 = vmatmul.bf16.gmra.mxu0 %v1604
      %v2117 = vpop.f32.mrf.mxu0
      %v2118 = vadd.f32 %v2034, %v2117
      %v2119 = vpop.f32.mrf.mxu0
      %v2120 = vadd.f32 %v2036, %v2119
      %2121 = vmatmul.bf16.gmra.mxu0 %v1607
      %v2122 = vpop.f32.mrf.mxu0
      %v2123 = vadd.f32 %v2039, %v2122
      %v2124 = vpop.f32.mrf.mxu0
      %v2125 = vadd.f32 %v2041, %v2124
      %2126 = vmatmul.bf16.gmra.mxu0 %v1610
      %v2127 = vpop.f32.mrf.mxu0
      %v2128 = vadd.f32 %v2044, %v2127
      %v2129 = vpop.f32.mrf.mxu0
      %v2130 = vadd.f32 %v2046, %v2129
      %2131 = vmatmul.bf16.gmra.mxu0 %v1613
      %v2132 = vpop.f32.mrf.mxu0
      %v2133 = vadd.f32 %v2049, %v2132
      %v2134 = vpop.f32.mrf.mxu0
      %v2135 = vadd.f32 %v2051, %v2134
      %2136 = vmatmul.bf16.gmra.mxu0 %v1616
      %v2137 = vpop.f32.mrf.mxu0
      %v2138 = vadd.f32 %v2054, %v2137
      %v2139 = vpop.f32.mrf.mxu0
      %v2140 = vadd.f32 %v2056, %v2139
      %2141 = vmatmul.bf16.gmra.mxu0 %v1619
      %v2142 = vpop.f32.mrf.mxu0
      %v2143 = vadd.f32 %v2059, %v2142
      %v2144 = vpop.f32.mrf.mxu0
      %v2145 = vadd.f32 %v2061, %v2144
      %2146 = vmatmul.bf16.gmra.mxu0 %v1622
      %v2147 = vpop.f32.mrf.mxu0
      %v2148 = vadd.f32 %v2064, %v2147
      %v2149 = vpop.f32.mrf.mxu0
      %v2150 = vadd.f32 %v2066, %v2149
      %2151 = vmatmul.bf16.gmra.mxu0 %v1625
      %v2152 = vpop.f32.mrf.mxu0
      %v2153 = vadd.f32 %v2069, %v2152
      %v2154 = vpop.f32.mrf.mxu0
      %v2155 = vadd.f32 %v2071, %v2154
      %2156 = vmatmul.bf16.gmra.mxu0 %v1628
      %v2157 = vpop.f32.mrf.mxu0
      %v2158 = vadd.f32 %v2074, %v2157
      %v2159 = vpop.f32.mrf.mxu0
      %v2160 = vadd.f32 %v2076, %v2159
      %2161 = vdwg.mxu0
      %2162 = vmatpush.bf16.msra.mxu0 %v1346
      %2163 = vmatpush.bf16.msra.mxu0 %v1338
      %2164 = vmatpush.bf16.msra.mxu0 %v1330
      %2165 = vmatpush.bf16.msra.mxu0 %v1322
      %2166 = vmatpush.bf16.msra.mxu0 %v1314
      %2167 = vmatpush.bf16.msra.mxu0 %v1306
      %2168 = vmatpush.bf16.msra.mxu0 %v1298
      %2169 = vmatpush.bf16.msra.mxu0 %v1290
      %2170 = vmatmul.bf16.gmra.mxu0 %v769
      %v2171 = vpop.f32.mrf.mxu0
      %v2172 = vadd.f32 0.0, %v2171
      %v2173 = vpop.f32.mrf.mxu0
      %v2174 = vadd.f32 0.0, %v2173
      %2175 = vmatmul.bf16.gmra.mxu0 %v772
      %v2176 = vpop.f32.mrf.mxu0
      %v2177 = vadd.f32 0.0, %v2176
      %v2178 = vpop.f32.mrf.mxu0
      %v2179 = vadd.f32 0.0, %v2178
      %2180 = vmatmul.bf16.gmra.mxu0 %v775
      %v2181 = vpop.f32.mrf.mxu0
      %v2182 = vadd.f32 0.0, %v2181
      %v2183 = vpop.f32.mrf.mxu0
      %v2184 = vadd.f32 0.0, %v2183
      %2185 = vmatmul.bf16.gmra.mxu0 %v778
      %v2186 = vpop.f32.mrf.mxu0
      %v2187 = vadd.f32 0.0, %v2186
      %v2188 = vpop.f32.mrf.mxu0
      %v2189 = vadd.f32 0.0, %v2188
      %2190 = vmatmul.bf16.gmra.mxu0 %v781
      %v2191 = vpop.f32.mrf.mxu0
      %v2192 = vadd.f32 0.0, %v2191
      %v2193 = vpop.f32.mrf.mxu0
      %v2194 = vadd.f32 0.0, %v2193
      %2195 = vmatmul.bf16.gmra.mxu0 %v784
      %v2196 = vpop.f32.mrf.mxu0
      %v2197 = vadd.f32 0.0, %v2196
      %v2198 = vpop.f32.mrf.mxu0
      %v2199 = vadd.f32 0.0, %v2198
      %2200 = vmatmul.bf16.gmra.mxu0 %v787
      %v2201 = vpop.f32.mrf.mxu0
      %v2202 = vadd.f32 0.0, %v2201
      %v2203 = vpop.f32.mrf.mxu0
      %v2204 = vadd.f32 0.0, %v2203
      %2205 = vmatmul.bf16.gmra.mxu0 %v790
      %v2206 = vpop.f32.mrf.mxu0
      %v2207 = vadd.f32 0.0, %v2206
      %v2208 = vpop.f32.mrf.mxu0
      %v2209 = vadd.f32 0.0, %v2208
      %2210 = vmatmul.bf16.gmra.mxu0 %v793
      %v2211 = vpop.f32.mrf.mxu0
      %v2212 = vadd.f32 0.0, %v2211
      %v2213 = vpop.f32.mrf.mxu0
      %v2214 = vadd.f32 0.0, %v2213
      %2215 = vmatmul.bf16.gmra.mxu0 %v796
      %v2216 = vpop.f32.mrf.mxu0
      %v2217 = vadd.f32 0.0, %v2216
      %v2218 = vpop.f32.mrf.mxu0
      %v2219 = vadd.f32 0.0, %v2218
      %2220 = vmatmul.bf16.gmra.mxu0 %v799
      %v2221 = vpop.f32.mrf.mxu0
      %v2222 = vadd.f32 0.0, %v2221
      %v2223 = vpop.f32.mrf.mxu0
      %v2224 = vadd.f32 0.0, %v2223
      %2225 = vmatmul.bf16.gmra.mxu0 %v802
      %v2226 = vpop.f32.mrf.mxu0
      %v2227 = vadd.f32 0.0, %v2226
      %v2228 = vpop.f32.mrf.mxu0
      %v2229 = vadd.f32 0.0, %v2228
      %2230 = vmatmul.bf16.gmra.mxu0 %v805
      %v2231 = vpop.f32.mrf.mxu0
      %v2232 = vadd.f32 0.0, %v2231
      %v2233 = vpop.f32.mrf.mxu0
      %v2234 = vadd.f32 0.0, %v2233
      %2235 = vmatmul.bf16.gmra.mxu0 %v808
      %v2236 = vpop.f32.mrf.mxu0
      %v2237 = vadd.f32 0.0, %v2236
      %v2238 = vpop.f32.mrf.mxu0
      %v2239 = vadd.f32 0.0, %v2238
      %2240 = vmatmul.bf16.gmra.mxu0 %v811
      %v2241 = vpop.f32.mrf.mxu0
      %v2242 = vadd.f32 0.0, %v2241
      %v2243 = vpop.f32.mrf.mxu0
      %v2244 = vadd.f32 0.0, %v2243
      %2245 = vdwg.mxu0
      %2246 = vmatpush.bf16.msra.mxu0 %v1410
      %2247 = vmatpush.bf16.msra.mxu0 %v1402
      %2248 = vmatpush.bf16.msra.mxu0 %v1394
      %2249 = vmatpush.bf16.msra.mxu0 %v1386
      %2250 = vmatpush.bf16.msra.mxu0 %v1378
      %2251 = vmatpush.bf16.msra.mxu0 %v1370
      %2252 = vmatpush.bf16.msra.mxu0 %v1362
      %2253 = vmatpush.bf16.msra.mxu0 %v1354
      %2254 = vmatmul.bf16.gmra.mxu0 %v770
      %v2255 = vpop.f32.mrf.mxu0
      %v2256 = vadd.f32 %v2172, %v2255
      %v2257 = vpop.f32.mrf.mxu0
      %v2258 = vadd.f32 %v2174, %v2257
      %2259 = vmatmul.bf16.gmra.mxu0 %v773
      %v2260 = vpop.f32.mrf.mxu0
      %v2261 = vadd.f32 %v2177, %v2260
      %v2262 = vpop.f32.mrf.mxu0
      %v2263 = vadd.f32 %v2179, %v2262
      %2264 = vmatmul.bf16.gmra.mxu0 %v776
      %v2265 = vpop.f32.mrf.mxu0
      %v2266 = vadd.f32 %v2182, %v2265
      %v2267 = vpop.f32.mrf.mxu0
      %v2268 = vadd.f32 %v2184, %v2267
      %2269 = vmatmul.bf16.gmra.mxu0 %v779
      %v2270 = vpop.f32.mrf.mxu0
      %v2271 = vadd.f32 %v2187, %v2270
      %v2272 = vpop.f32.mrf.mxu0
      %v2273 = vadd.f32 %v2189, %v2272
      %2274 = vmatmul.bf16.gmra.mxu0 %v782
      %v2275 = vpop.f32.mrf.mxu0
      %v2276 = vadd.f32 %v2192, %v2275
      %v2277 = vpop.f32.mrf.mxu0
      %v2278 = vadd.f32 %v2194, %v2277
      %2279 = vmatmul.bf16.gmra.mxu0 %v785
      %v2280 = vpop.f32.mrf.mxu0
      %v2281 = vadd.f32 %v2197, %v2280
      %v2282 = vpop.f32.mrf.mxu0
      %v2283 = vadd.f32 %v2199, %v2282
      %2284 = vmatmul.bf16.gmra.mxu0 %v788
      %v2285 = vpop.f32.mrf.mxu0
      %v2286 = vadd.f32 %v2202, %v2285
      %v2287 = vpop.f32.mrf.mxu0
      %v2288 = vadd.f32 %v2204, %v2287
      %2289 = vmatmul.bf16.gmra.mxu0 %v791
      %v2290 = vpop.f32.mrf.mxu0
      %v2291 = vadd.f32 %v2207, %v2290
      %v2292 = vpop.f32.mrf.mxu0
      %v2293 = vadd.f32 %v2209, %v2292
      %2294 = vmatmul.bf16.gmra.mxu0 %v794
      %v2295 = vpop.f32.mrf.mxu0
      %v2296 = vadd.f32 %v2212, %v2295
      %v2297 = vpop.f32.mrf.mxu0
      %v2298 = vadd.f32 %v2214, %v2297
      %2299 = vmatmul.bf16.gmra.mxu0 %v797
      %v2300 = vpop.f32.mrf.mxu0
      %v2301 = vadd.f32 %v2217, %v2300
      %v2302 = vpop.f32.mrf.mxu0
      %v2303 = vadd.f32 %v2219, %v2302
      %2304 = vmatmul.bf16.gmra.mxu0 %v800
      %v2305 = vpop.f32.mrf.mxu0
      %v2306 = vadd.f32 %v2222, %v2305
      %v2307 = vpop.f32.mrf.mxu0
      %v2308 = vadd.f32 %v2224, %v2307
      %2309 = vmatmul.bf16.gmra.mxu0 %v803
      %v2310 = vpop.f32.mrf.mxu0
      %v2311 = vadd.f32 %v2227, %v2310
      %v2312 = vpop.f32.mrf.mxu0
      %v2313 = vadd.f32 %v2229, %v2312
      %2314 = vmatmul.bf16.gmra.mxu0 %v806
      %v2315 = vpop.f32.mrf.mxu0
      %v2316 = vadd.f32 %v2232, %v2315
      %v2317 = vpop.f32.mrf.mxu0
      %v2318 = vadd.f32 %v2234, %v2317
      %2319 = vmatmul.bf16.gmra.mxu0 %v809
      %v2320 = vpop.f32.mrf.mxu0
      %v2321 = vadd.f32 %v2237, %v2320
      %v2322 = vpop.f32.mrf.mxu0
      %v2323 = vadd.f32 %v2239, %v2322
      %2324 = vmatmul.bf16.gmra.mxu0 %v812
      %v2325 = vpop.f32.mrf.mxu0
      %v2326 = vadd.f32 %v2242, %v2325
      %v2327 = vpop.f32.mrf.mxu0
      %v2328 = vadd.f32 %v2244, %v2327
      %2329 = vdwg.mxu0
      %2330 = vmatpush.bf16.msra.mxu0 0
      %2331 = vmatpush.bf16.msra.mxu0 0
      %2332 = vmatpush.bf16.msra.mxu0 0
      %2333 = vmatpush.bf16.msra.mxu0 0
      %2334 = vmatpush.bf16.msra.mxu0 0
      %2335 = vmatpush.bf16.msra.mxu0 %v1641
      %2336 = vmatpush.bf16.msra.mxu0 %v1426
      %2337 = vmatpush.bf16.msra.mxu0 %v1418
      %2338 = vmatmul.bf16.gmra.mxu0 %v1586
      %v2339 = vpop.f32.mrf.mxu0
      %v2340 = vadd.f32 %v2256, %v2339
      %v2341 = vpop.f32.mrf.mxu0
      %v2342 = vadd.f32 %v2258, %v2341
      %2343 = vmatmul.bf16.gmra.mxu0 %v1589
      %v2344 = vpop.f32.mrf.mxu0
      %v2345 = vadd.f32 %v2261, %v2344
      %v2346 = vpop.f32.mrf.mxu0
      %v2347 = vadd.f32 %v2263, %v2346
      %2348 = vmatmul.bf16.gmra.mxu0 %v1592
      %v2349 = vpop.f32.mrf.mxu0
      %v2350 = vadd.f32 %v2266, %v2349
      %v2351 = vpop.f32.mrf.mxu0
      %v2352 = vadd.f32 %v2268, %v2351
      %2353 = vmatmul.bf16.gmra.mxu0 %v1595
      %v2354 = vpop.f32.mrf.mxu0
      %v2355 = vadd.f32 %v2271, %v2354
      %v2356 = vpop.f32.mrf.mxu0
      %v2357 = vadd.f32 %v2273, %v2356
      %2358 = vmatmul.bf16.gmra.mxu0 %v1598
      %v2359 = vpop.f32.mrf.mxu0
      %v2360 = vadd.f32 %v2276, %v2359
      %v2361 = vpop.f32.mrf.mxu0
      %v2362 = vadd.f32 %v2278, %v2361
      %2363 = vmatmul.bf16.gmra.mxu0 %v1601
      %v2364 = vpop.f32.mrf.mxu0
      %v2365 = vadd.f32 %v2281, %v2364
      %v2366 = vpop.f32.mrf.mxu0
      %v2367 = vadd.f32 %v2283, %v2366
      %2368 = vmatmul.bf16.gmra.mxu0 %v1604
      %v2369 = vpop.f32.mrf.mxu0
      %v2370 = vadd.f32 %v2286, %v2369
      %v2371 = vpop.f32.mrf.mxu0
      %v2372 = vadd.f32 %v2288, %v2371
      %2373 = vmatmul.bf16.gmra.mxu0 %v1607
      %v2374 = vpop.f32.mrf.mxu0
      %v2375 = vadd.f32 %v2291, %v2374
      %v2376 = vpop.f32.mrf.mxu0
      %v2377 = vadd.f32 %v2293, %v2376
      %2378 = vmatmul.bf16.gmra.mxu0 %v1610
      %v2379 = vpop.f32.mrf.mxu0
      %v2380 = vadd.f32 %v2296, %v2379
      %v2381 = vpop.f32.mrf.mxu0
      %v2382 = vadd.f32 %v2298, %v2381
      %2383 = vmatmul.bf16.gmra.mxu0 %v1613
      %v2384 = vpop.f32.mrf.mxu0
      %v2385 = vadd.f32 %v2301, %v2384
      %v2386 = vpop.f32.mrf.mxu0
      %v2387 = vadd.f32 %v2303, %v2386
      %2388 = vmatmul.bf16.gmra.mxu0 %v1616
      %v2389 = vpop.f32.mrf.mxu0
      %v2390 = vadd.f32 %v2306, %v2389
      %v2391 = vpop.f32.mrf.mxu0
      %v2392 = vadd.f32 %v2308, %v2391
      %2393 = vmatmul.bf16.gmra.mxu0 %v1619
      %v2394 = vpop.f32.mrf.mxu0
      %v2395 = vadd.f32 %v2311, %v2394
      %v2396 = vpop.f32.mrf.mxu0
      %v2397 = vadd.f32 %v2313, %v2396
      %2398 = vmatmul.bf16.gmra.mxu0 %v1622
      %v2399 = vpop.f32.mrf.mxu0
      %v2400 = vadd.f32 %v2316, %v2399
      %v2401 = vpop.f32.mrf.mxu0
      %v2402 = vadd.f32 %v2318, %v2401
      %2403 = vmatmul.bf16.gmra.mxu0 %v1625
      %v2404 = vpop.f32.mrf.mxu0
      %v2405 = vadd.f32 %v2321, %v2404
      %v2406 = vpop.f32.mrf.mxu0
      %v2407 = vadd.f32 %v2323, %v2406
      %2408 = vmatmul.bf16.gmra.mxu0 %v1628
      %v2409 = vpop.f32.mrf.mxu0
      %v2410 = vadd.f32 %v2326, %v2409
      %v2411 = vpop.f32.mrf.mxu0
      %v2412 = vadd.f32 %v2328, %v2411
      %2413 = vdwg.mxu0
      %2414 = vmatpush.bf16.msra.mxu0 %v1347
      %2415 = vmatpush.bf16.msra.mxu0 %v1339
      %2416 = vmatpush.bf16.msra.mxu0 %v1331
      %2417 = vmatpush.bf16.msra.mxu0 %v1323
      %2418 = vmatpush.bf16.msra.mxu0 %v1315
      %2419 = vmatpush.bf16.msra.mxu0 %v1307
      %2420 = vmatpush.bf16.msra.mxu0 %v1299
      %2421 = vmatpush.bf16.msra.mxu0 %v1291
      %2422 = vmatmul.bf16.gmra.mxu0 %v769
      %v2423 = vpop.f32.mrf.mxu0
      %v2424 = vadd.f32 0.0, %v2423
      %v2425 = vpop.f32.mrf.mxu0
      %v2426 = vadd.f32 0.0, %v2425
      %2427 = vmatmul.bf16.gmra.mxu0 %v772
      %v2428 = vpop.f32.mrf.mxu0
      %v2429 = vadd.f32 0.0, %v2428
      %v2430 = vpop.f32.mrf.mxu0
      %v2431 = vadd.f32 0.0, %v2430
      %2432 = vmatmul.bf16.gmra.mxu0 %v775
      %v2433 = vpop.f32.mrf.mxu0
      %v2434 = vadd.f32 0.0, %v2433
      %v2435 = vpop.f32.mrf.mxu0
      %v2436 = vadd.f32 0.0, %v2435
      %2437 = vmatmul.bf16.gmra.mxu0 %v778
      %v2438 = vpop.f32.mrf.mxu0
      %v2439 = vadd.f32 0.0, %v2438
      %v2440 = vpop.f32.mrf.mxu0
      %v2441 = vadd.f32 0.0, %v2440
      %2442 = vmatmul.bf16.gmra.mxu0 %v781
      %v2443 = vpop.f32.mrf.mxu0
      %v2444 = vadd.f32 0.0, %v2443
      %v2445 = vpop.f32.mrf.mxu0
      %v2446 = vadd.f32 0.0, %v2445
      %2447 = vmatmul.bf16.gmra.mxu0 %v784
      %v2448 = vpop.f32.mrf.mxu0
      %v2449 = vadd.f32 0.0, %v2448
      %v2450 = vpop.f32.mrf.mxu0
      %v2451 = vadd.f32 0.0, %v2450
      %2452 = vmatmul.bf16.gmra.mxu0 %v787
      %v2453 = vpop.f32.mrf.mxu0
      %v2454 = vadd.f32 0.0, %v2453
      %v2455 = vpop.f32.mrf.mxu0
      %v2456 = vadd.f32 0.0, %v2455
      %2457 = vmatmul.bf16.gmra.mxu0 %v790
      %v2458 = vpop.f32.mrf.mxu0
      %v2459 = vadd.f32 0.0, %v2458
      %v2460 = vpop.f32.mrf.mxu0
      %v2461 = vadd.f32 0.0, %v2460
      %2462 = vmatmul.bf16.gmra.mxu0 %v793
      %v2463 = vpop.f32.mrf.mxu0
      %v2464 = vadd.f32 0.0, %v2463
      %v2465 = vpop.f32.mrf.mxu0
      %v2466 = vadd.f32 0.0, %v2465
      %2467 = vmatmul.bf16.gmra.mxu0 %v796
      %v2468 = vpop.f32.mrf.mxu0
      %v2469 = vadd.f32 0.0, %v2468
      %v2470 = vpop.f32.mrf.mxu0
      %v2471 = vadd.f32 0.0, %v2470
      %2472 = vmatmul.bf16.gmra.mxu0 %v799
      %v2473 = vpop.f32.mrf.mxu0
      %v2474 = vadd.f32 0.0, %v2473
      %v2475 = vpop.f32.mrf.mxu0
      %v2476 = vadd.f32 0.0, %v2475
      %2477 = vmatmul.bf16.gmra.mxu0 %v802
      %v2478 = vpop.f32.mrf.mxu0
      %v2479 = vadd.f32 0.0, %v2478
      %v2480 = vpop.f32.mrf.mxu0
      %v2481 = vadd.f32 0.0, %v2480
      %2482 = vmatmul.bf16.gmra.mxu0 %v805
      %v2483 = vpop.f32.mrf.mxu0
      %v2484 = vadd.f32 0.0, %v2483
      %v2485 = vpop.f32.mrf.mxu0
      %v2486 = vadd.f32 0.0, %v2485
      %2487 = vmatmul.bf16.gmra.mxu0 %v808
      %v2488 = vpop.f32.mrf.mxu0
      %v2489 = vadd.f32 0.0, %v2488
      %v2490 = vpop.f32.mrf.mxu0
      %v2491 = vadd.f32 0.0, %v2490
      %2492 = vmatmul.bf16.gmra.mxu0 %v811
      %v2493 = vpop.f32.mrf.mxu0
      %v2494 = vadd.f32 0.0, %v2493
      %v2495 = vpop.f32.mrf.mxu0
      %v2496 = vadd.f32 0.0, %v2495
      %2497 = vdwg.mxu0
      %2498 = vmatpush.bf16.msra.mxu0 %v1411
      %2499 = vmatpush.bf16.msra.mxu0 %v1403
      %2500 = vmatpush.bf16.msra.mxu0 %v1395
      %2501 = vmatpush.bf16.msra.mxu0 %v1387
      %2502 = vmatpush.bf16.msra.mxu0 %v1379
      %2503 = vmatpush.bf16.msra.mxu0 %v1371
      %2504 = vmatpush.bf16.msra.mxu0 %v1363
      %2505 = vmatpush.bf16.msra.mxu0 %v1355
      %2506 = vmatmul.bf16.gmra.mxu0 %v770
      %v2507 = vpop.f32.mrf.mxu0
      %v2508 = vadd.f32 %v2424, %v2507
      %v2509 = vpop.f32.mrf.mxu0
      %v2510 = vadd.f32 %v2426, %v2509
      %2511 = vmatmul.bf16.gmra.mxu0 %v773
      %v2512 = vpop.f32.mrf.mxu0
      %v2513 = vadd.f32 %v2429, %v2512
      %v2514 = vpop.f32.mrf.mxu0
      %v2515 = vadd.f32 %v2431, %v2514
      %2516 = vmatmul.bf16.gmra.mxu0 %v776
      %v2517 = vpop.f32.mrf.mxu0
      %v2518 = vadd.f32 %v2434, %v2517
      %v2519 = vpop.f32.mrf.mxu0
      %v2520 = vadd.f32 %v2436, %v2519
      %2521 = vmatmul.bf16.gmra.mxu0 %v779
      %v2522 = vpop.f32.mrf.mxu0
      %v2523 = vadd.f32 %v2439, %v2522
      %v2524 = vpop.f32.mrf.mxu0
      %v2525 = vadd.f32 %v2441, %v2524
      %2526 = vmatmul.bf16.gmra.mxu0 %v782
      %v2527 = vpop.f32.mrf.mxu0
      %v2528 = vadd.f32 %v2444, %v2527
      %v2529 = vpop.f32.mrf.mxu0
      %v2530 = vadd.f32 %v2446, %v2529
      %2531 = vmatmul.bf16.gmra.mxu0 %v785
      %v2532 = vpop.f32.mrf.mxu0
      %v2533 = vadd.f32 %v2449, %v2532
      %v2534 = vpop.f32.mrf.mxu0
      %v2535 = vadd.f32 %v2451, %v2534
      %2536 = vmatmul.bf16.gmra.mxu0 %v788
      %v2537 = vpop.f32.mrf.mxu0
      %v2538 = vadd.f32 %v2454, %v2537
      %v2539 = vpop.f32.mrf.mxu0
      %v2540 = vadd.f32 %v2456, %v2539
      %2541 = vmatmul.bf16.gmra.mxu0 %v791
      %v2542 = vpop.f32.mrf.mxu0
      %v2543 = vadd.f32 %v2459, %v2542
      %v2544 = vpop.f32.mrf.mxu0
      %v2545 = vadd.f32 %v2461, %v2544
      %2546 = vmatmul.bf16.gmra.mxu0 %v794
      %v2547 = vpop.f32.mrf.mxu0
      %v2548 = vadd.f32 %v2464, %v2547
      %v2549 = vpop.f32.mrf.mxu0
      %v2550 = vadd.f32 %v2466, %v2549
      %2551 = vmatmul.bf16.gmra.mxu0 %v797
      %v2552 = vpop.f32.mrf.mxu0
      %v2553 = vadd.f32 %v2469, %v2552
      %v2554 = vpop.f32.mrf.mxu0
      %v2555 = vadd.f32 %v2471, %v2554
      %2556 = vmatmul.bf16.gmra.mxu0 %v800
      %v2557 = vpop.f32.mrf.mxu0
      %v2558 = vadd.f32 %v2474, %v2557
      %v2559 = vpop.f32.mrf.mxu0
      %v2560 = vadd.f32 %v2476, %v2559
      %2561 = vmatmul.bf16.gmra.mxu0 %v803
      %v2562 = vpop.f32.mrf.mxu0
      %v2563 = vadd.f32 %v2479, %v2562
      %v2564 = vpop.f32.mrf.mxu0
      %v2565 = vadd.f32 %v2481, %v2564
      %2566 = vmatmul.bf16.gmra.mxu0 %v806
      %v2567 = vpop.f32.mrf.mxu0
      %v2568 = vadd.f32 %v2484, %v2567
      %v2569 = vpop.f32.mrf.mxu0
      %v2570 = vadd.f32 %v2486, %v2569
      %2571 = vmatmul.bf16.gmra.mxu0 %v809
      %v2572 = vpop.f32.mrf.mxu0
      %v2573 = vadd.f32 %v2489, %v2572
      %v2574 = vpop.f32.mrf.mxu0
      %v2575 = vadd.f32 %v2491, %v2574
      %2576 = vmatmul.bf16.gmra.mxu0 %v812
      %v2577 = vpop.f32.mrf.mxu0
      %v2578 = vadd.f32 %v2494, %v2577
      %v2579 = vpop.f32.mrf.mxu0
      %v2580 = vadd.f32 %v2496, %v2579
      %2581 = vdwg.mxu0
      %2582 = vmatpush.bf16.msra.mxu0 0
      %2583 = vmatpush.bf16.msra.mxu0 0
      %2584 = vmatpush.bf16.msra.mxu0 0
      %2585 = vmatpush.bf16.msra.mxu0 0
      %2586 = vmatpush.bf16.msra.mxu0 0
      %2587 = vmatpush.bf16.msra.mxu0 %v1644
      %2588 = vmatpush.bf16.msra.mxu0 %v1427
      %2589 = vmatpush.bf16.msra.mxu0 %v1419
      %2590 = vmatmul.bf16.gmra.mxu0 %v1586
      %v2591 = vpop.f32.mrf.mxu0
      %v2592 = vadd.f32 %v2508, %v2591
      %v2593 = vpop.f32.mrf.mxu0
      %v2594 = vadd.f32 %v2510, %v2593
      %2595 = vmatmul.bf16.gmra.mxu0 %v1589
      %v2596 = vpop.f32.mrf.mxu0
      %v2597 = vadd.f32 %v2513, %v2596
      %v2598 = vpop.f32.mrf.mxu0
      %v2599 = vadd.f32 %v2515, %v2598
      %2600 = vmatmul.bf16.gmra.mxu0 %v1592
      %v2601 = vpop.f32.mrf.mxu0
      %v2602 = vadd.f32 %v2518, %v2601
      %v2603 = vpop.f32.mrf.mxu0
      %v2604 = vadd.f32 %v2520, %v2603
      %2605 = vmatmul.bf16.gmra.mxu0 %v1595
      %v2606 = vpop.f32.mrf.mxu0
      %v2607 = vadd.f32 %v2523, %v2606
      %v2608 = vpop.f32.mrf.mxu0
      %v2609 = vadd.f32 %v2525, %v2608
      %2610 = vmatmul.bf16.gmra.mxu0 %v1598
      %v2611 = vpop.f32.mrf.mxu0
      %v2612 = vadd.f32 %v2528, %v2611
      %v2613 = vpop.f32.mrf.mxu0
      %v2614 = vadd.f32 %v2530, %v2613
      %2615 = vmatmul.bf16.gmra.mxu0 %v1601
      %v2616 = vpop.f32.mrf.mxu0
      %v2617 = vadd.f32 %v2533, %v2616
      %v2618 = vpop.f32.mrf.mxu0
      %v2619 = vadd.f32 %v2535, %v2618
      %2620 = vmatmul.bf16.gmra.mxu0 %v1604
      %v2621 = vpop.f32.mrf.mxu0
      %v2622 = vadd.f32 %v2538, %v2621
      %v2623 = vpop.f32.mrf.mxu0
      %v2624 = vadd.f32 %v2540, %v2623
      %2625 = vmatmul.bf16.gmra.mxu0 %v1607
      %v2626 = vpop.f32.mrf.mxu0
      %v2627 = vadd.f32 %v2543, %v2626
      %v2628 = vpop.f32.mrf.mxu0
      %v2629 = vadd.f32 %v2545, %v2628
      %2630 = vmatmul.bf16.gmra.mxu0 %v1610
      %v2631 = vpop.f32.mrf.mxu0
      %v2632 = vadd.f32 %v2548, %v2631
      %v2633 = vpop.f32.mrf.mxu0
      %v2634 = vadd.f32 %v2550, %v2633
      %2635 = vmatmul.bf16.gmra.mxu0 %v1613
      %v2636 = vpop.f32.mrf.mxu0
      %v2637 = vadd.f32 %v2553, %v2636
      %v2638 = vpop.f32.mrf.mxu0
      %v2639 = vadd.f32 %v2555, %v2638
      %2640 = vmatmul.bf16.gmra.mxu0 %v1616
      %v2641 = vpop.f32.mrf.mxu0
      %v2642 = vadd.f32 %v2558, %v2641
      %v2643 = vpop.f32.mrf.mxu0
      %v2644 = vadd.f32 %v2560, %v2643
      %2645 = vmatmul.bf16.gmra.mxu0 %v1619
      %v2646 = vpop.f32.mrf.mxu0
      %v2647 = vadd.f32 %v2563, %v2646
      %v2648 = vpop.f32.mrf.mxu0
      %v2649 = vadd.f32 %v2565, %v2648
      %2650 = vmatmul.bf16.gmra.mxu0 %v1622
      %v2651 = vpop.f32.mrf.mxu0
      %v2652 = vadd.f32 %v2568, %v2651
      %v2653 = vpop.f32.mrf.mxu0
      %v2654 = vadd.f32 %v2570, %v2653
      %2655 = vmatmul.bf16.gmra.mxu0 %v1625
      %v2656 = vpop.f32.mrf.mxu0
      %v2657 = vadd.f32 %v2573, %v2656
      %v2658 = vpop.f32.mrf.mxu0
      %v2659 = vadd.f32 %v2575, %v2658
      %2660 = vmatmul.bf16.gmra.mxu0 %v1628
      %v2661 = vpop.f32.mrf.mxu0
      %v2662 = vadd.f32 %v2578, %v2661
      %v2663 = vpop.f32.mrf.mxu0
      %v2664 = vadd.f32 %v2580, %v2663
      %2665 = vdwg.mxu0
      %2666 = vmatpush.bf16.msra.mxu0 %v1348
      %2667 = vmatpush.bf16.msra.mxu0 %v1340
      %2668 = vmatpush.bf16.msra.mxu0 %v1332
      %2669 = vmatpush.bf16.msra.mxu0 %v1324
      %2670 = vmatpush.bf16.msra.mxu0 %v1316
      %2671 = vmatpush.bf16.msra.mxu0 %v1308
      %2672 = vmatpush.bf16.msra.mxu0 %v1300
      %2673 = vmatpush.bf16.msra.mxu0 %v1292
      %2674 = vmatmul.bf16.gmra.mxu0 %v769
      %v2675 = vpop.f32.mrf.mxu0
      %v2676 = vadd.f32 0.0, %v2675
      %v2677 = vpop.f32.mrf.mxu0
      %v2678 = vadd.f32 0.0, %v2677
      %2679 = vmatmul.bf16.gmra.mxu0 %v772
      %v2680 = vpop.f32.mrf.mxu0
      %v2681 = vadd.f32 0.0, %v2680
      %v2682 = vpop.f32.mrf.mxu0
      %v2683 = vadd.f32 0.0, %v2682
      %2684 = vmatmul.bf16.gmra.mxu0 %v775
      %v2685 = vpop.f32.mrf.mxu0
      %v2686 = vadd.f32 0.0, %v2685
      %v2687 = vpop.f32.mrf.mxu0
      %v2688 = vadd.f32 0.0, %v2687
      %2689 = vmatmul.bf16.gmra.mxu0 %v778
      %v2690 = vpop.f32.mrf.mxu0
      %v2691 = vadd.f32 0.0, %v2690
      %v2692 = vpop.f32.mrf.mxu0
      %v2693 = vadd.f32 0.0, %v2692
      %2694 = vmatmul.bf16.gmra.mxu0 %v781
      %v2695 = vpop.f32.mrf.mxu0
      %v2696 = vadd.f32 0.0, %v2695
      %v2697 = vpop.f32.mrf.mxu0
      %v2698 = vadd.f32 0.0, %v2697
      %2699 = vmatmul.bf16.gmra.mxu0 %v784
      %v2700 = vpop.f32.mrf.mxu0
      %v2701 = vadd.f32 0.0, %v2700
      %v2702 = vpop.f32.mrf.mxu0
      %v2703 = vadd.f32 0.0, %v2702
      %2704 = vmatmul.bf16.gmra.mxu0 %v787
      %v2705 = vpop.f32.mrf.mxu0
      %v2706 = vadd.f32 0.0, %v2705
      %v2707 = vpop.f32.mrf.mxu0
      %v2708 = vadd.f32 0.0, %v2707
      %2709 = vmatmul.bf16.gmra.mxu0 %v790
      %v2710 = vpop.f32.mrf.mxu0
      %v2711 = vadd.f32 0.0, %v2710
      %v2712 = vpop.f32.mrf.mxu0
      %v2713 = vadd.f32 0.0, %v2712
      %2714 = vmatmul.bf16.gmra.mxu0 %v793
      %v2715 = vpop.f32.mrf.mxu0
      %v2716 = vadd.f32 0.0, %v2715
      %v2717 = vpop.f32.mrf.mxu0
      %v2718 = vadd.f32 0.0, %v2717
      %2719 = vmatmul.bf16.gmra.mxu0 %v796
      %v2720 = vpop.f32.mrf.mxu0
      %v2721 = vadd.f32 0.0, %v2720
      %v2722 = vpop.f32.mrf.mxu0
      %v2723 = vadd.f32 0.0, %v2722
      %2724 = vmatmul.bf16.gmra.mxu0 %v799
      %v2725 = vpop.f32.mrf.mxu0
      %v2726 = vadd.f32 0.0, %v2725
      %v2727 = vpop.f32.mrf.mxu0
      %v2728 = vadd.f32 0.0, %v2727
      %2729 = vmatmul.bf16.gmra.mxu0 %v802
      %v2730 = vpop.f32.mrf.mxu0
      %v2731 = vadd.f32 0.0, %v2730
      %v2732 = vpop.f32.mrf.mxu0
      %v2733 = vadd.f32 0.0, %v2732
      %2734 = vmatmul.bf16.gmra.mxu0 %v805
      %v2735 = vpop.f32.mrf.mxu0
      %v2736 = vadd.f32 0.0, %v2735
      %v2737 = vpop.f32.mrf.mxu0
      %v2738 = vadd.f32 0.0, %v2737
      %2739 = vmatmul.bf16.gmra.mxu0 %v808
      %v2740 = vpop.f32.mrf.mxu0
      %v2741 = vadd.f32 0.0, %v2740
      %v2742 = vpop.f32.mrf.mxu0
      %v2743 = vadd.f32 0.0, %v2742
      %2744 = vmatmul.bf16.gmra.mxu0 %v811
      %v2745 = vpop.f32.mrf.mxu0
      %v2746 = vadd.f32 0.0, %v2745
      %v2747 = vpop.f32.mrf.mxu0
      %v2748 = vadd.f32 0.0, %v2747
      %2749 = vdwg.mxu0
      %2750 = vmatpush.bf16.msra.mxu0 %v1412
      %2751 = vmatpush.bf16.msra.mxu0 %v1404
      %2752 = vmatpush.bf16.msra.mxu0 %v1396
      %2753 = vmatpush.bf16.msra.mxu0 %v1388
      %2754 = vmatpush.bf16.msra.mxu0 %v1380
      %2755 = vmatpush.bf16.msra.mxu0 %v1372
      %2756 = vmatpush.bf16.msra.mxu0 %v1364
      %2757 = vmatpush.bf16.msra.mxu0 %v1356
      %2758 = vmatmul.bf16.gmra.mxu0 %v770
      %v2759 = vpop.f32.mrf.mxu0
      %v2760 = vadd.f32 %v2676, %v2759
      %v2761 = vpop.f32.mrf.mxu0
      %v2762 = vadd.f32 %v2678, %v2761
      %2763 = vmatmul.bf16.gmra.mxu0 %v773
      %v2764 = vpop.f32.mrf.mxu0
      %v2765 = vadd.f32 %v2681, %v2764
      %v2766 = vpop.f32.mrf.mxu0
      %v2767 = vadd.f32 %v2683, %v2766
      %2768 = vmatmul.bf16.gmra.mxu0 %v776
      %v2769 = vpop.f32.mrf.mxu0
      %v2770 = vadd.f32 %v2686, %v2769
      %v2771 = vpop.f32.mrf.mxu0
      %v2772 = vadd.f32 %v2688, %v2771
      %2773 = vmatmul.bf16.gmra.mxu0 %v779
      %v2774 = vpop.f32.mrf.mxu0
      %v2775 = vadd.f32 %v2691, %v2774
      %v2776 = vpop.f32.mrf.mxu0
      %v2777 = vadd.f32 %v2693, %v2776
      %2778 = vmatmul.bf16.gmra.mxu0 %v782
      %v2779 = vpop.f32.mrf.mxu0
      %v2780 = vadd.f32 %v2696, %v2779
      %v2781 = vpop.f32.mrf.mxu0
      %v2782 = vadd.f32 %v2698, %v2781
      %2783 = vmatmul.bf16.gmra.mxu0 %v785
      %v2784 = vpop.f32.mrf.mxu0
      %v2785 = vadd.f32 %v2701, %v2784
      %v2786 = vpop.f32.mrf.mxu0
      %v2787 = vadd.f32 %v2703, %v2786
      %2788 = vmatmul.bf16.gmra.mxu0 %v788
      %v2789 = vpop.f32.mrf.mxu0
      %v2790 = vadd.f32 %v2706, %v2789
      %v2791 = vpop.f32.mrf.mxu0
      %v2792 = vadd.f32 %v2708, %v2791
      %2793 = vmatmul.bf16.gmra.mxu0 %v791
      %v2794 = vpop.f32.mrf.mxu0
      %v2795 = vadd.f32 %v2711, %v2794
      %v2796 = vpop.f32.mrf.mxu0
      %v2797 = vadd.f32 %v2713, %v2796
      %2798 = vmatmul.bf16.gmra.mxu0 %v794
      %v2799 = vpop.f32.mrf.mxu0
      %v2800 = vadd.f32 %v2716, %v2799
      %v2801 = vpop.f32.mrf.mxu0
      %v2802 = vadd.f32 %v2718, %v2801
      %2803 = vmatmul.bf16.gmra.mxu0 %v797
      %v2804 = vpop.f32.mrf.mxu0
      %v2805 = vadd.f32 %v2721, %v2804
      %v2806 = vpop.f32.mrf.mxu0
      %v2807 = vadd.f32 %v2723, %v2806
      %2808 = vmatmul.bf16.gmra.mxu0 %v800
      %v2809 = vpop.f32.mrf.mxu0
      %v2810 = vadd.f32 %v2726, %v2809
      %v2811 = vpop.f32.mrf.mxu0
      %v2812 = vadd.f32 %v2728, %v2811
      %2813 = vmatmul.bf16.gmra.mxu0 %v803
      %v2814 = vpop.f32.mrf.mxu0
      %v2815 = vadd.f32 %v2731, %v2814
      %v2816 = vpop.f32.mrf.mxu0
      %v2817 = vadd.f32 %v2733, %v2816
      %2818 = vmatmul.bf16.gmra.mxu0 %v806
      %v2819 = vpop.f32.mrf.mxu0
      %v2820 = vadd.f32 %v2736, %v2819
      %v2821 = vpop.f32.mrf.mxu0
      %v2822 = vadd.f32 %v2738, %v2821
      %2823 = vmatmul.bf16.gmra.mxu0 %v809
      %v2824 = vpop.f32.mrf.mxu0
      %v2825 = vadd.f32 %v2741, %v2824
      %v2826 = vpop.f32.mrf.mxu0
      %v2827 = vadd.f32 %v2743, %v2826
      %2828 = vmatmul.bf16.gmra.mxu0 %v812
      %v2829 = vpop.f32.mrf.mxu0
      %v2830 = vadd.f32 %v2746, %v2829
      %v2831 = vpop.f32.mrf.mxu0
      %v2832 = vadd.f32 %v2748, %v2831
      %2833 = vdwg.mxu0
      %2834 = vmatpush.bf16.msra.mxu0 0
      %2835 = vmatpush.bf16.msra.mxu0 0
      %2836 = vmatpush.bf16.msra.mxu0 0
      %2837 = vmatpush.bf16.msra.mxu0 0
      %2838 = vmatpush.bf16.msra.mxu0 0
      %2839 = vmatpush.bf16.msra.mxu0 %v1647
      %2840 = vmatpush.bf16.msra.mxu0 %v1428
      %2841 = vmatpush.bf16.msra.mxu0 %v1420
      %2842 = vmatmul.bf16.gmra.mxu0 %v1586
      %v2843 = vpop.f32.mrf.mxu0
      %v2844 = vadd.f32 %v2760, %v2843
      %v2845 = vpop.f32.mrf.mxu0
      %v2846 = vadd.f32 %v2762, %v2845
      %2847 = vmatmul.bf16.gmra.mxu0 %v1589
      %v2848 = vpop.f32.mrf.mxu0
      %v2849 = vadd.f32 %v2765, %v2848
      %v2850 = vpop.f32.mrf.mxu0
      %v2851 = vadd.f32 %v2767, %v2850
      %2852 = vmatmul.bf16.gmra.mxu0 %v1592
      %v2853 = vpop.f32.mrf.mxu0
      %v2854 = vadd.f32 %v2770, %v2853
      %v2855 = vpop.f32.mrf.mxu0
      %v2856 = vadd.f32 %v2772, %v2855
      %2857 = vmatmul.bf16.gmra.mxu0 %v1595
      %v2858 = vpop.f32.mrf.mxu0
      %v2859 = vadd.f32 %v2775, %v2858
      %v2860 = vpop.f32.mrf.mxu0
      %v2861 = vadd.f32 %v2777, %v2860
      %2862 = vmatmul.bf16.gmra.mxu0 %v1598
      %v2863 = vpop.f32.mrf.mxu0
      %v2864 = vadd.f32 %v2780, %v2863
      %v2865 = vpop.f32.mrf.mxu0
      %v2866 = vadd.f32 %v2782, %v2865
      %2867 = vmatmul.bf16.gmra.mxu0 %v1601
      %v2868 = vpop.f32.mrf.mxu0
      %v2869 = vadd.f32 %v2785, %v2868
      %v2870 = vpop.f32.mrf.mxu0
      %v2871 = vadd.f32 %v2787, %v2870
      %2872 = vmatmul.bf16.gmra.mxu0 %v1604
      %v2873 = vpop.f32.mrf.mxu0
      %v2874 = vadd.f32 %v2790, %v2873
      %v2875 = vpop.f32.mrf.mxu0
      %v2876 = vadd.f32 %v2792, %v2875
      %2877 = vmatmul.bf16.gmra.mxu0 %v1607
      %v2878 = vpop.f32.mrf.mxu0
      %v2879 = vadd.f32 %v2795, %v2878
      %v2880 = vpop.f32.mrf.mxu0
      %v2881 = vadd.f32 %v2797, %v2880
      %2882 = vmatmul.bf16.gmra.mxu0 %v1610
      %v2883 = vpop.f32.mrf.mxu0
      %v2884 = vadd.f32 %v2800, %v2883
      %v2885 = vpop.f32.mrf.mxu0
      %v2886 = vadd.f32 %v2802, %v2885
      %2887 = vmatmul.bf16.gmra.mxu0 %v1613
      %v2888 = vpop.f32.mrf.mxu0
      %v2889 = vadd.f32 %v2805, %v2888
      %v2890 = vpop.f32.mrf.mxu0
      %v2891 = vadd.f32 %v2807, %v2890
      %2892 = vmatmul.bf16.gmra.mxu0 %v1616
      %v2893 = vpop.f32.mrf.mxu0
      %v2894 = vadd.f32 %v2810, %v2893
      %v2895 = vpop.f32.mrf.mxu0
      %v2896 = vadd.f32 %v2812, %v2895
      %2897 = vmatmul.bf16.gmra.mxu0 %v1619
      %v2898 = vpop.f32.mrf.mxu0
      %v2899 = vadd.f32 %v2815, %v2898
      %v2900 = vpop.f32.mrf.mxu0
      %v2901 = vadd.f32 %v2817, %v2900
      %2902 = vmatmul.bf16.gmra.mxu0 %v1622
      %v2903 = vpop.f32.mrf.mxu0
      %v2904 = vadd.f32 %v2820, %v2903
      %v2905 = vpop.f32.mrf.mxu0
      %v2906 = vadd.f32 %v2822, %v2905
      %2907 = vmatmul.bf16.gmra.mxu0 %v1625
      %v2908 = vpop.f32.mrf.mxu0
      %v2909 = vadd.f32 %v2825, %v2908
      %v2910 = vpop.f32.mrf.mxu0
      %v2911 = vadd.f32 %v2827, %v2910
      %2912 = vmatmul.bf16.gmra.mxu0 %v1628
      %v2913 = vpop.f32.mrf.mxu0
      %v2914 = vadd.f32 %v2830, %v2913
      %v2915 = vpop.f32.mrf.mxu0
      %v2916 = vadd.f32 %v2832, %v2915
      %2917 = vdwg.mxu0
      %2918 = vmatpush.bf16.msra.mxu0 %v1349
      %2919 = vmatpush.bf16.msra.mxu0 %v1341
      %2920 = vmatpush.bf16.msra.mxu0 %v1333
      %2921 = vmatpush.bf16.msra.mxu0 %v1325
      %2922 = vmatpush.bf16.msra.mxu0 %v1317
      %2923 = vmatpush.bf16.msra.mxu0 %v1309
      %2924 = vmatpush.bf16.msra.mxu0 %v1301
      %2925 = vmatpush.bf16.msra.mxu0 %v1293
      %2926 = vmatmul.bf16.gmra.mxu0 %v769
      %v2927 = vpop.f32.mrf.mxu0
      %v2928 = vadd.f32 0.0, %v2927
      %v2929 = vpop.f32.mrf.mxu0
      %v2930 = vadd.f32 0.0, %v2929
      %2931 = vmatmul.bf16.gmra.mxu0 %v772
      %v2932 = vpop.f32.mrf.mxu0
      %v2933 = vadd.f32 0.0, %v2932
      %v2934 = vpop.f32.mrf.mxu0
      %v2935 = vadd.f32 0.0, %v2934
      %2936 = vmatmul.bf16.gmra.mxu0 %v775
      %v2937 = vpop.f32.mrf.mxu0
      %v2938 = vadd.f32 0.0, %v2937
      %v2939 = vpop.f32.mrf.mxu0
      %v2940 = vadd.f32 0.0, %v2939
      %2941 = vmatmul.bf16.gmra.mxu0 %v778
      %v2942 = vpop.f32.mrf.mxu0
      %v2943 = vadd.f32 0.0, %v2942
      %v2944 = vpop.f32.mrf.mxu0
      %v2945 = vadd.f32 0.0, %v2944
      %2946 = vmatmul.bf16.gmra.mxu0 %v781
      %v2947 = vpop.f32.mrf.mxu0
      %v2948 = vadd.f32 0.0, %v2947
      %v2949 = vpop.f32.mrf.mxu0
      %v2950 = vadd.f32 0.0, %v2949
      %2951 = vmatmul.bf16.gmra.mxu0 %v784
      %v2952 = vpop.f32.mrf.mxu0
      %v2953 = vadd.f32 0.0, %v2952
      %v2954 = vpop.f32.mrf.mxu0
      %v2955 = vadd.f32 0.0, %v2954
      %2956 = vmatmul.bf16.gmra.mxu0 %v787
      %v2957 = vpop.f32.mrf.mxu0
      %v2958 = vadd.f32 0.0, %v2957
      %v2959 = vpop.f32.mrf.mxu0
      %v2960 = vadd.f32 0.0, %v2959
      %2961 = vmatmul.bf16.gmra.mxu0 %v790
      %v2962 = vpop.f32.mrf.mxu0
      %v2963 = vadd.f32 0.0, %v2962
      %v2964 = vpop.f32.mrf.mxu0
      %v2965 = vadd.f32 0.0, %v2964
      %2966 = vmatmul.bf16.gmra.mxu0 %v793
      %v2967 = vpop.f32.mrf.mxu0
      %v2968 = vadd.f32 0.0, %v2967
      %v2969 = vpop.f32.mrf.mxu0
      %v2970 = vadd.f32 0.0, %v2969
      %2971 = vmatmul.bf16.gmra.mxu0 %v796
      %v2972 = vpop.f32.mrf.mxu0
      %v2973 = vadd.f32 0.0, %v2972
      %v2974 = vpop.f32.mrf.mxu0
      %v2975 = vadd.f32 0.0, %v2974
      %2976 = vmatmul.bf16.gmra.mxu0 %v799
      %v2977 = vpop.f32.mrf.mxu0
      %v2978 = vadd.f32 0.0, %v2977
      %v2979 = vpop.f32.mrf.mxu0
      %v2980 = vadd.f32 0.0, %v2979
      %2981 = vmatmul.bf16.gmra.mxu0 %v802
      %v2982 = vpop.f32.mrf.mxu0
      %v2983 = vadd.f32 0.0, %v2982
      %v2984 = vpop.f32.mrf.mxu0
      %v2985 = vadd.f32 0.0, %v2984
      %2986 = vmatmul.bf16.gmra.mxu0 %v805
      %v2987 = vpop.f32.mrf.mxu0
      %v2988 = vadd.f32 0.0, %v2987
      %v2989 = vpop.f32.mrf.mxu0
      %v2990 = vadd.f32 0.0, %v2989
      %2991 = vmatmul.bf16.gmra.mxu0 %v808
      %v2992 = vpop.f32.mrf.mxu0
      %v2993 = vadd.f32 0.0, %v2992
      %v2994 = vpop.f32.mrf.mxu0
      %v2995 = vadd.f32 0.0, %v2994
      %2996 = vmatmul.bf16.gmra.mxu0 %v811
      %v2997 = vpop.f32.mrf.mxu0
      %v2998 = vadd.f32 0.0, %v2997
      %v2999 = vpop.f32.mrf.mxu0
      %v3000 = vadd.f32 0.0, %v2999
      %3001 = vdwg.mxu0
      %3002 = vmatpush.bf16.msra.mxu0 %v1413
      %3003 = vmatpush.bf16.msra.mxu0 %v1405
      %3004 = vmatpush.bf16.msra.mxu0 %v1397
      %3005 = vmatpush.bf16.msra.mxu0 %v1389
      %3006 = vmatpush.bf16.msra.mxu0 %v1381
      %3007 = vmatpush.bf16.msra.mxu0 %v1373
      %3008 = vmatpush.bf16.msra.mxu0 %v1365
      %3009 = vmatpush.bf16.msra.mxu0 %v1357
      %3010 = vmatmul.bf16.gmra.mxu0 %v770
      %v3011 = vpop.f32.mrf.mxu0
      %v3012 = vadd.f32 %v2928, %v3011
      %v3013 = vpop.f32.mrf.mxu0
      %v3014 = vadd.f32 %v2930, %v3013
      %3015 = vmatmul.bf16.gmra.mxu0 %v773
      %v3016 = vpop.f32.mrf.mxu0
      %v3017 = vadd.f32 %v2933, %v3016
      %v3018 = vpop.f32.mrf.mxu0
      %v3019 = vadd.f32 %v2935, %v3018
      %3020 = vmatmul.bf16.gmra.mxu0 %v776
      %v3021 = vpop.f32.mrf.mxu0
      %v3022 = vadd.f32 %v2938, %v3021
      %v3023 = vpop.f32.mrf.mxu0
      %v3024 = vadd.f32 %v2940, %v3023
      %3025 = vmatmul.bf16.gmra.mxu0 %v779
      %v3026 = vpop.f32.mrf.mxu0
      %v3027 = vadd.f32 %v2943, %v3026
      %v3028 = vpop.f32.mrf.mxu0
      %v3029 = vadd.f32 %v2945, %v3028
      %3030 = vmatmul.bf16.gmra.mxu0 %v782
      %v3031 = vpop.f32.mrf.mxu0
      %v3032 = vadd.f32 %v2948, %v3031
      %v3033 = vpop.f32.mrf.mxu0
      %v3034 = vadd.f32 %v2950, %v3033
      %3035 = vmatmul.bf16.gmra.mxu0 %v785
      %v3036 = vpop.f32.mrf.mxu0
      %v3037 = vadd.f32 %v2953, %v3036
      %v3038 = vpop.f32.mrf.mxu0
      %v3039 = vadd.f32 %v2955, %v3038
      %3040 = vmatmul.bf16.gmra.mxu0 %v788
      %v3041 = vpop.f32.mrf.mxu0
      %v3042 = vadd.f32 %v2958, %v3041
      %v3043 = vpop.f32.mrf.mxu0
      %v3044 = vadd.f32 %v2960, %v3043
      %3045 = vmatmul.bf16.gmra.mxu0 %v791
      %v3046 = vpop.f32.mrf.mxu0
      %v3047 = vadd.f32 %v2963, %v3046
      %v3048 = vpop.f32.mrf.mxu0
      %v3049 = vadd.f32 %v2965, %v3048
      %3050 = vmatmul.bf16.gmra.mxu0 %v794
      %v3051 = vpop.f32.mrf.mxu0
      %v3052 = vadd.f32 %v2968, %v3051
      %v3053 = vpop.f32.mrf.mxu0
      %v3054 = vadd.f32 %v2970, %v3053
      %3055 = vmatmul.bf16.gmra.mxu0 %v797
      %v3056 = vpop.f32.mrf.mxu0
      %v3057 = vadd.f32 %v2973, %v3056
      %v3058 = vpop.f32.mrf.mxu0
      %v3059 = vadd.f32 %v2975, %v3058
      %3060 = vmatmul.bf16.gmra.mxu0 %v800
      %v3061 = vpop.f32.mrf.mxu0
      %v3062 = vadd.f32 %v2978, %v3061
      %v3063 = vpop.f32.mrf.mxu0
      %v3064 = vadd.f32 %v2980, %v3063
      %3065 = vmatmul.bf16.gmra.mxu0 %v803
      %v3066 = vpop.f32.mrf.mxu0
      %v3067 = vadd.f32 %v2983, %v3066
      %v3068 = vpop.f32.mrf.mxu0
      %v3069 = vadd.f32 %v2985, %v3068
      %3070 = vmatmul.bf16.gmra.mxu0 %v806
      %v3071 = vpop.f32.mrf.mxu0
      %v3072 = vadd.f32 %v2988, %v3071
      %v3073 = vpop.f32.mrf.mxu0
      %v3074 = vadd.f32 %v2990, %v3073
      %3075 = vmatmul.bf16.gmra.mxu0 %v809
      %v3076 = vpop.f32.mrf.mxu0
      %v3077 = vadd.f32 %v2993, %v3076
      %v3078 = vpop.f32.mrf.mxu0
      %v3079 = vadd.f32 %v2995, %v3078
      %3080 = vmatmul.bf16.gmra.mxu0 %v812
      %v3081 = vpop.f32.mrf.mxu0
      %v3082 = vadd.f32 %v2998, %v3081
      %v3083 = vpop.f32.mrf.mxu0
      %v3084 = vadd.f32 %v3000, %v3083
      %3085 = vdwg.mxu0
      %3086 = vmatpush.bf16.msra.mxu0 0
      %3087 = vmatpush.bf16.msra.mxu0 0
      %3088 = vmatpush.bf16.msra.mxu0 0
      %3089 = vmatpush.bf16.msra.mxu0 0
      %3090 = vmatpush.bf16.msra.mxu0 0
      %3091 = vmatpush.bf16.msra.mxu0 %v1650
      %3092 = vmatpush.bf16.msra.mxu0 %v1429
      %3093 = vmatpush.bf16.msra.mxu0 %v1421
      %3094 = vmatmul.bf16.gmra.mxu0 %v1586
      %v3095 = vpop.f32.mrf.mxu0
      %v3096 = vadd.f32 %v3012, %v3095
      %v3097 = vpop.f32.mrf.mxu0
      %v3098 = vadd.f32 %v3014, %v3097
      %3099 = vmatmul.bf16.gmra.mxu0 %v1589
      %v3100 = vpop.f32.mrf.mxu0
      %v3101 = vadd.f32 %v3017, %v3100
      %v3102 = vpop.f32.mrf.mxu0
      %v3103 = vadd.f32 %v3019, %v3102
      %3104 = vmatmul.bf16.gmra.mxu0 %v1592
      %v3105 = vpop.f32.mrf.mxu0
      %v3106 = vadd.f32 %v3022, %v3105
      %v3107 = vpop.f32.mrf.mxu0
      %v3108 = vadd.f32 %v3024, %v3107
      %3109 = vmatmul.bf16.gmra.mxu0 %v1595
      %v3110 = vpop.f32.mrf.mxu0
      %v3111 = vadd.f32 %v3027, %v3110
      %v3112 = vpop.f32.mrf.mxu0
      %v3113 = vadd.f32 %v3029, %v3112
      %3114 = vmatmul.bf16.gmra.mxu0 %v1598
      %v3115 = vpop.f32.mrf.mxu0
      %v3116 = vadd.f32 %v3032, %v3115
      %v3117 = vpop.f32.mrf.mxu0
      %v3118 = vadd.f32 %v3034, %v3117
      %3119 = vmatmul.bf16.gmra.mxu0 %v1601
      %v3120 = vpop.f32.mrf.mxu0
      %v3121 = vadd.f32 %v3037, %v3120
      %v3122 = vpop.f32.mrf.mxu0
      %v3123 = vadd.f32 %v3039, %v3122
      %3124 = vmatmul.bf16.gmra.mxu0 %v1604
      %v3125 = vpop.f32.mrf.mxu0
      %v3126 = vadd.f32 %v3042, %v3125
      %v3127 = vpop.f32.mrf.mxu0
      %v3128 = vadd.f32 %v3044, %v3127
      %3129 = vmatmul.bf16.gmra.mxu0 %v1607
      %v3130 = vpop.f32.mrf.mxu0
      %v3131 = vadd.f32 %v3047, %v3130
      %v3132 = vpop.f32.mrf.mxu0
      %v3133 = vadd.f32 %v3049, %v3132
      %3134 = vmatmul.bf16.gmra.mxu0 %v1610
      %v3135 = vpop.f32.mrf.mxu0
      %v3136 = vadd.f32 %v3052, %v3135
      %v3137 = vpop.f32.mrf.mxu0
      %v3138 = vadd.f32 %v3054, %v3137
      %3139 = vmatmul.bf16.gmra.mxu0 %v1613
      %v3140 = vpop.f32.mrf.mxu0
      %v3141 = vadd.f32 %v3057, %v3140
      %v3142 = vpop.f32.mrf.mxu0
      %v3143 = vadd.f32 %v3059, %v3142
      %3144 = vmatmul.bf16.gmra.mxu0 %v1616
      %v3145 = vpop.f32.mrf.mxu0
      %v3146 = vadd.f32 %v3062, %v3145
      %v3147 = vpop.f32.mrf.mxu0
      %v3148 = vadd.f32 %v3064, %v3147
      %3149 = vmatmul.bf16.gmra.mxu0 %v1619
      %v3150 = vpop.f32.mrf.mxu0
      %v3151 = vadd.f32 %v3067, %v3150
      %v3152 = vpop.f32.mrf.mxu0
      %v3153 = vadd.f32 %v3069, %v3152
      %3154 = vmatmul.bf16.gmra.mxu0 %v1622
      %v3155 = vpop.f32.mrf.mxu0
      %v3156 = vadd.f32 %v3072, %v3155
      %v3157 = vpop.f32.mrf.mxu0
      %v3158 = vadd.f32 %v3074, %v3157
      %3159 = vmatmul.bf16.gmra.mxu0 %v1625
      %v3160 = vpop.f32.mrf.mxu0
      %v3161 = vadd.f32 %v3077, %v3160
      %v3162 = vpop.f32.mrf.mxu0
      %v3163 = vadd.f32 %v3079, %v3162
      %3164 = vmatmul.bf16.gmra.mxu0 %v1628
      %v3165 = vpop.f32.mrf.mxu0
      %v3166 = vadd.f32 %v3082, %v3165
      %v3167 = vpop.f32.mrf.mxu0
      %v3168 = vadd.f32 %v3084, %v3167
      %3169 = vdwg.mxu0
      %3170 = vmatpush.bf16.msra.mxu0 %v1350
      %3171 = vmatpush.bf16.msra.mxu0 %v1342
      %3172 = vmatpush.bf16.msra.mxu0 %v1334
      %3173 = vmatpush.bf16.msra.mxu0 %v1326
      %3174 = vmatpush.bf16.msra.mxu0 %v1318
      %3175 = vmatpush.bf16.msra.mxu0 %v1310
      %3176 = vmatpush.bf16.msra.mxu0 %v1302
      %3177 = vmatpush.bf16.msra.mxu0 %v1294
      %3178 = vmatmul.bf16.gmra.mxu0 %v769
      %v3179 = vpop.f32.mrf.mxu0
      %v3180 = vadd.f32 0.0, %v3179
      %v3181 = vpop.f32.mrf.mxu0
      %v3182 = vadd.f32 0.0, %v3181
      %3183 = vmatmul.bf16.gmra.mxu0 %v772
      %v3184 = vpop.f32.mrf.mxu0
      %v3185 = vadd.f32 0.0, %v3184
      %v3186 = vpop.f32.mrf.mxu0
      %v3187 = vadd.f32 0.0, %v3186
      %3188 = vmatmul.bf16.gmra.mxu0 %v775
      %v3189 = vpop.f32.mrf.mxu0
      %v3190 = vadd.f32 0.0, %v3189
      %v3191 = vpop.f32.mrf.mxu0
      %v3192 = vadd.f32 0.0, %v3191
      %3193 = vmatmul.bf16.gmra.mxu0 %v778
      %v3194 = vpop.f32.mrf.mxu0
      %v3195 = vadd.f32 0.0, %v3194
      %v3196 = vpop.f32.mrf.mxu0
      %v3197 = vadd.f32 0.0, %v3196
      %3198 = vmatmul.bf16.gmra.mxu0 %v781
      %v3199 = vpop.f32.mrf.mxu0
      %v3200 = vadd.f32 0.0, %v3199
      %v3201 = vpop.f32.mrf.mxu0
      %v3202 = vadd.f32 0.0, %v3201
      %3203 = vmatmul.bf16.gmra.mxu0 %v784
      %v3204 = vpop.f32.mrf.mxu0
      %v3205 = vadd.f32 0.0, %v3204
      %v3206 = vpop.f32.mrf.mxu0
      %v3207 = vadd.f32 0.0, %v3206
      %3208 = vmatmul.bf16.gmra.mxu0 %v787
      %v3209 = vpop.f32.mrf.mxu0
      %v3210 = vadd.f32 0.0, %v3209
      %v3211 = vpop.f32.mrf.mxu0
      %v3212 = vadd.f32 0.0, %v3211
      %3213 = vmatmul.bf16.gmra.mxu0 %v790
      %v3214 = vpop.f32.mrf.mxu0
      %v3215 = vadd.f32 0.0, %v3214
      %v3216 = vpop.f32.mrf.mxu0
      %v3217 = vadd.f32 0.0, %v3216
      %3218 = vmatmul.bf16.gmra.mxu0 %v793
      %v3219 = vpop.f32.mrf.mxu0
      %v3220 = vadd.f32 0.0, %v3219
      %v3221 = vpop.f32.mrf.mxu0
      %v3222 = vadd.f32 0.0, %v3221
      %3223 = vmatmul.bf16.gmra.mxu0 %v796
      %v3224 = vpop.f32.mrf.mxu0
      %v3225 = vadd.f32 0.0, %v3224
      %v3226 = vpop.f32.mrf.mxu0
      %v3227 = vadd.f32 0.0, %v3226
      %3228 = vmatmul.bf16.gmra.mxu0 %v799
      %v3229 = vpop.f32.mrf.mxu0
      %v3230 = vadd.f32 0.0, %v3229
      %v3231 = vpop.f32.mrf.mxu0
      %v3232 = vadd.f32 0.0, %v3231
      %3233 = vmatmul.bf16.gmra.mxu0 %v802
      %v3234 = vpop.f32.mrf.mxu0
      %v3235 = vadd.f32 0.0, %v3234
      %v3236 = vpop.f32.mrf.mxu0
      %v3237 = vadd.f32 0.0, %v3236
      %3238 = vmatmul.bf16.gmra.mxu0 %v805
      %v3239 = vpop.f32.mrf.mxu0
      %v3240 = vadd.f32 0.0, %v3239
      %v3241 = vpop.f32.mrf.mxu0
      %v3242 = vadd.f32 0.0, %v3241
      %3243 = vmatmul.bf16.gmra.mxu0 %v808
      %v3244 = vpop.f32.mrf.mxu0
      %v3245 = vadd.f32 0.0, %v3244
      %v3246 = vpop.f32.mrf.mxu0
      %v3247 = vadd.f32 0.0, %v3246
      %3248 = vmatmul.bf16.gmra.mxu0 %v811
      %v3249 = vpop.f32.mrf.mxu0
      %v3250 = vadd.f32 0.0, %v3249
      %v3251 = vpop.f32.mrf.mxu0
      %v3252 = vadd.f32 0.0, %v3251
      %3253 = vdwg.mxu0
      %3254 = vmatpush.bf16.msra.mxu0 %v1414
      %3255 = vmatpush.bf16.msra.mxu0 %v1406
      %3256 = vmatpush.bf16.msra.mxu0 %v1398
      %3257 = vmatpush.bf16.msra.mxu0 %v1390
      %3258 = vmatpush.bf16.msra.mxu0 %v1382
      %3259 = vmatpush.bf16.msra.mxu0 %v1374
      %3260 = vmatpush.bf16.msra.mxu0 %v1366
      %3261 = vmatpush.bf16.msra.mxu0 %v1358
      %3262 = vmatmul.bf16.gmra.mxu0 %v770
      %v3263 = vpop.f32.mrf.mxu0
      %v3264 = vadd.f32 %v3180, %v3263
      %v3265 = vpop.f32.mrf.mxu0
      %v3266 = vadd.f32 %v3182, %v3265
      %3267 = vmatmul.bf16.gmra.mxu0 %v773
      %v3268 = vpop.f32.mrf.mxu0
      %v3269 = vadd.f32 %v3185, %v3268
      %v3270 = vpop.f32.mrf.mxu0
      %v3271 = vadd.f32 %v3187, %v3270
      %3272 = vmatmul.bf16.gmra.mxu0 %v776
      %v3273 = vpop.f32.mrf.mxu0
      %v3274 = vadd.f32 %v3190, %v3273
      %v3275 = vpop.f32.mrf.mxu0
      %v3276 = vadd.f32 %v3192, %v3275
      %3277 = vmatmul.bf16.gmra.mxu0 %v779
      %v3278 = vpop.f32.mrf.mxu0
      %v3279 = vadd.f32 %v3195, %v3278
      %v3280 = vpop.f32.mrf.mxu0
      %v3281 = vadd.f32 %v3197, %v3280
      %3282 = vmatmul.bf16.gmra.mxu0 %v782
      %v3283 = vpop.f32.mrf.mxu0
      %v3284 = vadd.f32 %v3200, %v3283
      %v3285 = vpop.f32.mrf.mxu0
      %v3286 = vadd.f32 %v3202, %v3285
      %3287 = vmatmul.bf16.gmra.mxu0 %v785
      %v3288 = vpop.f32.mrf.mxu0
      %v3289 = vadd.f32 %v3205, %v3288
      %v3290 = vpop.f32.mrf.mxu0
      %v3291 = vadd.f32 %v3207, %v3290
      %3292 = vmatmul.bf16.gmra.mxu0 %v788
      %v3293 = vpop.f32.mrf.mxu0
      %v3294 = vadd.f32 %v3210, %v3293
      %v3295 = vpop.f32.mrf.mxu0
      %v3296 = vadd.f32 %v3212, %v3295
      %3297 = vmatmul.bf16.gmra.mxu0 %v791
      %v3298 = vpop.f32.mrf.mxu0
      %v3299 = vadd.f32 %v3215, %v3298
      %v3300 = vpop.f32.mrf.mxu0
      %v3301 = vadd.f32 %v3217, %v3300
      %3302 = vmatmul.bf16.gmra.mxu0 %v794
      %v3303 = vpop.f32.mrf.mxu0
      %v3304 = vadd.f32 %v3220, %v3303
      %v3305 = vpop.f32.mrf.mxu0
      %v3306 = vadd.f32 %v3222, %v3305
      %3307 = vmatmul.bf16.gmra.mxu0 %v797
      %v3308 = vpop.f32.mrf.mxu0
      %v3309 = vadd.f32 %v3225, %v3308
      %v3310 = vpop.f32.mrf.mxu0
      %v3311 = vadd.f32 %v3227, %v3310
      %3312 = vmatmul.bf16.gmra.mxu0 %v800
      %v3313 = vpop.f32.mrf.mxu0
      %v3314 = vadd.f32 %v3230, %v3313
      %v3315 = vpop.f32.mrf.mxu0
      %v3316 = vadd.f32 %v3232, %v3315
      %3317 = vmatmul.bf16.gmra.mxu0 %v803
      %v3318 = vpop.f32.mrf.mxu0
      %v3319 = vadd.f32 %v3235, %v3318
      %v3320 = vpop.f32.mrf.mxu0
      %v3321 = vadd.f32 %v3237, %v3320
      %3322 = vmatmul.bf16.gmra.mxu0 %v806
      %v3323 = vpop.f32.mrf.mxu0
      %v3324 = vadd.f32 %v3240, %v3323
      %v3325 = vpop.f32.mrf.mxu0
      %v3326 = vadd.f32 %v3242, %v3325
      %3327 = vmatmul.bf16.gmra.mxu0 %v809
      %v3328 = vpop.f32.mrf.mxu0
      %v3329 = vadd.f32 %v3245, %v3328
      %v3330 = vpop.f32.mrf.mxu0
      %v3331 = vadd.f32 %v3247, %v3330
      %3332 = vmatmul.bf16.gmra.mxu0 %v812
      %v3333 = vpop.f32.mrf.mxu0
      %v3334 = vadd.f32 %v3250, %v3333
      %v3335 = vpop.f32.mrf.mxu0
      %v3336 = vadd.f32 %v3252, %v3335
      %3337 = vdwg.mxu0
      %3338 = vmatpush.bf16.msra.mxu0 0
      %3339 = vmatpush.bf16.msra.mxu0 0
      %3340 = vmatpush.bf16.msra.mxu0 0
      %3341 = vmatpush.bf16.msra.mxu0 0
      %3342 = vmatpush.bf16.msra.mxu0 0
      %3343 = vmatpush.bf16.msra.mxu0 %v1653
      %3344 = vmatpush.bf16.msra.mxu0 %v1430
      %3345 = vmatpush.bf16.msra.mxu0 %v1422
      %3346 = vmatmul.bf16.gmra.mxu0 %v1586
      %v3347 = vpop.f32.mrf.mxu0
      %v3348 = vadd.f32 %v3264, %v3347
      %v3349 = vpop.f32.mrf.mxu0
      %v3350 = vadd.f32 %v3266, %v3349
      %3351 = vmatmul.bf16.gmra.mxu0 %v1589
      %v3352 = vpop.f32.mrf.mxu0
      %v3353 = vadd.f32 %v3269, %v3352
      %v3354 = vpop.f32.mrf.mxu0
      %v3355 = vadd.f32 %v3271, %v3354
      %3356 = vmatmul.bf16.gmra.mxu0 %v1592
      %v3357 = vpop.f32.mrf.mxu0
      %v3358 = vadd.f32 %v3274, %v3357
      %v3359 = vpop.f32.mrf.mxu0
      %v3360 = vadd.f32 %v3276, %v3359
      %3361 = vmatmul.bf16.gmra.mxu0 %v1595
      %v3362 = vpop.f32.mrf.mxu0
      %v3363 = vadd.f32 %v3279, %v3362
      %v3364 = vpop.f32.mrf.mxu0
      %v3365 = vadd.f32 %v3281, %v3364
      %3366 = vmatmul.bf16.gmra.mxu0 %v1598
      %v3367 = vpop.f32.mrf.mxu0
      %v3368 = vadd.f32 %v3284, %v3367
      %v3369 = vpop.f32.mrf.mxu0
      %v3370 = vadd.f32 %v3286, %v3369
      %3371 = vmatmul.bf16.gmra.mxu0 %v1601
      %v3372 = vpop.f32.mrf.mxu0
      %v3373 = vadd.f32 %v3289, %v3372
      %v3374 = vpop.f32.mrf.mxu0
      %v3375 = vadd.f32 %v3291, %v3374
      %3376 = vmatmul.bf16.gmra.mxu0 %v1604
      %v3377 = vpop.f32.mrf.mxu0
      %v3378 = vadd.f32 %v3294, %v3377
      %v3379 = vpop.f32.mrf.mxu0
      %v3380 = vadd.f32 %v3296, %v3379
      %3381 = vmatmul.bf16.gmra.mxu0 %v1607
      %v3382 = vpop.f32.mrf.mxu0
      %v3383 = vadd.f32 %v3299, %v3382
      %v3384 = vpop.f32.mrf.mxu0
      %v3385 = vadd.f32 %v3301, %v3384
      %3386 = vmatmul.bf16.gmra.mxu0 %v1610
      %v3387 = vpop.f32.mrf.mxu0
      %v3388 = vadd.f32 %v3304, %v3387
      %v3389 = vpop.f32.mrf.mxu0
      %v3390 = vadd.f32 %v3306, %v3389
      %3391 = vmatmul.bf16.gmra.mxu0 %v1613
      %v3392 = vpop.f32.mrf.mxu0
      %v3393 = vadd.f32 %v3309, %v3392
      %v3394 = vpop.f32.mrf.mxu0
      %v3395 = vadd.f32 %v3311, %v3394
      %3396 = vmatmul.bf16.gmra.mxu0 %v1616
      %v3397 = vpop.f32.mrf.mxu0
      %v3398 = vadd.f32 %v3314, %v3397
      %v3399 = vpop.f32.mrf.mxu0
      %v3400 = vadd.f32 %v3316, %v3399
      %3401 = vmatmul.bf16.gmra.mxu0 %v1619
      %v3402 = vpop.f32.mrf.mxu0
      %v3403 = vadd.f32 %v3319, %v3402
      %v3404 = vpop.f32.mrf.mxu0
      %v3405 = vadd.f32 %v3321, %v3404
      %3406 = vmatmul.bf16.gmra.mxu0 %v1622
      %v3407 = vpop.f32.mrf.mxu0
      %v3408 = vadd.f32 %v3324, %v3407
      %v3409 = vpop.f32.mrf.mxu0
      %v3410 = vadd.f32 %v3326, %v3409
      %3411 = vmatmul.bf16.gmra.mxu0 %v1625
      %v3412 = vpop.f32.mrf.mxu0
      %v3413 = vadd.f32 %v3329, %v3412
      %v3414 = vpop.f32.mrf.mxu0
      %v3415 = vadd.f32 %v3331, %v3414
      %3416 = vmatmul.bf16.gmra.mxu0 %v1628
      %v3417 = vpop.f32.mrf.mxu0
      %v3418 = vadd.f32 %v3334, %v3417
      %v3419 = vpop.f32.mrf.mxu0
      %v3420 = vadd.f32 %v3336, %v3419
      %3421 = vdwg.mxu0
      %3422 = vmatpush.bf16.msra.mxu0 %v1351
      %3423 = vmatpush.bf16.msra.mxu0 %v1343
      %3424 = vmatpush.bf16.msra.mxu0 %v1335
      %3425 = vmatpush.bf16.msra.mxu0 %v1327
      %3426 = vmatpush.bf16.msra.mxu0 %v1319
      %3427 = vmatpush.bf16.msra.mxu0 %v1311
      %3428 = vmatpush.bf16.msra.mxu0 %v1303
      %3429 = vmatpush.bf16.msra.mxu0 %v1295
      %3430 = vmatmul.bf16.gmra.mxu0 %v769
      %v3431 = vpop.f32.mrf.mxu0
      %v3432 = vadd.f32 0.0, %v3431
      %v3433 = vpop.f32.mrf.mxu0
      %v3434 = vadd.f32 0.0, %v3433
      %3435 = vmatmul.bf16.gmra.mxu0 %v772
      %v3436 = vpop.f32.mrf.mxu0
      %v3437 = vadd.f32 0.0, %v3436
      %v3438 = vpop.f32.mrf.mxu0
      %v3439 = vadd.f32 0.0, %v3438
      %3440 = vmatmul.bf16.gmra.mxu0 %v775
      %v3441 = vpop.f32.mrf.mxu0
      %v3442 = vadd.f32 0.0, %v3441
      %v3443 = vpop.f32.mrf.mxu0
      %v3444 = vadd.f32 0.0, %v3443
      %3445 = vmatmul.bf16.gmra.mxu0 %v778
      %v3446 = vpop.f32.mrf.mxu0
      %v3447 = vadd.f32 0.0, %v3446
      %v3448 = vpop.f32.mrf.mxu0
      %v3449 = vadd.f32 0.0, %v3448
      %3450 = vmatmul.bf16.gmra.mxu0 %v781
      %v3451 = vpop.f32.mrf.mxu0
      %v3452 = vadd.f32 0.0, %v3451
      %v3453 = vpop.f32.mrf.mxu0
      %v3454 = vadd.f32 0.0, %v3453
      %3455 = vmatmul.bf16.gmra.mxu0 %v784
      %v3456 = vpop.f32.mrf.mxu0
      %v3457 = vadd.f32 0.0, %v3456
      %v3458 = vpop.f32.mrf.mxu0
      %v3459 = vadd.f32 0.0, %v3458
      %3460 = vmatmul.bf16.gmra.mxu0 %v787
      %v3461 = vpop.f32.mrf.mxu0
      %v3462 = vadd.f32 0.0, %v3461
      %v3463 = vpop.f32.mrf.mxu0
      %v3464 = vadd.f32 0.0, %v3463
      %3465 = vmatmul.bf16.gmra.mxu0 %v790
      %v3466 = vpop.f32.mrf.mxu0
      %v3467 = vadd.f32 0.0, %v3466
      %v3468 = vpop.f32.mrf.mxu0
      %v3469 = vadd.f32 0.0, %v3468
      %3470 = vmatmul.bf16.gmra.mxu0 %v793
      %v3471 = vpop.f32.mrf.mxu0
      %v3472 = vadd.f32 0.0, %v3471
      %v3473 = vpop.f32.mrf.mxu0
      %v3474 = vadd.f32 0.0, %v3473
      %3475 = vmatmul.bf16.gmra.mxu0 %v796
      %v3476 = vpop.f32.mrf.mxu0
      %v3477 = vadd.f32 0.0, %v3476
      %v3478 = vpop.f32.mrf.mxu0
      %v3479 = vadd.f32 0.0, %v3478
      %3480 = vmatmul.bf16.gmra.mxu0 %v799
      %v3481 = vpop.f32.mrf.mxu0
      %v3482 = vadd.f32 0.0, %v3481
      %v3483 = vpop.f32.mrf.mxu0
      %v3484 = vadd.f32 0.0, %v3483
      %3485 = vmatmul.bf16.gmra.mxu0 %v802
      %v3486 = vpop.f32.mrf.mxu0
      %v3487 = vadd.f32 0.0, %v3486
      %v3488 = vpop.f32.mrf.mxu0
      %v3489 = vadd.f32 0.0, %v3488
      %3490 = vmatmul.bf16.gmra.mxu0 %v805
      %v3491 = vpop.f32.mrf.mxu0
      %v3492 = vadd.f32 0.0, %v3491
      %v3493 = vpop.f32.mrf.mxu0
      %v3494 = vadd.f32 0.0, %v3493
      %3495 = vmatmul.bf16.gmra.mxu0 %v808
      %v3496 = vpop.f32.mrf.mxu0
      %v3497 = vadd.f32 0.0, %v3496
      %v3498 = vpop.f32.mrf.mxu0
      %v3499 = vadd.f32 0.0, %v3498
      %3500 = vmatmul.bf16.gmra.mxu0 %v811
      %v3501 = vpop.f32.mrf.mxu0
      %v3502 = vadd.f32 0.0, %v3501
      %v3503 = vpop.f32.mrf.mxu0
      %v3504 = vadd.f32 0.0, %v3503
      %3505 = vdwg.mxu0
      %3506 = vmatpush.bf16.msra.mxu0 %v1415
      %3507 = vmatpush.bf16.msra.mxu0 %v1407
      %3508 = vmatpush.bf16.msra.mxu0 %v1399
      %3509 = vmatpush.bf16.msra.mxu0 %v1391
      %3510 = vmatpush.bf16.msra.mxu0 %v1383
      %3511 = vmatpush.bf16.msra.mxu0 %v1375
      %3512 = vmatpush.bf16.msra.mxu0 %v1367
      %3513 = vmatpush.bf16.msra.mxu0 %v1359
      %3514 = vmatmul.bf16.gmra.mxu0 %v770
      %v3515 = vpop.f32.mrf.mxu0
      %v3516 = vadd.f32 %v3432, %v3515
      %v3517 = vpop.f32.mrf.mxu0
      %v3518 = vadd.f32 %v3434, %v3517
      %3519 = vmatmul.bf16.gmra.mxu0 %v773
      %v3520 = vpop.f32.mrf.mxu0
      %v3521 = vadd.f32 %v3437, %v3520
      %v3522 = vpop.f32.mrf.mxu0
      %v3523 = vadd.f32 %v3439, %v3522
      %3524 = vmatmul.bf16.gmra.mxu0 %v776
      %v3525 = vpop.f32.mrf.mxu0
      %v3526 = vadd.f32 %v3442, %v3525
      %v3527 = vpop.f32.mrf.mxu0
      %v3528 = vadd.f32 %v3444, %v3527
      %3529 = vmatmul.bf16.gmra.mxu0 %v779
      %v3530 = vpop.f32.mrf.mxu0
      %v3531 = vadd.f32 %v3447, %v3530
      %v3532 = vpop.f32.mrf.mxu0
      %v3533 = vadd.f32 %v3449, %v3532
      %3534 = vmatmul.bf16.gmra.mxu0 %v782
      %v3535 = vpop.f32.mrf.mxu0
      %v3536 = vadd.f32 %v3452, %v3535
      %v3537 = vpop.f32.mrf.mxu0
      %v3538 = vadd.f32 %v3454, %v3537
      %3539 = vmatmul.bf16.gmra.mxu0 %v785
      %v3540 = vpop.f32.mrf.mxu0
      %v3541 = vadd.f32 %v3457, %v3540
      %v3542 = vpop.f32.mrf.mxu0
      %v3543 = vadd.f32 %v3459, %v3542
      %3544 = vmatmul.bf16.gmra.mxu0 %v788
      %v3545 = vpop.f32.mrf.mxu0
      %v3546 = vadd.f32 %v3462, %v3545
      %v3547 = vpop.f32.mrf.mxu0
      %v3548 = vadd.f32 %v3464, %v3547
      %3549 = vmatmul.bf16.gmra.mxu0 %v791
      %v3550 = vpop.f32.mrf.mxu0
      %v3551 = vadd.f32 %v3467, %v3550
      %v3552 = vpop.f32.mrf.mxu0
      %v3553 = vadd.f32 %v3469, %v3552
      %3554 = vmatmul.bf16.gmra.mxu0 %v794
      %v3555 = vpop.f32.mrf.mxu0
      %v3556 = vadd.f32 %v3472, %v3555
      %v3557 = vpop.f32.mrf.mxu0
      %v3558 = vadd.f32 %v3474, %v3557
      %3559 = vmatmul.bf16.gmra.mxu0 %v797
      %v3560 = vpop.f32.mrf.mxu0
      %v3561 = vadd.f32 %v3477, %v3560
      %v3562 = vpop.f32.mrf.mxu0
      %v3563 = vadd.f32 %v3479, %v3562
      %3564 = vmatmul.bf16.gmra.mxu0 %v800
      %v3565 = vpop.f32.mrf.mxu0
      %v3566 = vadd.f32 %v3482, %v3565
      %v3567 = vpop.f32.mrf.mxu0
      %v3568 = vadd.f32 %v3484, %v3567
      %3569 = vmatmul.bf16.gmra.mxu0 %v803
      %v3570 = vpop.f32.mrf.mxu0
      %v3571 = vadd.f32 %v3487, %v3570
      %v3572 = vpop.f32.mrf.mxu0
      %v3573 = vadd.f32 %v3489, %v3572
      %3574 = vmatmul.bf16.gmra.mxu0 %v806
      %v3575 = vpop.f32.mrf.mxu0
      %v3576 = vadd.f32 %v3492, %v3575
      %v3577 = vpop.f32.mrf.mxu0
      %v3578 = vadd.f32 %v3494, %v3577
      %3579 = vmatmul.bf16.gmra.mxu0 %v809
      %v3580 = vpop.f32.mrf.mxu0
      %v3581 = vadd.f32 %v3497, %v3580
      %v3582 = vpop.f32.mrf.mxu0
      %v3583 = vadd.f32 %v3499, %v3582
      %3584 = vmatmul.bf16.gmra.mxu0 %v812
      %v3585 = vpop.f32.mrf.mxu0
      %v3586 = vadd.f32 %v3502, %v3585
      %v3587 = vpop.f32.mrf.mxu0
      %v3588 = vadd.f32 %v3504, %v3587
      %3589 = vdwg.mxu0
      %3590 = vmatpush.bf16.msra.mxu0 0
      %3591 = vmatpush.bf16.msra.mxu0 0
      %3592 = vmatpush.bf16.msra.mxu0 0
      %3593 = vmatpush.bf16.msra.mxu0 0
      %3594 = vmatpush.bf16.msra.mxu0 0
      %3595 = vmatpush.bf16.msra.mxu0 %v1656
      %3596 = vmatpush.bf16.msra.mxu0 %v1431
      %3597 = vmatpush.bf16.msra.mxu0 %v1423
      %3598 = vmatmul.bf16.gmra.mxu0 %v1586
      %v3599 = vpop.f32.mrf.mxu0
      %v3600 = vadd.f32 %v3516, %v3599
      %v3601 = vpop.f32.mrf.mxu0
      %v3602 = vadd.f32 %v3518, %v3601
      %3603 = vmatmul.bf16.gmra.mxu0 %v1589
      %v3604 = vpop.f32.mrf.mxu0
      %v3605 = vadd.f32 %v3521, %v3604
      %v3606 = vpop.f32.mrf.mxu0
      %v3607 = vadd.f32 %v3523, %v3606
      %3608 = vmatmul.bf16.gmra.mxu0 %v1592
      %v3609 = vpop.f32.mrf.mxu0
      %v3610 = vadd.f32 %v3526, %v3609
      %v3611 = vpop.f32.mrf.mxu0
      %v3612 = vadd.f32 %v3528, %v3611
      %3613 = vmatmul.bf16.gmra.mxu0 %v1595
      %v3614 = vpop.f32.mrf.mxu0
      %v3615 = vadd.f32 %v3531, %v3614
      %v3616 = vpop.f32.mrf.mxu0
      %v3617 = vadd.f32 %v3533, %v3616
      %3618 = vmatmul.bf16.gmra.mxu0 %v1598
      %v3619 = vpop.f32.mrf.mxu0
      %v3620 = vadd.f32 %v3536, %v3619
      %v3621 = vpop.f32.mrf.mxu0
      %v3622 = vadd.f32 %v3538, %v3621
      %3623 = vmatmul.bf16.gmra.mxu0 %v1601
      %v3624 = vpop.f32.mrf.mxu0
      %v3625 = vadd.f32 %v3541, %v3624
      %v3626 = vpop.f32.mrf.mxu0
      %v3627 = vadd.f32 %v3543, %v3626
      %3628 = vmatmul.bf16.gmra.mxu0 %v1604
      %v3629 = vpop.f32.mrf.mxu0
      %v3630 = vadd.f32 %v3546, %v3629
      %v3631 = vpop.f32.mrf.mxu0
      %v3632 = vadd.f32 %v3548, %v3631
      %3633 = vmatmul.bf16.gmra.mxu0 %v1607
      %v3634 = vpop.f32.mrf.mxu0
      %v3635 = vadd.f32 %v3551, %v3634
      %v3636 = vpop.f32.mrf.mxu0
      %v3637 = vadd.f32 %v3553, %v3636
      %3638 = vmatmul.bf16.gmra.mxu0 %v1610
      %v3639 = vpop.f32.mrf.mxu0
      %v3640 = vadd.f32 %v3556, %v3639
      %v3641 = vpop.f32.mrf.mxu0
      %v3642 = vadd.f32 %v3558, %v3641
      %3643 = vmatmul.bf16.gmra.mxu0 %v1613
      %v3644 = vpop.f32.mrf.mxu0
      %v3645 = vadd.f32 %v3561, %v3644
      %v3646 = vpop.f32.mrf.mxu0
      %v3647 = vadd.f32 %v3563, %v3646
      %3648 = vmatmul.bf16.gmra.mxu0 %v1616
      %v3649 = vpop.f32.mrf.mxu0
      %v3650 = vadd.f32 %v3566, %v3649
      %v3651 = vpop.f32.mrf.mxu0
      %v3652 = vadd.f32 %v3568, %v3651
      %3653 = vmatmul.bf16.gmra.mxu0 %v1619
      %v3654 = vpop.f32.mrf.mxu0
      %v3655 = vadd.f32 %v3571, %v3654
      %v3656 = vpop.f32.mrf.mxu0
      %v3657 = vadd.f32 %v3573, %v3656
      %3658 = vmatmul.bf16.gmra.mxu0 %v1622
      %v3659 = vpop.f32.mrf.mxu0
      %v3660 = vadd.f32 %v3576, %v3659
      %v3661 = vpop.f32.mrf.mxu0
      %v3662 = vadd.f32 %v3578, %v3661
      %3663 = vmatmul.bf16.gmra.mxu0 %v1625
      %v3664 = vpop.f32.mrf.mxu0
      %v3665 = vadd.f32 %v3581, %v3664
      %v3666 = vpop.f32.mrf.mxu0
      %v3667 = vadd.f32 %v3583, %v3666
      %3668 = vmatmul.bf16.gmra.mxu0 %v1628
      %v3669 = vpop.f32.mrf.mxu0
      %v3670 = vadd.f32 %v3586, %v3669
      %v3671 = vpop.f32.mrf.mxu0
      %v3672 = vadd.f32 %v3588, %v3671
      %3673 = vdwg.mxu0
      %v3674 = vpack.c.bf16 %v2088, %v1836
      %v3675 = vpack.c.bf16 %v2592, %v2340
      %v3676 = vpack.c.bf16 %v3096, %v2844
      %v3677 = vpack.c.bf16 %v3600, %v3348
      %v3678 = vpack.c.bf16 %v2090, %v1838
      %v3679 = vpack.c.bf16 %v2594, %v2342
      %v3680 = vpack.c.bf16 %v3098, %v2846
      %v3681 = vpack.c.bf16 %v3602, %v3350
      %v3682 = vpack.c.bf16 %v2093, %v1841
      %v3683 = vpack.c.bf16 %v2597, %v2345
      %v3684 = vpack.c.bf16 %v3101, %v2849
      %v3685 = vpack.c.bf16 %v3605, %v3353
      %v3686 = vpack.c.bf16 %v2095, %v1843
      %v3687 = vpack.c.bf16 %v2599, %v2347
      %v3688 = vpack.c.bf16 %v3103, %v2851
      %v3689 = vpack.c.bf16 %v3607, %v3355
      %v3690 = vpack.c.bf16 %v2098, %v1846
      %v3691 = vpack.c.bf16 %v2602, %v2350
      %v3692 = vpack.c.bf16 %v3106, %v2854
      %v3693 = vpack.c.bf16 %v3610, %v3358
      %v3694 = vpack.c.bf16 %v2100, %v1848
      %v3695 = vpack.c.bf16 %v2604, %v2352
      %v3696 = vpack.c.bf16 %v3108, %v2856
      %v3697 = vpack.c.bf16 %v3612, %v3360
      %v3698 = vpack.c.bf16 %v2103, %v1851
      %v3699 = vpack.c.bf16 %v2607, %v2355
      %v3700 = vpack.c.bf16 %v3111, %v2859
      %v3701 = vpack.c.bf16 %v3615, %v3363
      %v3702 = vpack.c.bf16 %v2105, %v1853
      %v3703 = vpack.c.bf16 %v2609, %v2357
      %v3704 = vpack.c.bf16 %v3113, %v2861
      %v3705 = vpack.c.bf16 %v3617, %v3365
      %v3706 = vpack.c.bf16 %v2108, %v1856
      %v3707 = vpack.c.bf16 %v2612, %v2360
      %v3708 = vpack.c.bf16 %v3116, %v2864
      %v3709 = vpack.c.bf16 %v3620, %v3368
      %v3710 = vpack.c.bf16 %v2110, %v1858
      %v3711 = vpack.c.bf16 %v2614, %v2362
      %v3712 = vpack.c.bf16 %v3118, %v2866
      %v3713 = vpack.c.bf16 %v3622, %v3370
      %v3714 = vpack.c.bf16 %v2113, %v1861
      %v3715 = vpack.c.bf16 %v2617, %v2365
      %v3716 = vpack.c.bf16 %v3121, %v2869
      %v3717 = vpack.c.bf16 %v3625, %v3373
      %v3718 = vpack.c.bf16 %v2115, %v1863
      %v3719 = vpack.c.bf16 %v2619, %v2367
      %v3720 = vpack.c.bf16 %v3123, %v2871
      %v3721 = vpack.c.bf16 %v3627, %v3375
      %v3722 = vpack.c.bf16 %v2118, %v1866
      %v3723 = vpack.c.bf16 %v2622, %v2370
      %v3724 = vpack.c.bf16 %v3126, %v2874
      %v3725 = vpack.c.bf16 %v3630, %v3378
      %v3726 = vpack.c.bf16 %v2120, %v1868
      %v3727 = vpack.c.bf16 %v2624, %v2372
      %v3728 = vpack.c.bf16 %v3128, %v2876
      %v3729 = vpack.c.bf16 %v3632, %v3380
      %v3730 = vpack.c.bf16 %v2123, %v1871
      %v3731 = vpack.c.bf16 %v2627, %v2375
      %v3732 = vpack.c.bf16 %v3131, %v2879
      %v3733 = vpack.c.bf16 %v3635, %v3383
      %v3734 = vpack.c.bf16 %v2125, %v1873
      %v3735 = vpack.c.bf16 %v2629, %v2377
      %v3736 = vpack.c.bf16 %v3133, %v2881
      %v3737 = vpack.c.bf16 %v3637, %v3385
      %v3738 = vpack.c.bf16 %v2128, %v1876
      %v3739 = vpack.c.bf16 %v2632, %v2380
      %v3740 = vpack.c.bf16 %v3136, %v2884
      %v3741 = vpack.c.bf16 %v3640, %v3388
      %v3742 = vpack.c.bf16 %v2130, %v1878
      %v3743 = vpack.c.bf16 %v2634, %v2382
      %v3744 = vpack.c.bf16 %v3138, %v2886
      %v3745 = vpack.c.bf16 %v3642, %v3390
      %v3746 = vpack.c.bf16 %v2133, %v1881
      %v3747 = vpack.c.bf16 %v2637, %v2385
      %v3748 = vpack.c.bf16 %v3141, %v2889
      %v3749 = vpack.c.bf16 %v3645, %v3393
      %v3750 = vpack.c.bf16 %v2135, %v1883
      %v3751 = vpack.c.bf16 %v2639, %v2387
      %v3752 = vpack.c.bf16 %v3143, %v2891
      %v3753 = vpack.c.bf16 %v3647, %v3395
      %v3754 = vpack.c.bf16 %v2138, %v1886
      %v3755 = vpack.c.bf16 %v2642, %v2390
      %v3756 = vpack.c.bf16 %v3146, %v2894
      %v3757 = vpack.c.bf16 %v3650, %v3398
      %v3758 = vpack.c.bf16 %v2140, %v1888
      %v3759 = vpack.c.bf16 %v2644, %v2392
      %v3760 = vpack.c.bf16 %v3148, %v2896
      %v3761 = vpack.c.bf16 %v3652, %v3400
      %v3762 = vpack.c.bf16 %v2143, %v1891
      %v3763 = vpack.c.bf16 %v2647, %v2395
      %v3764 = vpack.c.bf16 %v3151, %v2899
      %v3765 = vpack.c.bf16 %v3655, %v3403
      %v3766 = vpack.c.bf16 %v2145, %v1893
      %v3767 = vpack.c.bf16 %v2649, %v2397
      %v3768 = vpack.c.bf16 %v3153, %v2901
      %v3769 = vpack.c.bf16 %v3657, %v3405
      %v3770 = vpack.c.bf16 %v2148, %v1896
      %v3771 = vpack.c.bf16 %v2652, %v2400
      %v3772 = vpack.c.bf16 %v3156, %v2904
      %v3773 = vpack.c.bf16 %v3660, %v3408
      %v3774 = vpack.c.bf16 %v2150, %v1898
      %v3775 = vpack.c.bf16 %v2654, %v2402
      %v3776 = vpack.c.bf16 %v3158, %v2906
      %v3777 = vpack.c.bf16 %v3662, %v3410
      %v3778 = vpack.c.bf16 %v2153, %v1901
      %v3779 = vpack.c.bf16 %v2657, %v2405
      %v3780 = vpack.c.bf16 %v3161, %v2909
      %v3781 = vpack.c.bf16 %v3665, %v3413
      %v3782 = vpack.c.bf16 %v2155, %v1903
      %v3783 = vpack.c.bf16 %v2659, %v2407
      %v3784 = vpack.c.bf16 %v3163, %v2911
      %v3785 = vpack.c.bf16 %v3667, %v3415
      %v3786 = vpack.c.bf16 %v2158, %v1906
      %v3787 = vpack.c.bf16 %v2662, %v2410
      %v3788 = vpack.c.bf16 %v3166, %v2914
      %v3789 = vpack.c.bf16 %v3670, %v3418
      %v3790 = vpack.c.bf16 %v2160, %v1908
      %v3791 = vpack.c.bf16 %v2664, %v2412
      %v3792 = vpack.c.bf16 %v3168, %v2916
      %v3793 = vpack.c.bf16 %v3672, %v3420
      %v3794 = vld [vmem:[%s2] sm:$0xff]
      %v3795 = vld [vmem:[%s2 + $0x8] sm:$0xff]
      %v3796 = vld [vmem:[%s2 + $0x10] sm:$0xff]
      %v3797 = vld [vmem:[%s2 + $0x18] sm:$0xff]
      %v3798 = vld [vmem:[%s2 + $0x20] sm:$0xff]
      %v3799 = vld [vmem:[%s2 + $0x28] sm:$0xff]
      %v3800 = vld [vmem:[%s2 + $0x30] sm:$0xff]
      %v3801 = vld [vmem:[%s2 + $0x38] sm:$0xff]
      %v3802 = vld [vmem:[%s2 + $0x40] sm:$0xff]
      %v3803 = vld [vmem:[%s2 + $0x48] sm:$0xff]
      %v3804 = vld [vmem:[%s2 + $0x50] sm:$0xff]
      %v3805 = vld [vmem:[%s2 + $0x58] sm:$0xff]
      %v3806 = vld [vmem:[%s2 + $0x60] sm:$0xff]
      %v3807 = vld [vmem:[%s2 + $0x68] sm:$0xff]
      %v3808 = vld [vmem:[%s2 + $0x70] sm:$0xff]
      %v3809 = vld [vmem:[%s2 + $0x78] sm:$0xff]
      %v3810 = vld [vmem:[%s2 + $0x80] sm:$0xff]
      %v3811 = vld [vmem:[%s2 + $0x88] sm:$0xff]
      %v3812 = vld [vmem:[%s2 + $0x90] sm:$0xff]
      %v3813 = vld [vmem:[%s2 + $0x98] sm:$0xff]
      %v3814 = vld [vmem:[%s2 + $0xa0] sm:$0xff]
      %v3815 = vld [vmem:[%s2 + $0xa8] sm:$0xff]
      %v3816 = vld [vmem:[%s2 + $0xb0] sm:$0xff]
      %v3817 = vld [vmem:[%s2 + $0xb8] sm:$0xff]
      %v3818 = vld [vmem:[%s2 + $0xc0] sm:$0xff]
      %v3819 = vld [vmem:[%s2 + $0xc8] sm:$0xff]
      %v3820 = vld [vmem:[%s2 + $0xd0] sm:$0xff]
      %v3821 = vld [vmem:[%s2 + $0xd8] sm:$0xff]
      %v3822 = vld [vmem:[%s2 + $0xe0] sm:$0xff]
      %v3823 = vld [vmem:[%s2 + $0xe8] sm:$0xff]
      %v3824 = vld [vmem:[%s2 + $0xf0] sm:$0xff]
      %v3825 = vld [vmem:[%s2 + $0xf8] sm:$0xff]
      %v3826 = vld [vmem:[%s2 + $0x100] sm:$0xff]
      %v3827 = vld [vmem:[%s2 + $0x108] sm:$0xff]
      %v3828 = vld [vmem:[%s2 + $0x110] sm:$0xff]
      %v3829 = vld [vmem:[%s2 + $0x118] sm:$0xff]
      %v3830 = vld [vmem:[%s2 + $0x120] sm:$0xff]
      %v3831 = vld [vmem:[%s2 + $0x128] sm:$0xff]
      %v3832 = vld [vmem:[%s2 + $0x130] sm:$0xff]
      %v3833 = vld [vmem:[%s2 + $0x138] sm:$0xff]
      %v3834 = vld [vmem:[%s2 + $0x140] sm:$0xff]
      %v3835 = vld [vmem:[%s2 + $0x148] sm:$0xff]
      %v3836 = vld [vmem:[%s2 + $0x150] sm:$0xff]
      %v3837 = vld [vmem:[%s2 + $0x158] sm:$0xff]
      %v3838 = vld [vmem:[%s2 + $0x160] sm:$0xff]
      %v3839 = vld [vmem:[%s2 + $0x168] sm:$0xff]
      %v3840 = vld [vmem:[%s2 + $0x170] sm:$0xff]
      %v3841 = vld [vmem:[%s2 + $0x178] sm:$0xff]
      %v3842 = vld [vmem:[%s2 + $0x180] sm:$0xff]
      %v3843 = vld [vmem:[%s2 + $0x188] sm:$0xff]
      %v3844 = vld [vmem:[%s2 + $0x190] sm:$0xff]
      %v3845 = vld [vmem:[%s2 + $0x198] sm:$0xff]
      %v3846 = vld [vmem:[%s2 + $0x1a0] sm:$0xff]
      %v3847 = vld [vmem:[%s2 + $0x1a8] sm:$0xff]
      %v3848 = vld [vmem:[%s2 + $0x1b0] sm:$0xff]
      %v3849 = vld [vmem:[%s2 + $0x1b8] sm:$0xff]
      %v3850 = vld [vmem:[%s2 + $0x1c0] sm:$0xff]
      %v3851 = vld [vmem:[%s2 + $0x1c8] sm:$0xff]
      %v3852 = vld [vmem:[%s2 + $0x1d0] sm:$0xff]
      %v3853 = vld [vmem:[%s2 + $0x1d8] sm:$0xff]
      %v3854 = vld [vmem:[%s2 + $0x1e0] sm:$0xff]
      %v3855 = vld [vmem:[%s2 + $0x1e8] sm:$0xff]
      %v3856 = vld [vmem:[%s2 + $0x1f0] sm:$0xff]
      %v3857 = vld [vmem:[%s2 + $0x1f8] sm:$0xff]
      %v3858 = vld [vmem:[%s2 + $0x200] sm:$0xff]
      %v3859 = vld [vmem:[%s2 + $0x208] sm:$0xff]
      %v3860 = vld [vmem:[%s2 + $0x210] sm:$0xff]
      %v3861 = vld [vmem:[%s2 + $0x218] sm:$0xff]
      %v3862 = vld [vmem:[%s2 + $0x220] sm:$0xff]
      %v3863 = vld [vmem:[%s2 + $0x228] sm:$0xff]
      %v3864 = vld [vmem:[%s2 + $0x230] sm:$0xff]
      %v3865 = vld [vmem:[%s2 + $0x238] sm:$0xff]
      %v3866 = vld [vmem:[%s2 + $0x240] sm:$0xff]
      %v3867 = vld [vmem:[%s2 + $0x248] sm:$0xff]
      %v3868 = vld [vmem:[%s2 + $0x250] sm:$0xff]
      %v3869 = vld [vmem:[%s2 + $0x258] sm:$0xff]
      %v3870 = vld [vmem:[%s2 + $0x260] sm:$0xff]
      %v3871 = vld [vmem:[%s2 + $0x268] sm:$0xff]
      %v3872 = vld [vmem:[%s2 + $0x270] sm:$0xff]
      %v3873 = vld [vmem:[%s2 + $0x278] sm:$0xff]
      %v3874 = vld [vmem:[%s2 + $0x280] sm:$0xff]
      %v3875 = vld [vmem:[%s2 + $0x288] sm:$0xff]
      %v3876 = vld [vmem:[%s2 + $0x290] sm:$0xff]
      %v3877 = vld [vmem:[%s2 + $0x298] sm:$0xff]
      %v3878 = vld [vmem:[%s2 + $0x2a0] sm:$0xff]
      %v3879 = vld [vmem:[%s2 + $0x2a8] sm:$0xff]
      %v3880 = vld [vmem:[%s2 + $0x2b0] sm:$0xff]
      %v3881 = vld [vmem:[%s2 + $0x2b8] sm:$0xff]
      %v3882 = vld [vmem:[%s2 + $0x2c0] sm:$0xff]
      %v3883 = vld [vmem:[%s2 + $0x2c8] sm:$0xff]
      %v3884 = vld [vmem:[%s2 + $0x2d0] sm:$0xff]
      %v3885 = vld [vmem:[%s2 + $0x2d8] sm:$0xff]
      %v3886 = vld [vmem:[%s2 + $0x2e0] sm:$0xff]
      %v3887 = vld [vmem:[%s2 + $0x2e8] sm:$0xff]
      %v3888 = vld [vmem:[%s2 + $0x2f0] sm:$0xff]
      %v3889 = vld [vmem:[%s2 + $0x2f8] sm:$0xff]
      %v3890 = vld [vmem:[%s2 + $0x300] sm:$0xff]
      %v3891 = vld [vmem:[%s2 + $0x308] sm:$0xff]
      %v3892 = vld [vmem:[%s2 + $0x310] sm:$0xff]
      %v3893 = vld [vmem:[%s2 + $0x318] sm:$0xff]
      %v3894 = vld [vmem:[%s2 + $0x320] sm:$0xff]
      %v3895 = vld [vmem:[%s2 + $0x328] sm:$0xff]
      %v3896 = vld [vmem:[%s2 + $0x330] sm:$0xff]
      %v3897 = vld [vmem:[%s2 + $0x338] sm:$0xff]
      %v3898 = vld [vmem:[%s2 + $0x340] sm:$0xff]
      %v3899 = vld [vmem:[%s2 + $0x348] sm:$0xff]
      %v3900 = vld [vmem:[%s2 + $0x350] sm:$0xff]
      %v3901 = vld [vmem:[%s2 + $0x358] sm:$0xff]
      %v3902 = vld [vmem:[%s2 + $0x360] sm:$0xff]
      %v3903 = vld [vmem:[%s2 + $0x368] sm:$0xff]
      %v3904 = vld [vmem:[%s2 + $0x370] sm:$0xff]
      %v3905 = vld [vmem:[%s2 + $0x378] sm:$0xff]
      %v3906 = vld [vmem:[%s2 + $0x380] sm:$0xff]
      %v3907 = vld [vmem:[%s2 + $0x388] sm:$0xff]
      %v3908 = vld [vmem:[%s2 + $0x390] sm:$0xff]
      %v3909 = vld [vmem:[%s2 + $0x398] sm:$0xff]
      %v3910 = vld [vmem:[%s2 + $0x3a0] sm:$0xff]
      %v3911 = vld [vmem:[%s2 + $0x3a8] sm:$0xff]
      %v3912 = vld [vmem:[%s2 + $0x3b0] sm:$0xff]
      %v3913 = vld [vmem:[%s2 + $0x3b8] sm:$0xff]
      %v3914 = vld [vmem:[%s2 + $0x3c0] sm:$0xff]
      %v3915 = vld [vmem:[%s2 + $0x3c8] sm:$0xff]
      %v3916 = vld [vmem:[%s2 + $0x3d0] sm:$0xff]
      %v3917 = vld [vmem:[%s2 + $0x3d8] sm:$0xff]
      %v3918 = vld [vmem:[%s2 + $0x3e0] sm:$0xff]
      %v3919 = vld [vmem:[%s2 + $0x3e8] sm:$0xff]
      %v3920 = vld [vmem:[%s2 + $0x3f0] sm:$0xff]
      %v3921 = vld [vmem:[%s2 + $0x3f8] sm:$0xff]
      %v3922 = vld [vmem:[%s2 + $0x400] sm:$0xff]
      %v3923 = vld [vmem:[%s2 + $0x408] sm:$0xff]
      %v3924 = vld [vmem:[%s2 + $0x410] sm:$0xff]
      %v3925 = vld [vmem:[%s2 + $0x418] sm:$0xff]
      %v3926 = vld [vmem:[%s2 + $0x420] sm:$0xff]
      %v3927 = vld [vmem:[%s2 + $0x428] sm:$0xff]
      %v3928 = vld [vmem:[%s2 + $0x430] sm:$0xff]
      %v3929 = vld [vmem:[%s2 + $0x438] sm:$0xff]
      %v3930 = vld [vmem:[%s2 + $0x440] sm:$0xff]
      %v3931 = vld [vmem:[%s2 + $0x448] sm:$0xff]
      %v3932 = vld [vmem:[%s2 + $0x450] sm:$0xff]
      %v3933 = vld [vmem:[%s2 + $0x458] sm:$0xff]
      %v3934 = vld [vmem:[%s2 + $0x460] sm:$0xff]
      %v3935 = vld [vmem:[%s2 + $0x468] sm:$0xff]
      %v3936 = vld [vmem:[%s2 + $0x470] sm:$0xff]
      %v3937 = vld [vmem:[%s2 + $0x478] sm:$0xff]
      %v3938 = vld [vmem:[%s2 + $0x480] sm:$0xff]
      %v3939 = vld [vmem:[%s2 + $0x488] sm:$0xff]
      %v3940 = vld [vmem:[%s2 + $0x490] sm:$0xff]
      %v3941 = vld [vmem:[%s2 + $0x498] sm:$0xff]
      %v3942 = vld [vmem:[%s2 + $0x4a0] sm:$0xff]
      %v3943 = vld [vmem:[%s2 + $0x4a8] sm:$0xff]
      %v3944 = vld [vmem:[%s2 + $0x4b0] sm:$0xff]
      %v3945 = vld [vmem:[%s2 + $0x4b8] sm:$0xff]
      %v3946 = vld [vmem:[%s2 + $0x4c0] sm:$0xff]
      %v3947 = vld [vmem:[%s2 + $0x4c8] sm:$0xff]
      %v3948 = vld [vmem:[%s2 + $0x4d0] sm:$0xff]
      %v3949 = vld [vmem:[%s2 + $0x4d8] sm:$0xff]
      %v3950 = vld [vmem:[%s2 + $0x4e0] sm:$0xff]
      %v3951 = vld [vmem:[%s2 + $0x4e8] sm:$0xff]
      %v3952 = vld [vmem:[%s2 + $0x4f0] sm:$0xff]
      %v3953 = vld [vmem:[%s2 + $0x4f8] sm:$0xff]
      %v3954 = vld [vmem:[%s2 + $0x500] sm:$0xff]
      %v3955 = vld [vmem:[%s2 + $0x508] sm:$0xff]
      %v3956 = vld [vmem:[%s2 + $0x510] sm:$0xff]
      %v3957 = vld [vmem:[%s2 + $0x518] sm:$0xff]
      %v3958 = vld [vmem:[%s2 + $0x520] sm:$0xff]
      %v3959 = vld [vmem:[%s2 + $0x528] sm:$0xff]
      %v3960 = vld [vmem:[%s2 + $0x530] sm:$0xff]
      %v3961 = vld [vmem:[%s2 + $0x538] sm:$0xff]
      %v3962 = vld [vmem:[%s2 + $0x540] sm:$0xff]
      %v3963 = vld [vmem:[%s2 + $0x548] sm:$0xff]
      %v3964 = vld [vmem:[%s2 + $0x550] sm:$0xff]
      %v3965 = vld [vmem:[%s2 + $0x558] sm:$0xff]
      %v3966 = vld [vmem:[%s2 + $0x560] sm:$0xff]
      %v3967 = vld [vmem:[%s2 + $0x568] sm:$0xff]
      %v3968 = vld [vmem:[%s2 + $0x570] sm:$0xff]
      %v3969 = vld [vmem:[%s2 + $0x578] sm:$0xff]
      %v3970 = vld [vmem:[%s2 + $0x580] sm:$0xff]
      %v3971 = vld [vmem:[%s2 + $0x588] sm:$0xff]
      %v3972 = vld [vmem:[%s2 + $0x590] sm:$0xff]
      %v3973 = vld [vmem:[%s2 + $0x598] sm:$0xff]
      %v3974 = vld [vmem:[%s2 + $0x5a0] sm:$0xff]
      %v3975 = vld [vmem:[%s2 + $0x5a8] sm:$0xff]
      %v3976 = vld [vmem:[%s2 + $0x5b0] sm:$0xff]
      %v3977 = vld [vmem:[%s2 + $0x5b8] sm:$0xff]
      %v3978 = vld [vmem:[%s2 + $0x5c0] sm:$0xff]
      %v3979 = vld [vmem:[%s2 + $0x5c8] sm:$0xff]
      %v3980 = vld [vmem:[%s2 + $0x5d0] sm:$0xff]
      %v3981 = vld [vmem:[%s2 + $0x5d8] sm:$0xff]
      %v3982 = vld [vmem:[%s2 + $0x5e0] sm:$0xff]
      %v3983 = vld [vmem:[%s2 + $0x5e8] sm:$0xff]
      %v3984 = vld [vmem:[%s2 + $0x5f0] sm:$0xff]
      %v3985 = vld [vmem:[%s2 + $0x5f8] sm:$0xff]
      %v3986 = vld [vmem:[%s2 + $0x600] sm:$0xff]
      %v3987 = vld [vmem:[%s2 + $0x608] sm:$0xff]
      %v3988 = vld [vmem:[%s2 + $0x610] sm:$0xff]
      %v3989 = vld [vmem:[%s2 + $0x618] sm:$0xff]
      %v3990 = vld [vmem:[%s2 + $0x620] sm:$0xff]
      %v3991 = vld [vmem:[%s2 + $0x628] sm:$0xff]
      %v3992 = vld [vmem:[%s2 + $0x630] sm:$0xff]
      %v3993 = vld [vmem:[%s2 + $0x638] sm:$0xff]
      %v3994 = vld [vmem:[%s2 + $0x640] sm:$0xff]
      %v3995 = vld [vmem:[%s2 + $0x648] sm:$0xff]
      %v3996 = vld [vmem:[%s2 + $0x650] sm:$0xff]
      %v3997 = vld [vmem:[%s2 + $0x658] sm:$0xff]
      %v3998 = vld [vmem:[%s2 + $0x660] sm:$0xff]
      %v3999 = vld [vmem:[%s2 + $0x668] sm:$0xff]
      %v4000 = vld [vmem:[%s2 + $0x670] sm:$0xff]
      %v4001 = vld [vmem:[%s2 + $0x678] sm:$0xff]
      %v4002 = vld [vmem:[%s2 + $0x680] sm:$0xff]
      %v4003 = vld [vmem:[%s2 + $0x688] sm:$0xff]
      %v4004 = vld [vmem:[%s2 + $0x690] sm:$0xff]
      %v4005 = vld [vmem:[%s2 + $0x698] sm:$0xff]
      %v4006 = vld [vmem:[%s2 + $0x6a0] sm:$0xff]
      %v4007 = vld [vmem:[%s2 + $0x6a8] sm:$0xff]
      %v4008 = vld [vmem:[%s2 + $0x6b0] sm:$0xff]
      %v4009 = vld [vmem:[%s2 + $0x6b8] sm:$0xff]
      %v4010 = vld [vmem:[%s2 + $0x6c0] sm:$0xff]
      %v4011 = vld [vmem:[%s2 + $0x6c8] sm:$0xff]
      %v4012 = vld [vmem:[%s2 + $0x6d0] sm:$0xff]
      %v4013 = vld [vmem:[%s2 + $0x6d8] sm:$0xff]
      %v4014 = vld [vmem:[%s2 + $0x6e0] sm:$0xff]
      %v4015 = vld [vmem:[%s2 + $0x6e8] sm:$0xff]
      %v4016 = vld [vmem:[%s2 + $0x6f0] sm:$0xff]
      %v4017 = vld [vmem:[%s2 + $0x6f8] sm:$0xff]
      %v4018 = vld [vmem:[%s2 + $0x700] sm:$0xff]
      %v4019 = vld [vmem:[%s2 + $0x708] sm:$0xff]
      %v4020 = vld [vmem:[%s2 + $0x710] sm:$0xff]
      %v4021 = vld [vmem:[%s2 + $0x718] sm:$0xff]
      %v4022 = vld [vmem:[%s2 + $0x720] sm:$0xff]
      %v4023 = vld [vmem:[%s2 + $0x728] sm:$0xff]
      %v4024 = vld [vmem:[%s2 + $0x730] sm:$0x33]
      %v4025 = vld [vmem:[%s2 + $0x738] sm:$0x33]
      %s4026 = scalar_lea.vmem %s2, 1856
      %v4027 = vld [vmem:[%s4026] sm:$0xff]
      %v4028 = vld [vmem:[%s4026 + $0x8] sm:$0xff]
      %v4029 = vld [vmem:[%s4026 + $0x10] sm:$0xff]
      %v4030 = vld [vmem:[%s4026 + $0x18] sm:$0xff]
      %v4031 = vld [vmem:[%s4026 + $0x20] sm:$0xff]
      %v4032 = vld [vmem:[%s4026 + $0x28] sm:$0xff]
      %v4033 = vld [vmem:[%s4026 + $0x30] sm:$0xff]
      %v4034 = vld [vmem:[%s4026 + $0x38] sm:$0xff]
      %v4035 = vld [vmem:[%s4026 + $0x40] sm:$0xff]
      %v4036 = vld [vmem:[%s4026 + $0x48] sm:$0xff]
      %v4037 = vld [vmem:[%s4026 + $0x50] sm:$0xff]
      %v4038 = vld [vmem:[%s4026 + $0x58] sm:$0xff]
      %v4039 = vld [vmem:[%s4026 + $0x60] sm:$0xff]
      %v4040 = vld [vmem:[%s4026 + $0x68] sm:$0xff]
      %v4041 = vld [vmem:[%s4026 + $0x70] sm:$0xff]
      %v4042 = vld [vmem:[%s4026 + $0x78] sm:$0xff]
      %v4043 = vld [vmem:[%s4026 + $0x80] sm:$0xff]
      %v4044 = vld [vmem:[%s4026 + $0x88] sm:$0xff]
      %v4045 = vld [vmem:[%s4026 + $0x90] sm:$0xff]
      %v4046 = vld [vmem:[%s4026 + $0x98] sm:$0xff]
      %v4047 = vld [vmem:[%s4026 + $0xa0] sm:$0xff]
      %v4048 = vld [vmem:[%s4026 + $0xa8] sm:$0xff]
      %v4049 = vld [vmem:[%s4026 + $0xb0] sm:$0xff]
      %v4050 = vld [vmem:[%s4026 + $0xb8] sm:$0xff]
      %v4051 = vld [vmem:[%s4026 + $0xc0] sm:$0xff]
      %v4052 = vld [vmem:[%s4026 + $0xc8] sm:$0xff]
      %v4053 = vld [vmem:[%s4026 + $0xd0] sm:$0xff]
      %v4054 = vld [vmem:[%s4026 + $0xd8] sm:$0xff]
      %v4055 = vld [vmem:[%s4026 + $0xe0] sm:$0xff]
      %v4056 = vld [vmem:[%s4026 + $0xe8] sm:$0xff]
      %v4057 = vld [vmem:[%s4026 + $0xf0] sm:$0xff]
      %v4058 = vld [vmem:[%s4026 + $0xf8] sm:$0xff]
      %v4059 = vld [vmem:[%s4026 + $0x100] sm:$0xff]
      %v4060 = vld [vmem:[%s4026 + $0x108] sm:$0xff]
      %v4061 = vld [vmem:[%s4026 + $0x110] sm:$0xff]
      %v4062 = vld [vmem:[%s4026 + $0x118] sm:$0xff]
      %v4063 = vld [vmem:[%s4026 + $0x120] sm:$0xff]
      %v4064 = vld [vmem:[%s4026 + $0x128] sm:$0xff]
      %v4065 = vld [vmem:[%s4026 + $0x130] sm:$0xff]
      %v4066 = vld [vmem:[%s4026 + $0x138] sm:$0xff]
      %v4067 = vld [vmem:[%s4026 + $0x140] sm:$0xff]
      %v4068 = vld [vmem:[%s4026 + $0x148] sm:$0xff]
      %v4069 = vld [vmem:[%s4026 + $0x150] sm:$0xff]
      %v4070 = vld [vmem:[%s4026 + $0x158] sm:$0xff]
      %v4071 = vld [vmem:[%s4026 + $0x160] sm:$0xff]
      %v4072 = vld [vmem:[%s4026 + $0x168] sm:$0xff]
      %v4073 = vld [vmem:[%s4026 + $0x170] sm:$0xff]
      %v4074 = vld [vmem:[%s4026 + $0x178] sm:$0xff]
      %v4075 = vld [vmem:[%s4026 + $0x180] sm:$0xff]
      %v4076 = vld [vmem:[%s4026 + $0x188] sm:$0xff]
      %v4077 = vld [vmem:[%s4026 + $0x190] sm:$0xff]
      %v4078 = vld [vmem:[%s4026 + $0x198] sm:$0xff]
      %v4079 = vld [vmem:[%s4026 + $0x1a0] sm:$0xff]
      %v4080 = vld [vmem:[%s4026 + $0x1a8] sm:$0xff]
      %v4081 = vld [vmem:[%s4026 + $0x1b0] sm:$0xff]
      %v4082 = vld [vmem:[%s4026 + $0x1b8] sm:$0xff]
      %v4083 = vld [vmem:[%s4026 + $0x1c0] sm:$0xff]
      %v4084 = vld [vmem:[%s4026 + $0x1c8] sm:$0xff]
      %v4085 = vld [vmem:[%s4026 + $0x1d0] sm:$0xff]
      %v4086 = vld [vmem:[%s4026 + $0x1d8] sm:$0xff]
      %v4087 = vld [vmem:[%s4026 + $0x1e0] sm:$0xff]
      %v4088 = vld [vmem:[%s4026 + $0x1e8] sm:$0xff]
      %v4089 = vld [vmem:[%s4026 + $0x1f0] sm:$0xff]
      %v4090 = vld [vmem:[%s4026 + $0x1f8] sm:$0xff]
      %v4091 = vld [vmem:[%s4026 + $0x200] sm:$0xff]
      %v4092 = vld [vmem:[%s4026 + $0x208] sm:$0xff]
      %v4093 = vld [vmem:[%s4026 + $0x210] sm:$0xff]
      %v4094 = vld [vmem:[%s4026 + $0x218] sm:$0xff]
      %v4095 = vld [vmem:[%s4026 + $0x220] sm:$0xff]
      %v4096 = vld [vmem:[%s4026 + $0x228] sm:$0xff]
      %v4097 = vld [vmem:[%s4026 + $0x230] sm:$0xff]
      %v4098 = vld [vmem:[%s4026 + $0x238] sm:$0xff]
      %v4099 = vld [vmem:[%s4026 + $0x240] sm:$0xff]
      %v4100 = vld [vmem:[%s4026 + $0x248] sm:$0xff]
      %v4101 = vld [vmem:[%s4026 + $0x250] sm:$0xff]
      %v4102 = vld [vmem:[%s4026 + $0x258] sm:$0xff]
      %v4103 = vld [vmem:[%s4026 + $0x260] sm:$0xff]
      %v4104 = vld [vmem:[%s4026 + $0x268] sm:$0xff]
      %v4105 = vld [vmem:[%s4026 + $0x270] sm:$0xff]
      %v4106 = vld [vmem:[%s4026 + $0x278] sm:$0xff]
      %v4107 = vld [vmem:[%s4026 + $0x280] sm:$0xff]
      %v4108 = vld [vmem:[%s4026 + $0x288] sm:$0xff]
      %v4109 = vld [vmem:[%s4026 + $0x290] sm:$0xff]
      %v4110 = vld [vmem:[%s4026 + $0x298] sm:$0xff]
      %v4111 = vld [vmem:[%s4026 + $0x2a0] sm:$0xff]
      %v4112 = vld [vmem:[%s4026 + $0x2a8] sm:$0xff]
      %v4113 = vld [vmem:[%s4026 + $0x2b0] sm:$0xff]
      %v4114 = vld [vmem:[%s4026 + $0x2b8] sm:$0xff]
      %v4115 = vld [vmem:[%s4026 + $0x2c0] sm:$0xff]
      %v4116 = vld [vmem:[%s4026 + $0x2c8] sm:$0xff]
      %v4117 = vld [vmem:[%s4026 + $0x2d0] sm:$0xff]
      %v4118 = vld [vmem:[%s4026 + $0x2d8] sm:$0xff]
      %v4119 = vld [vmem:[%s4026 + $0x2e0] sm:$0xff]
      %v4120 = vld [vmem:[%s4026 + $0x2e8] sm:$0xff]
      %v4121 = vld [vmem:[%s4026 + $0x2f0] sm:$0xff]
      %v4122 = vld [vmem:[%s4026 + $0x2f8] sm:$0xff]
      %v4123 = vld [vmem:[%s4026 + $0x300] sm:$0xff]
      %v4124 = vld [vmem:[%s4026 + $0x308] sm:$0xff]
      %v4125 = vld [vmem:[%s4026 + $0x310] sm:$0xff]
      %v4126 = vld [vmem:[%s4026 + $0x318] sm:$0xff]
      %v4127 = vld [vmem:[%s4026 + $0x320] sm:$0xff]
      %v4128 = vld [vmem:[%s4026 + $0x328] sm:$0xff]
      %v4129 = vld [vmem:[%s4026 + $0x330] sm:$0xff]
      %v4130 = vld [vmem:[%s4026 + $0x338] sm:$0xff]
      %v4131 = vld [vmem:[%s4026 + $0x340] sm:$0xff]
      %v4132 = vld [vmem:[%s4026 + $0x348] sm:$0xff]
      %v4133 = vld [vmem:[%s4026 + $0x350] sm:$0xff]
      %v4134 = vld [vmem:[%s4026 + $0x358] sm:$0xff]
      %v4135 = vld [vmem:[%s4026 + $0x360] sm:$0xff]
      %v4136 = vld [vmem:[%s4026 + $0x368] sm:$0xff]
      %v4137 = vld [vmem:[%s4026 + $0x370] sm:$0xff]
      %v4138 = vld [vmem:[%s4026 + $0x378] sm:$0xff]
      %v4139 = vld [vmem:[%s4026 + $0x380] sm:$0xff]
      %v4140 = vld [vmem:[%s4026 + $0x388] sm:$0xff]
      %v4141 = vld [vmem:[%s4026 + $0x390] sm:$0xff]
      %v4142 = vld [vmem:[%s4026 + $0x398] sm:$0xff]
      %v4143 = vld [vmem:[%s4026 + $0x3a0] sm:$0xff]
      %v4144 = vld [vmem:[%s4026 + $0x3a8] sm:$0xff]
      %v4145 = vld [vmem:[%s4026 + $0x3b0] sm:$0xff]
      %v4146 = vld [vmem:[%s4026 + $0x3b8] sm:$0xff]
      %v4147 = vld [vmem:[%s4026 + $0x3c0] sm:$0xff]
      %v4148 = vld [vmem:[%s4026 + $0x3c8] sm:$0xff]
      %v4149 = vld [vmem:[%s4026 + $0x3d0] sm:$0xff]
      %v4150 = vld [vmem:[%s4026 + $0x3d8] sm:$0xff]
      %v4151 = vld [vmem:[%s4026 + $0x3e0] sm:$0xff]
      %v4152 = vld [vmem:[%s4026 + $0x3e8] sm:$0xff]
      %v4153 = vld [vmem:[%s4026 + $0x3f0] sm:$0xff]
      %v4154 = vld [vmem:[%s4026 + $0x3f8] sm:$0xff]
      %v4155 = vld [vmem:[%s4026 + $0x400] sm:$0xff]
      %v4156 = vld [vmem:[%s4026 + $0x408] sm:$0xff]
      %v4157 = vld [vmem:[%s4026 + $0x410] sm:$0xff]
      %v4158 = vld [vmem:[%s4026 + $0x418] sm:$0xff]
      %v4159 = vld [vmem:[%s4026 + $0x420] sm:$0xff]
      %v4160 = vld [vmem:[%s4026 + $0x428] sm:$0xff]
      %v4161 = vld [vmem:[%s4026 + $0x430] sm:$0xff]
      %v4162 = vld [vmem:[%s4026 + $0x438] sm:$0xff]
      %v4163 = vld [vmem:[%s4026 + $0x440] sm:$0xff]
      %v4164 = vld [vmem:[%s4026 + $0x448] sm:$0xff]
      %v4165 = vld [vmem:[%s4026 + $0x450] sm:$0xff]
      %v4166 = vld [vmem:[%s4026 + $0x458] sm:$0xff]
      %v4167 = vld [vmem:[%s4026 + $0x460] sm:$0xff]
      %v4168 = vld [vmem:[%s4026 + $0x468] sm:$0xff]
      %v4169 = vld [vmem:[%s4026 + $0x470] sm:$0xff]
      %v4170 = vld [vmem:[%s4026 + $0x478] sm:$0xff]
      %v4171 = vld [vmem:[%s4026 + $0x480] sm:$0xff]
      %v4172 = vld [vmem:[%s4026 + $0x488] sm:$0xff]
      %v4173 = vld [vmem:[%s4026 + $0x490] sm:$0xff]
      %v4174 = vld [vmem:[%s4026 + $0x498] sm:$0xff]
      %v4175 = vld [vmem:[%s4026 + $0x4a0] sm:$0xff]
      %v4176 = vld [vmem:[%s4026 + $0x4a8] sm:$0xff]
      %v4177 = vld [vmem:[%s4026 + $0x4b0] sm:$0xff]
      %v4178 = vld [vmem:[%s4026 + $0x4b8] sm:$0xff]
      %v4179 = vld [vmem:[%s4026 + $0x4c0] sm:$0xff]
      %v4180 = vld [vmem:[%s4026 + $0x4c8] sm:$0xff]
      %v4181 = vld [vmem:[%s4026 + $0x4d0] sm:$0xff]
      %v4182 = vld [vmem:[%s4026 + $0x4d8] sm:$0xff]
      %v4183 = vld [vmem:[%s4026 + $0x4e0] sm:$0xff]
      %v4184 = vld [vmem:[%s4026 + $0x4e8] sm:$0xff]
      %v4185 = vld [vmem:[%s4026 + $0x4f0] sm:$0xff]
      %v4186 = vld [vmem:[%s4026 + $0x4f8] sm:$0xff]
      %v4187 = vld [vmem:[%s4026 + $0x500] sm:$0xff]
      %v4188 = vld [vmem:[%s4026 + $0x508] sm:$0xff]
      %v4189 = vld [vmem:[%s4026 + $0x510] sm:$0xff]
      %v4190 = vld [vmem:[%s4026 + $0x518] sm:$0xff]
      %v4191 = vld [vmem:[%s4026 + $0x520] sm:$0xff]
      %v4192 = vld [vmem:[%s4026 + $0x528] sm:$0xff]
      %v4193 = vld [vmem:[%s4026 + $0x530] sm:$0xff]
      %v4194 = vld [vmem:[%s4026 + $0x538] sm:$0xff]
      %v4195 = vld [vmem:[%s4026 + $0x540] sm:$0xff]
      %v4196 = vld [vmem:[%s4026 + $0x548] sm:$0xff]
      %v4197 = vld [vmem:[%s4026 + $0x550] sm:$0xff]
      %v4198 = vld [vmem:[%s4026 + $0x558] sm:$0xff]
      %v4199 = vld [vmem:[%s4026 + $0x560] sm:$0xff]
      %v4200 = vld [vmem:[%s4026 + $0x568] sm:$0xff]
      %v4201 = vld [vmem:[%s4026 + $0x570] sm:$0xff]
      %v4202 = vld [vmem:[%s4026 + $0x578] sm:$0xff]
      %v4203 = vld [vmem:[%s4026 + $0x580] sm:$0xff]
      %v4204 = vld [vmem:[%s4026 + $0x588] sm:$0xff]
      %v4205 = vld [vmem:[%s4026 + $0x590] sm:$0xff]
      %v4206 = vld [vmem:[%s4026 + $0x598] sm:$0xff]
      %v4207 = vld [vmem:[%s4026 + $0x5a0] sm:$0xff]
      %v4208 = vld [vmem:[%s4026 + $0x5a8] sm:$0xff]
      %v4209 = vld [vmem:[%s4026 + $0x5b0] sm:$0xff]
      %v4210 = vld [vmem:[%s4026 + $0x5b8] sm:$0xff]
      %v4211 = vld [vmem:[%s4026 + $0x5c0] sm:$0xff]
      %v4212 = vld [vmem:[%s4026 + $0x5c8] sm:$0xff]
      %v4213 = vld [vmem:[%s4026 + $0x5d0] sm:$0xff]
      %v4214 = vld [vmem:[%s4026 + $0x5d8] sm:$0xff]
      %v4215 = vld [vmem:[%s4026 + $0x5e0] sm:$0xff]
      %v4216 = vld [vmem:[%s4026 + $0x5e8] sm:$0xff]
      %v4217 = vld [vmem:[%s4026 + $0x5f0] sm:$0xff]
      %v4218 = vld [vmem:[%s4026 + $0x5f8] sm:$0xff]
      %v4219 = vld [vmem:[%s4026 + $0x600] sm:$0xff]
      %v4220 = vld [vmem:[%s4026 + $0x608] sm:$0xff]
      %v4221 = vld [vmem:[%s4026 + $0x610] sm:$0xff]
      %v4222 = vld [vmem:[%s4026 + $0x618] sm:$0xff]
      %v4223 = vld [vmem:[%s4026 + $0x620] sm:$0xff]
      %v4224 = vld [vmem:[%s4026 + $0x628] sm:$0xff]
      %v4225 = vld [vmem:[%s4026 + $0x630] sm:$0xff]
      %v4226 = vld [vmem:[%s4026 + $0x638] sm:$0xff]
      %v4227 = vld [vmem:[%s4026 + $0x640] sm:$0xff]
      %v4228 = vld [vmem:[%s4026 + $0x648] sm:$0xff]
      %v4229 = vld [vmem:[%s4026 + $0x650] sm:$0xff]
      %v4230 = vld [vmem:[%s4026 + $0x658] sm:$0xff]
      %v4231 = vld [vmem:[%s4026 + $0x660] sm:$0xff]
      %v4232 = vld [vmem:[%s4026 + $0x668] sm:$0xff]
      %v4233 = vld [vmem:[%s4026 + $0x670] sm:$0xff]
      %v4234 = vld [vmem:[%s4026 + $0x678] sm:$0xff]
      %v4235 = vld [vmem:[%s4026 + $0x680] sm:$0xff]
      %v4236 = vld [vmem:[%s4026 + $0x688] sm:$0xff]
      %v4237 = vld [vmem:[%s4026 + $0x690] sm:$0xff]
      %v4238 = vld [vmem:[%s4026 + $0x698] sm:$0xff]
      %v4239 = vld [vmem:[%s4026 + $0x6a0] sm:$0xff]
      %v4240 = vld [vmem:[%s4026 + $0x6a8] sm:$0xff]
      %v4241 = vld [vmem:[%s4026 + $0x6b0] sm:$0xff]
      %v4242 = vld [vmem:[%s4026 + $0x6b8] sm:$0xff]
      %v4243 = vld [vmem:[%s4026 + $0x6c0] sm:$0xff]
      %v4244 = vld [vmem:[%s4026 + $0x6c8] sm:$0xff]
      %v4245 = vld [vmem:[%s4026 + $0x6d0] sm:$0xff]
      %v4246 = vld [vmem:[%s4026 + $0x6d8] sm:$0xff]
      %v4247 = vld [vmem:[%s4026 + $0x6e0] sm:$0xff]
      %v4248 = vld [vmem:[%s4026 + $0x6e8] sm:$0xff]
      %v4249 = vld [vmem:[%s4026 + $0x6f0] sm:$0xff]
      %v4250 = vld [vmem:[%s4026 + $0x6f8] sm:$0xff]
      %v4251 = vld [vmem:[%s4026 + $0x700] sm:$0xff]
      %v4252 = vld [vmem:[%s4026 + $0x708] sm:$0xff]
      %v4253 = vld [vmem:[%s4026 + $0x710] sm:$0xff]
      %v4254 = vld [vmem:[%s4026 + $0x718] sm:$0xff]
      %v4255 = vld [vmem:[%s4026 + $0x720] sm:$0xff]
      %v4256 = vld [vmem:[%s4026 + $0x728] sm:$0xff]
      %v4257 = vld [vmem:[%s4026 + $0x730] sm:$0x33]
      %v4258 = vld [vmem:[%s4026 + $0x738] sm:$0x33]
      %v4299 = vunpack.c.l.b16 %v3714
      %v4300 = vunpack.c.h.b16 %v3714
      %v4301 = vunpack.c.l.b16 %v3715
      %v4302 = vunpack.c.h.b16 %v3715
      %v4303 = vunpack.c.l.b16 %v3716
      %v4304 = vunpack.c.h.b16 %v3716
      %v4305 = vunpack.c.l.b16 %v3717
      %v4306 = vunpack.c.h.b16 %v3717
      %v4307 = vunpack.c.l.b16 %v3718
      %v4308 = vunpack.c.h.b16 %v3718
      %v4309 = vunpack.c.l.b16 %v3719
      %v4310 = vunpack.c.h.b16 %v3719
      %v4311 = vunpack.c.l.b16 %v3720
      %v4312 = vunpack.c.h.b16 %v3720
      %v4313 = vunpack.c.l.b16 %v3721
      %v4314 = vunpack.c.h.b16 %v3721
      %v4315 = vunpack.c.l.b16 %v3722
      %v4316 = vunpack.c.h.b16 %v3722
      %v4317 = vunpack.c.l.b16 %v3723
      %v4318 = vunpack.c.h.b16 %v3723
      %v4319 = vunpack.c.l.b16 %v3724
      %v4320 = vunpack.c.h.b16 %v3724
      %v4321 = vunpack.c.l.b16 %v3725
      %v4322 = vunpack.c.h.b16 %v3725
      %v4323 = vunpack.c.l.b16 %v3726
      %v4324 = vunpack.c.h.b16 %v3726
      %v4325 = vunpack.c.l.b16 %v3727
      %v4326 = vunpack.c.h.b16 %v3727
      %v4327 = vunpack.c.l.b16 %v3728
      %v4328 = vunpack.c.h.b16 %v3728
      %v4329 = vunpack.c.l.b16 %v3729
      %v4330 = vunpack.c.h.b16 %v3729
      %v4331 = vunpack.c.l.b16 %v3730
      %v4332 = vunpack.c.h.b16 %v3730
      %v4333 = vunpack.c.l.b16 %v3731
      %v4334 = vunpack.c.h.b16 %v3731
      %v4335 = vunpack.c.l.b16 %v3732
      %v4336 = vunpack.c.h.b16 %v3732
      %v4337 = vunpack.c.l.b16 %v3733
      %v4338 = vunpack.c.h.b16 %v3733
      %v4339 = vunpack.c.l.b16 %v3734
      %v4340 = vunpack.c.h.b16 %v3734
      %v4341 = vunpack.c.l.b16 %v3735
      %v4342 = vunpack.c.h.b16 %v3735
      %v4343 = vunpack.c.l.b16 %v3736
      %v4344 = vunpack.c.h.b16 %v3736
      %v4345 = vunpack.c.l.b16 %v3737
      %v4346 = vunpack.c.h.b16 %v3737
      %v4347 = vunpack.c.l.b16 %v3738
      %v4348 = vunpack.c.h.b16 %v3738
      %v4349 = vunpack.c.l.b16 %v3739
      %v4350 = vunpack.c.h.b16 %v3739
      %v4351 = vunpack.c.l.b16 %v3740
      %v4352 = vunpack.c.h.b16 %v3740
      %v4353 = vunpack.c.l.b16 %v3741
      %v4354 = vunpack.c.h.b16 %v3741
      %v4355 = vunpack.c.l.b16 %v3742
      %v4356 = vunpack.c.h.b16 %v3742
      %v4357 = vunpack.c.l.b16 %v3743
      %v4358 = vunpack.c.h.b16 %v3743
      %v4359 = vunpack.c.l.b16 %v3744
      %v4360 = vunpack.c.h.b16 %v3744
      %v4361 = vunpack.c.l.b16 %v3745
      %v4362 = vunpack.c.h.b16 %v3745
      %v4363 = vunpack.c.l.b16 %v3746
      %v4364 = vunpack.c.h.b16 %v3746
      %v4365 = vunpack.c.l.b16 %v3747
      %v4366 = vunpack.c.h.b16 %v3747
      %v4367 = vunpack.c.l.b16 %v3748
      %v4368 = vunpack.c.h.b16 %v3748
      %v4369 = vunpack.c.l.b16 %v3749
      %v4370 = vunpack.c.h.b16 %v3749
      %v4371 = vunpack.c.l.b16 %v3750
      %v4372 = vunpack.c.h.b16 %v3750
      %v4373 = vunpack.c.l.b16 %v3751
      %v4374 = vunpack.c.h.b16 %v3751
      %v4375 = vunpack.c.l.b16 %v3752
      %v4376 = vunpack.c.h.b16 %v3752
      %v4377 = vunpack.c.l.b16 %v3753
      %v4378 = vunpack.c.h.b16 %v3753
      %v4379 = vpack.c.b16 %v4307, %v4299
      %v4380 = vpack.c.b16 %v4308, %v4300
      %v4381 = vpack.c.b16 %v4309, %v4301
      %v4382 = vpack.c.b16 %v4310, %v4302
      %v4383 = vpack.c.b16 %v4311, %v4303
      %v4384 = vpack.c.b16 %v4312, %v4304
      %v4385 = vpack.c.b16 %v4313, %v4305
      %v4386 = vpack.c.b16 %v4314, %v4306
      %v4387 = vpack.c.b16 %v4323, %v4315
      %v4388 = vpack.c.b16 %v4324, %v4316
      %v4389 = vpack.c.b16 %v4325, %v4317
      %v4390 = vpack.c.b16 %v4326, %v4318
      %v4391 = vpack.c.b16 %v4327, %v4319
      %v4392 = vpack.c.b16 %v4328, %v4320
      %v4393 = vpack.c.b16 %v4329, %v4321
      %v4394 = vpack.c.b16 %v4330, %v4322
      %v4395 = vpack.c.b16 %v4339, %v4331
      %v4396 = vpack.c.b16 %v4340, %v4332
      %v4397 = vpack.c.b16 %v4341, %v4333
      %v4398 = vpack.c.b16 %v4342, %v4334
      %v4399 = vpack.c.b16 %v4343, %v4335
      %v4400 = vpack.c.b16 %v4344, %v4336
      %v4401 = vpack.c.b16 %v4345, %v4337
      %v4402 = vpack.c.b16 %v4346, %v4338
      %v4403 = vpack.c.b16 %v4355, %v4347
      %v4404 = vpack.c.b16 %v4356, %v4348
      %v4405 = vpack.c.b16 %v4357, %v4349
      %v4406 = vpack.c.b16 %v4358, %v4350
      %v4407 = vpack.c.b16 %v4359, %v4351
      %v4408 = vpack.c.b16 %v4360, %v4352
      %v4409 = vpack.c.b16 %v4361, %v4353
      %v4410 = vpack.c.b16 %v4362, %v4354
      %v4411 = vpack.c.b16 %v4371, %v4363
      %v4412 = vpack.c.b16 %v4372, %v4364
      %v4413 = vpack.c.b16 %v4373, %v4365
      %v4414 = vpack.c.b16 %v4374, %v4366
      %v4415 = vpack.c.b16 %v4375, %v4367
      %v4416 = vpack.c.b16 %v4376, %v4368
      %v4417 = vpack.c.b16 %v4377, %v4369
      %v4418 = vpack.c.b16 %v4378, %v4370
      %v4686 = vunpack.c.l.b16 %v4027
      %v4687 = vunpack.c.h.b16 %v4027
      %v4688 = vunpack.c.l.b16 %v4028
      %v4689 = vunpack.c.h.b16 %v4028
      %v4690 = vunpack.c.l.b16 %v4029
      %v4691 = vunpack.c.h.b16 %v4029
      %v4692 = vunpack.c.l.b16 %v4030
      %v4693 = vunpack.c.h.b16 %v4030
      %v4694 = vunpack.c.l.b16 %v4031
      %v4695 = vunpack.c.h.b16 %v4031
      %v4696 = vunpack.c.l.b16 %v4032
      %v4697 = vunpack.c.h.b16 %v4032
      %v4698 = vunpack.c.l.b16 %v4033
      %v4699 = vunpack.c.h.b16 %v4033
      %v4700 = vunpack.c.l.b16 %v4034
      %v4701 = vunpack.c.h.b16 %v4034
      %v4702 = vunpack.c.l.b16 %v4035
      %v4703 = vunpack.c.h.b16 %v4035
      %v4704 = vunpack.c.l.b16 %v4036
      %v4705 = vunpack.c.h.b16 %v4036
      %v4706 = vunpack.c.l.b16 %v4037
      %v4707 = vunpack.c.h.b16 %v4037
      %v4708 = vunpack.c.l.b16 %v4038
      %v4709 = vunpack.c.h.b16 %v4038
      %v4710 = vunpack.c.l.b16 %v4039
      %v4711 = vunpack.c.h.b16 %v4039
      %v4712 = vunpack.c.l.b16 %v4040
      %v4713 = vunpack.c.h.b16 %v4040
      %v4714 = vunpack.c.l.b16 %v4041
      %v4715 = vunpack.c.h.b16 %v4041
      %v4716 = vunpack.c.l.b16 %v4042
      %v4717 = vunpack.c.h.b16 %v4042
      %v4718 = vunpack.c.l.b16 %v4043
      %v4719 = vunpack.c.h.b16 %v4043
      %v4720 = vunpack.c.l.b16 %v4044
      %v4721 = vunpack.c.h.b16 %v4044
      %v4722 = vunpack.c.l.b16 %v4045
      %v4723 = vunpack.c.h.b16 %v4045
      %v4724 = vunpack.c.l.b16 %v4046
      %v4725 = vunpack.c.h.b16 %v4046
      %v4726 = vunpack.c.l.b16 %v4047
      %v4727 = vunpack.c.h.b16 %v4047
      %v4728 = vunpack.c.l.b16 %v4048
      %v4729 = vunpack.c.h.b16 %v4048
      %v4730 = vunpack.c.l.b16 %v4049
      %v4731 = vunpack.c.h.b16 %v4049
      %v4732 = vunpack.c.l.b16 %v4050
      %v4733 = vunpack.c.h.b16 %v4050
      %v4734 = vunpack.c.l.b16 %v4051
      %v4735 = vunpack.c.h.b16 %v4051
      %v4736 = vunpack.c.l.b16 %v4052
      %v4737 = vunpack.c.h.b16 %v4052
      %v4738 = vunpack.c.l.b16 %v4053
      %v4739 = vunpack.c.h.b16 %v4053
      %v4740 = vunpack.c.l.b16 %v4054
      %v4741 = vunpack.c.h.b16 %v4054
      %v4742 = vunpack.c.l.b16 %v4055
      %v4743 = vunpack.c.h.b16 %v4055
      %v4744 = vunpack.c.l.b16 %v4056
      %v4745 = vunpack.c.h.b16 %v4056
      %v4746 = vunpack.c.l.b16 %v4057
      %v4747 = vunpack.c.h.b16 %v4057
      %v4748 = vunpack.c.l.b16 %v4058
      %v4749 = vunpack.c.h.b16 %v4058
      %v4750 = vunpack.c.l.b16 %v4059
      %v4751 = vunpack.c.h.b16 %v4059
      %v4752 = vunpack.c.l.b16 %v4060
      %v4753 = vunpack.c.h.b16 %v4060
      %v4754 = vunpack.c.l.b16 %v4061
      %v4755 = vunpack.c.h.b16 %v4061
      %v4756 = vunpack.c.l.b16 %v4062
      %v4757 = vunpack.c.h.b16 %v4062
      %v4758 = vunpack.c.l.b16 %v4063
      %v4759 = vunpack.c.h.b16 %v4063
      %v4760 = vunpack.c.l.b16 %v4064
      %v4761 = vunpack.c.h.b16 %v4064
      %v4762 = vunpack.c.l.b16 %v4065
      %v4763 = vunpack.c.h.b16 %v4065
      %v4764 = vunpack.c.l.b16 %v4066
      %v4765 = vunpack.c.h.b16 %v4066
      %v4766 = vunpack.c.l.b16 %v4067
      %v4767 = vunpack.c.h.b16 %v4067
      %v4768 = vunpack.c.l.b16 %v4068
      %v4769 = vunpack.c.h.b16 %v4068
      %v4770 = vunpack.c.l.b16 %v4069
      %v4771 = vunpack.c.h.b16 %v4069
      %v4772 = vunpack.c.l.b16 %v4070
      %v4773 = vunpack.c.h.b16 %v4070
      %v4774 = vunpack.c.l.b16 %v4071
      %v4775 = vunpack.c.h.b16 %v4071
      %v4776 = vunpack.c.l.b16 %v4072
      %v4777 = vunpack.c.h.b16 %v4072
      %v4778 = vunpack.c.l.b16 %v4073
      %v4779 = vunpack.c.h.b16 %v4073
      %v4780 = vunpack.c.l.b16 %v4074
      %v4781 = vunpack.c.h.b16 %v4074
      %v4782 = vunpack.c.l.b16 %v4075
      %v4783 = vunpack.c.h.b16 %v4075
      %v4784 = vunpack.c.l.b16 %v4076
      %v4785 = vunpack.c.h.b16 %v4076
      %v4786 = vunpack.c.l.b16 %v4077
      %v4787 = vunpack.c.h.b16 %v4077
      %v4788 = vunpack.c.l.b16 %v4078
      %v4789 = vunpack.c.h.b16 %v4078
      %v4790 = vunpack.c.l.b16 %v4079
      %v4791 = vunpack.c.h.b16 %v4079
      %v4792 = vunpack.c.l.b16 %v4080
      %v4793 = vunpack.c.h.b16 %v4080
      %v4794 = vunpack.c.l.b16 %v4081
      %v4795 = vunpack.c.h.b16 %v4081
      %v4796 = vunpack.c.l.b16 %v4082
      %v4797 = vunpack.c.h.b16 %v4082
      %v4798 = vunpack.c.l.b16 %v4083
      %v4799 = vunpack.c.h.b16 %v4083
      %v4800 = vunpack.c.l.b16 %v4084
      %v4801 = vunpack.c.h.b16 %v4084
      %v4802 = vunpack.c.l.b16 %v4085
      %v4803 = vunpack.c.h.b16 %v4085
      %v4804 = vunpack.c.l.b16 %v4086
      %v4805 = vunpack.c.h.b16 %v4086
      %v4806 = vunpack.c.l.b16 %v4087
      %v4807 = vunpack.c.h.b16 %v4087
      %v4808 = vunpack.c.l.b16 %v4088
      %v4809 = vunpack.c.h.b16 %v4088
      %v4810 = vunpack.c.l.b16 %v4089
      %v4811 = vunpack.c.h.b16 %v4089
      %v4812 = vunpack.c.l.b16 %v4090
      %v4813 = vunpack.c.h.b16 %v4090
      %v4814 = vunpack.c.l.b16 %v4091
      %v4815 = vunpack.c.h.b16 %v4091
      %v4816 = vunpack.c.l.b16 %v4092
      %v4817 = vunpack.c.h.b16 %v4092
      %v4818 = vunpack.c.l.b16 %v4093
      %v4819 = vunpack.c.h.b16 %v4093
      %v4820 = vunpack.c.l.b16 %v4094
      %v4821 = vunpack.c.h.b16 %v4094
      %v4822 = vunpack.c.l.b16 %v4095
      %v4823 = vunpack.c.h.b16 %v4095
      %v4824 = vunpack.c.l.b16 %v4096
      %v4825 = vunpack.c.h.b16 %v4096
      %v4826 = vunpack.c.l.b16 %v4097
      %v4827 = vunpack.c.h.b16 %v4097
      %v4828 = vunpack.c.l.b16 %v4098
      %v4829 = vunpack.c.h.b16 %v4098
      %v4830 = vunpack.c.l.b16 %v4099
      %v4831 = vunpack.c.h.b16 %v4099
      %v4832 = vunpack.c.l.b16 %v4100
      %v4833 = vunpack.c.h.b16 %v4100
      %v4834 = vunpack.c.l.b16 %v4101
      %v4835 = vunpack.c.h.b16 %v4101
      %v4836 = vunpack.c.l.b16 %v4102
      %v4837 = vunpack.c.h.b16 %v4102
      %v4838 = vunpack.c.l.b16 %v4103
      %v4839 = vunpack.c.h.b16 %v4103
      %v4840 = vunpack.c.l.b16 %v4104
      %v4841 = vunpack.c.h.b16 %v4104
      %v4842 = vunpack.c.l.b16 %v4105
      %v4843 = vunpack.c.h.b16 %v4105
      %v4844 = vunpack.c.l.b16 %v4106
      %v4845 = vunpack.c.h.b16 %v4106
      %v4846 = vunpack.c.l.b16 %v4107
      %v4847 = vunpack.c.h.b16 %v4107
      %v4848 = vunpack.c.l.b16 %v4108
      %v4849 = vunpack.c.h.b16 %v4108
      %v4850 = vunpack.c.l.b16 %v4109
      %v4851 = vunpack.c.h.b16 %v4109
      %v4852 = vunpack.c.l.b16 %v4110
      %v4853 = vunpack.c.h.b16 %v4110
      %v4854 = vunpack.c.l.b16 %v4111
      %v4855 = vunpack.c.h.b16 %v4111
      %v4856 = vunpack.c.l.b16 %v4112
      %v4857 = vunpack.c.h.b16 %v4112
      %v4858 = vunpack.c.l.b16 %v4113
      %v4859 = vunpack.c.h.b16 %v4113
      %v4860 = vunpack.c.l.b16 %v4114
      %v4861 = vunpack.c.h.b16 %v4114
      %v4862 = vunpack.c.l.b16 %v4115
      %v4863 = vunpack.c.h.b16 %v4115
      %v4864 = vunpack.c.l.b16 %v4116
      %v4865 = vunpack.c.h.b16 %v4116
      %v4866 = vunpack.c.l.b16 %v4117
      %v4867 = vunpack.c.h.b16 %v4117
      %v4868 = vunpack.c.l.b16 %v4118
      %v4869 = vunpack.c.h.b16 %v4118
      %v4870 = vunpack.c.l.b16 %v4119
      %v4871 = vunpack.c.h.b16 %v4119
      %v4872 = vunpack.c.l.b16 %v4120
      %v4873 = vunpack.c.h.b16 %v4120
      %v4874 = vunpack.c.l.b16 %v4121
      %v4875 = vunpack.c.h.b16 %v4121
      %v4876 = vunpack.c.l.b16 %v4122
      %v4877 = vunpack.c.h.b16 %v4122
      %v4878 = vunpack.c.l.b16 %v4123
      %v4879 = vunpack.c.h.b16 %v4123
      %v4880 = vunpack.c.l.b16 %v4124
      %v4881 = vunpack.c.h.b16 %v4124
      %v4882 = vunpack.c.l.b16 %v4125
      %v4883 = vunpack.c.h.b16 %v4125
      %v4884 = vunpack.c.l.b16 %v4126
      %v4885 = vunpack.c.h.b16 %v4126
      %v4886 = vunpack.c.l.b16 %v4127
      %v4887 = vunpack.c.h.b16 %v4127
      %v4888 = vunpack.c.l.b16 %v4128
      %v4889 = vunpack.c.h.b16 %v4128
      %v4890 = vunpack.c.l.b16 %v4129
      %v4891 = vunpack.c.h.b16 %v4129
      %v4892 = vunpack.c.l.b16 %v4130
      %v4893 = vunpack.c.h.b16 %v4130
      %v4894 = vunpack.c.l.b16 %v4131
      %v4895 = vunpack.c.h.b16 %v4131
      %v4896 = vunpack.c.l.b16 %v4132
      %v4897 = vunpack.c.h.b16 %v4132
      %v4898 = vunpack.c.l.b16 %v4133
      %v4899 = vunpack.c.h.b16 %v4133
      %v4900 = vunpack.c.l.b16 %v4134
      %v4901 = vunpack.c.h.b16 %v4134
      %v4902 = vunpack.c.l.b16 %v4135
      %v4903 = vunpack.c.h.b16 %v4135
      %v4904 = vunpack.c.l.b16 %v4136
      %v4905 = vunpack.c.h.b16 %v4136
      %v4906 = vunpack.c.l.b16 %v4137
      %v4907 = vunpack.c.h.b16 %v4137
      %v4908 = vunpack.c.l.b16 %v4138
      %v4909 = vunpack.c.h.b16 %v4138
      %v4910 = vunpack.c.l.b16 %v4139
      %v4911 = vunpack.c.h.b16 %v4139
      %v4912 = vunpack.c.l.b16 %v4140
      %v4913 = vunpack.c.h.b16 %v4140
      %v4914 = vunpack.c.l.b16 %v4141
      %v4915 = vunpack.c.h.b16 %v4141
      %v4916 = vunpack.c.l.b16 %v4142
      %v4917 = vunpack.c.h.b16 %v4142
      %v4918 = vunpack.c.l.b16 %v4143
      %v4919 = vunpack.c.h.b16 %v4143
      %v4920 = vunpack.c.l.b16 %v4144
      %v4921 = vunpack.c.h.b16 %v4144
      %v4922 = vunpack.c.l.b16 %v4145
      %v4923 = vunpack.c.h.b16 %v4145
      %v4924 = vunpack.c.l.b16 %v4146
      %v4925 = vunpack.c.h.b16 %v4146
      %v4926 = vunpack.c.l.b16 %v4147
      %v4927 = vunpack.c.h.b16 %v4147
      %v4928 = vunpack.c.l.b16 %v4148
      %v4929 = vunpack.c.h.b16 %v4148
      %v4930 = vunpack.c.l.b16 %v4149
      %v4931 = vunpack.c.h.b16 %v4149
      %v4932 = vunpack.c.l.b16 %v4150
      %v4933 = vunpack.c.h.b16 %v4150
      %v4934 = vunpack.c.l.b16 %v4151
      %v4935 = vunpack.c.h.b16 %v4151
      %v4936 = vunpack.c.l.b16 %v4152
      %v4937 = vunpack.c.h.b16 %v4152
      %v4938 = vunpack.c.l.b16 %v4153
      %v4939 = vunpack.c.h.b16 %v4153
      %v4940 = vunpack.c.l.b16 %v4154
      %v4941 = vunpack.c.h.b16 %v4154
      %v4942 = vunpack.c.l.b16 %v4155
      %v4943 = vunpack.c.h.b16 %v4155
      %v4944 = vunpack.c.l.b16 %v4156
      %v4945 = vunpack.c.h.b16 %v4156
      %v4946 = vunpack.c.l.b16 %v4157
      %v4947 = vunpack.c.h.b16 %v4157
      %v4948 = vunpack.c.l.b16 %v4158
      %v4949 = vunpack.c.h.b16 %v4158
      %v4950 = vunpack.c.l.b16 %v4159
      %v4951 = vunpack.c.h.b16 %v4159
      %v4952 = vunpack.c.l.b16 %v4160
      %v4953 = vunpack.c.h.b16 %v4160
      %v4954 = vunpack.c.l.b16 %v4161
      %v4955 = vunpack.c.h.b16 %v4161
      %v4956 = vunpack.c.l.b16 %v4162
      %v4957 = vunpack.c.h.b16 %v4162
      %v4958 = vunpack.c.l.b16 %v4163
      %v4959 = vunpack.c.h.b16 %v4163
      %v4960 = vunpack.c.l.b16 %v4164
      %v4961 = vunpack.c.h.b16 %v4164
      %v4962 = vunpack.c.l.b16 %v4165
      %v4963 = vunpack.c.h.b16 %v4165
      %v4964 = vunpack.c.l.b16 %v4166
      %v4965 = vunpack.c.h.b16 %v4166
      %v4966 = vunpack.c.l.b16 %v4167
      %v4967 = vunpack.c.h.b16 %v4167
      %v4968 = vunpack.c.l.b16 %v4168
      %v4969 = vunpack.c.h.b16 %v4168
      %v4970 = vunpack.c.l.b16 %v4169
      %v4971 = vunpack.c.h.b16 %v4169
      %v4972 = vunpack.c.l.b16 %v4170
      %v4973 = vunpack.c.h.b16 %v4170
      %v4974 = vunpack.c.l.b16 %v4171
      %v4975 = vunpack.c.h.b16 %v4171
      %v4976 = vunpack.c.l.b16 %v4172
      %v4977 = vunpack.c.h.b16 %v4172
      %v4978 = vunpack.c.l.b16 %v4173
      %v4979 = vunpack.c.h.b16 %v4173
      %v4980 = vunpack.c.l.b16 %v4174
      %v4981 = vunpack.c.h.b16 %v4174
      %v4982 = vunpack.c.l.b16 %v4175
      %v4983 = vunpack.c.h.b16 %v4175
      %v4984 = vunpack.c.l.b16 %v4176
      %v4985 = vunpack.c.h.b16 %v4176
      %v4986 = vunpack.c.l.b16 %v4177
      %v4987 = vunpack.c.h.b16 %v4177
      %v4988 = vunpack.c.l.b16 %v4178
      %v4989 = vunpack.c.h.b16 %v4178
      %v4990 = vunpack.c.l.b16 %v4179
      %v4991 = vunpack.c.h.b16 %v4179
      %v4992 = vunpack.c.l.b16 %v4180
      %v4993 = vunpack.c.h.b16 %v4180
      %v4994 = vunpack.c.l.b16 %v4181
      %v4995 = vunpack.c.h.b16 %v4181
      %v4996 = vunpack.c.l.b16 %v4182
      %v4997 = vunpack.c.h.b16 %v4182
      %v4998 = vunpack.c.l.b16 %v4183
      %v4999 = vunpack.c.h.b16 %v4183
      %v5000 = vunpack.c.l.b16 %v4184
      %v5001 = vunpack.c.h.b16 %v4184
      %v5002 = vunpack.c.l.b16 %v4185
      %v5003 = vunpack.c.h.b16 %v4185
      %v5004 = vunpack.c.l.b16 %v4186
      %v5005 = vunpack.c.h.b16 %v4186
      %v5006 = vunpack.c.l.b16 %v4187
      %v5007 = vunpack.c.h.b16 %v4187
      %v5008 = vunpack.c.l.b16 %v4188
      %v5009 = vunpack.c.h.b16 %v4188
      %v5010 = vunpack.c.l.b16 %v4189
      %v5011 = vunpack.c.h.b16 %v4189
      %v5012 = vunpack.c.l.b16 %v4190
      %v5013 = vunpack.c.h.b16 %v4190
      %v5014 = vunpack.c.l.b16 %v4191
      %v5015 = vunpack.c.h.b16 %v4191
      %v5016 = vunpack.c.l.b16 %v4192
      %v5017 = vunpack.c.h.b16 %v4192
      %v5018 = vunpack.c.l.b16 %v4193
      %v5019 = vunpack.c.h.b16 %v4193
      %v5020 = vunpack.c.l.b16 %v4194
      %v5021 = vunpack.c.h.b16 %v4194
      %v5022 = vunpack.c.l.b16 %v4195
      %v5023 = vunpack.c.h.b16 %v4195
      %v5024 = vunpack.c.l.b16 %v4196
      %v5025 = vunpack.c.h.b16 %v4196
      %v5026 = vunpack.c.l.b16 %v4197
      %v5027 = vunpack.c.h.b16 %v4197
      %v5028 = vunpack.c.l.b16 %v4198
      %v5029 = vunpack.c.h.b16 %v4198
      %v5030 = vunpack.c.l.b16 %v4199
      %v5031 = vunpack.c.h.b16 %v4199
      %v5032 = vunpack.c.l.b16 %v4200
      %v5033 = vunpack.c.h.b16 %v4200
      %v5034 = vunpack.c.l.b16 %v4201
      %v5035 = vunpack.c.h.b16 %v4201
      %v5036 = vunpack.c.l.b16 %v4202
      %v5037 = vunpack.c.h.b16 %v4202
      %v5038 = vunpack.c.l.b16 %v4203
      %v5039 = vunpack.c.h.b16 %v4203
      %v5040 = vunpack.c.l.b16 %v4204
      %v5041 = vunpack.c.h.b16 %v4204
      %v5042 = vunpack.c.l.b16 %v4205
      %v5043 = vunpack.c.h.b16 %v4205
      %v5044 = vunpack.c.l.b16 %v4206
      %v5045 = vunpack.c.h.b16 %v4206
      %v5046 = vunpack.c.l.b16 %v4207
      %v5047 = vunpack.c.h.b16 %v4207
      %v5048 = vunpack.c.l.b16 %v4208
      %v5049 = vunpack.c.h.b16 %v4208
      %v5050 = vunpack.c.l.b16 %v4209
      %v5051 = vunpack.c.h.b16 %v4209
      %v5052 = vunpack.c.l.b16 %v4210
      %v5053 = vunpack.c.h.b16 %v4210
      %v5054 = vunpack.c.l.b16 %v4211
      %v5055 = vunpack.c.h.b16 %v4211
      %v5056 = vunpack.c.l.b16 %v4212
      %v5057 = vunpack.c.h.b16 %v4212
      %v5058 = vunpack.c.l.b16 %v4213
      %v5059 = vunpack.c.h.b16 %v4213
      %v5060 = vunpack.c.l.b16 %v4214
      %v5061 = vunpack.c.h.b16 %v4214
      %v5062 = vunpack.c.l.b16 %v4215
      %v5063 = vunpack.c.h.b16 %v4215
      %v5064 = vunpack.c.l.b16 %v4216
      %v5065 = vunpack.c.h.b16 %v4216
      %v5066 = vunpack.c.l.b16 %v4217
      %v5067 = vunpack.c.h.b16 %v4217
      %v5068 = vunpack.c.l.b16 %v4218
      %v5069 = vunpack.c.h.b16 %v4218
      %v5070 = vunpack.c.l.b16 %v4219
      %v5071 = vunpack.c.h.b16 %v4219
      %v5072 = vunpack.c.l.b16 %v4220
      %v5073 = vunpack.c.h.b16 %v4220
      %v5074 = vunpack.c.l.b16 %v4221
      %v5075 = vunpack.c.h.b16 %v4221
      %v5076 = vunpack.c.l.b16 %v4222
      %v5077 = vunpack.c.h.b16 %v4222
      %v5078 = vunpack.c.l.b16 %v4223
      %v5079 = vunpack.c.h.b16 %v4223
      %v5080 = vunpack.c.l.b16 %v4224
      %v5081 = vunpack.c.h.b16 %v4224
      %v5082 = vunpack.c.l.b16 %v4225
      %v5083 = vunpack.c.h.b16 %v4225
      %v5084 = vunpack.c.l.b16 %v4226
      %v5085 = vunpack.c.h.b16 %v4226
      %v5086 = vunpack.c.l.b16 %v4227
      %v5087 = vunpack.c.h.b16 %v4227
      %v5088 = vunpack.c.l.b16 %v4228
      %v5089 = vunpack.c.h.b16 %v4228
      %v5090 = vunpack.c.l.b16 %v4229
      %v5091 = vunpack.c.h.b16 %v4229
      %v5092 = vunpack.c.l.b16 %v4230
      %v5093 = vunpack.c.h.b16 %v4230
      %v5094 = vunpack.c.l.b16 %v4231
      %v5095 = vunpack.c.h.b16 %v4231
      %v5096 = vunpack.c.l.b16 %v4232
      %v5097 = vunpack.c.h.b16 %v4232
      %v5098 = vunpack.c.l.b16 %v4233
      %v5099 = vunpack.c.h.b16 %v4233
      %v5100 = vunpack.c.l.b16 %v4234
      %v5101 = vunpack.c.h.b16 %v4234
      %v5102 = vunpack.c.l.b16 %v4235
      %v5103 = vunpack.c.h.b16 %v4235
      %v5104 = vunpack.c.l.b16 %v4236
      %v5105 = vunpack.c.h.b16 %v4236
      %v5106 = vunpack.c.l.b16 %v4237
      %v5107 = vunpack.c.h.b16 %v4237
      %v5108 = vunpack.c.l.b16 %v4238
      %v5109 = vunpack.c.h.b16 %v4238
      %v5110 = vunpack.c.l.b16 %v4239
      %v5111 = vunpack.c.h.b16 %v4239
      %v5112 = vunpack.c.l.b16 %v4240
      %v5113 = vunpack.c.h.b16 %v4240
      %v5114 = vunpack.c.l.b16 %v4241
      %v5115 = vunpack.c.h.b16 %v4241
      %v5116 = vunpack.c.l.b16 %v4242
      %v5117 = vunpack.c.h.b16 %v4242
      %v5118 = vunpack.c.l.b16 %v4243
      %v5119 = vunpack.c.h.b16 %v4243
      %v5120 = vunpack.c.l.b16 %v4244
      %v5121 = vunpack.c.h.b16 %v4244
      %v5122 = vunpack.c.l.b16 %v4245
      %v5123 = vunpack.c.h.b16 %v4245
      %v5124 = vunpack.c.l.b16 %v4246
      %v5125 = vunpack.c.h.b16 %v4246
      %v5126 = vunpack.c.l.b16 %v4247
      %v5127 = vunpack.c.h.b16 %v4247
      %v5128 = vunpack.c.l.b16 %v4248
      %v5129 = vunpack.c.h.b16 %v4248
      %v5130 = vunpack.c.l.b16 %v4249
      %v5131 = vunpack.c.h.b16 %v4249
      %v5132 = vunpack.c.l.b16 %v4250
      %v5133 = vunpack.c.h.b16 %v4250
      %v5134 = vunpack.c.l.b16 %v4251
      %v5135 = vunpack.c.h.b16 %v4251
      %v5136 = vunpack.c.l.b16 %v4252
      %v5137 = vunpack.c.h.b16 %v4252
      %v5138 = vunpack.c.l.b16 %v4253
      %v5139 = vunpack.c.h.b16 %v4253
      %v5140 = vunpack.c.l.b16 %v4254
      %v5141 = vunpack.c.h.b16 %v4254
      %v5142 = vunpack.c.l.b16 %v4255
      %v5143 = vunpack.c.h.b16 %v4255
      %v5144 = vunpack.c.l.b16 %v4256
      %v5145 = vunpack.c.h.b16 %v4256
      %v5146 = vunpack.c.l.b16 %v4257
      %v5147 = vunpack.c.h.b16 %v4257
      %v5148 = vunpack.c.l.b16 %v4258
      %v5149 = vunpack.c.h.b16 %v4258
      %v5150 = vpack.c.b16 %v4690, %v4686
      %v5151 = vpack.c.b16 %v4691, %v4687
      %v5152 = vpack.c.b16 %v4692, %v4688
      %v5153 = vpack.c.b16 %v4693, %v4689
      %v5154 = vpack.c.b16 %v4698, %v4694
      %v5155 = vpack.c.b16 %v4699, %v4695
      %v5156 = vpack.c.b16 %v4700, %v4696
      %v5157 = vpack.c.b16 %v4701, %v4697
      %v5158 = vpack.c.b16 %v4706, %v4702
      %v5159 = vpack.c.b16 %v4707, %v4703
      %v5160 = vpack.c.b16 %v4708, %v4704
      %v5161 = vpack.c.b16 %v4709, %v4705
      %v5162 = vpack.c.b16 %v4714, %v4710
      %v5163 = vpack.c.b16 %v4715, %v4711
      %v5164 = vpack.c.b16 %v4716, %v4712
      %v5165 = vpack.c.b16 %v4717, %v4713
      %v5166 = vpack.c.b16 %v4722, %v4718
      %v5167 = vpack.c.b16 %v4723, %v4719
      %v5168 = vpack.c.b16 %v4724, %v4720
      %v5169 = vpack.c.b16 %v4725, %v4721
      %v5170 = vpack.c.b16 %v4730, %v4726
      %v5171 = vpack.c.b16 %v4731, %v4727
      %v5172 = vpack.c.b16 %v4732, %v4728
      %v5173 = vpack.c.b16 %v4733, %v4729
      %v5174 = vpack.c.b16 %v4738, %v4734
      %v5175 = vpack.c.b16 %v4739, %v4735
      %v5176 = vpack.c.b16 %v4740, %v4736
      %v5177 = vpack.c.b16 %v4741, %v4737
      %v5178 = vpack.c.b16 %v4746, %v4742
      %v5179 = vpack.c.b16 %v4747, %v4743
      %v5180 = vpack.c.b16 %v4748, %v4744
      %v5181 = vpack.c.b16 %v4749, %v4745
      %v5182 = vpack.c.b16 %v4754, %v4750
      %v5183 = vpack.c.b16 %v4755, %v4751
      %v5184 = vpack.c.b16 %v4756, %v4752
      %v5185 = vpack.c.b16 %v4757, %v4753
      %v5186 = vpack.c.b16 %v4762, %v4758
      %v5187 = vpack.c.b16 %v4763, %v4759
      %v5188 = vpack.c.b16 %v4764, %v4760
      %v5189 = vpack.c.b16 %v4765, %v4761
      %v5190 = vpack.c.b16 %v4770, %v4766
      %v5191 = vpack.c.b16 %v4771, %v4767
      %v5192 = vpack.c.b16 %v4772, %v4768
      %v5193 = vpack.c.b16 %v4773, %v4769
      %v5194 = vpack.c.b16 %v4778, %v4774
      %v5195 = vpack.c.b16 %v4779, %v4775
      %v5196 = vpack.c.b16 %v4780, %v4776
      %v5197 = vpack.c.b16 %v4781, %v4777
      %v5198 = vpack.c.b16 %v4786, %v4782
      %v5199 = vpack.c.b16 %v4787, %v4783
      %v5200 = vpack.c.b16 %v4788, %v4784
      %v5201 = vpack.c.b16 %v4789, %v4785
      %v5202 = vpack.c.b16 %v4794, %v4790
      %v5203 = vpack.c.b16 %v4795, %v4791
      %v5204 = vpack.c.b16 %v4796, %v4792
      %v5205 = vpack.c.b16 %v4797, %v4793
      %v5206 = vpack.c.b16 %v4802, %v4798
      %v5207 = vpack.c.b16 %v4803, %v4799
      %v5208 = vpack.c.b16 %v4804, %v4800
      %v5209 = vpack.c.b16 %v4805, %v4801
      %v5210 = vpack.c.b16 %v4810, %v4806
      %v5211 = vpack.c.b16 %v4811, %v4807
      %v5212 = vpack.c.b16 %v4812, %v4808
      %v5213 = vpack.c.b16 %v4813, %v4809
      %v5214 = vpack.c.b16 %v4818, %v4814
      %v5215 = vpack.c.b16 %v4819, %v4815
      %v5216 = vpack.c.b16 %v4820, %v4816
      %v5217 = vpack.c.b16 %v4821, %v4817
      %v5218 = vpack.c.b16 %v4826, %v4822
      %v5219 = vpack.c.b16 %v4827, %v4823
      %v5220 = vpack.c.b16 %v4828, %v4824
      %v5221 = vpack.c.b16 %v4829, %v4825
      %v5222 = vpack.c.b16 %v4834, %v4830
      %v5223 = vpack.c.b16 %v4835, %v4831
      %v5224 = vpack.c.b16 %v4836, %v4832
      %v5225 = vpack.c.b16 %v4837, %v4833
      %v5226 = vpack.c.b16 %v4842, %v4838
      %v5227 = vpack.c.b16 %v4843, %v4839
      %v5228 = vpack.c.b16 %v4844, %v4840
      %v5229 = vpack.c.b16 %v4845, %v4841
      %v5230 = vpack.c.b16 %v4850, %v4846
      %v5231 = vpack.c.b16 %v4851, %v4847
      %v5232 = vpack.c.b16 %v4852, %v4848
      %v5233 = vpack.c.b16 %v4853, %v4849
      %v5234 = vpack.c.b16 %v4858, %v4854
      %v5235 = vpack.c.b16 %v4859, %v4855
      %v5236 = vpack.c.b16 %v4860, %v4856
      %v5237 = vpack.c.b16 %v4861, %v4857
      %v5238 = vpack.c.b16 %v4866, %v4862
      %v5239 = vpack.c.b16 %v4867, %v4863
      %v5240 = vpack.c.b16 %v4868, %v4864
      %v5241 = vpack.c.b16 %v4869, %v4865
      %v5242 = vpack.c.b16 %v4874, %v4870
      %v5243 = vpack.c.b16 %v4875, %v4871
      %v5244 = vpack.c.b16 %v4876, %v4872
      %v5245 = vpack.c.b16 %v4877, %v4873
      %v5246 = vpack.c.b16 %v4882, %v4878
      %v5247 = vpack.c.b16 %v4883, %v4879
      %v5248 = vpack.c.b16 %v4884, %v4880
      %v5249 = vpack.c.b16 %v4885, %v4881
      %v5250 = vpack.c.b16 %v4890, %v4886
      %v5251 = vpack.c.b16 %v4891, %v4887
      %v5252 = vpack.c.b16 %v4892, %v4888
      %v5253 = vpack.c.b16 %v4893, %v4889
      %v5254 = vpack.c.b16 %v4898, %v4894
      %v5255 = vpack.c.b16 %v4899, %v4895
      %v5256 = vpack.c.b16 %v4900, %v4896
      %v5257 = vpack.c.b16 %v4901, %v4897
      %v5258 = vpack.c.b16 %v4906, %v4902
      %v5259 = vpack.c.b16 %v4907, %v4903
      %v5260 = vpack.c.b16 %v4908, %v4904
      %v5261 = vpack.c.b16 %v4909, %v4905
      %v5262 = vpack.c.b16 %v4914, %v4910
      %v5263 = vpack.c.b16 %v4915, %v4911
      %v5264 = vpack.c.b16 %v4916, %v4912
      %v5265 = vpack.c.b16 %v4917, %v4913
      %v5266 = vpack.c.b16 %v4922, %v4918
      %v5267 = vpack.c.b16 %v4923, %v4919
      %v5268 = vpack.c.b16 %v4924, %v4920
      %v5269 = vpack.c.b16 %v4925, %v4921
      %v5270 = vpack.c.b16 %v4930, %v4926
      %v5271 = vpack.c.b16 %v4931, %v4927
      %v5272 = vpack.c.b16 %v4932, %v4928
      %v5273 = vpack.c.b16 %v4933, %v4929
      %v5274 = vpack.c.b16 %v4938, %v4934
      %v5275 = vpack.c.b16 %v4939, %v4935
      %v5276 = vpack.c.b16 %v4940, %v4936
      %v5277 = vpack.c.b16 %v4941, %v4937
      %v5278 = vpack.c.b16 %v4946, %v4942
      %v5279 = vpack.c.b16 %v4947, %v4943
      %v5280 = vpack.c.b16 %v4948, %v4944
      %v5281 = vpack.c.b16 %v4949, %v4945
      %v5282 = vpack.c.b16 %v4954, %v4950
      %v5283 = vpack.c.b16 %v4955, %v4951
      %v5284 = vpack.c.b16 %v4956, %v4952
      %v5285 = vpack.c.b16 %v4957, %v4953
      %v5286 = vpack.c.b16 %v4962, %v4958
      %v5287 = vpack.c.b16 %v4963, %v4959
      %v5288 = vpack.c.b16 %v4964, %v4960
      %v5289 = vpack.c.b16 %v4965, %v4961
      %v5290 = vpack.c.b16 %v4970, %v4966
      %v5291 = vpack.c.b16 %v4971, %v4967
      %v5292 = vpack.c.b16 %v4972, %v4968
      %v5293 = vpack.c.b16 %v4973, %v4969
      %v5294 = vpack.c.b16 %v4978, %v4974
      %v5295 = vpack.c.b16 %v4979, %v4975
      %v5296 = vpack.c.b16 %v4980, %v4976
      %v5297 = vpack.c.b16 %v4981, %v4977
      %v5298 = vpack.c.b16 %v4986, %v4982
      %v5299 = vpack.c.b16 %v4987, %v4983
      %v5300 = vpack.c.b16 %v4988, %v4984
      %v5301 = vpack.c.b16 %v4989, %v4985
      %v5302 = vpack.c.b16 %v4994, %v4990
      %v5303 = vpack.c.b16 %v4995, %v4991
      %v5304 = vpack.c.b16 %v4996, %v4992
      %v5305 = vpack.c.b16 %v4997, %v4993
      %v5306 = vpack.c.b16 %v5002, %v4998
      %v5307 = vpack.c.b16 %v5003, %v4999
      %v5308 = vpack.c.b16 %v5004, %v5000
      %v5309 = vpack.c.b16 %v5005, %v5001
      %v5310 = vpack.c.b16 %v5010, %v5006
      %v5311 = vpack.c.b16 %v5011, %v5007
      %v5312 = vpack.c.b16 %v5012, %v5008
      %v5313 = vpack.c.b16 %v5013, %v5009
      %v5314 = vpack.c.b16 %v5018, %v5014
      %v5315 = vpack.c.b16 %v5019, %v5015
      %v5316 = vpack.c.b16 %v5020, %v5016
      %v5317 = vpack.c.b16 %v5021, %v5017
      %v5318 = vpack.c.b16 %v5026, %v5022
      %v5319 = vpack.c.b16 %v5027, %v5023
      %v5320 = vpack.c.b16 %v5028, %v5024
      %v5321 = vpack.c.b16 %v5029, %v5025
      %v5322 = vpack.c.b16 %v5034, %v5030
      %v5323 = vpack.c.b16 %v5035, %v5031
      %v5324 = vpack.c.b16 %v5036, %v5032
      %v5325 = vpack.c.b16 %v5037, %v5033
      %v5326 = vpack.c.b16 %v5042, %v5038
      %v5327 = vpack.c.b16 %v5043, %v5039
      %v5328 = vpack.c.b16 %v5044, %v5040
      %v5329 = vpack.c.b16 %v5045, %v5041
      %v5330 = vpack.c.b16 %v5050, %v5046
      %v5331 = vpack.c.b16 %v5051, %v5047
      %v5332 = vpack.c.b16 %v5052, %v5048
      %v5333 = vpack.c.b16 %v5053, %v5049
      %v5334 = vpack.c.b16 %v5058, %v5054
      %v5335 = vpack.c.b16 %v5059, %v5055
      %v5336 = vpack.c.b16 %v5060, %v5056
      %v5337 = vpack.c.b16 %v5061, %v5057
      %v5338 = vpack.c.b16 %v5066, %v5062
      %v5339 = vpack.c.b16 %v5067, %v5063
      %v5340 = vpack.c.b16 %v5068, %v5064
      %v5341 = vpack.c.b16 %v5069, %v5065
      %v5342 = vpack.c.b16 %v5074, %v5070
      %v5343 = vpack.c.b16 %v5075, %v5071
      %v5344 = vpack.c.b16 %v5076, %v5072
      %v5345 = vpack.c.b16 %v5077, %v5073
      %v5346 = vpack.c.b16 %v5082, %v5078
      %v5347 = vpack.c.b16 %v5083, %v5079
      %v5348 = vpack.c.b16 %v5084, %v5080
      %v5349 = vpack.c.b16 %v5085, %v5081
      %v5350 = vpack.c.b16 %v5090, %v5086
      %v5351 = vpack.c.b16 %v5091, %v5087
      %v5352 = vpack.c.b16 %v5092, %v5088
      %v5353 = vpack.c.b16 %v5093, %v5089
      %v5354 = vpack.c.b16 %v5098, %v5094
      %v5355 = vpack.c.b16 %v5099, %v5095
      %v5356 = vpack.c.b16 %v5100, %v5096
      %v5357 = vpack.c.b16 %v5101, %v5097
      %v5358 = vpack.c.b16 %v5106, %v5102
      %v5359 = vpack.c.b16 %v5107, %v5103
      %v5360 = vpack.c.b16 %v5108, %v5104
      %v5361 = vpack.c.b16 %v5109, %v5105
      %v5362 = vpack.c.b16 %v5114, %v5110
      %v5363 = vpack.c.b16 %v5115, %v5111
      %v5364 = vpack.c.b16 %v5116, %v5112
      %v5365 = vpack.c.b16 %v5117, %v5113
      %v5366 = vpack.c.b16 %v5122, %v5118
      %v5367 = vpack.c.b16 %v5123, %v5119
      %v5368 = vpack.c.b16 %v5124, %v5120
      %v5369 = vpack.c.b16 %v5125, %v5121
      %v5370 = vpack.c.b16 %v5130, %v5126
      %v5371 = vpack.c.b16 %v5131, %v5127
      %v5372 = vpack.c.b16 %v5132, %v5128
      %v5373 = vpack.c.b16 %v5133, %v5129
      %v5374 = vpack.c.b16 %v5138, %v5134
      %v5375 = vpack.c.b16 %v5139, %v5135
      %v5376 = vpack.c.b16 %v5140, %v5136
      %v5377 = vpack.c.b16 %v5141, %v5137
      %v5378 = vpack.c.b16 %v5146, %v5142
      %v5379 = vpack.c.b16 %v5147, %v5143
      %v5380 = vpack.c.b16 %v5148, %v5144
      %v5381 = vpack.c.b16 %v5149, %v5145
      %vm5610 = vcmask 228352
      %v5612 = vsel %vm5610, %v4386, 0
      %v5615 = vsel %vm5610, %v4394, 0
      %v5618 = vsel %vm5610, %v4402, 0
      %v5621 = vsel %vm5610, %v4410, 0
      %v5624 = vsel %vm5610, %v4418, 0
      %vm5626 = vcmask 1045504
      %v5628 = vsel %vm5626, %v5378, 0
      %v5631 = vsel %vm5626, %v5379, 0
      %v5634 = vsel %vm5626, %v5380, 0
      %v5637 = vsel %vm5626, %v5381, 0
      %5639 = vmatpush.bf16.msra.mxu0 %v5178
      %5640 = vmatpush.bf16.msra.mxu0 %v5174
      %5641 = vmatpush.bf16.msra.mxu0 %v5170
      %5642 = vmatpush.bf16.msra.mxu0 %v5166
      %5643 = vmatpush.bf16.msra.mxu0 %v5162
      %5644 = vmatpush.bf16.msra.mxu0 %v5158
      %5645 = vmatpush.bf16.msra.mxu0 %v5154
      %5646 = vmatpush.bf16.msra.mxu0 %v5150
      %5647 = vmatmul.bf16.gmra.mxu0 %v4379
      %v5648 = vpop.f32.mrf.mxu0
      %v5649 = vadd.f32 0.0, %v5648
      %v5650 = vpop.f32.mrf.mxu0
      %v5651 = vadd.f32 0.0, %v5650
      %5652 = vmatmul.bf16.gmra.mxu0 %v4387
      %v5653 = vpop.f32.mrf.mxu0
      %v5654 = vadd.f32 0.0, %v5653
      %v5655 = vpop.f32.mrf.mxu0
      %v5656 = vadd.f32 0.0, %v5655
      %5657 = vmatmul.bf16.gmra.mxu0 %v4395
      %v5658 = vpop.f32.mrf.mxu0
      %v5659 = vadd.f32 0.0, %v5658
      %v5660 = vpop.f32.mrf.mxu0
      %v5661 = vadd.f32 0.0, %v5660
      %5662 = vmatmul.bf16.gmra.mxu0 %v4403
      %v5663 = vpop.f32.mrf.mxu0
      %v5664 = vadd.f32 0.0, %v5663
      %v5665 = vpop.f32.mrf.mxu0
      %v5666 = vadd.f32 0.0, %v5665
      %5667 = vmatmul.bf16.gmra.mxu0 %v4411
      %v5668 = vpop.f32.mrf.mxu0
      %v5669 = vadd.f32 0.0, %v5668
      %v5670 = vpop.f32.mrf.mxu0
      %v5671 = vadd.f32 0.0, %v5670
      %5672 = vdwg.mxu0
      %5673 = vmatpush.bf16.msra.mxu0 %v5210
      %5674 = vmatpush.bf16.msra.mxu0 %v5206
      %5675 = vmatpush.bf16.msra.mxu0 %v5202
      %5676 = vmatpush.bf16.msra.mxu0 %v5198
      %5677 = vmatpush.bf16.msra.mxu0 %v5194
      %5678 = vmatpush.bf16.msra.mxu0 %v5190
      %5679 = vmatpush.bf16.msra.mxu0 %v5186
      %5680 = vmatpush.bf16.msra.mxu0 %v5182
      %5681 = vmatmul.bf16.gmra.mxu0 %v4380
      %v5682 = vpop.f32.mrf.mxu0
      %v5683 = vadd.f32 %v5649, %v5682
      %v5684 = vpop.f32.mrf.mxu0
      %v5685 = vadd.f32 %v5651, %v5684
      %5686 = vmatmul.bf16.gmra.mxu0 %v4388
      %v5687 = vpop.f32.mrf.mxu0
      %v5688 = vadd.f32 %v5654, %v5687
      %v5689 = vpop.f32.mrf.mxu0
      %v5690 = vadd.f32 %v5656, %v5689
      %5691 = vmatmul.bf16.gmra.mxu0 %v4396
      %v5692 = vpop.f32.mrf.mxu0
      %v5693 = vadd.f32 %v5659, %v5692
      %v5694 = vpop.f32.mrf.mxu0
      %v5695 = vadd.f32 %v5661, %v5694
      %5696 = vmatmul.bf16.gmra.mxu0 %v4404
      %v5697 = vpop.f32.mrf.mxu0
      %v5698 = vadd.f32 %v5664, %v5697
      %v5699 = vpop.f32.mrf.mxu0
      %v5700 = vadd.f32 %v5666, %v5699
      %5701 = vmatmul.bf16.gmra.mxu0 %v4412
      %v5702 = vpop.f32.mrf.mxu0
      %v5703 = vadd.f32 %v5669, %v5702
      %v5704 = vpop.f32.mrf.mxu0
      %v5705 = vadd.f32 %v5671, %v5704
      %5706 = vdwg.mxu0
      %5707 = vmatpush.bf16.msra.mxu0 %v5242
      %5708 = vmatpush.bf16.msra.mxu0 %v5238
      %5709 = vmatpush.bf16.msra.mxu0 %v5234
      %5710 = vmatpush.bf16.msra.mxu0 %v5230
      %5711 = vmatpush.bf16.msra.mxu0 %v5226
      %5712 = vmatpush.bf16.msra.mxu0 %v5222
      %5713 = vmatpush.bf16.msra.mxu0 %v5218
      %5714 = vmatpush.bf16.msra.mxu0 %v5214
      %5715 = vmatmul.bf16.gmra.mxu0 %v4381
      %v5716 = vpop.f32.mrf.mxu0
      %v5717 = vadd.f32 %v5683, %v5716
      %v5718 = vpop.f32.mrf.mxu0
      %v5719 = vadd.f32 %v5685, %v5718
      %5720 = vmatmul.bf16.gmra.mxu0 %v4389
      %v5721 = vpop.f32.mrf.mxu0
      %v5722 = vadd.f32 %v5688, %v5721
      %v5723 = vpop.f32.mrf.mxu0
      %v5724 = vadd.f32 %v5690, %v5723
      %5725 = vmatmul.bf16.gmra.mxu0 %v4397
      %v5726 = vpop.f32.mrf.mxu0
      %v5727 = vadd.f32 %v5693, %v5726
      %v5728 = vpop.f32.mrf.mxu0
      %v5729 = vadd.f32 %v5695, %v5728
      %5730 = vmatmul.bf16.gmra.mxu0 %v4405
      %v5731 = vpop.f32.mrf.mxu0
      %v5732 = vadd.f32 %v5698, %v5731
      %v5733 = vpop.f32.mrf.mxu0
      %v5734 = vadd.f32 %v5700, %v5733
      %5735 = vmatmul.bf16.gmra.mxu0 %v4413
      %v5736 = vpop.f32.mrf.mxu0
      %v5737 = vadd.f32 %v5703, %v5736
      %v5738 = vpop.f32.mrf.mxu0
      %v5739 = vadd.f32 %v5705, %v5738
      %5740 = vdwg.mxu0
      %5741 = vmatpush.bf16.msra.mxu0 %v5274
      %5742 = vmatpush.bf16.msra.mxu0 %v5270
      %5743 = vmatpush.bf16.msra.mxu0 %v5266
      %5744 = vmatpush.bf16.msra.mxu0 %v5262
      %5745 = vmatpush.bf16.msra.mxu0 %v5258
      %5746 = vmatpush.bf16.msra.mxu0 %v5254
      %5747 = vmatpush.bf16.msra.mxu0 %v5250
      %5748 = vmatpush.bf16.msra.mxu0 %v5246
      %5749 = vmatmul.bf16.gmra.mxu0 %v4382
      %v5750 = vpop.f32.mrf.mxu0
      %v5751 = vadd.f32 %v5717, %v5750
      %v5752 = vpop.f32.mrf.mxu0
      %v5753 = vadd.f32 %v5719, %v5752
      %5754 = vmatmul.bf16.gmra.mxu0 %v4390
      %v5755 = vpop.f32.mrf.mxu0
      %v5756 = vadd.f32 %v5722, %v5755
      %v5757 = vpop.f32.mrf.mxu0
      %v5758 = vadd.f32 %v5724, %v5757
      %5759 = vmatmul.bf16.gmra.mxu0 %v4398
      %v5760 = vpop.f32.mrf.mxu0
      %v5761 = vadd.f32 %v5727, %v5760
      %v5762 = vpop.f32.mrf.mxu0
      %v5763 = vadd.f32 %v5729, %v5762
      %5764 = vmatmul.bf16.gmra.mxu0 %v4406
      %v5765 = vpop.f32.mrf.mxu0
      %v5766 = vadd.f32 %v5732, %v5765
      %v5767 = vpop.f32.mrf.mxu0
      %v5768 = vadd.f32 %v5734, %v5767
      %5769 = vmatmul.bf16.gmra.mxu0 %v4414
      %v5770 = vpop.f32.mrf.mxu0
      %v5771 = vadd.f32 %v5737, %v5770
      %v5772 = vpop.f32.mrf.mxu0
      %v5773 = vadd.f32 %v5739, %v5772
      %5774 = vdwg.mxu0
      %5775 = vmatpush.bf16.msra.mxu0 %v5306
      %5776 = vmatpush.bf16.msra.mxu0 %v5302
      %5777 = vmatpush.bf16.msra.mxu0 %v5298
      %5778 = vmatpush.bf16.msra.mxu0 %v5294
      %5779 = vmatpush.bf16.msra.mxu0 %v5290
      %5780 = vmatpush.bf16.msra.mxu0 %v5286
      %5781 = vmatpush.bf16.msra.mxu0 %v5282
      %5782 = vmatpush.bf16.msra.mxu0 %v5278
      %5783 = vmatmul.bf16.gmra.mxu0 %v4383
      %v5784 = vpop.f32.mrf.mxu0
      %v5785 = vadd.f32 %v5751, %v5784
      %v5786 = vpop.f32.mrf.mxu0
      %v5787 = vadd.f32 %v5753, %v5786
      %5788 = vmatmul.bf16.gmra.mxu0 %v4391
      %v5789 = vpop.f32.mrf.mxu0
      %v5790 = vadd.f32 %v5756, %v5789
      %v5791 = vpop.f32.mrf.mxu0
      %v5792 = vadd.f32 %v5758, %v5791
      %5793 = vmatmul.bf16.gmra.mxu0 %v4399
      %v5794 = vpop.f32.mrf.mxu0
      %v5795 = vadd.f32 %v5761, %v5794
      %v5796 = vpop.f32.mrf.mxu0
      %v5797 = vadd.f32 %v5763, %v5796
      %5798 = vmatmul.bf16.gmra.mxu0 %v4407
      %v5799 = vpop.f32.mrf.mxu0
      %v5800 = vadd.f32 %v5766, %v5799
      %v5801 = vpop.f32.mrf.mxu0
      %v5802 = vadd.f32 %v5768, %v5801
      %5803 = vmatmul.bf16.gmra.mxu0 %v4415
      %v5804 = vpop.f32.mrf.mxu0
      %v5805 = vadd.f32 %v5771, %v5804
      %v5806 = vpop.f32.mrf.mxu0
      %v5807 = vadd.f32 %v5773, %v5806
      %5808 = vdwg.mxu0
      %5809 = vmatpush.bf16.msra.mxu0 %v5338
      %5810 = vmatpush.bf16.msra.mxu0 %v5334
      %5811 = vmatpush.bf16.msra.mxu0 %v5330
      %5812 = vmatpush.bf16.msra.mxu0 %v5326
      %5813 = vmatpush.bf16.msra.mxu0 %v5322
      %5814 = vmatpush.bf16.msra.mxu0 %v5318
      %5815 = vmatpush.bf16.msra.mxu0 %v5314
      %5816 = vmatpush.bf16.msra.mxu0 %v5310
      %5817 = vmatmul.bf16.gmra.mxu0 %v4384
      %v5818 = vpop.f32.mrf.mxu0
      %v5819 = vadd.f32 %v5785, %v5818
      %v5820 = vpop.f32.mrf.mxu0
      %v5821 = vadd.f32 %v5787, %v5820
      %5822 = vmatmul.bf16.gmra.mxu0 %v4392
      %v5823 = vpop.f32.mrf.mxu0
      %v5824 = vadd.f32 %v5790, %v5823
      %v5825 = vpop.f32.mrf.mxu0
      %v5826 = vadd.f32 %v5792, %v5825
      %5827 = vmatmul.bf16.gmra.mxu0 %v4400
      %v5828 = vpop.f32.mrf.mxu0
      %v5829 = vadd.f32 %v5795, %v5828
      %v5830 = vpop.f32.mrf.mxu0
      %v5831 = vadd.f32 %v5797, %v5830
      %5832 = vmatmul.bf16.gmra.mxu0 %v4408
      %v5833 = vpop.f32.mrf.mxu0
      %v5834 = vadd.f32 %v5800, %v5833
      %v5835 = vpop.f32.mrf.mxu0
      %v5836 = vadd.f32 %v5802, %v5835
      %5837 = vmatmul.bf16.gmra.mxu0 %v4416
      %v5838 = vpop.f32.mrf.mxu0
      %v5839 = vadd.f32 %v5805, %v5838
      %v5840 = vpop.f32.mrf.mxu0
      %v5841 = vadd.f32 %v5807, %v5840
      %5842 = vdwg.mxu0
      %5843 = vmatpush.bf16.msra.mxu0 %v5370
      %5844 = vmatpush.bf16.msra.mxu0 %v5366
      %5845 = vmatpush.bf16.msra.mxu0 %v5362
      %5846 = vmatpush.bf16.msra.mxu0 %v5358
      %5847 = vmatpush.bf16.msra.mxu0 %v5354
      %5848 = vmatpush.bf16.msra.mxu0 %v5350
      %5849 = vmatpush.bf16.msra.mxu0 %v5346
      %5850 = vmatpush.bf16.msra.mxu0 %v5342
      %5851 = vmatmul.bf16.gmra.mxu0 %v4385
      %v5852 = vpop.f32.mrf.mxu0
      %v5853 = vadd.f32 %v5819, %v5852
      %v5854 = vpop.f32.mrf.mxu0
      %v5855 = vadd.f32 %v5821, %v5854
      %5856 = vmatmul.bf16.gmra.mxu0 %v4393
      %v5857 = vpop.f32.mrf.mxu0
      %v5858 = vadd.f32 %v5824, %v5857
      %v5859 = vpop.f32.mrf.mxu0
      %v5860 = vadd.f32 %v5826, %v5859
      %5861 = vmatmul.bf16.gmra.mxu0 %v4401
      %v5862 = vpop.f32.mrf.mxu0
      %v5863 = vadd.f32 %v5829, %v5862
      %v5864 = vpop.f32.mrf.mxu0
      %v5865 = vadd.f32 %v5831, %v5864
      %5866 = vmatmul.bf16.gmra.mxu0 %v4409
      %v5867 = vpop.f32.mrf.mxu0
      %v5868 = vadd.f32 %v5834, %v5867
      %v5869 = vpop.f32.mrf.mxu0
      %v5870 = vadd.f32 %v5836, %v5869
      %5871 = vmatmul.bf16.gmra.mxu0 %v4417
      %v5872 = vpop.f32.mrf.mxu0
      %v5873 = vadd.f32 %v5839, %v5872
      %v5874 = vpop.f32.mrf.mxu0
      %v5875 = vadd.f32 %v5841, %v5874
      %5876 = vdwg.mxu0
      %5877 = vmatpush.bf16.msra.mxu0 0
      %5878 = vmatpush.bf16.msra.mxu0 0
      %5879 = vmatpush.bf16.msra.mxu0 0
      %5880 = vmatpush.bf16.msra.mxu0 0
      %5881 = vmatpush.bf16.msra.mxu0 0
      %5882 = vmatpush.bf16.msra.mxu0 0
      %5883 = vmatpush.bf16.msra.mxu0 %v5628
      %5884 = vmatpush.bf16.msra.mxu0 %v5374
      %5885 = vmatmul.bf16.gmra.mxu0 %v5612
      %v5886 = vpop.f32.mrf.mxu0
      %v5887 = vadd.f32 %v5853, %v5886
      %v5888 = vpop.f32.mrf.mxu0
      %v5889 = vadd.f32 %v5855, %v5888
      %5890 = vmatmul.bf16.gmra.mxu0 %v5615
      %v5891 = vpop.f32.mrf.mxu0
      %v5892 = vadd.f32 %v5858, %v5891
      %v5893 = vpop.f32.mrf.mxu0
      %v5894 = vadd.f32 %v5860, %v5893
      %5895 = vmatmul.bf16.gmra.mxu0 %v5618
      %v5896 = vpop.f32.mrf.mxu0
      %v5897 = vadd.f32 %v5863, %v5896
      %v5898 = vpop.f32.mrf.mxu0
      %v5899 = vadd.f32 %v5865, %v5898
      %5900 = vmatmul.bf16.gmra.mxu0 %v5621
      %v5901 = vpop.f32.mrf.mxu0
      %v5902 = vadd.f32 %v5868, %v5901
      %v5903 = vpop.f32.mrf.mxu0
      %v5904 = vadd.f32 %v5870, %v5903
      %5905 = vmatmul.bf16.gmra.mxu0 %v5624
      %v5906 = vpop.f32.mrf.mxu0
      %v5907 = vadd.f32 %v5873, %v5906
      %v5908 = vpop.f32.mrf.mxu0
      %v5909 = vadd.f32 %v5875, %v5908
      %5910 = vdwg.mxu0
      %5911 = vmatpush.bf16.msra.mxu0 %v5179
      %5912 = vmatpush.bf16.msra.mxu0 %v5175
      %5913 = vmatpush.bf16.msra.mxu0 %v5171
      %5914 = vmatpush.bf16.msra.mxu0 %v5167
      %5915 = vmatpush.bf16.msra.mxu0 %v5163
      %5916 = vmatpush.bf16.msra.mxu0 %v5159
      %5917 = vmatpush.bf16.msra.mxu0 %v5155
      %5918 = vmatpush.bf16.msra.mxu0 %v5151
      %5919 = vmatmul.bf16.gmra.mxu0 %v4379
      %v5920 = vpop.f32.mrf.mxu0
      %v5921 = vadd.f32 0.0, %v5920
      %v5922 = vpop.f32.mrf.mxu0
      %v5923 = vadd.f32 0.0, %v5922
      %5924 = vmatmul.bf16.gmra.mxu0 %v4387
      %v5925 = vpop.f32.mrf.mxu0
      %v5926 = vadd.f32 0.0, %v5925
      %v5927 = vpop.f32.mrf.mxu0
      %v5928 = vadd.f32 0.0, %v5927
      %5929 = vmatmul.bf16.gmra.mxu0 %v4395
      %v5930 = vpop.f32.mrf.mxu0
      %v5931 = vadd.f32 0.0, %v5930
      %v5932 = vpop.f32.mrf.mxu0
      %v5933 = vadd.f32 0.0, %v5932
      %5934 = vmatmul.bf16.gmra.mxu0 %v4403
      %v5935 = vpop.f32.mrf.mxu0
      %v5936 = vadd.f32 0.0, %v5935
      %v5937 = vpop.f32.mrf.mxu0
      %v5938 = vadd.f32 0.0, %v5937
      %5939 = vmatmul.bf16.gmra.mxu0 %v4411
      %v5940 = vpop.f32.mrf.mxu0
      %v5941 = vadd.f32 0.0, %v5940
      %v5942 = vpop.f32.mrf.mxu0
      %v5943 = vadd.f32 0.0, %v5942
      %5944 = vdwg.mxu0
      %5945 = vmatpush.bf16.msra.mxu0 %v5211
      %5946 = vmatpush.bf16.msra.mxu0 %v5207
      %5947 = vmatpush.bf16.msra.mxu0 %v5203
      %5948 = vmatpush.bf16.msra.mxu0 %v5199
      %5949 = vmatpush.bf16.msra.mxu0 %v5195
      %5950 = vmatpush.bf16.msra.mxu0 %v5191
      %5951 = vmatpush.bf16.msra.mxu0 %v5187
      %5952 = vmatpush.bf16.msra.mxu0 %v5183
      %5953 = vmatmul.bf16.gmra.mxu0 %v4380
      %v5954 = vpop.f32.mrf.mxu0
      %v5955 = vadd.f32 %v5921, %v5954
      %v5956 = vpop.f32.mrf.mxu0
      %v5957 = vadd.f32 %v5923, %v5956
      %5958 = vmatmul.bf16.gmra.mxu0 %v4388
      %v5959 = vpop.f32.mrf.mxu0
      %v5960 = vadd.f32 %v5926, %v5959
      %v5961 = vpop.f32.mrf.mxu0
      %v5962 = vadd.f32 %v5928, %v5961
      %5963 = vmatmul.bf16.gmra.mxu0 %v4396
      %v5964 = vpop.f32.mrf.mxu0
      %v5965 = vadd.f32 %v5931, %v5964
      %v5966 = vpop.f32.mrf.mxu0
      %v5967 = vadd.f32 %v5933, %v5966
      %5968 = vmatmul.bf16.gmra.mxu0 %v4404
      %v5969 = vpop.f32.mrf.mxu0
      %v5970 = vadd.f32 %v5936, %v5969
      %v5971 = vpop.f32.mrf.mxu0
      %v5972 = vadd.f32 %v5938, %v5971
      %5973 = vmatmul.bf16.gmra.mxu0 %v4412
      %v5974 = vpop.f32.mrf.mxu0
      %v5975 = vadd.f32 %v5941, %v5974
      %v5976 = vpop.f32.mrf.mxu0
      %v5977 = vadd.f32 %v5943, %v5976
      %5978 = vdwg.mxu0
      %5979 = vmatpush.bf16.msra.mxu0 %v5243
      %5980 = vmatpush.bf16.msra.mxu0 %v5239
      %5981 = vmatpush.bf16.msra.mxu0 %v5235
      %5982 = vmatpush.bf16.msra.mxu0 %v5231
      %5983 = vmatpush.bf16.msra.mxu0 %v5227
      %5984 = vmatpush.bf16.msra.mxu0 %v5223
      %5985 = vmatpush.bf16.msra.mxu0 %v5219
      %5986 = vmatpush.bf16.msra.mxu0 %v5215
      %5987 = vmatmul.bf16.gmra.mxu0 %v4381
      %v5988 = vpop.f32.mrf.mxu0
      %v5989 = vadd.f32 %v5955, %v5988
      %v5990 = vpop.f32.mrf.mxu0
      %v5991 = vadd.f32 %v5957, %v5990
      %5992 = vmatmul.bf16.gmra.mxu0 %v4389
      %v5993 = vpop.f32.mrf.mxu0
      %v5994 = vadd.f32 %v5960, %v5993
      %v5995 = vpop.f32.mrf.mxu0
      %v5996 = vadd.f32 %v5962, %v5995
      %5997 = vmatmul.bf16.gmra.mxu0 %v4397
      %v5998 = vpop.f32.mrf.mxu0
      %v5999 = vadd.f32 %v5965, %v5998
      %v6000 = vpop.f32.mrf.mxu0
      %v6001 = vadd.f32 %v5967, %v6000
      %6002 = vmatmul.bf16.gmra.mxu0 %v4405
      %v6003 = vpop.f32.mrf.mxu0
      %v6004 = vadd.f32 %v5970, %v6003
      %v6005 = vpop.f32.mrf.mxu0
      %v6006 = vadd.f32 %v5972, %v6005
      %6007 = vmatmul.bf16.gmra.mxu0 %v4413
      %v6008 = vpop.f32.mrf.mxu0
      %v6009 = vadd.f32 %v5975, %v6008
      %v6010 = vpop.f32.mrf.mxu0
      %v6011 = vadd.f32 %v5977, %v6010
      %6012 = vdwg.mxu0
      %6013 = vmatpush.bf16.msra.mxu0 %v5275
      %6014 = vmatpush.bf16.msra.mxu0 %v5271
      %6015 = vmatpush.bf16.msra.mxu0 %v5267
      %6016 = vmatpush.bf16.msra.mxu0 %v5263
      %6017 = vmatpush.bf16.msra.mxu0 %v5259
      %6018 = vmatpush.bf16.msra.mxu0 %v5255
      %6019 = vmatpush.bf16.msra.mxu0 %v5251
      %6020 = vmatpush.bf16.msra.mxu0 %v5247
      %6021 = vmatmul.bf16.gmra.mxu0 %v4382
      %v6022 = vpop.f32.mrf.mxu0
      %v6023 = vadd.f32 %v5989, %v6022
      %v6024 = vpop.f32.mrf.mxu0
      %v6025 = vadd.f32 %v5991, %v6024
      %6026 = vmatmul.bf16.gmra.mxu0 %v4390
      %v6027 = vpop.f32.mrf.mxu0
      %v6028 = vadd.f32 %v5994, %v6027
      %v6029 = vpop.f32.mrf.mxu0
      %v6030 = vadd.f32 %v5996, %v6029
      %6031 = vmatmul.bf16.gmra.mxu0 %v4398
      %v6032 = vpop.f32.mrf.mxu0
      %v6033 = vadd.f32 %v5999, %v6032
      %v6034 = vpop.f32.mrf.mxu0
      %v6035 = vadd.f32 %v6001, %v6034
      %6036 = vmatmul.bf16.gmra.mxu0 %v4406
      %v6037 = vpop.f32.mrf.mxu0
      %v6038 = vadd.f32 %v6004, %v6037
      %v6039 = vpop.f32.mrf.mxu0
      %v6040 = vadd.f32 %v6006, %v6039
      %6041 = vmatmul.bf16.gmra.mxu0 %v4414
      %v6042 = vpop.f32.mrf.mxu0
      %v6043 = vadd.f32 %v6009, %v6042
      %v6044 = vpop.f32.mrf.mxu0
      %v6045 = vadd.f32 %v6011, %v6044
      %6046 = vdwg.mxu0
      %6047 = vmatpush.bf16.msra.mxu0 %v5307
      %6048 = vmatpush.bf16.msra.mxu0 %v5303
      %6049 = vmatpush.bf16.msra.mxu0 %v5299
      %6050 = vmatpush.bf16.msra.mxu0 %v5295
      %6051 = vmatpush.bf16.msra.mxu0 %v5291
      %6052 = vmatpush.bf16.msra.mxu0 %v5287
      %6053 = vmatpush.bf16.msra.mxu0 %v5283
      %6054 = vmatpush.bf16.msra.mxu0 %v5279
      %6055 = vmatmul.bf16.gmra.mxu0 %v4383
      %v6056 = vpop.f32.mrf.mxu0
      %v6057 = vadd.f32 %v6023, %v6056
      %v6058 = vpop.f32.mrf.mxu0
      %v6059 = vadd.f32 %v6025, %v6058
      %6060 = vmatmul.bf16.gmra.mxu0 %v4391
      %v6061 = vpop.f32.mrf.mxu0
      %v6062 = vadd.f32 %v6028, %v6061
      %v6063 = vpop.f32.mrf.mxu0
      %v6064 = vadd.f32 %v6030, %v6063
      %6065 = vmatmul.bf16.gmra.mxu0 %v4399
      %v6066 = vpop.f32.mrf.mxu0
      %v6067 = vadd.f32 %v6033, %v6066
      %v6068 = vpop.f32.mrf.mxu0
      %v6069 = vadd.f32 %v6035, %v6068
      %6070 = vmatmul.bf16.gmra.mxu0 %v4407
      %v6071 = vpop.f32.mrf.mxu0
      %v6072 = vadd.f32 %v6038, %v6071
      %v6073 = vpop.f32.mrf.mxu0
      %v6074 = vadd.f32 %v6040, %v6073
      %6075 = vmatmul.bf16.gmra.mxu0 %v4415
      %v6076 = vpop.f32.mrf.mxu0
      %v6077 = vadd.f32 %v6043, %v6076
      %v6078 = vpop.f32.mrf.mxu0
      %v6079 = vadd.f32 %v6045, %v6078
      %6080 = vdwg.mxu0
      %6081 = vmatpush.bf16.msra.mxu0 %v5339
      %6082 = vmatpush.bf16.msra.mxu0 %v5335
      %6083 = vmatpush.bf16.msra.mxu0 %v5331
      %6084 = vmatpush.bf16.msra.mxu0 %v5327
      %6085 = vmatpush.bf16.msra.mxu0 %v5323
      %6086 = vmatpush.bf16.msra.mxu0 %v5319
      %6087 = vmatpush.bf16.msra.mxu0 %v5315
      %6088 = vmatpush.bf16.msra.mxu0 %v5311
      %6089 = vmatmul.bf16.gmra.mxu0 %v4384
      %v6090 = vpop.f32.mrf.mxu0
      %v6091 = vadd.f32 %v6057, %v6090
      %v6092 = vpop.f32.mrf.mxu0
      %v6093 = vadd.f32 %v6059, %v6092
      %6094 = vmatmul.bf16.gmra.mxu0 %v4392
      %v6095 = vpop.f32.mrf.mxu0
      %v6096 = vadd.f32 %v6062, %v6095
      %v6097 = vpop.f32.mrf.mxu0
      %v6098 = vadd.f32 %v6064, %v6097
      %6099 = vmatmul.bf16.gmra.mxu0 %v4400
      %v6100 = vpop.f32.mrf.mxu0
      %v6101 = vadd.f32 %v6067, %v6100
      %v6102 = vpop.f32.mrf.mxu0
      %v6103 = vadd.f32 %v6069, %v6102
      %6104 = vmatmul.bf16.gmra.mxu0 %v4408
      %v6105 = vpop.f32.mrf.mxu0
      %v6106 = vadd.f32 %v6072, %v6105
      %v6107 = vpop.f32.mrf.mxu0
      %v6108 = vadd.f32 %v6074, %v6107
      %6109 = vmatmul.bf16.gmra.mxu0 %v4416
      %v6110 = vpop.f32.mrf.mxu0
      %v6111 = vadd.f32 %v6077, %v6110
      %v6112 = vpop.f32.mrf.mxu0
      %v6113 = vadd.f32 %v6079, %v6112
      %6114 = vdwg.mxu0
      %6115 = vmatpush.bf16.msra.mxu0 %v5371
      %6116 = vmatpush.bf16.msra.mxu0 %v5367
      %6117 = vmatpush.bf16.msra.mxu0 %v5363
      %6118 = vmatpush.bf16.msra.mxu0 %v5359
      %6119 = vmatpush.bf16.msra.mxu0 %v5355
      %6120 = vmatpush.bf16.msra.mxu0 %v5351
      %6121 = vmatpush.bf16.msra.mxu0 %v5347
      %6122 = vmatpush.bf16.msra.mxu0 %v5343
      %6123 = vmatmul.bf16.gmra.mxu0 %v4385
      %v6124 = vpop.f32.mrf.mxu0
      %v6125 = vadd.f32 %v6091, %v6124
      %v6126 = vpop.f32.mrf.mxu0
      %v6127 = vadd.f32 %v6093, %v6126
      %6128 = vmatmul.bf16.gmra.mxu0 %v4393
      %v6129 = vpop.f32.mrf.mxu0
      %v6130 = vadd.f32 %v6096, %v6129
      %v6131 = vpop.f32.mrf.mxu0
      %v6132 = vadd.f32 %v6098, %v6131
      %6133 = vmatmul.bf16.gmra.mxu0 %v4401
      %v6134 = vpop.f32.mrf.mxu0
      %v6135 = vadd.f32 %v6101, %v6134
      %v6136 = vpop.f32.mrf.mxu0
      %v6137 = vadd.f32 %v6103, %v6136
      %6138 = vmatmul.bf16.gmra.mxu0 %v4409
      %v6139 = vpop.f32.mrf.mxu0
      %v6140 = vadd.f32 %v6106, %v6139
      %v6141 = vpop.f32.mrf.mxu0
      %v6142 = vadd.f32 %v6108, %v6141
      %6143 = vmatmul.bf16.gmra.mxu0 %v4417
      %v6144 = vpop.f32.mrf.mxu0
      %v6145 = vadd.f32 %v6111, %v6144
      %v6146 = vpop.f32.mrf.mxu0
      %v6147 = vadd.f32 %v6113, %v6146
      %6148 = vdwg.mxu0
      %6149 = vmatpush.bf16.msra.mxu0 0
      %6150 = vmatpush.bf16.msra.mxu0 0
      %6151 = vmatpush.bf16.msra.mxu0 0
      %6152 = vmatpush.bf16.msra.mxu0 0
      %6153 = vmatpush.bf16.msra.mxu0 0
      %6154 = vmatpush.bf16.msra.mxu0 0
      %6155 = vmatpush.bf16.msra.mxu0 %v5631
      %6156 = vmatpush.bf16.msra.mxu0 %v5375
      %6157 = vmatmul.bf16.gmra.mxu0 %v5612
      %v6158 = vpop.f32.mrf.mxu0
      %v6159 = vadd.f32 %v6125, %v6158
      %v6160 = vpop.f32.mrf.mxu0
      %v6161 = vadd.f32 %v6127, %v6160
      %6162 = vmatmul.bf16.gmra.mxu0 %v5615
      %v6163 = vpop.f32.mrf.mxu0
      %v6164 = vadd.f32 %v6130, %v6163
      %v6165 = vpop.f32.mrf.mxu0
      %v6166 = vadd.f32 %v6132, %v6165
      %6167 = vmatmul.bf16.gmra.mxu0 %v5618
      %v6168 = vpop.f32.mrf.mxu0
      %v6169 = vadd.f32 %v6135, %v6168
      %v6170 = vpop.f32.mrf.mxu0
      %v6171 = vadd.f32 %v6137, %v6170
      %6172 = vmatmul.bf16.gmra.mxu0 %v5621
      %v6173 = vpop.f32.mrf.mxu0
      %v6174 = vadd.f32 %v6140, %v6173
      %v6175 = vpop.f32.mrf.mxu0
      %v6176 = vadd.f32 %v6142, %v6175
      %6177 = vmatmul.bf16.gmra.mxu0 %v5624
      %v6178 = vpop.f32.mrf.mxu0
      %v6179 = vadd.f32 %v6145, %v6178
      %v6180 = vpop.f32.mrf.mxu0
      %v6181 = vadd.f32 %v6147, %v6180
      %6182 = vdwg.mxu0
      %6183 = vmatpush.bf16.msra.mxu0 %v5180
      %6184 = vmatpush.bf16.msra.mxu0 %v5176
      %6185 = vmatpush.bf16.msra.mxu0 %v5172
      %6186 = vmatpush.bf16.msra.mxu0 %v5168
      %6187 = vmatpush.bf16.msra.mxu0 %v5164
      %6188 = vmatpush.bf16.msra.mxu0 %v5160
      %6189 = vmatpush.bf16.msra.mxu0 %v5156
      %6190 = vmatpush.bf16.msra.mxu0 %v5152
      %6191 = vmatmul.bf16.gmra.mxu0 %v4379
      %v6192 = vpop.f32.mrf.mxu0
      %v6193 = vadd.f32 0.0, %v6192
      %v6194 = vpop.f32.mrf.mxu0
      %v6195 = vadd.f32 0.0, %v6194
      %6196 = vmatmul.bf16.gmra.mxu0 %v4387
      %v6197 = vpop.f32.mrf.mxu0
      %v6198 = vadd.f32 0.0, %v6197
      %v6199 = vpop.f32.mrf.mxu0
      %v6200 = vadd.f32 0.0, %v6199
      %6201 = vmatmul.bf16.gmra.mxu0 %v4395
      %v6202 = vpop.f32.mrf.mxu0
      %v6203 = vadd.f32 0.0, %v6202
      %v6204 = vpop.f32.mrf.mxu0
      %v6205 = vadd.f32 0.0, %v6204
      %6206 = vmatmul.bf16.gmra.mxu0 %v4403
      %v6207 = vpop.f32.mrf.mxu0
      %v6208 = vadd.f32 0.0, %v6207
      %v6209 = vpop.f32.mrf.mxu0
      %v6210 = vadd.f32 0.0, %v6209
      %6211 = vmatmul.bf16.gmra.mxu0 %v4411
      %v6212 = vpop.f32.mrf.mxu0
      %v6213 = vadd.f32 0.0, %v6212
      %v6214 = vpop.f32.mrf.mxu0
      %v6215 = vadd.f32 0.0, %v6214
      %6216 = vdwg.mxu0
      %6217 = vmatpush.bf16.msra.mxu0 %v5212
      %6218 = vmatpush.bf16.msra.mxu0 %v5208
      %6219 = vmatpush.bf16.msra.mxu0 %v5204
      %6220 = vmatpush.bf16.msra.mxu0 %v5200
      %6221 = vmatpush.bf16.msra.mxu0 %v5196
      %6222 = vmatpush.bf16.msra.mxu0 %v5192
      %6223 = vmatpush.bf16.msra.mxu0 %v5188
      %6224 = vmatpush.bf16.msra.mxu0 %v5184
      %6225 = vmatmul.bf16.gmra.mxu0 %v4380
      %v6226 = vpop.f32.mrf.mxu0
      %v6227 = vadd.f32 %v6193, %v6226
      %v6228 = vpop.f32.mrf.mxu0
      %v6229 = vadd.f32 %v6195, %v6228
      %6230 = vmatmul.bf16.gmra.mxu0 %v4388
      %v6231 = vpop.f32.mrf.mxu0
      %v6232 = vadd.f32 %v6198, %v6231
      %v6233 = vpop.f32.mrf.mxu0
      %v6234 = vadd.f32 %v6200, %v6233
      %6235 = vmatmul.bf16.gmra.mxu0 %v4396
      %v6236 = vpop.f32.mrf.mxu0
      %v6237 = vadd.f32 %v6203, %v6236
      %v6238 = vpop.f32.mrf.mxu0
      %v6239 = vadd.f32 %v6205, %v6238
      %6240 = vmatmul.bf16.gmra.mxu0 %v4404
      %v6241 = vpop.f32.mrf.mxu0
      %v6242 = vadd.f32 %v6208, %v6241
      %v6243 = vpop.f32.mrf.mxu0
      %v6244 = vadd.f32 %v6210, %v6243
      %6245 = vmatmul.bf16.gmra.mxu0 %v4412
      %v6246 = vpop.f32.mrf.mxu0
      %v6247 = vadd.f32 %v6213, %v6246
      %v6248 = vpop.f32.mrf.mxu0
      %v6249 = vadd.f32 %v6215, %v6248
      %6250 = vdwg.mxu0
      %6251 = vmatpush.bf16.msra.mxu0 %v5244
      %6252 = vmatpush.bf16.msra.mxu0 %v5240
      %6253 = vmatpush.bf16.msra.mxu0 %v5236
      %6254 = vmatpush.bf16.msra.mxu0 %v5232
      %6255 = vmatpush.bf16.msra.mxu0 %v5228
      %6256 = vmatpush.bf16.msra.mxu0 %v5224
      %6257 = vmatpush.bf16.msra.mxu0 %v5220
      %6258 = vmatpush.bf16.msra.mxu0 %v5216
      %6259 = vmatmul.bf16.gmra.mxu0 %v4381
      %v6260 = vpop.f32.mrf.mxu0
      %v6261 = vadd.f32 %v6227, %v6260
      %v6262 = vpop.f32.mrf.mxu0
      %v6263 = vadd.f32 %v6229, %v6262
      %6264 = vmatmul.bf16.gmra.mxu0 %v4389
      %v6265 = vpop.f32.mrf.mxu0
      %v6266 = vadd.f32 %v6232, %v6265
      %v6267 = vpop.f32.mrf.mxu0
      %v6268 = vadd.f32 %v6234, %v6267
      %6269 = vmatmul.bf16.gmra.mxu0 %v4397
      %v6270 = vpop.f32.mrf.mxu0
      %v6271 = vadd.f32 %v6237, %v6270
      %v6272 = vpop.f32.mrf.mxu0
      %v6273 = vadd.f32 %v6239, %v6272
      %6274 = vmatmul.bf16.gmra.mxu0 %v4405
      %v6275 = vpop.f32.mrf.mxu0
      %v6276 = vadd.f32 %v6242, %v6275
      %v6277 = vpop.f32.mrf.mxu0
      %v6278 = vadd.f32 %v6244, %v6277
      %6279 = vmatmul.bf16.gmra.mxu0 %v4413
      %v6280 = vpop.f32.mrf.mxu0
      %v6281 = vadd.f32 %v6247, %v6280
      %v6282 = vpop.f32.mrf.mxu0
      %v6283 = vadd.f32 %v6249, %v6282
      %6284 = vdwg.mxu0
      %6285 = vmatpush.bf16.msra.mxu0 %v5276
      %6286 = vmatpush.bf16.msra.mxu0 %v5272
      %6287 = vmatpush.bf16.msra.mxu0 %v5268
      %6288 = vmatpush.bf16.msra.mxu0 %v5264
      %6289 = vmatpush.bf16.msra.mxu0 %v5260
      %6290 = vmatpush.bf16.msra.mxu0 %v5256
      %6291 = vmatpush.bf16.msra.mxu0 %v5252
      %6292 = vmatpush.bf16.msra.mxu0 %v5248
      %6293 = vmatmul.bf16.gmra.mxu0 %v4382
      %v6294 = vpop.f32.mrf.mxu0
      %v6295 = vadd.f32 %v6261, %v6294
      %v6296 = vpop.f32.mrf.mxu0
      %v6297 = vadd.f32 %v6263, %v6296
      %6298 = vmatmul.bf16.gmra.mxu0 %v4390
      %v6299 = vpop.f32.mrf.mxu0
      %v6300 = vadd.f32 %v6266, %v6299
      %v6301 = vpop.f32.mrf.mxu0
      %v6302 = vadd.f32 %v6268, %v6301
      %6303 = vmatmul.bf16.gmra.mxu0 %v4398
      %v6304 = vpop.f32.mrf.mxu0
      %v6305 = vadd.f32 %v6271, %v6304
      %v6306 = vpop.f32.mrf.mxu0
      %v6307 = vadd.f32 %v6273, %v6306
      %6308 = vmatmul.bf16.gmra.mxu0 %v4406
      %v6309 = vpop.f32.mrf.mxu0
      %v6310 = vadd.f32 %v6276, %v6309
      %v6311 = vpop.f32.mrf.mxu0
      %v6312 = vadd.f32 %v6278, %v6311
      %6313 = vmatmul.bf16.gmra.mxu0 %v4414
      %v6314 = vpop.f32.mrf.mxu0
      %v6315 = vadd.f32 %v6281, %v6314
      %v6316 = vpop.f32.mrf.mxu0
      %v6317 = vadd.f32 %v6283, %v6316
      %6318 = vdwg.mxu0
      %6319 = vmatpush.bf16.msra.mxu0 %v5308
      %6320 = vmatpush.bf16.msra.mxu0 %v5304
      %6321 = vmatpush.bf16.msra.mxu0 %v5300
      %6322 = vmatpush.bf16.msra.mxu0 %v5296
      %6323 = vmatpush.bf16.msra.mxu0 %v5292
      %6324 = vmatpush.bf16.msra.mxu0 %v5288
      %6325 = vmatpush.bf16.msra.mxu0 %v5284
      %6326 = vmatpush.bf16.msra.mxu0 %v5280
      %6327 = vmatmul.bf16.gmra.mxu0 %v4383
      %v6328 = vpop.f32.mrf.mxu0
      %v6329 = vadd.f32 %v6295, %v6328
      %v6330 = vpop.f32.mrf.mxu0
      %v6331 = vadd.f32 %v6297, %v6330
      %6332 = vmatmul.bf16.gmra.mxu0 %v4391
      %v6333 = vpop.f32.mrf.mxu0
      %v6334 = vadd.f32 %v6300, %v6333
      %v6335 = vpop.f32.mrf.mxu0
      %v6336 = vadd.f32 %v6302, %v6335
      %6337 = vmatmul.bf16.gmra.mxu0 %v4399
      %v6338 = vpop.f32.mrf.mxu0
      %v6339 = vadd.f32 %v6305, %v6338
      %v6340 = vpop.f32.mrf.mxu0
      %v6341 = vadd.f32 %v6307, %v6340
      %6342 = vmatmul.bf16.gmra.mxu0 %v4407
      %v6343 = vpop.f32.mrf.mxu0
      %v6344 = vadd.f32 %v6310, %v6343
      %v6345 = vpop.f32.mrf.mxu0
      %v6346 = vadd.f32 %v6312, %v6345
      %6347 = vmatmul.bf16.gmra.mxu0 %v4415
      %v6348 = vpop.f32.mrf.mxu0
      %v6349 = vadd.f32 %v6315, %v6348
      %v6350 = vpop.f32.mrf.mxu0
      %v6351 = vadd.f32 %v6317, %v6350
      %6352 = vdwg.mxu0
      %6353 = vmatpush.bf16.msra.mxu0 %v5340
      %6354 = vmatpush.bf16.msra.mxu0 %v5336
      %6355 = vmatpush.bf16.msra.mxu0 %v5332
      %6356 = vmatpush.bf16.msra.mxu0 %v5328
      %6357 = vmatpush.bf16.msra.mxu0 %v5324
      %6358 = vmatpush.bf16.msra.mxu0 %v5320
      %6359 = vmatpush.bf16.msra.mxu0 %v5316
      %6360 = vmatpush.bf16.msra.mxu0 %v5312
      %6361 = vmatmul.bf16.gmra.mxu0 %v4384
      %v6362 = vpop.f32.mrf.mxu0
      %v6363 = vadd.f32 %v6329, %v6362
      %v6364 = vpop.f32.mrf.mxu0
      %v6365 = vadd.f32 %v6331, %v6364
      %6366 = vmatmul.bf16.gmra.mxu0 %v4392
      %v6367 = vpop.f32.mrf.mxu0
      %v6368 = vadd.f32 %v6334, %v6367
      %v6369 = vpop.f32.mrf.mxu0
      %v6370 = vadd.f32 %v6336, %v6369
      %6371 = vmatmul.bf16.gmra.mxu0 %v4400
      %v6372 = vpop.f32.mrf.mxu0
      %v6373 = vadd.f32 %v6339, %v6372
      %v6374 = vpop.f32.mrf.mxu0
      %v6375 = vadd.f32 %v6341, %v6374
      %6376 = vmatmul.bf16.gmra.mxu0 %v4408
      %v6377 = vpop.f32.mrf.mxu0
      %v6378 = vadd.f32 %v6344, %v6377
      %v6379 = vpop.f32.mrf.mxu0
      %v6380 = vadd.f32 %v6346, %v6379
      %6381 = vmatmul.bf16.gmra.mxu0 %v4416
      %v6382 = vpop.f32.mrf.mxu0
      %v6383 = vadd.f32 %v6349, %v6382
      %v6384 = vpop.f32.mrf.mxu0
      %v6385 = vadd.f32 %v6351, %v6384
      %6386 = vdwg.mxu0
      %6387 = vmatpush.bf16.msra.mxu0 %v5372
      %6388 = vmatpush.bf16.msra.mxu0 %v5368
      %6389 = vmatpush.bf16.msra.mxu0 %v5364
      %6390 = vmatpush.bf16.msra.mxu0 %v5360
      %6391 = vmatpush.bf16.msra.mxu0 %v5356
      %6392 = vmatpush.bf16.msra.mxu0 %v5352
      %6393 = vmatpush.bf16.msra.mxu0 %v5348
      %6394 = vmatpush.bf16.msra.mxu0 %v5344
      %6395 = vmatmul.bf16.gmra.mxu0 %v4385
      %v6396 = vpop.f32.mrf.mxu0
      %v6397 = vadd.f32 %v6363, %v6396
      %v6398 = vpop.f32.mrf.mxu0
      %v6399 = vadd.f32 %v6365, %v6398
      %6400 = vmatmul.bf16.gmra.mxu0 %v4393
      %v6401 = vpop.f32.mrf.mxu0
      %v6402 = vadd.f32 %v6368, %v6401
      %v6403 = vpop.f32.mrf.mxu0
      %v6404 = vadd.f32 %v6370, %v6403
      %6405 = vmatmul.bf16.gmra.mxu0 %v4401
      %v6406 = vpop.f32.mrf.mxu0
      %v6407 = vadd.f32 %v6373, %v6406
      %v6408 = vpop.f32.mrf.mxu0
      %v6409 = vadd.f32 %v6375, %v6408
      %6410 = vmatmul.bf16.gmra.mxu0 %v4409
      %v6411 = vpop.f32.mrf.mxu0
      %v6412 = vadd.f32 %v6378, %v6411
      %v6413 = vpop.f32.mrf.mxu0
      %v6414 = vadd.f32 %v6380, %v6413
      %6415 = vmatmul.bf16.gmra.mxu0 %v4417
      %v6416 = vpop.f32.mrf.mxu0
      %v6417 = vadd.f32 %v6383, %v6416
      %v6418 = vpop.f32.mrf.mxu0
      %v6419 = vadd.f32 %v6385, %v6418
      %6420 = vdwg.mxu0
      %6421 = vmatpush.bf16.msra.mxu0 0
      %6422 = vmatpush.bf16.msra.mxu0 0
      %6423 = vmatpush.bf16.msra.mxu0 0
      %6424 = vmatpush.bf16.msra.mxu0 0
      %6425 = vmatpush.bf16.msra.mxu0 0
      %6426 = vmatpush.bf16.msra.mxu0 0
      %6427 = vmatpush.bf16.msra.mxu0 %v5634
      %6428 = vmatpush.bf16.msra.mxu0 %v5376
      %6429 = vmatmul.bf16.gmra.mxu0 %v5612
      %v6430 = vpop.f32.mrf.mxu0
      %v6431 = vadd.f32 %v6397, %v6430
      %v6432 = vpop.f32.mrf.mxu0
      %v6433 = vadd.f32 %v6399, %v6432
      %6434 = vmatmul.bf16.gmra.mxu0 %v5615
      %v6435 = vpop.f32.mrf.mxu0
      %v6436 = vadd.f32 %v6402, %v6435
      %v6437 = vpop.f32.mrf.mxu0
      %v6438 = vadd.f32 %v6404, %v6437
      %6439 = vmatmul.bf16.gmra.mxu0 %v5618
      %v6440 = vpop.f32.mrf.mxu0
      %v6441 = vadd.f32 %v6407, %v6440
      %v6442 = vpop.f32.mrf.mxu0
      %v6443 = vadd.f32 %v6409, %v6442
      %6444 = vmatmul.bf16.gmra.mxu0 %v5621
      %v6445 = vpop.f32.mrf.mxu0
      %v6446 = vadd.f32 %v6412, %v6445
      %v6447 = vpop.f32.mrf.mxu0
      %v6448 = vadd.f32 %v6414, %v6447
      %6449 = vmatmul.bf16.gmra.mxu0 %v5624
      %v6450 = vpop.f32.mrf.mxu0
      %v6451 = vadd.f32 %v6417, %v6450
      %v6452 = vpop.f32.mrf.mxu0
      %v6453 = vadd.f32 %v6419, %v6452
      %6454 = vdwg.mxu0
      %6455 = vmatpush.bf16.msra.mxu0 %v5181
      %6456 = vmatpush.bf16.msra.mxu0 %v5177
      %6457 = vmatpush.bf16.msra.mxu0 %v5173
      %6458 = vmatpush.bf16.msra.mxu0 %v5169
      %6459 = vmatpush.bf16.msra.mxu0 %v5165
      %6460 = vmatpush.bf16.msra.mxu0 %v5161
      %6461 = vmatpush.bf16.msra.mxu0 %v5157
      %6462 = vmatpush.bf16.msra.mxu0 %v5153
      %6463 = vmatmul.bf16.gmra.mxu0 %v4379
      %v6464 = vpop.f32.mrf.mxu0
      %v6465 = vadd.f32 0.0, %v6464
      %v6466 = vpop.f32.mrf.mxu0
      %v6467 = vadd.f32 0.0, %v6466
      %6468 = vmatmul.bf16.gmra.mxu0 %v4387
      %v6469 = vpop.f32.mrf.mxu0
      %v6470 = vadd.f32 0.0, %v6469
      %v6471 = vpop.f32.mrf.mxu0
      %v6472 = vadd.f32 0.0, %v6471
      %6473 = vmatmul.bf16.gmra.mxu0 %v4395
      %v6474 = vpop.f32.mrf.mxu0
      %v6475 = vadd.f32 0.0, %v6474
      %v6476 = vpop.f32.mrf.mxu0
      %v6477 = vadd.f32 0.0, %v6476
      %6478 = vmatmul.bf16.gmra.mxu0 %v4403
      %v6479 = vpop.f32.mrf.mxu0
      %v6480 = vadd.f32 0.0, %v6479
      %v6481 = vpop.f32.mrf.mxu0
      %v6482 = vadd.f32 0.0, %v6481
      %6483 = vmatmul.bf16.gmra.mxu0 %v4411
      %v6484 = vpop.f32.mrf.mxu0
      %v6485 = vadd.f32 0.0, %v6484
      %v6486 = vpop.f32.mrf.mxu0
      %v6487 = vadd.f32 0.0, %v6486
      %6488 = vdwg.mxu0
      %6489 = vmatpush.bf16.msra.mxu0 %v5213
      %6490 = vmatpush.bf16.msra.mxu0 %v5209
      %6491 = vmatpush.bf16.msra.mxu0 %v5205
      %6492 = vmatpush.bf16.msra.mxu0 %v5201
      %6493 = vmatpush.bf16.msra.mxu0 %v5197
      %6494 = vmatpush.bf16.msra.mxu0 %v5193
      %6495 = vmatpush.bf16.msra.mxu0 %v5189
      %6496 = vmatpush.bf16.msra.mxu0 %v5185
      %6497 = vmatmul.bf16.gmra.mxu0 %v4380
      %v6498 = vpop.f32.mrf.mxu0
      %v6499 = vadd.f32 %v6465, %v6498
      %v6500 = vpop.f32.mrf.mxu0
      %v6501 = vadd.f32 %v6467, %v6500
      %6502 = vmatmul.bf16.gmra.mxu0 %v4388
      %v6503 = vpop.f32.mrf.mxu0
      %v6504 = vadd.f32 %v6470, %v6503
      %v6505 = vpop.f32.mrf.mxu0
      %v6506 = vadd.f32 %v6472, %v6505
      %6507 = vmatmul.bf16.gmra.mxu0 %v4396
      %v6508 = vpop.f32.mrf.mxu0
      %v6509 = vadd.f32 %v6475, %v6508
      %v6510 = vpop.f32.mrf.mxu0
      %v6511 = vadd.f32 %v6477, %v6510
      %6512 = vmatmul.bf16.gmra.mxu0 %v4404
      %v6513 = vpop.f32.mrf.mxu0
      %v6514 = vadd.f32 %v6480, %v6513
      %v6515 = vpop.f32.mrf.mxu0
      %v6516 = vadd.f32 %v6482, %v6515
      %6517 = vmatmul.bf16.gmra.mxu0 %v4412
      %v6518 = vpop.f32.mrf.mxu0
      %v6519 = vadd.f32 %v6485, %v6518
      %v6520 = vpop.f32.mrf.mxu0
      %v6521 = vadd.f32 %v6487, %v6520
      %6522 = vdwg.mxu0
      %6523 = vmatpush.bf16.msra.mxu0 %v5245
      %6524 = vmatpush.bf16.msra.mxu0 %v5241
      %6525 = vmatpush.bf16.msra.mxu0 %v5237
      %6526 = vmatpush.bf16.msra.mxu0 %v5233
      %6527 = vmatpush.bf16.msra.mxu0 %v5229
      %6528 = vmatpush.bf16.msra.mxu0 %v5225
      %6529 = vmatpush.bf16.msra.mxu0 %v5221
      %6530 = vmatpush.bf16.msra.mxu0 %v5217
      %6531 = vmatmul.bf16.gmra.mxu0 %v4381
      %v6532 = vpop.f32.mrf.mxu0
      %v6533 = vadd.f32 %v6499, %v6532
      %v6534 = vpop.f32.mrf.mxu0
      %v6535 = vadd.f32 %v6501, %v6534
      %6536 = vmatmul.bf16.gmra.mxu0 %v4389
      %v6537 = vpop.f32.mrf.mxu0
      %v6538 = vadd.f32 %v6504, %v6537
      %v6539 = vpop.f32.mrf.mxu0
      %v6540 = vadd.f32 %v6506, %v6539
      %6541 = vmatmul.bf16.gmra.mxu0 %v4397
      %v6542 = vpop.f32.mrf.mxu0
      %v6543 = vadd.f32 %v6509, %v6542
      %v6544 = vpop.f32.mrf.mxu0
      %v6545 = vadd.f32 %v6511, %v6544
      %6546 = vmatmul.bf16.gmra.mxu0 %v4405
      %v6547 = vpop.f32.mrf.mxu0
      %v6548 = vadd.f32 %v6514, %v6547
      %v6549 = vpop.f32.mrf.mxu0
      %v6550 = vadd.f32 %v6516, %v6549
      %6551 = vmatmul.bf16.gmra.mxu0 %v4413
      %v6552 = vpop.f32.mrf.mxu0
      %v6553 = vadd.f32 %v6519, %v6552
      %v6554 = vpop.f32.mrf.mxu0
      %v6555 = vadd.f32 %v6521, %v6554
      %6556 = vdwg.mxu0
      %6557 = vmatpush.bf16.msra.mxu0 %v5277
      %6558 = vmatpush.bf16.msra.mxu0 %v5273
      %6559 = vmatpush.bf16.msra.mxu0 %v5269
      %6560 = vmatpush.bf16.msra.mxu0 %v5265
      %6561 = vmatpush.bf16.msra.mxu0 %v5261
      %6562 = vmatpush.bf16.msra.mxu0 %v5257
      %6563 = vmatpush.bf16.msra.mxu0 %v5253
      %6564 = vmatpush.bf16.msra.mxu0 %v5249
      %6565 = vmatmul.bf16.gmra.mxu0 %v4382
      %v6566 = vpop.f32.mrf.mxu0
      %v6567 = vadd.f32 %v6533, %v6566
      %v6568 = vpop.f32.mrf.mxu0
      %v6569 = vadd.f32 %v6535, %v6568
      %6570 = vmatmul.bf16.gmra.mxu0 %v4390
      %v6571 = vpop.f32.mrf.mxu0
      %v6572 = vadd.f32 %v6538, %v6571
      %v6573 = vpop.f32.mrf.mxu0
      %v6574 = vadd.f32 %v6540, %v6573
      %6575 = vmatmul.bf16.gmra.mxu0 %v4398
      %v6576 = vpop.f32.mrf.mxu0
      %v6577 = vadd.f32 %v6543, %v6576
      %v6578 = vpop.f32.mrf.mxu0
      %v6579 = vadd.f32 %v6545, %v6578
      %6580 = vmatmul.bf16.gmra.mxu0 %v4406
      %v6581 = vpop.f32.mrf.mxu0
      %v6582 = vadd.f32 %v6548, %v6581
      %v6583 = vpop.f32.mrf.mxu0
      %v6584 = vadd.f32 %v6550, %v6583
      %6585 = vmatmul.bf16.gmra.mxu0 %v4414
      %v6586 = vpop.f32.mrf.mxu0
      %v6587 = vadd.f32 %v6553, %v6586
      %v6588 = vpop.f32.mrf.mxu0
      %v6589 = vadd.f32 %v6555, %v6588
      %6590 = vdwg.mxu0
      %6591 = vmatpush.bf16.msra.mxu0 %v5309
      %6592 = vmatpush.bf16.msra.mxu0 %v5305
      %6593 = vmatpush.bf16.msra.mxu0 %v5301
      %6594 = vmatpush.bf16.msra.mxu0 %v5297
      %6595 = vmatpush.bf16.msra.mxu0 %v5293
      %6596 = vmatpush.bf16.msra.mxu0 %v5289
      %6597 = vmatpush.bf16.msra.mxu0 %v5285
      %6598 = vmatpush.bf16.msra.mxu0 %v5281
      %6599 = vmatmul.bf16.gmra.mxu0 %v4383
      %v6600 = vpop.f32.mrf.mxu0
      %v6601 = vadd.f32 %v6567, %v6600
      %v6602 = vpop.f32.mrf.mxu0
      %v6603 = vadd.f32 %v6569, %v6602
      %6604 = vmatmul.bf16.gmra.mxu0 %v4391
      %v6605 = vpop.f32.mrf.mxu0
      %v6606 = vadd.f32 %v6572, %v6605
      %v6607 = vpop.f32.mrf.mxu0
      %v6608 = vadd.f32 %v6574, %v6607
      %6609 = vmatmul.bf16.gmra.mxu0 %v4399
      %v6610 = vpop.f32.mrf.mxu0
      %v6611 = vadd.f32 %v6577, %v6610
      %v6612 = vpop.f32.mrf.mxu0
      %v6613 = vadd.f32 %v6579, %v6612
      %6614 = vmatmul.bf16.gmra.mxu0 %v4407
      %v6615 = vpop.f32.mrf.mxu0
      %v6616 = vadd.f32 %v6582, %v6615
      %v6617 = vpop.f32.mrf.mxu0
      %v6618 = vadd.f32 %v6584, %v6617
      %6619 = vmatmul.bf16.gmra.mxu0 %v4415
      %v6620 = vpop.f32.mrf.mxu0
      %v6621 = vadd.f32 %v6587, %v6620
      %v6622 = vpop.f32.mrf.mxu0
      %v6623 = vadd.f32 %v6589, %v6622
      %6624 = vdwg.mxu0
      %6625 = vmatpush.bf16.msra.mxu0 %v5341
      %6626 = vmatpush.bf16.msra.mxu0 %v5337
      %6627 = vmatpush.bf16.msra.mxu0 %v5333
      %6628 = vmatpush.bf16.msra.mxu0 %v5329
      %6629 = vmatpush.bf16.msra.mxu0 %v5325
      %6630 = vmatpush.bf16.msra.mxu0 %v5321
      %6631 = vmatpush.bf16.msra.mxu0 %v5317
      %6632 = vmatpush.bf16.msra.mxu0 %v5313
      %6633 = vmatmul.bf16.gmra.mxu0 %v4384
      %v6634 = vpop.f32.mrf.mxu0
      %v6635 = vadd.f32 %v6601, %v6634
      %v6636 = vpop.f32.mrf.mxu0
      %v6637 = vadd.f32 %v6603, %v6636
      %6638 = vmatmul.bf16.gmra.mxu0 %v4392
      %v6639 = vpop.f32.mrf.mxu0
      %v6640 = vadd.f32 %v6606, %v6639
      %v6641 = vpop.f32.mrf.mxu0
      %v6642 = vadd.f32 %v6608, %v6641
      %6643 = vmatmul.bf16.gmra.mxu0 %v4400
      %v6644 = vpop.f32.mrf.mxu0
      %v6645 = vadd.f32 %v6611, %v6644
      %v6646 = vpop.f32.mrf.mxu0
      %v6647 = vadd.f32 %v6613, %v6646
      %6648 = vmatmul.bf16.gmra.mxu0 %v4408
      %v6649 = vpop.f32.mrf.mxu0
      %v6650 = vadd.f32 %v6616, %v6649
      %v6651 = vpop.f32.mrf.mxu0
      %v6652 = vadd.f32 %v6618, %v6651
      %6653 = vmatmul.bf16.gmra.mxu0 %v4416
      %v6654 = vpop.f32.mrf.mxu0
      %v6655 = vadd.f32 %v6621, %v6654
      %v6656 = vpop.f32.mrf.mxu0
      %v6657 = vadd.f32 %v6623, %v6656
      %6658 = vdwg.mxu0
      %6659 = vmatpush.bf16.msra.mxu0 %v5373
      %6660 = vmatpush.bf16.msra.mxu0 %v5369
      %6661 = vmatpush.bf16.msra.mxu0 %v5365
      %6662 = vmatpush.bf16.msra.mxu0 %v5361
      %6663 = vmatpush.bf16.msra.mxu0 %v5357
      %6664 = vmatpush.bf16.msra.mxu0 %v5353
      %6665 = vmatpush.bf16.msra.mxu0 %v5349
      %6666 = vmatpush.bf16.msra.mxu0 %v5345
      %6667 = vmatmul.bf16.gmra.mxu0 %v4385
      %v6668 = vpop.f32.mrf.mxu0
      %v6669 = vadd.f32 %v6635, %v6668
      %v6670 = vpop.f32.mrf.mxu0
      %v6671 = vadd.f32 %v6637, %v6670
      %6672 = vmatmul.bf16.gmra.mxu0 %v4393
      %v6673 = vpop.f32.mrf.mxu0
      %v6674 = vadd.f32 %v6640, %v6673
      %v6675 = vpop.f32.mrf.mxu0
      %v6676 = vadd.f32 %v6642, %v6675
      %6677 = vmatmul.bf16.gmra.mxu0 %v4401
      %v6678 = vpop.f32.mrf.mxu0
      %v6679 = vadd.f32 %v6645, %v6678
      %v6680 = vpop.f32.mrf.mxu0
      %v6681 = vadd.f32 %v6647, %v6680
      %6682 = vmatmul.bf16.gmra.mxu0 %v4409
      %v6683 = vpop.f32.mrf.mxu0
      %v6684 = vadd.f32 %v6650, %v6683
      %v6685 = vpop.f32.mrf.mxu0
      %v6686 = vadd.f32 %v6652, %v6685
      %6687 = vmatmul.bf16.gmra.mxu0 %v4417
      %v6688 = vpop.f32.mrf.mxu0
      %v6689 = vadd.f32 %v6655, %v6688
      %v6690 = vpop.f32.mrf.mxu0
      %v6691 = vadd.f32 %v6657, %v6690
      %6692 = vdwg.mxu0
      %6693 = vmatpush.bf16.msra.mxu0 0
      %6694 = vmatpush.bf16.msra.mxu0 0
      %6695 = vmatpush.bf16.msra.mxu0 0
      %6696 = vmatpush.bf16.msra.mxu0 0
      %6697 = vmatpush.bf16.msra.mxu0 0
      %6698 = vmatpush.bf16.msra.mxu0 0
      %6699 = vmatpush.bf16.msra.mxu0 %v5637
      %6700 = vmatpush.bf16.msra.mxu0 %v5377
      %6701 = vmatmul.bf16.gmra.mxu0 %v5612
      %v6702 = vpop.f32.mrf.mxu0
      %v6703 = vadd.f32 %v6669, %v6702
      %v6704 = vpop.f32.mrf.mxu0
      %v6705 = vadd.f32 %v6671, %v6704
      %6706 = vmatmul.bf16.gmra.mxu0 %v5615
      %v6707 = vpop.f32.mrf.mxu0
      %v6708 = vadd.f32 %v6674, %v6707
      %v6709 = vpop.f32.mrf.mxu0
      %v6710 = vadd.f32 %v6676, %v6709
      %6711 = vmatmul.bf16.gmra.mxu0 %v5618
      %v6712 = vpop.f32.mrf.mxu0
      %v6713 = vadd.f32 %v6679, %v6712
      %v6714 = vpop.f32.mrf.mxu0
      %v6715 = vadd.f32 %v6681, %v6714
      %6716 = vmatmul.bf16.gmra.mxu0 %v5621
      %v6717 = vpop.f32.mrf.mxu0
      %v6718 = vadd.f32 %v6684, %v6717
      %v6719 = vpop.f32.mrf.mxu0
      %v6720 = vadd.f32 %v6686, %v6719
      %6721 = vmatmul.bf16.gmra.mxu0 %v5624
      %v6722 = vpop.f32.mrf.mxu0
      %v6723 = vadd.f32 %v6689, %v6722
      %v6724 = vpop.f32.mrf.mxu0
      %v6725 = vadd.f32 %v6691, %v6724
      %6726 = vdwg.mxu0
      %v6767 = vunpack.c.l.b16 %v3674
      %v6768 = vunpack.c.h.b16 %v3674
      %v6769 = vunpack.c.l.b16 %v3675
      %v6770 = vunpack.c.h.b16 %v3675
      %v6771 = vunpack.c.l.b16 %v3676
      %v6772 = vunpack.c.h.b16 %v3676
      %v6773 = vunpack.c.l.b16 %v3677
      %v6774 = vunpack.c.h.b16 %v3677
      %v6775 = vunpack.c.l.b16 %v3678
      %v6776 = vunpack.c.h.b16 %v3678
      %v6777 = vunpack.c.l.b16 %v3679
      %v6778 = vunpack.c.h.b16 %v3679
      %v6779 = vunpack.c.l.b16 %v3680
      %v6780 = vunpack.c.h.b16 %v3680
      %v6781 = vunpack.c.l.b16 %v3681
      %v6782 = vunpack.c.h.b16 %v3681
      %v6783 = vunpack.c.l.b16 %v3682
      %v6784 = vunpack.c.h.b16 %v3682
      %v6785 = vunpack.c.l.b16 %v3683
      %v6786 = vunpack.c.h.b16 %v3683
      %v6787 = vunpack.c.l.b16 %v3684
      %v6788 = vunpack.c.h.b16 %v3684
      %v6789 = vunpack.c.l.b16 %v3685
      %v6790 = vunpack.c.h.b16 %v3685
      %v6791 = vunpack.c.l.b16 %v3686
      %v6792 = vunpack.c.h.b16 %v3686
      %v6793 = vunpack.c.l.b16 %v3687
      %v6794 = vunpack.c.h.b16 %v3687
      %v6795 = vunpack.c.l.b16 %v3688
      %v6796 = vunpack.c.h.b16 %v3688
      %v6797 = vunpack.c.l.b16 %v3689
      %v6798 = vunpack.c.h.b16 %v3689
      %v6799 = vunpack.c.l.b16 %v3690
      %v6800 = vunpack.c.h.b16 %v3690
      %v6801 = vunpack.c.l.b16 %v3691
      %v6802 = vunpack.c.h.b16 %v3691
      %v6803 = vunpack.c.l.b16 %v3692
      %v6804 = vunpack.c.h.b16 %v3692
      %v6805 = vunpack.c.l.b16 %v3693
      %v6806 = vunpack.c.h.b16 %v3693
      %v6807 = vunpack.c.l.b16 %v3694
      %v6808 = vunpack.c.h.b16 %v3694
      %v6809 = vunpack.c.l.b16 %v3695
      %v6810 = vunpack.c.h.b16 %v3695
      %v6811 = vunpack.c.l.b16 %v3696
      %v6812 = vunpack.c.h.b16 %v3696
      %v6813 = vunpack.c.l.b16 %v3697
      %v6814 = vunpack.c.h.b16 %v3697
      %v6815 = vunpack.c.l.b16 %v3698
      %v6816 = vunpack.c.h.b16 %v3698
      %v6817 = vunpack.c.l.b16 %v3699
      %v6818 = vunpack.c.h.b16 %v3699
      %v6819 = vunpack.c.l.b16 %v3700
      %v6820 = vunpack.c.h.b16 %v3700
      %v6821 = vunpack.c.l.b16 %v3701
      %v6822 = vunpack.c.h.b16 %v3701
      %v6823 = vunpack.c.l.b16 %v3702
      %v6824 = vunpack.c.h.b16 %v3702
      %v6825 = vunpack.c.l.b16 %v3703
      %v6826 = vunpack.c.h.b16 %v3703
      %v6827 = vunpack.c.l.b16 %v3704
      %v6828 = vunpack.c.h.b16 %v3704
      %v6829 = vunpack.c.l.b16 %v3705
      %v6830 = vunpack.c.h.b16 %v3705
      %v6831 = vunpack.c.l.b16 %v3706
      %v6832 = vunpack.c.h.b16 %v3706
      %v6833 = vunpack.c.l.b16 %v3707
      %v6834 = vunpack.c.h.b16 %v3707
      %v6835 = vunpack.c.l.b16 %v3708
      %v6836 = vunpack.c.h.b16 %v3708
      %v6837 = vunpack.c.l.b16 %v3709
      %v6838 = vunpack.c.h.b16 %v3709
      %v6839 = vunpack.c.l.b16 %v3710
      %v6840 = vunpack.c.h.b16 %v3710
      %v6841 = vunpack.c.l.b16 %v3711
      %v6842 = vunpack.c.h.b16 %v3711
      %v6843 = vunpack.c.l.b16 %v3712
      %v6844 = vunpack.c.h.b16 %v3712
      %v6845 = vunpack.c.l.b16 %v3713
      %v6846 = vunpack.c.h.b16 %v3713
      %v6847 = vpack.c.b16 %v6775, %v6767
      %v6848 = vpack.c.b16 %v6776, %v6768
      %v6849 = vpack.c.b16 %v6777, %v6769
      %v6850 = vpack.c.b16 %v6778, %v6770
      %v6851 = vpack.c.b16 %v6779, %v6771
      %v6852 = vpack.c.b16 %v6780, %v6772
      %v6853 = vpack.c.b16 %v6781, %v6773
      %v6854 = vpack.c.b16 %v6782, %v6774
      %v6855 = vpack.c.b16 %v6791, %v6783
      %v6856 = vpack.c.b16 %v6792, %v6784
      %v6857 = vpack.c.b16 %v6793, %v6785
      %v6858 = vpack.c.b16 %v6794, %v6786
      %v6859 = vpack.c.b16 %v6795, %v6787
      %v6860 = vpack.c.b16 %v6796, %v6788
      %v6861 = vpack.c.b16 %v6797, %v6789
      %v6862 = vpack.c.b16 %v6798, %v6790
      %v6863 = vpack.c.b16 %v6807, %v6799
      %v6864 = vpack.c.b16 %v6808, %v6800
      %v6865 = vpack.c.b16 %v6809, %v6801
      %v6866 = vpack.c.b16 %v6810, %v6802
      %v6867 = vpack.c.b16 %v6811, %v6803
      %v6868 = vpack.c.b16 %v6812, %v6804
      %v6869 = vpack.c.b16 %v6813, %v6805
      %v6870 = vpack.c.b16 %v6814, %v6806
      %v6871 = vpack.c.b16 %v6823, %v6815
      %v6872 = vpack.c.b16 %v6824, %v6816
      %v6873 = vpack.c.b16 %v6825, %v6817
      %v6874 = vpack.c.b16 %v6826, %v6818
      %v6875 = vpack.c.b16 %v6827, %v6819
      %v6876 = vpack.c.b16 %v6828, %v6820
      %v6877 = vpack.c.b16 %v6829, %v6821
      %v6878 = vpack.c.b16 %v6830, %v6822
      %v6879 = vpack.c.b16 %v6839, %v6831
      %v6880 = vpack.c.b16 %v6840, %v6832
      %v6881 = vpack.c.b16 %v6841, %v6833
      %v6882 = vpack.c.b16 %v6842, %v6834
      %v6883 = vpack.c.b16 %v6843, %v6835
      %v6884 = vpack.c.b16 %v6844, %v6836
      %v6885 = vpack.c.b16 %v6845, %v6837
      %v6886 = vpack.c.b16 %v6846, %v6838
      %v7154 = vunpack.c.l.b16 %v3794
      %v7155 = vunpack.c.h.b16 %v3794
      %v7156 = vunpack.c.l.b16 %v3795
      %v7157 = vunpack.c.h.b16 %v3795
      %v7158 = vunpack.c.l.b16 %v3796
      %v7159 = vunpack.c.h.b16 %v3796
      %v7160 = vunpack.c.l.b16 %v3797
      %v7161 = vunpack.c.h.b16 %v3797
      %v7162 = vunpack.c.l.b16 %v3798
      %v7163 = vunpack.c.h.b16 %v3798
      %v7164 = vunpack.c.l.b16 %v3799
      %v7165 = vunpack.c.h.b16 %v3799
      %v7166 = vunpack.c.l.b16 %v3800
      %v7167 = vunpack.c.h.b16 %v3800
      %v7168 = vunpack.c.l.b16 %v3801
      %v7169 = vunpack.c.h.b16 %v3801
      %v7170 = vunpack.c.l.b16 %v3802
      %v7171 = vunpack.c.h.b16 %v3802
      %v7172 = vunpack.c.l.b16 %v3803
      %v7173 = vunpack.c.h.b16 %v3803
      %v7174 = vunpack.c.l.b16 %v3804
      %v7175 = vunpack.c.h.b16 %v3804
      %v7176 = vunpack.c.l.b16 %v3805
      %v7177 = vunpack.c.h.b16 %v3805
      %v7178 = vunpack.c.l.b16 %v3806
      %v7179 = vunpack.c.h.b16 %v3806
      %v7180 = vunpack.c.l.b16 %v3807
      %v7181 = vunpack.c.h.b16 %v3807
      %v7182 = vunpack.c.l.b16 %v3808
      %v7183 = vunpack.c.h.b16 %v3808
      %v7184 = vunpack.c.l.b16 %v3809
      %v7185 = vunpack.c.h.b16 %v3809
      %v7186 = vunpack.c.l.b16 %v3810
      %v7187 = vunpack.c.h.b16 %v3810
      %v7188 = vunpack.c.l.b16 %v3811
      %v7189 = vunpack.c.h.b16 %v3811
      %v7190 = vunpack.c.l.b16 %v3812
      %v7191 = vunpack.c.h.b16 %v3812
      %v7192 = vunpack.c.l.b16 %v3813
      %v7193 = vunpack.c.h.b16 %v3813
      %v7194 = vunpack.c.l.b16 %v3814
      %v7195 = vunpack.c.h.b16 %v3814
      %v7196 = vunpack.c.l.b16 %v3815
      %v7197 = vunpack.c.h.b16 %v3815
      %v7198 = vunpack.c.l.b16 %v3816
      %v7199 = vunpack.c.h.b16 %v3816
      %v7200 = vunpack.c.l.b16 %v3817
      %v7201 = vunpack.c.h.b16 %v3817
      %v7202 = vunpack.c.l.b16 %v3818
      %v7203 = vunpack.c.h.b16 %v3818
      %v7204 = vunpack.c.l.b16 %v3819
      %v7205 = vunpack.c.h.b16 %v3819
      %v7206 = vunpack.c.l.b16 %v3820
      %v7207 = vunpack.c.h.b16 %v3820
      %v7208 = vunpack.c.l.b16 %v3821
      %v7209 = vunpack.c.h.b16 %v3821
      %v7210 = vunpack.c.l.b16 %v3822
      %v7211 = vunpack.c.h.b16 %v3822
      %v7212 = vunpack.c.l.b16 %v3823
      %v7213 = vunpack.c.h.b16 %v3823
      %v7214 = vunpack.c.l.b16 %v3824
      %v7215 = vunpack.c.h.b16 %v3824
      %v7216 = vunpack.c.l.b16 %v3825
      %v7217 = vunpack.c.h.b16 %v3825
      %v7218 = vunpack.c.l.b16 %v3826
      %v7219 = vunpack.c.h.b16 %v3826
      %v7220 = vunpack.c.l.b16 %v3827
      %v7221 = vunpack.c.h.b16 %v3827
      %v7222 = vunpack.c.l.b16 %v3828
      %v7223 = vunpack.c.h.b16 %v3828
      %v7224 = vunpack.c.l.b16 %v3829
      %v7225 = vunpack.c.h.b16 %v3829
      %v7226 = vunpack.c.l.b16 %v3830
      %v7227 = vunpack.c.h.b16 %v3830
      %v7228 = vunpack.c.l.b16 %v3831
      %v7229 = vunpack.c.h.b16 %v3831
      %v7230 = vunpack.c.l.b16 %v3832
      %v7231 = vunpack.c.h.b16 %v3832
      %v7232 = vunpack.c.l.b16 %v3833
      %v7233 = vunpack.c.h.b16 %v3833
      %v7234 = vunpack.c.l.b16 %v3834
      %v7235 = vunpack.c.h.b16 %v3834
      %v7236 = vunpack.c.l.b16 %v3835
      %v7237 = vunpack.c.h.b16 %v3835
      %v7238 = vunpack.c.l.b16 %v3836
      %v7239 = vunpack.c.h.b16 %v3836
      %v7240 = vunpack.c.l.b16 %v3837
      %v7241 = vunpack.c.h.b16 %v3837
      %v7242 = vunpack.c.l.b16 %v3838
      %v7243 = vunpack.c.h.b16 %v3838
      %v7244 = vunpack.c.l.b16 %v3839
      %v7245 = vunpack.c.h.b16 %v3839
      %v7246 = vunpack.c.l.b16 %v3840
      %v7247 = vunpack.c.h.b16 %v3840
      %v7248 = vunpack.c.l.b16 %v3841
      %v7249 = vunpack.c.h.b16 %v3841
      %v7250 = vunpack.c.l.b16 %v3842
      %v7251 = vunpack.c.h.b16 %v3842
      %v7252 = vunpack.c.l.b16 %v3843
      %v7253 = vunpack.c.h.b16 %v3843
      %v7254 = vunpack.c.l.b16 %v3844
      %v7255 = vunpack.c.h.b16 %v3844
      %v7256 = vunpack.c.l.b16 %v3845
      %v7257 = vunpack.c.h.b16 %v3845
      %v7258 = vunpack.c.l.b16 %v3846
      %v7259 = vunpack.c.h.b16 %v3846
      %v7260 = vunpack.c.l.b16 %v3847
      %v7261 = vunpack.c.h.b16 %v3847
      %v7262 = vunpack.c.l.b16 %v3848
      %v7263 = vunpack.c.h.b16 %v3848
      %v7264 = vunpack.c.l.b16 %v3849
      %v7265 = vunpack.c.h.b16 %v3849
      %v7266 = vunpack.c.l.b16 %v3850
      %v7267 = vunpack.c.h.b16 %v3850
      %v7268 = vunpack.c.l.b16 %v3851
      %v7269 = vunpack.c.h.b16 %v3851
      %v7270 = vunpack.c.l.b16 %v3852
      %v7271 = vunpack.c.h.b16 %v3852
      %v7272 = vunpack.c.l.b16 %v3853
      %v7273 = vunpack.c.h.b16 %v3853
      %v7274 = vunpack.c.l.b16 %v3854
      %v7275 = vunpack.c.h.b16 %v3854
      %v7276 = vunpack.c.l.b16 %v3855
      %v7277 = vunpack.c.h.b16 %v3855
      %v7278 = vunpack.c.l.b16 %v3856
      %v7279 = vunpack.c.h.b16 %v3856
      %v7280 = vunpack.c.l.b16 %v3857
      %v7281 = vunpack.c.h.b16 %v3857
      %v7282 = vunpack.c.l.b16 %v3858
      %v7283 = vunpack.c.h.b16 %v3858
      %v7284 = vunpack.c.l.b16 %v3859
      %v7285 = vunpack.c.h.b16 %v3859
      %v7286 = vunpack.c.l.b16 %v3860
      %v7287 = vunpack.c.h.b16 %v3860
      %v7288 = vunpack.c.l.b16 %v3861
      %v7289 = vunpack.c.h.b16 %v3861
      %v7290 = vunpack.c.l.b16 %v3862
      %v7291 = vunpack.c.h.b16 %v3862
      %v7292 = vunpack.c.l.b16 %v3863
      %v7293 = vunpack.c.h.b16 %v3863
      %v7294 = vunpack.c.l.b16 %v3864
      %v7295 = vunpack.c.h.b16 %v3864
      %v7296 = vunpack.c.l.b16 %v3865
      %v7297 = vunpack.c.h.b16 %v3865
      %v7298 = vunpack.c.l.b16 %v3866
      %v7299 = vunpack.c.h.b16 %v3866
      %v7300 = vunpack.c.l.b16 %v3867
      %v7301 = vunpack.c.h.b16 %v3867
      %v7302 = vunpack.c.l.b16 %v3868
      %v7303 = vunpack.c.h.b16 %v3868
      %v7304 = vunpack.c.l.b16 %v3869
      %v7305 = vunpack.c.h.b16 %v3869
      %v7306 = vunpack.c.l.b16 %v3870
      %v7307 = vunpack.c.h.b16 %v3870
      %v7308 = vunpack.c.l.b16 %v3871
      %v7309 = vunpack.c.h.b16 %v3871
      %v7310 = vunpack.c.l.b16 %v3872
      %v7311 = vunpack.c.h.b16 %v3872
      %v7312 = vunpack.c.l.b16 %v3873
      %v7313 = vunpack.c.h.b16 %v3873
      %v7314 = vunpack.c.l.b16 %v3874
      %v7315 = vunpack.c.h.b16 %v3874
      %v7316 = vunpack.c.l.b16 %v3875
      %v7317 = vunpack.c.h.b16 %v3875
      %v7318 = vunpack.c.l.b16 %v3876
      %v7319 = vunpack.c.h.b16 %v3876
      %v7320 = vunpack.c.l.b16 %v3877
      %v7321 = vunpack.c.h.b16 %v3877
      %v7322 = vunpack.c.l.b16 %v3878
      %v7323 = vunpack.c.h.b16 %v3878
      %v7324 = vunpack.c.l.b16 %v3879
      %v7325 = vunpack.c.h.b16 %v3879
      %v7326 = vunpack.c.l.b16 %v3880
      %v7327 = vunpack.c.h.b16 %v3880
      %v7328 = vunpack.c.l.b16 %v3881
      %v7329 = vunpack.c.h.b16 %v3881
      %v7330 = vunpack.c.l.b16 %v3882
      %v7331 = vunpack.c.h.b16 %v3882
      %v7332 = vunpack.c.l.b16 %v3883
      %v7333 = vunpack.c.h.b16 %v3883
      %v7334 = vunpack.c.l.b16 %v3884
      %v7335 = vunpack.c.h.b16 %v3884
      %v7336 = vunpack.c.l.b16 %v3885
      %v7337 = vunpack.c.h.b16 %v3885
      %v7338 = vunpack.c.l.b16 %v3886
      %v7339 = vunpack.c.h.b16 %v3886
      %v7340 = vunpack.c.l.b16 %v3887
      %v7341 = vunpack.c.h.b16 %v3887
      %v7342 = vunpack.c.l.b16 %v3888
      %v7343 = vunpack.c.h.b16 %v3888
      %v7344 = vunpack.c.l.b16 %v3889
      %v7345 = vunpack.c.h.b16 %v3889
      %v7346 = vunpack.c.l.b16 %v3890
      %v7347 = vunpack.c.h.b16 %v3890
      %v7348 = vunpack.c.l.b16 %v3891
      %v7349 = vunpack.c.h.b16 %v3891
      %v7350 = vunpack.c.l.b16 %v3892
      %v7351 = vunpack.c.h.b16 %v3892
      %v7352 = vunpack.c.l.b16 %v3893
      %v7353 = vunpack.c.h.b16 %v3893
      %v7354 = vunpack.c.l.b16 %v3894
      %v7355 = vunpack.c.h.b16 %v3894
      %v7356 = vunpack.c.l.b16 %v3895
      %v7357 = vunpack.c.h.b16 %v3895
      %v7358 = vunpack.c.l.b16 %v3896
      %v7359 = vunpack.c.h.b16 %v3896
      %v7360 = vunpack.c.l.b16 %v3897
      %v7361 = vunpack.c.h.b16 %v3897
      %v7362 = vunpack.c.l.b16 %v3898
      %v7363 = vunpack.c.h.b16 %v3898
      %v7364 = vunpack.c.l.b16 %v3899
      %v7365 = vunpack.c.h.b16 %v3899
      %v7366 = vunpack.c.l.b16 %v3900
      %v7367 = vunpack.c.h.b16 %v3900
      %v7368 = vunpack.c.l.b16 %v3901
      %v7369 = vunpack.c.h.b16 %v3901
      %v7370 = vunpack.c.l.b16 %v3902
      %v7371 = vunpack.c.h.b16 %v3902
      %v7372 = vunpack.c.l.b16 %v3903
      %v7373 = vunpack.c.h.b16 %v3903
      %v7374 = vunpack.c.l.b16 %v3904
      %v7375 = vunpack.c.h.b16 %v3904
      %v7376 = vunpack.c.l.b16 %v3905
      %v7377 = vunpack.c.h.b16 %v3905
      %v7378 = vunpack.c.l.b16 %v3906
      %v7379 = vunpack.c.h.b16 %v3906
      %v7380 = vunpack.c.l.b16 %v3907
      %v7381 = vunpack.c.h.b16 %v3907
      %v7382 = vunpack.c.l.b16 %v3908
      %v7383 = vunpack.c.h.b16 %v3908
      %v7384 = vunpack.c.l.b16 %v3909
      %v7385 = vunpack.c.h.b16 %v3909
      %v7386 = vunpack.c.l.b16 %v3910
      %v7387 = vunpack.c.h.b16 %v3910
      %v7388 = vunpack.c.l.b16 %v3911
      %v7389 = vunpack.c.h.b16 %v3911
      %v7390 = vunpack.c.l.b16 %v3912
      %v7391 = vunpack.c.h.b16 %v3912
      %v7392 = vunpack.c.l.b16 %v3913
      %v7393 = vunpack.c.h.b16 %v3913
      %v7394 = vunpack.c.l.b16 %v3914
      %v7395 = vunpack.c.h.b16 %v3914
      %v7396 = vunpack.c.l.b16 %v3915
      %v7397 = vunpack.c.h.b16 %v3915
      %v7398 = vunpack.c.l.b16 %v3916
      %v7399 = vunpack.c.h.b16 %v3916
      %v7400 = vunpack.c.l.b16 %v3917
      %v7401 = vunpack.c.h.b16 %v3917
      %v7402 = vunpack.c.l.b16 %v3918
      %v7403 = vunpack.c.h.b16 %v3918
      %v7404 = vunpack.c.l.b16 %v3919
      %v7405 = vunpack.c.h.b16 %v3919
      %v7406 = vunpack.c.l.b16 %v3920
      %v7407 = vunpack.c.h.b16 %v3920
      %v7408 = vunpack.c.l.b16 %v3921
      %v7409 = vunpack.c.h.b16 %v3921
      %v7410 = vunpack.c.l.b16 %v3922
      %v7411 = vunpack.c.h.b16 %v3922
      %v7412 = vunpack.c.l.b16 %v3923
      %v7413 = vunpack.c.h.b16 %v3923
      %v7414 = vunpack.c.l.b16 %v3924
      %v7415 = vunpack.c.h.b16 %v3924
      %v7416 = vunpack.c.l.b16 %v3925
      %v7417 = vunpack.c.h.b16 %v3925
      %v7418 = vunpack.c.l.b16 %v3926
      %v7419 = vunpack.c.h.b16 %v3926
      %v7420 = vunpack.c.l.b16 %v3927
      %v7421 = vunpack.c.h.b16 %v3927
      %v7422 = vunpack.c.l.b16 %v3928
      %v7423 = vunpack.c.h.b16 %v3928
      %v7424 = vunpack.c.l.b16 %v3929
      %v7425 = vunpack.c.h.b16 %v3929
      %v7426 = vunpack.c.l.b16 %v3930
      %v7427 = vunpack.c.h.b16 %v3930
      %v7428 = vunpack.c.l.b16 %v3931
      %v7429 = vunpack.c.h.b16 %v3931
      %v7430 = vunpack.c.l.b16 %v3932
      %v7431 = vunpack.c.h.b16 %v3932
      %v7432 = vunpack.c.l.b16 %v3933
      %v7433 = vunpack.c.h.b16 %v3933
      %v7434 = vunpack.c.l.b16 %v3934
      %v7435 = vunpack.c.h.b16 %v3934
      %v7436 = vunpack.c.l.b16 %v3935
      %v7437 = vunpack.c.h.b16 %v3935
      %v7438 = vunpack.c.l.b16 %v3936
      %v7439 = vunpack.c.h.b16 %v3936
      %v7440 = vunpack.c.l.b16 %v3937
      %v7441 = vunpack.c.h.b16 %v3937
      %v7442 = vunpack.c.l.b16 %v3938
      %v7443 = vunpack.c.h.b16 %v3938
      %v7444 = vunpack.c.l.b16 %v3939
      %v7445 = vunpack.c.h.b16 %v3939
      %v7446 = vunpack.c.l.b16 %v3940
      %v7447 = vunpack.c.h.b16 %v3940
      %v7448 = vunpack.c.l.b16 %v3941
      %v7449 = vunpack.c.h.b16 %v3941
      %v7450 = vunpack.c.l.b16 %v3942
      %v7451 = vunpack.c.h.b16 %v3942
      %v7452 = vunpack.c.l.b16 %v3943
      %v7453 = vunpack.c.h.b16 %v3943
      %v7454 = vunpack.c.l.b16 %v3944
      %v7455 = vunpack.c.h.b16 %v3944
      %v7456 = vunpack.c.l.b16 %v3945
      %v7457 = vunpack.c.h.b16 %v3945
      %v7458 = vunpack.c.l.b16 %v3946
      %v7459 = vunpack.c.h.b16 %v3946
      %v7460 = vunpack.c.l.b16 %v3947
      %v7461 = vunpack.c.h.b16 %v3947
      %v7462 = vunpack.c.l.b16 %v3948
      %v7463 = vunpack.c.h.b16 %v3948
      %v7464 = vunpack.c.l.b16 %v3949
      %v7465 = vunpack.c.h.b16 %v3949
      %v7466 = vunpack.c.l.b16 %v3950
      %v7467 = vunpack.c.h.b16 %v3950
      %v7468 = vunpack.c.l.b16 %v3951
      %v7469 = vunpack.c.h.b16 %v3951
      %v7470 = vunpack.c.l.b16 %v3952
      %v7471 = vunpack.c.h.b16 %v3952
      %v7472 = vunpack.c.l.b16 %v3953
      %v7473 = vunpack.c.h.b16 %v3953
      %v7474 = vunpack.c.l.b16 %v3954
      %v7475 = vunpack.c.h.b16 %v3954
      %v7476 = vunpack.c.l.b16 %v3955
      %v7477 = vunpack.c.h.b16 %v3955
      %v7478 = vunpack.c.l.b16 %v3956
      %v7479 = vunpack.c.h.b16 %v3956
      %v7480 = vunpack.c.l.b16 %v3957
      %v7481 = vunpack.c.h.b16 %v3957
      %v7482 = vunpack.c.l.b16 %v3958
      %v7483 = vunpack.c.h.b16 %v3958
      %v7484 = vunpack.c.l.b16 %v3959
      %v7485 = vunpack.c.h.b16 %v3959
      %v7486 = vunpack.c.l.b16 %v3960
      %v7487 = vunpack.c.h.b16 %v3960
      %v7488 = vunpack.c.l.b16 %v3961
      %v7489 = vunpack.c.h.b16 %v3961
      %v7490 = vunpack.c.l.b16 %v3962
      %v7491 = vunpack.c.h.b16 %v3962
      %v7492 = vunpack.c.l.b16 %v3963
      %v7493 = vunpack.c.h.b16 %v3963
      %v7494 = vunpack.c.l.b16 %v3964
      %v7495 = vunpack.c.h.b16 %v3964
      %v7496 = vunpack.c.l.b16 %v3965
      %v7497 = vunpack.c.h.b16 %v3965
      %v7498 = vunpack.c.l.b16 %v3966
      %v7499 = vunpack.c.h.b16 %v3966
      %v7500 = vunpack.c.l.b16 %v3967
      %v7501 = vunpack.c.h.b16 %v3967
      %v7502 = vunpack.c.l.b16 %v3968
      %v7503 = vunpack.c.h.b16 %v3968
      %v7504 = vunpack.c.l.b16 %v3969
      %v7505 = vunpack.c.h.b16 %v3969
      %v7506 = vunpack.c.l.b16 %v3970
      %v7507 = vunpack.c.h.b16 %v3970
      %v7508 = vunpack.c.l.b16 %v3971
      %v7509 = vunpack.c.h.b16 %v3971
      %v7510 = vunpack.c.l.b16 %v3972
      %v7511 = vunpack.c.h.b16 %v3972
      %v7512 = vunpack.c.l.b16 %v3973
      %v7513 = vunpack.c.h.b16 %v3973
      %v7514 = vunpack.c.l.b16 %v3974
      %v7515 = vunpack.c.h.b16 %v3974
      %v7516 = vunpack.c.l.b16 %v3975
      %v7517 = vunpack.c.h.b16 %v3975
      %v7518 = vunpack.c.l.b16 %v3976
      %v7519 = vunpack.c.h.b16 %v3976
      %v7520 = vunpack.c.l.b16 %v3977
      %v7521 = vunpack.c.h.b16 %v3977
      %v7522 = vunpack.c.l.b16 %v3978
      %v7523 = vunpack.c.h.b16 %v3978
      %v7524 = vunpack.c.l.b16 %v3979
      %v7525 = vunpack.c.h.b16 %v3979
      %v7526 = vunpack.c.l.b16 %v3980
      %v7527 = vunpack.c.h.b16 %v3980
      %v7528 = vunpack.c.l.b16 %v3981
      %v7529 = vunpack.c.h.b16 %v3981
      %v7530 = vunpack.c.l.b16 %v3982
      %v7531 = vunpack.c.h.b16 %v3982
      %v7532 = vunpack.c.l.b16 %v3983
      %v7533 = vunpack.c.h.b16 %v3983
      %v7534 = vunpack.c.l.b16 %v3984
      %v7535 = vunpack.c.h.b16 %v3984
      %v7536 = vunpack.c.l.b16 %v3985
      %v7537 = vunpack.c.h.b16 %v3985
      %v7538 = vunpack.c.l.b16 %v3986
      %v7539 = vunpack.c.h.b16 %v3986
      %v7540 = vunpack.c.l.b16 %v3987
      %v7541 = vunpack.c.h.b16 %v3987
      %v7542 = vunpack.c.l.b16 %v3988
      %v7543 = vunpack.c.h.b16 %v3988
      %v7544 = vunpack.c.l.b16 %v3989
      %v7545 = vunpack.c.h.b16 %v3989
      %v7546 = vunpack.c.l.b16 %v3990
      %v7547 = vunpack.c.h.b16 %v3990
      %v7548 = vunpack.c.l.b16 %v3991
      %v7549 = vunpack.c.h.b16 %v3991
      %v7550 = vunpack.c.l.b16 %v3992
      %v7551 = vunpack.c.h.b16 %v3992
      %v7552 = vunpack.c.l.b16 %v3993
      %v7553 = vunpack.c.h.b16 %v3993
      %v7554 = vunpack.c.l.b16 %v3994
      %v7555 = vunpack.c.h.b16 %v3994
      %v7556 = vunpack.c.l.b16 %v3995
      %v7557 = vunpack.c.h.b16 %v3995
      %v7558 = vunpack.c.l.b16 %v3996
      %v7559 = vunpack.c.h.b16 %v3996
      %v7560 = vunpack.c.l.b16 %v3997
      %v7561 = vunpack.c.h.b16 %v3997
      %v7562 = vunpack.c.l.b16 %v3998
      %v7563 = vunpack.c.h.b16 %v3998
      %v7564 = vunpack.c.l.b16 %v3999
      %v7565 = vunpack.c.h.b16 %v3999
      %v7566 = vunpack.c.l.b16 %v4000
      %v7567 = vunpack.c.h.b16 %v4000
      %v7568 = vunpack.c.l.b16 %v4001
      %v7569 = vunpack.c.h.b16 %v4001
      %v7570 = vunpack.c.l.b16 %v4002
      %v7571 = vunpack.c.h.b16 %v4002
      %v7572 = vunpack.c.l.b16 %v4003
      %v7573 = vunpack.c.h.b16 %v4003
      %v7574 = vunpack.c.l.b16 %v4004
      %v7575 = vunpack.c.h.b16 %v4004
      %v7576 = vunpack.c.l.b16 %v4005
      %v7577 = vunpack.c.h.b16 %v4005
      %v7578 = vunpack.c.l.b16 %v4006
      %v7579 = vunpack.c.h.b16 %v4006
      %v7580 = vunpack.c.l.b16 %v4007
      %v7581 = vunpack.c.h.b16 %v4007
      %v7582 = vunpack.c.l.b16 %v4008
      %v7583 = vunpack.c.h.b16 %v4008
      %v7584 = vunpack.c.l.b16 %v4009
      %v7585 = vunpack.c.h.b16 %v4009
      %v7586 = vunpack.c.l.b16 %v4010
      %v7587 = vunpack.c.h.b16 %v4010
      %v7588 = vunpack.c.l.b16 %v4011
      %v7589 = vunpack.c.h.b16 %v4011
      %v7590 = vunpack.c.l.b16 %v4012
      %v7591 = vunpack.c.h.b16 %v4012
      %v7592 = vunpack.c.l.b16 %v4013
      %v7593 = vunpack.c.h.b16 %v4013
      %v7594 = vunpack.c.l.b16 %v4014
      %v7595 = vunpack.c.h.b16 %v4014
      %v7596 = vunpack.c.l.b16 %v4015
      %v7597 = vunpack.c.h.b16 %v4015
      %v7598 = vunpack.c.l.b16 %v4016
      %v7599 = vunpack.c.h.b16 %v4016
      %v7600 = vunpack.c.l.b16 %v4017
      %v7601 = vunpack.c.h.b16 %v4017
      %v7602 = vunpack.c.l.b16 %v4018
      %v7603 = vunpack.c.h.b16 %v4018
      %v7604 = vunpack.c.l.b16 %v4019
      %v7605 = vunpack.c.h.b16 %v4019
      %v7606 = vunpack.c.l.b16 %v4020
      %v7607 = vunpack.c.h.b16 %v4020
      %v7608 = vunpack.c.l.b16 %v4021
      %v7609 = vunpack.c.h.b16 %v4021
      %v7610 = vunpack.c.l.b16 %v4022
      %v7611 = vunpack.c.h.b16 %v4022
      %v7612 = vunpack.c.l.b16 %v4023
      %v7613 = vunpack.c.h.b16 %v4023
      %v7614 = vunpack.c.l.b16 %v4024
      %v7615 = vunpack.c.h.b16 %v4024
      %v7616 = vunpack.c.l.b16 %v4025
      %v7617 = vunpack.c.h.b16 %v4025
      %v7618 = vpack.c.b16 %v7158, %v7154
      %v7619 = vpack.c.b16 %v7159, %v7155
      %v7620 = vpack.c.b16 %v7160, %v7156
      %v7621 = vpack.c.b16 %v7161, %v7157
      %v7622 = vpack.c.b16 %v7166, %v7162
      %v7623 = vpack.c.b16 %v7167, %v7163
      %v7624 = vpack.c.b16 %v7168, %v7164
      %v7625 = vpack.c.b16 %v7169, %v7165
      %v7626 = vpack.c.b16 %v7174, %v7170
      %v7627 = vpack.c.b16 %v7175, %v7171
      %v7628 = vpack.c.b16 %v7176, %v7172
      %v7629 = vpack.c.b16 %v7177, %v7173
      %v7630 = vpack.c.b16 %v7182, %v7178
      %v7631 = vpack.c.b16 %v7183, %v7179
      %v7632 = vpack.c.b16 %v7184, %v7180
      %v7633 = vpack.c.b16 %v7185, %v7181
      %v7634 = vpack.c.b16 %v7190, %v7186
      %v7635 = vpack.c.b16 %v7191, %v7187
      %v7636 = vpack.c.b16 %v7192, %v7188
      %v7637 = vpack.c.b16 %v7193, %v7189
      %v7638 = vpack.c.b16 %v7198, %v7194
      %v7639 = vpack.c.b16 %v7199, %v7195
      %v7640 = vpack.c.b16 %v7200, %v7196
      %v7641 = vpack.c.b16 %v7201, %v7197
      %v7642 = vpack.c.b16 %v7206, %v7202
      %v7643 = vpack.c.b16 %v7207, %v7203
      %v7644 = vpack.c.b16 %v7208, %v7204
      %v7645 = vpack.c.b16 %v7209, %v7205
      %v7646 = vpack.c.b16 %v7214, %v7210
      %v7647 = vpack.c.b16 %v7215, %v7211
      %v7648 = vpack.c.b16 %v7216, %v7212
      %v7649 = vpack.c.b16 %v7217, %v7213
      %v7650 = vpack.c.b16 %v7222, %v7218
      %v7651 = vpack.c.b16 %v7223, %v7219
      %v7652 = vpack.c.b16 %v7224, %v7220
      %v7653 = vpack.c.b16 %v7225, %v7221
      %v7654 = vpack.c.b16 %v7230, %v7226
      %v7655 = vpack.c.b16 %v7231, %v7227
      %v7656 = vpack.c.b16 %v7232, %v7228
      %v7657 = vpack.c.b16 %v7233, %v7229
      %v7658 = vpack.c.b16 %v7238, %v7234
      %v7659 = vpack.c.b16 %v7239, %v7235
      %v7660 = vpack.c.b16 %v7240, %v7236
      %v7661 = vpack.c.b16 %v7241, %v7237
      %v7662 = vpack.c.b16 %v7246, %v7242
      %v7663 = vpack.c.b16 %v7247, %v7243
      %v7664 = vpack.c.b16 %v7248, %v7244
      %v7665 = vpack.c.b16 %v7249, %v7245
      %v7666 = vpack.c.b16 %v7254, %v7250
      %v7667 = vpack.c.b16 %v7255, %v7251
      %v7668 = vpack.c.b16 %v7256, %v7252
      %v7669 = vpack.c.b16 %v7257, %v7253
      %v7670 = vpack.c.b16 %v7262, %v7258
      %v7671 = vpack.c.b16 %v7263, %v7259
      %v7672 = vpack.c.b16 %v7264, %v7260
      %v7673 = vpack.c.b16 %v7265, %v7261
      %v7674 = vpack.c.b16 %v7270, %v7266
      %v7675 = vpack.c.b16 %v7271, %v7267
      %v7676 = vpack.c.b16 %v7272, %v7268
      %v7677 = vpack.c.b16 %v7273, %v7269
      %v7678 = vpack.c.b16 %v7278, %v7274
      %v7679 = vpack.c.b16 %v7279, %v7275
      %v7680 = vpack.c.b16 %v7280, %v7276
      %v7681 = vpack.c.b16 %v7281, %v7277
      %v7682 = vpack.c.b16 %v7286, %v7282
      %v7683 = vpack.c.b16 %v7287, %v7283
      %v7684 = vpack.c.b16 %v7288, %v7284
      %v7685 = vpack.c.b16 %v7289, %v7285
      %v7686 = vpack.c.b16 %v7294, %v7290
      %v7687 = vpack.c.b16 %v7295, %v7291
      %v7688 = vpack.c.b16 %v7296, %v7292
      %v7689 = vpack.c.b16 %v7297, %v7293
      %v7690 = vpack.c.b16 %v7302, %v7298
      %v7691 = vpack.c.b16 %v7303, %v7299
      %v7692 = vpack.c.b16 %v7304, %v7300
      %v7693 = vpack.c.b16 %v7305, %v7301
      %v7694 = vpack.c.b16 %v7310, %v7306
      %v7695 = vpack.c.b16 %v7311, %v7307
      %v7696 = vpack.c.b16 %v7312, %v7308
      %v7697 = vpack.c.b16 %v7313, %v7309
      %v7698 = vpack.c.b16 %v7318, %v7314
      %v7699 = vpack.c.b16 %v7319, %v7315
      %v7700 = vpack.c.b16 %v7320, %v7316
      %v7701 = vpack.c.b16 %v7321, %v7317
      %v7702 = vpack.c.b16 %v7326, %v7322
      %v7703 = vpack.c.b16 %v7327, %v7323
      %v7704 = vpack.c.b16 %v7328, %v7324
      %v7705 = vpack.c.b16 %v7329, %v7325
      %v7706 = vpack.c.b16 %v7334, %v7330
      %v7707 = vpack.c.b16 %v7335, %v7331
      %v7708 = vpack.c.b16 %v7336, %v7332
      %v7709 = vpack.c.b16 %v7337, %v7333
      %v7710 = vpack.c.b16 %v7342, %v7338
      %v7711 = vpack.c.b16 %v7343, %v7339
      %v7712 = vpack.c.b16 %v7344, %v7340
      %v7713 = vpack.c.b16 %v7345, %v7341
      %v7714 = vpack.c.b16 %v7350, %v7346
      %v7715 = vpack.c.b16 %v7351, %v7347
      %v7716 = vpack.c.b16 %v7352, %v7348
      %v7717 = vpack.c.b16 %v7353, %v7349
      %v7718 = vpack.c.b16 %v7358, %v7354
      %v7719 = vpack.c.b16 %v7359, %v7355
      %v7720 = vpack.c.b16 %v7360, %v7356
      %v7721 = vpack.c.b16 %v7361, %v7357
      %v7722 = vpack.c.b16 %v7366, %v7362
      %v7723 = vpack.c.b16 %v7367, %v7363
      %v7724 = vpack.c.b16 %v7368, %v7364
      %v7725 = vpack.c.b16 %v7369, %v7365
      %v7726 = vpack.c.b16 %v7374, %v7370
      %v7727 = vpack.c.b16 %v7375, %v7371
      %v7728 = vpack.c.b16 %v7376, %v7372
      %v7729 = vpack.c.b16 %v7377, %v7373
      %v7730 = vpack.c.b16 %v7382, %v7378
      %v7731 = vpack.c.b16 %v7383, %v7379
      %v7732 = vpack.c.b16 %v7384, %v7380
      %v7733 = vpack.c.b16 %v7385, %v7381
      %v7734 = vpack.c.b16 %v7390, %v7386
      %v7735 = vpack.c.b16 %v7391, %v7387
      %v7736 = vpack.c.b16 %v7392, %v7388
      %v7737 = vpack.c.b16 %v7393, %v7389
      %v7738 = vpack.c.b16 %v7398, %v7394
      %v7739 = vpack.c.b16 %v7399, %v7395
      %v7740 = vpack.c.b16 %v7400, %v7396
      %v7741 = vpack.c.b16 %v7401, %v7397
      %v7742 = vpack.c.b16 %v7406, %v7402
      %v7743 = vpack.c.b16 %v7407, %v7403
      %v7744 = vpack.c.b16 %v7408, %v7404
      %v7745 = vpack.c.b16 %v7409, %v7405
      %v7746 = vpack.c.b16 %v7414, %v7410
      %v7747 = vpack.c.b16 %v7415, %v7411
      %v7748 = vpack.c.b16 %v7416, %v7412
      %v7749 = vpack.c.b16 %v7417, %v7413
      %v7750 = vpack.c.b16 %v7422, %v7418
      %v7751 = vpack.c.b16 %v7423, %v7419
      %v7752 = vpack.c.b16 %v7424, %v7420
      %v7753 = vpack.c.b16 %v7425, %v7421
      %v7754 = vpack.c.b16 %v7430, %v7426
      %v7755 = vpack.c.b16 %v7431, %v7427
      %v7756 = vpack.c.b16 %v7432, %v7428
      %v7757 = vpack.c.b16 %v7433, %v7429
      %v7758 = vpack.c.b16 %v7438, %v7434
      %v7759 = vpack.c.b16 %v7439, %v7435
      %v7760 = vpack.c.b16 %v7440, %v7436
      %v7761 = vpack.c.b16 %v7441, %v7437
      %v7762 = vpack.c.b16 %v7446, %v7442
      %v7763 = vpack.c.b16 %v7447, %v7443
      %v7764 = vpack.c.b16 %v7448, %v7444
      %v7765 = vpack.c.b16 %v7449, %v7445
      %v7766 = vpack.c.b16 %v7454, %v7450
      %v7767 = vpack.c.b16 %v7455, %v7451
      %v7768 = vpack.c.b16 %v7456, %v7452
      %v7769 = vpack.c.b16 %v7457, %v7453
      %v7770 = vpack.c.b16 %v7462, %v7458
      %v7771 = vpack.c.b16 %v7463, %v7459
      %v7772 = vpack.c.b16 %v7464, %v7460
      %v7773 = vpack.c.b16 %v7465, %v7461
      %v7774 = vpack.c.b16 %v7470, %v7466
      %v7775 = vpack.c.b16 %v7471, %v7467
      %v7776 = vpack.c.b16 %v7472, %v7468
      %v7777 = vpack.c.b16 %v7473, %v7469
      %v7778 = vpack.c.b16 %v7478, %v7474
      %v7779 = vpack.c.b16 %v7479, %v7475
      %v7780 = vpack.c.b16 %v7480, %v7476
      %v7781 = vpack.c.b16 %v7481, %v7477
      %v7782 = vpack.c.b16 %v7486, %v7482
      %v7783 = vpack.c.b16 %v7487, %v7483
      %v7784 = vpack.c.b16 %v7488, %v7484
      %v7785 = vpack.c.b16 %v7489, %v7485
      %v7786 = vpack.c.b16 %v7494, %v7490
      %v7787 = vpack.c.b16 %v7495, %v7491
      %v7788 = vpack.c.b16 %v7496, %v7492
      %v7789 = vpack.c.b16 %v7497, %v7493
      %v7790 = vpack.c.b16 %v7502, %v7498
      %v7791 = vpack.c.b16 %v7503, %v7499
      %v7792 = vpack.c.b16 %v7504, %v7500
      %v7793 = vpack.c.b16 %v7505, %v7501
      %v7794 = vpack.c.b16 %v7510, %v7506
      %v7795 = vpack.c.b16 %v7511, %v7507
      %v7796 = vpack.c.b16 %v7512, %v7508
      %v7797 = vpack.c.b16 %v7513, %v7509
      %v7798 = vpack.c.b16 %v7518, %v7514
      %v7799 = vpack.c.b16 %v7519, %v7515
      %v7800 = vpack.c.b16 %v7520, %v7516
      %v7801 = vpack.c.b16 %v7521, %v7517
      %v7802 = vpack.c.b16 %v7526, %v7522
      %v7803 = vpack.c.b16 %v7527, %v7523
      %v7804 = vpack.c.b16 %v7528, %v7524
      %v7805 = vpack.c.b16 %v7529, %v7525
      %v7806 = vpack.c.b16 %v7534, %v7530
      %v7807 = vpack.c.b16 %v7535, %v7531
      %v7808 = vpack.c.b16 %v7536, %v7532
      %v7809 = vpack.c.b16 %v7537, %v7533
      %v7810 = vpack.c.b16 %v7542, %v7538
      %v7811 = vpack.c.b16 %v7543, %v7539
      %v7812 = vpack.c.b16 %v7544, %v7540
      %v7813 = vpack.c.b16 %v7545, %v7541
      %v7814 = vpack.c.b16 %v7550, %v7546
      %v7815 = vpack.c.b16 %v7551, %v7547
      %v7816 = vpack.c.b16 %v7552, %v7548
      %v7817 = vpack.c.b16 %v7553, %v7549
      %v7818 = vpack.c.b16 %v7558, %v7554
      %v7819 = vpack.c.b16 %v7559, %v7555
      %v7820 = vpack.c.b16 %v7560, %v7556
      %v7821 = vpack.c.b16 %v7561, %v7557
      %v7822 = vpack.c.b16 %v7566, %v7562
      %v7823 = vpack.c.b16 %v7567, %v7563
      %v7824 = vpack.c.b16 %v7568, %v7564
      %v7825 = vpack.c.b16 %v7569, %v7565
      %v7826 = vpack.c.b16 %v7574, %v7570
      %v7827 = vpack.c.b16 %v7575, %v7571
      %v7828 = vpack.c.b16 %v7576, %v7572
      %v7829 = vpack.c.b16 %v7577, %v7573
      %v7830 = vpack.c.b16 %v7582, %v7578
      %v7831 = vpack.c.b16 %v7583, %v7579
      %v7832 = vpack.c.b16 %v7584, %v7580
      %v7833 = vpack.c.b16 %v7585, %v7581
      %v7834 = vpack.c.b16 %v7590, %v7586
      %v7835 = vpack.c.b16 %v7591, %v7587
      %v7836 = vpack.c.b16 %v7592, %v7588
      %v7837 = vpack.c.b16 %v7593, %v7589
      %v7838 = vpack.c.b16 %v7598, %v7594
      %v7839 = vpack.c.b16 %v7599, %v7595
      %v7840 = vpack.c.b16 %v7600, %v7596
      %v7841 = vpack.c.b16 %v7601, %v7597
      %v7842 = vpack.c.b16 %v7606, %v7602
      %v7843 = vpack.c.b16 %v7607, %v7603
      %v7844 = vpack.c.b16 %v7608, %v7604
      %v7845 = vpack.c.b16 %v7609, %v7605
      %v7846 = vpack.c.b16 %v7614, %v7610
      %v7847 = vpack.c.b16 %v7615, %v7611
      %v7848 = vpack.c.b16 %v7616, %v7612
      %v7849 = vpack.c.b16 %v7617, %v7613
      %v8079 = vsel %vm5610, %v6854, 0
      %v8082 = vsel %vm5610, %v6862, 0
      %v8085 = vsel %vm5610, %v6870, 0
      %v8088 = vsel %vm5610, %v6878, 0
      %v8091 = vsel %vm5610, %v6886, 0
      %v8094 = vsel %vm5626, %v7846, 0
      %v8097 = vsel %vm5626, %v7847, 0
      %v8100 = vsel %vm5626, %v7848, 0
      %v8103 = vsel %vm5626, %v7849, 0
      %8105 = vmatpush.bf16.msra.mxu0 %v7646
      %8106 = vmatpush.bf16.msra.mxu0 %v7642
      %8107 = vmatpush.bf16.msra.mxu0 %v7638
      %8108 = vmatpush.bf16.msra.mxu0 %v7634
      %8109 = vmatpush.bf16.msra.mxu0 %v7630
      %8110 = vmatpush.bf16.msra.mxu0 %v7626
      %8111 = vmatpush.bf16.msra.mxu0 %v7622
      %8112 = vmatpush.bf16.msra.mxu0 %v7618
      %8113 = vmatmul.bf16.gmra.mxu0 %v6847
      %v8114 = vpop.f32.mrf.mxu0
      %v8115 = vadd.f32 %v5887, %v8114
      %v8116 = vpop.f32.mrf.mxu0
      %v8117 = vadd.f32 %v5889, %v8116
      %8118 = vmatmul.bf16.gmra.mxu0 %v6855
      %v8119 = vpop.f32.mrf.mxu0
      %v8120 = vadd.f32 %v5892, %v8119
      %v8121 = vpop.f32.mrf.mxu0
      %v8122 = vadd.f32 %v5894, %v8121
      %8123 = vmatmul.bf16.gmra.mxu0 %v6863
      %v8124 = vpop.f32.mrf.mxu0
      %v8125 = vadd.f32 %v5897, %v8124
      %v8126 = vpop.f32.mrf.mxu0
      %v8127 = vadd.f32 %v5899, %v8126
      %8128 = vmatmul.bf16.gmra.mxu0 %v6871
      %v8129 = vpop.f32.mrf.mxu0
      %v8130 = vadd.f32 %v5902, %v8129
      %v8131 = vpop.f32.mrf.mxu0
      %v8132 = vadd.f32 %v5904, %v8131
      %8133 = vmatmul.bf16.gmra.mxu0 %v6879
      %v8134 = vpop.f32.mrf.mxu0
      %v8135 = vadd.f32 %v5907, %v8134
      %v8136 = vpop.f32.mrf.mxu0
      %v8137 = vadd.f32 %v5909, %v8136
      %8138 = vdwg.mxu0
      %8139 = vmatpush.bf16.msra.mxu0 %v7678
      %8140 = vmatpush.bf16.msra.mxu0 %v7674
      %8141 = vmatpush.bf16.msra.mxu0 %v7670
      %8142 = vmatpush.bf16.msra.mxu0 %v7666
      %8143 = vmatpush.bf16.msra.mxu0 %v7662
      %8144 = vmatpush.bf16.msra.mxu0 %v7658
      %8145 = vmatpush.bf16.msra.mxu0 %v7654
      %8146 = vmatpush.bf16.msra.mxu0 %v7650
      %8147 = vmatmul.bf16.gmra.mxu0 %v6848
      %v8148 = vpop.f32.mrf.mxu0
      %v8149 = vadd.f32 %v8115, %v8148
      %v8150 = vpop.f32.mrf.mxu0
      %v8151 = vadd.f32 %v8117, %v8150
      %8152 = vmatmul.bf16.gmra.mxu0 %v6856
      %v8153 = vpop.f32.mrf.mxu0
      %v8154 = vadd.f32 %v8120, %v8153
      %v8155 = vpop.f32.mrf.mxu0
      %v8156 = vadd.f32 %v8122, %v8155
      %8157 = vmatmul.bf16.gmra.mxu0 %v6864
      %v8158 = vpop.f32.mrf.mxu0
      %v8159 = vadd.f32 %v8125, %v8158
      %v8160 = vpop.f32.mrf.mxu0
      %v8161 = vadd.f32 %v8127, %v8160
      %8162 = vmatmul.bf16.gmra.mxu0 %v6872
      %v8163 = vpop.f32.mrf.mxu0
      %v8164 = vadd.f32 %v8130, %v8163
      %v8165 = vpop.f32.mrf.mxu0
      %v8166 = vadd.f32 %v8132, %v8165
      %8167 = vmatmul.bf16.gmra.mxu0 %v6880
      %v8168 = vpop.f32.mrf.mxu0
      %v8169 = vadd.f32 %v8135, %v8168
      %v8170 = vpop.f32.mrf.mxu0
      %v8171 = vadd.f32 %v8137, %v8170
      %8172 = vdwg.mxu0
      %8173 = vmatpush.bf16.msra.mxu0 %v7710
      %8174 = vmatpush.bf16.msra.mxu0 %v7706
      %8175 = vmatpush.bf16.msra.mxu0 %v7702
      %8176 = vmatpush.bf16.msra.mxu0 %v7698
      %8177 = vmatpush.bf16.msra.mxu0 %v7694
      %8178 = vmatpush.bf16.msra.mxu0 %v7690
      %8179 = vmatpush.bf16.msra.mxu0 %v7686
      %8180 = vmatpush.bf16.msra.mxu0 %v7682
      %8181 = vmatmul.bf16.gmra.mxu0 %v6849
      %v8182 = vpop.f32.mrf.mxu0
      %v8183 = vadd.f32 %v8149, %v8182
      %v8184 = vpop.f32.mrf.mxu0
      %v8185 = vadd.f32 %v8151, %v8184
      %8186 = vmatmul.bf16.gmra.mxu0 %v6857
      %v8187 = vpop.f32.mrf.mxu0
      %v8188 = vadd.f32 %v8154, %v8187
      %v8189 = vpop.f32.mrf.mxu0
      %v8190 = vadd.f32 %v8156, %v8189
      %8191 = vmatmul.bf16.gmra.mxu0 %v6865
      %v8192 = vpop.f32.mrf.mxu0
      %v8193 = vadd.f32 %v8159, %v8192
      %v8194 = vpop.f32.mrf.mxu0
      %v8195 = vadd.f32 %v8161, %v8194
      %8196 = vmatmul.bf16.gmra.mxu0 %v6873
      %v8197 = vpop.f32.mrf.mxu0
      %v8198 = vadd.f32 %v8164, %v8197
      %v8199 = vpop.f32.mrf.mxu0
      %v8200 = vadd.f32 %v8166, %v8199
      %8201 = vmatmul.bf16.gmra.mxu0 %v6881
      %v8202 = vpop.f32.mrf.mxu0
      %v8203 = vadd.f32 %v8169, %v8202
      %v8204 = vpop.f32.mrf.mxu0
      %v8205 = vadd.f32 %v8171, %v8204
      %8206 = vdwg.mxu0
      %8207 = vmatpush.bf16.msra.mxu0 %v7742
      %8208 = vmatpush.bf16.msra.mxu0 %v7738
      %8209 = vmatpush.bf16.msra.mxu0 %v7734
      %8210 = vmatpush.bf16.msra.mxu0 %v7730
      %8211 = vmatpush.bf16.msra.mxu0 %v7726
      %8212 = vmatpush.bf16.msra.mxu0 %v7722
      %8213 = vmatpush.bf16.msra.mxu0 %v7718
      %8214 = vmatpush.bf16.msra.mxu0 %v7714
      %8215 = vmatmul.bf16.gmra.mxu0 %v6850
      %v8216 = vpop.f32.mrf.mxu0
      %v8217 = vadd.f32 %v8183, %v8216
      %v8218 = vpop.f32.mrf.mxu0
      %v8219 = vadd.f32 %v8185, %v8218
      %8220 = vmatmul.bf16.gmra.mxu0 %v6858
      %v8221 = vpop.f32.mrf.mxu0
      %v8222 = vadd.f32 %v8188, %v8221
      %v8223 = vpop.f32.mrf.mxu0
      %v8224 = vadd.f32 %v8190, %v8223
      %8225 = vmatmul.bf16.gmra.mxu0 %v6866
      %v8226 = vpop.f32.mrf.mxu0
      %v8227 = vadd.f32 %v8193, %v8226
      %v8228 = vpop.f32.mrf.mxu0
      %v8229 = vadd.f32 %v8195, %v8228
      %8230 = vmatmul.bf16.gmra.mxu0 %v6874
      %v8231 = vpop.f32.mrf.mxu0
      %v8232 = vadd.f32 %v8198, %v8231
      %v8233 = vpop.f32.mrf.mxu0
      %v8234 = vadd.f32 %v8200, %v8233
      %8235 = vmatmul.bf16.gmra.mxu0 %v6882
      %v8236 = vpop.f32.mrf.mxu0
      %v8237 = vadd.f32 %v8203, %v8236
      %v8238 = vpop.f32.mrf.mxu0
      %v8239 = vadd.f32 %v8205, %v8238
      %8240 = vdwg.mxu0
      %8241 = vmatpush.bf16.msra.mxu0 %v7774
      %8242 = vmatpush.bf16.msra.mxu0 %v7770
      %8243 = vmatpush.bf16.msra.mxu0 %v7766
      %8244 = vmatpush.bf16.msra.mxu0 %v7762
      %8245 = vmatpush.bf16.msra.mxu0 %v7758
      %8246 = vmatpush.bf16.msra.mxu0 %v7754
      %8247 = vmatpush.bf16.msra.mxu0 %v7750
      %8248 = vmatpush.bf16.msra.mxu0 %v7746
      %8249 = vmatmul.bf16.gmra.mxu0 %v6851
      %v8250 = vpop.f32.mrf.mxu0
      %v8251 = vadd.f32 %v8217, %v8250
      %v8252 = vpop.f32.mrf.mxu0
      %v8253 = vadd.f32 %v8219, %v8252
      %8254 = vmatmul.bf16.gmra.mxu0 %v6859
      %v8255 = vpop.f32.mrf.mxu0
      %v8256 = vadd.f32 %v8222, %v8255
      %v8257 = vpop.f32.mrf.mxu0
      %v8258 = vadd.f32 %v8224, %v8257
      %8259 = vmatmul.bf16.gmra.mxu0 %v6867
      %v8260 = vpop.f32.mrf.mxu0
      %v8261 = vadd.f32 %v8227, %v8260
      %v8262 = vpop.f32.mrf.mxu0
      %v8263 = vadd.f32 %v8229, %v8262
      %8264 = vmatmul.bf16.gmra.mxu0 %v6875
      %v8265 = vpop.f32.mrf.mxu0
      %v8266 = vadd.f32 %v8232, %v8265
      %v8267 = vpop.f32.mrf.mxu0
      %v8268 = vadd.f32 %v8234, %v8267
      %8269 = vmatmul.bf16.gmra.mxu0 %v6883
      %v8270 = vpop.f32.mrf.mxu0
      %v8271 = vadd.f32 %v8237, %v8270
      %v8272 = vpop.f32.mrf.mxu0
      %v8273 = vadd.f32 %v8239, %v8272
      %8274 = vdwg.mxu0
      %8275 = vmatpush.bf16.msra.mxu0 %v7806
      %8276 = vmatpush.bf16.msra.mxu0 %v7802
      %8277 = vmatpush.bf16.msra.mxu0 %v7798
      %8278 = vmatpush.bf16.msra.mxu0 %v7794
      %8279 = vmatpush.bf16.msra.mxu0 %v7790
      %8280 = vmatpush.bf16.msra.mxu0 %v7786
      %8281 = vmatpush.bf16.msra.mxu0 %v7782
      %8282 = vmatpush.bf16.msra.mxu0 %v7778
      %8283 = vmatmul.bf16.gmra.mxu0 %v6852
      %v8284 = vpop.f32.mrf.mxu0
      %v8285 = vadd.f32 %v8251, %v8284
      %v8286 = vpop.f32.mrf.mxu0
      %v8287 = vadd.f32 %v8253, %v8286
      %8288 = vmatmul.bf16.gmra.mxu0 %v6860
      %v8289 = vpop.f32.mrf.mxu0
      %v8290 = vadd.f32 %v8256, %v8289
      %v8291 = vpop.f32.mrf.mxu0
      %v8292 = vadd.f32 %v8258, %v8291
      %8293 = vmatmul.bf16.gmra.mxu0 %v6868
      %v8294 = vpop.f32.mrf.mxu0
      %v8295 = vadd.f32 %v8261, %v8294
      %v8296 = vpop.f32.mrf.mxu0
      %v8297 = vadd.f32 %v8263, %v8296
      %8298 = vmatmul.bf16.gmra.mxu0 %v6876
      %v8299 = vpop.f32.mrf.mxu0
      %v8300 = vadd.f32 %v8266, %v8299
      %v8301 = vpop.f32.mrf.mxu0
      %v8302 = vadd.f32 %v8268, %v8301
      %8303 = vmatmul.bf16.gmra.mxu0 %v6884
      %v8304 = vpop.f32.mrf.mxu0
      %v8305 = vadd.f32 %v8271, %v8304
      %v8306 = vpop.f32.mrf.mxu0
      %v8307 = vadd.f32 %v8273, %v8306
      %8308 = vdwg.mxu0
      %8309 = vmatpush.bf16.msra.mxu0 %v7838
      %8310 = vmatpush.bf16.msra.mxu0 %v7834
      %8311 = vmatpush.bf16.msra.mxu0 %v7830
      %8312 = vmatpush.bf16.msra.mxu0 %v7826
      %8313 = vmatpush.bf16.msra.mxu0 %v7822
      %8314 = vmatpush.bf16.msra.mxu0 %v7818
      %8315 = vmatpush.bf16.msra.mxu0 %v7814
      %8316 = vmatpush.bf16.msra.mxu0 %v7810
      %8317 = vmatmul.bf16.gmra.mxu0 %v6853
      %v8318 = vpop.f32.mrf.mxu0
      %v8319 = vadd.f32 %v8285, %v8318
      %v8320 = vpop.f32.mrf.mxu0
      %v8321 = vadd.f32 %v8287, %v8320
      %8322 = vmatmul.bf16.gmra.mxu0 %v6861
      %v8323 = vpop.f32.mrf.mxu0
      %v8324 = vadd.f32 %v8290, %v8323
      %v8325 = vpop.f32.mrf.mxu0
      %v8326 = vadd.f32 %v8292, %v8325
      %8327 = vmatmul.bf16.gmra.mxu0 %v6869
      %v8328 = vpop.f32.mrf.mxu0
      %v8329 = vadd.f32 %v8295, %v8328
      %v8330 = vpop.f32.mrf.mxu0
      %v8331 = vadd.f32 %v8297, %v8330
      %8332 = vmatmul.bf16.gmra.mxu0 %v6877
      %v8333 = vpop.f32.mrf.mxu0
      %v8334 = vadd.f32 %v8300, %v8333
      %v8335 = vpop.f32.mrf.mxu0
      %v8336 = vadd.f32 %v8302, %v8335
      %8337 = vmatmul.bf16.gmra.mxu0 %v6885
      %v8338 = vpop.f32.mrf.mxu0
      %v8339 = vadd.f32 %v8305, %v8338
      %v8340 = vpop.f32.mrf.mxu0
      %v8341 = vadd.f32 %v8307, %v8340
      %8342 = vdwg.mxu0
      %8343 = vmatpush.bf16.msra.mxu0 0
      %8344 = vmatpush.bf16.msra.mxu0 0
      %8345 = vmatpush.bf16.msra.mxu0 0
      %8346 = vmatpush.bf16.msra.mxu0 0
      %8347 = vmatpush.bf16.msra.mxu0 0
      %8348 = vmatpush.bf16.msra.mxu0 0
      %8349 = vmatpush.bf16.msra.mxu0 %v8094
      %8350 = vmatpush.bf16.msra.mxu0 %v7842
      %8351 = vmatmul.bf16.gmra.mxu0 %v8079
      %v8352 = vpop.f32.mrf.mxu0
      %v8353 = vadd.f32 %v8319, %v8352
      %v8354 = vpop.f32.mrf.mxu0
      %v8355 = vadd.f32 %v8321, %v8354
      %8356 = vmatmul.bf16.gmra.mxu0 %v8082
      %v8357 = vpop.f32.mrf.mxu0
      %v8358 = vadd.f32 %v8324, %v8357
      %v8359 = vpop.f32.mrf.mxu0
      %v8360 = vadd.f32 %v8326, %v8359
      %8361 = vmatmul.bf16.gmra.mxu0 %v8085
      %v8362 = vpop.f32.mrf.mxu0
      %v8363 = vadd.f32 %v8329, %v8362
      %v8364 = vpop.f32.mrf.mxu0
      %v8365 = vadd.f32 %v8331, %v8364
      %8366 = vmatmul.bf16.gmra.mxu0 %v8088
      %v8367 = vpop.f32.mrf.mxu0
      %v8368 = vadd.f32 %v8334, %v8367
      %v8369 = vpop.f32.mrf.mxu0
      %v8370 = vadd.f32 %v8336, %v8369
      %8371 = vmatmul.bf16.gmra.mxu0 %v8091
      %v8372 = vpop.f32.mrf.mxu0
      %v8373 = vadd.f32 %v8339, %v8372
      %v8374 = vpop.f32.mrf.mxu0
      %v8375 = vadd.f32 %v8341, %v8374
      %8376 = vdwg.mxu0
      %8377 = vmatpush.bf16.msra.mxu0 %v7647
      %8378 = vmatpush.bf16.msra.mxu0 %v7643
      %8379 = vmatpush.bf16.msra.mxu0 %v7639
      %8380 = vmatpush.bf16.msra.mxu0 %v7635
      %8381 = vmatpush.bf16.msra.mxu0 %v7631
      %8382 = vmatpush.bf16.msra.mxu0 %v7627
      %8383 = vmatpush.bf16.msra.mxu0 %v7623
      %8384 = vmatpush.bf16.msra.mxu0 %v7619
      %8385 = vmatmul.bf16.gmra.mxu0 %v6847
      %v8386 = vpop.f32.mrf.mxu0
      %v8387 = vadd.f32 %v6159, %v8386
      %v8388 = vpop.f32.mrf.mxu0
      %v8389 = vadd.f32 %v6161, %v8388
      %8390 = vmatmul.bf16.gmra.mxu0 %v6855
      %v8391 = vpop.f32.mrf.mxu0
      %v8392 = vadd.f32 %v6164, %v8391
      %v8393 = vpop.f32.mrf.mxu0
      %v8394 = vadd.f32 %v6166, %v8393
      %8395 = vmatmul.bf16.gmra.mxu0 %v6863
      %v8396 = vpop.f32.mrf.mxu0
      %v8397 = vadd.f32 %v6169, %v8396
      %v8398 = vpop.f32.mrf.mxu0
      %v8399 = vadd.f32 %v6171, %v8398
      %8400 = vmatmul.bf16.gmra.mxu0 %v6871
      %v8401 = vpop.f32.mrf.mxu0
      %v8402 = vadd.f32 %v6174, %v8401
      %v8403 = vpop.f32.mrf.mxu0
      %v8404 = vadd.f32 %v6176, %v8403
      %8405 = vmatmul.bf16.gmra.mxu0 %v6879
      %v8406 = vpop.f32.mrf.mxu0
      %v8407 = vadd.f32 %v6179, %v8406
      %v8408 = vpop.f32.mrf.mxu0
      %v8409 = vadd.f32 %v6181, %v8408
      %8410 = vdwg.mxu0
      %8411 = vmatpush.bf16.msra.mxu0 %v7679
      %8412 = vmatpush.bf16.msra.mxu0 %v7675
      %8413 = vmatpush.bf16.msra.mxu0 %v7671
      %8414 = vmatpush.bf16.msra.mxu0 %v7667
      %8415 = vmatpush.bf16.msra.mxu0 %v7663
      %8416 = vmatpush.bf16.msra.mxu0 %v7659
      %8417 = vmatpush.bf16.msra.mxu0 %v7655
      %8418 = vmatpush.bf16.msra.mxu0 %v7651
      %8419 = vmatmul.bf16.gmra.mxu0 %v6848
      %v8420 = vpop.f32.mrf.mxu0
      %v8421 = vadd.f32 %v8387, %v8420
      %v8422 = vpop.f32.mrf.mxu0
      %v8423 = vadd.f32 %v8389, %v8422
      %8424 = vmatmul.bf16.gmra.mxu0 %v6856
      %v8425 = vpop.f32.mrf.mxu0
      %v8426 = vadd.f32 %v8392, %v8425
      %v8427 = vpop.f32.mrf.mxu0
      %v8428 = vadd.f32 %v8394, %v8427
      %8429 = vmatmul.bf16.gmra.mxu0 %v6864
      %v8430 = vpop.f32.mrf.mxu0
      %v8431 = vadd.f32 %v8397, %v8430
      %v8432 = vpop.f32.mrf.mxu0
      %v8433 = vadd.f32 %v8399, %v8432
      %8434 = vmatmul.bf16.gmra.mxu0 %v6872
      %v8435 = vpop.f32.mrf.mxu0
      %v8436 = vadd.f32 %v8402, %v8435
      %v8437 = vpop.f32.mrf.mxu0
      %v8438 = vadd.f32 %v8404, %v8437
      %8439 = vmatmul.bf16.gmra.mxu0 %v6880
      %v8440 = vpop.f32.mrf.mxu0
      %v8441 = vadd.f32 %v8407, %v8440
      %v8442 = vpop.f32.mrf.mxu0
      %v8443 = vadd.f32 %v8409, %v8442
      %8444 = vdwg.mxu0
      %8445 = vmatpush.bf16.msra.mxu0 %v7711
      %8446 = vmatpush.bf16.msra.mxu0 %v7707
      %8447 = vmatpush.bf16.msra.mxu0 %v7703
      %8448 = vmatpush.bf16.msra.mxu0 %v7699
      %8449 = vmatpush.bf16.msra.mxu0 %v7695
      %8450 = vmatpush.bf16.msra.mxu0 %v7691
      %8451 = vmatpush.bf16.msra.mxu0 %v7687
      %8452 = vmatpush.bf16.msra.mxu0 %v7683
      %8453 = vmatmul.bf16.gmra.mxu0 %v6849
      %v8454 = vpop.f32.mrf.mxu0
      %v8455 = vadd.f32 %v8421, %v8454
      %v8456 = vpop.f32.mrf.mxu0
      %v8457 = vadd.f32 %v8423, %v8456
      %8458 = vmatmul.bf16.gmra.mxu0 %v6857
      %v8459 = vpop.f32.mrf.mxu0
      %v8460 = vadd.f32 %v8426, %v8459
      %v8461 = vpop.f32.mrf.mxu0
      %v8462 = vadd.f32 %v8428, %v8461
      %8463 = vmatmul.bf16.gmra.mxu0 %v6865
      %v8464 = vpop.f32.mrf.mxu0
      %v8465 = vadd.f32 %v8431, %v8464
      %v8466 = vpop.f32.mrf.mxu0
      %v8467 = vadd.f32 %v8433, %v8466
      %8468 = vmatmul.bf16.gmra.mxu0 %v6873
      %v8469 = vpop.f32.mrf.mxu0
      %v8470 = vadd.f32 %v8436, %v8469
      %v8471 = vpop.f32.mrf.mxu0
      %v8472 = vadd.f32 %v8438, %v8471
      %8473 = vmatmul.bf16.gmra.mxu0 %v6881
      %v8474 = vpop.f32.mrf.mxu0
      %v8475 = vadd.f32 %v8441, %v8474
      %v8476 = vpop.f32.mrf.mxu0
      %v8477 = vadd.f32 %v8443, %v8476
      %8478 = vdwg.mxu0
      %8479 = vmatpush.bf16.msra.mxu0 %v7743
      %8480 = vmatpush.bf16.msra.mxu0 %v7739
      %8481 = vmatpush.bf16.msra.mxu0 %v7735
      %8482 = vmatpush.bf16.msra.mxu0 %v7731
      %8483 = vmatpush.bf16.msra.mxu0 %v7727
      %8484 = vmatpush.bf16.msra.mxu0 %v7723
      %8485 = vmatpush.bf16.msra.mxu0 %v7719
      %8486 = vmatpush.bf16.msra.mxu0 %v7715
      %8487 = vmatmul.bf16.gmra.mxu0 %v6850
      %v8488 = vpop.f32.mrf.mxu0
      %v8489 = vadd.f32 %v8455, %v8488
      %v8490 = vpop.f32.mrf.mxu0
      %v8491 = vadd.f32 %v8457, %v8490
      %8492 = vmatmul.bf16.gmra.mxu0 %v6858
      %v8493 = vpop.f32.mrf.mxu0
      %v8494 = vadd.f32 %v8460, %v8493
      %v8495 = vpop.f32.mrf.mxu0
      %v8496 = vadd.f32 %v8462, %v8495
      %8497 = vmatmul.bf16.gmra.mxu0 %v6866
      %v8498 = vpop.f32.mrf.mxu0
      %v8499 = vadd.f32 %v8465, %v8498
      %v8500 = vpop.f32.mrf.mxu0
      %v8501 = vadd.f32 %v8467, %v8500
      %8502 = vmatmul.bf16.gmra.mxu0 %v6874
      %v8503 = vpop.f32.mrf.mxu0
      %v8504 = vadd.f32 %v8470, %v8503
      %v8505 = vpop.f32.mrf.mxu0
      %v8506 = vadd.f32 %v8472, %v8505
      %8507 = vmatmul.bf16.gmra.mxu0 %v6882
      %v8508 = vpop.f32.mrf.mxu0
      %v8509 = vadd.f32 %v8475, %v8508
      %v8510 = vpop.f32.mrf.mxu0
      %v8511 = vadd.f32 %v8477, %v8510
      %8512 = vdwg.mxu0
      %8513 = vmatpush.bf16.msra.mxu0 %v7775
      %8514 = vmatpush.bf16.msra.mxu0 %v7771
      %8515 = vmatpush.bf16.msra.mxu0 %v7767
      %8516 = vmatpush.bf16.msra.mxu0 %v7763
      %8517 = vmatpush.bf16.msra.mxu0 %v7759
      %8518 = vmatpush.bf16.msra.mxu0 %v7755
      %8519 = vmatpush.bf16.msra.mxu0 %v7751
      %8520 = vmatpush.bf16.msra.mxu0 %v7747
      %8521 = vmatmul.bf16.gmra.mxu0 %v6851
      %v8522 = vpop.f32.mrf.mxu0
      %v8523 = vadd.f32 %v8489, %v8522
      %v8524 = vpop.f32.mrf.mxu0
      %v8525 = vadd.f32 %v8491, %v8524
      %8526 = vmatmul.bf16.gmra.mxu0 %v6859
      %v8527 = vpop.f32.mrf.mxu0
      %v8528 = vadd.f32 %v8494, %v8527
      %v8529 = vpop.f32.mrf.mxu0
      %v8530 = vadd.f32 %v8496, %v8529
      %8531 = vmatmul.bf16.gmra.mxu0 %v6867
      %v8532 = vpop.f32.mrf.mxu0
      %v8533 = vadd.f32 %v8499, %v8532
      %v8534 = vpop.f32.mrf.mxu0
      %v8535 = vadd.f32 %v8501, %v8534
      %8536 = vmatmul.bf16.gmra.mxu0 %v6875
      %v8537 = vpop.f32.mrf.mxu0
      %v8538 = vadd.f32 %v8504, %v8537
      %v8539 = vpop.f32.mrf.mxu0
      %v8540 = vadd.f32 %v8506, %v8539
      %8541 = vmatmul.bf16.gmra.mxu0 %v6883
      %v8542 = vpop.f32.mrf.mxu0
      %v8543 = vadd.f32 %v8509, %v8542
      %v8544 = vpop.f32.mrf.mxu0
      %v8545 = vadd.f32 %v8511, %v8544
      %8546 = vdwg.mxu0
      %8547 = vmatpush.bf16.msra.mxu0 %v7807
      %8548 = vmatpush.bf16.msra.mxu0 %v7803
      %8549 = vmatpush.bf16.msra.mxu0 %v7799
      %8550 = vmatpush.bf16.msra.mxu0 %v7795
      %8551 = vmatpush.bf16.msra.mxu0 %v7791
      %8552 = vmatpush.bf16.msra.mxu0 %v7787
      %8553 = vmatpush.bf16.msra.mxu0 %v7783
      %8554 = vmatpush.bf16.msra.mxu0 %v7779
      %8555 = vmatmul.bf16.gmra.mxu0 %v6852
      %v8556 = vpop.f32.mrf.mxu0
      %v8557 = vadd.f32 %v8523, %v8556
      %v8558 = vpop.f32.mrf.mxu0
      %v8559 = vadd.f32 %v8525, %v8558
      %8560 = vmatmul.bf16.gmra.mxu0 %v6860
      %v8561 = vpop.f32.mrf.mxu0
      %v8562 = vadd.f32 %v8528, %v8561
      %v8563 = vpop.f32.mrf.mxu0
      %v8564 = vadd.f32 %v8530, %v8563
      %8565 = vmatmul.bf16.gmra.mxu0 %v6868
      %v8566 = vpop.f32.mrf.mxu0
      %v8567 = vadd.f32 %v8533, %v8566
      %v8568 = vpop.f32.mrf.mxu0
      %v8569 = vadd.f32 %v8535, %v8568
      %8570 = vmatmul.bf16.gmra.mxu0 %v6876
      %v8571 = vpop.f32.mrf.mxu0
      %v8572 = vadd.f32 %v8538, %v8571
      %v8573 = vpop.f32.mrf.mxu0
      %v8574 = vadd.f32 %v8540, %v8573
      %8575 = vmatmul.bf16.gmra.mxu0 %v6884
      %v8576 = vpop.f32.mrf.mxu0
      %v8577 = vadd.f32 %v8543, %v8576
      %v8578 = vpop.f32.mrf.mxu0
      %v8579 = vadd.f32 %v8545, %v8578
      %8580 = vdwg.mxu0
      %8581 = vmatpush.bf16.msra.mxu0 %v7839
      %8582 = vmatpush.bf16.msra.mxu0 %v7835
      %8583 = vmatpush.bf16.msra.mxu0 %v7831
      %8584 = vmatpush.bf16.msra.mxu0 %v7827
      %8585 = vmatpush.bf16.msra.mxu0 %v7823
      %8586 = vmatpush.bf16.msra.mxu0 %v7819
      %8587 = vmatpush.bf16.msra.mxu0 %v7815
      %8588 = vmatpush.bf16.msra.mxu0 %v7811
      %8589 = vmatmul.bf16.gmra.mxu0 %v6853
      %v8590 = vpop.f32.mrf.mxu0
      %v8591 = vadd.f32 %v8557, %v8590
      %v8592 = vpop.f32.mrf.mxu0
      %v8593 = vadd.f32 %v8559, %v8592
      %8594 = vmatmul.bf16.gmra.mxu0 %v6861
      %v8595 = vpop.f32.mrf.mxu0
      %v8596 = vadd.f32 %v8562, %v8595
      %v8597 = vpop.f32.mrf.mxu0
      %v8598 = vadd.f32 %v8564, %v8597
      %8599 = vmatmul.bf16.gmra.mxu0 %v6869
      %v8600 = vpop.f32.mrf.mxu0
      %v8601 = vadd.f32 %v8567, %v8600
      %v8602 = vpop.f32.mrf.mxu0
      %v8603 = vadd.f32 %v8569, %v8602
      %8604 = vmatmul.bf16.gmra.mxu0 %v6877
      %v8605 = vpop.f32.mrf.mxu0
      %v8606 = vadd.f32 %v8572, %v8605
      %v8607 = vpop.f32.mrf.mxu0
      %v8608 = vadd.f32 %v8574, %v8607
      %8609 = vmatmul.bf16.gmra.mxu0 %v6885
      %v8610 = vpop.f32.mrf.mxu0
      %v8611 = vadd.f32 %v8577, %v8610
      %v8612 = vpop.f32.mrf.mxu0
      %v8613 = vadd.f32 %v8579, %v8612
      %8614 = vdwg.mxu0
      %8615 = vmatpush.bf16.msra.mxu0 0
      %8616 = vmatpush.bf16.msra.mxu0 0
      %8617 = vmatpush.bf16.msra.mxu0 0
      %8618 = vmatpush.bf16.msra.mxu0 0
      %8619 = vmatpush.bf16.msra.mxu0 0
      %8620 = vmatpush.bf16.msra.mxu0 0
      %8621 = vmatpush.bf16.msra.mxu0 %v8097
      %8622 = vmatpush.bf16.msra.mxu0 %v7843
      %8623 = vmatmul.bf16.gmra.mxu0 %v8079
      %v8624 = vpop.f32.mrf.mxu0
      %v8625 = vadd.f32 %v8591, %v8624
      %v8626 = vpop.f32.mrf.mxu0
      %v8627 = vadd.f32 %v8593, %v8626
      %8628 = vmatmul.bf16.gmra.mxu0 %v8082
      %v8629 = vpop.f32.mrf.mxu0
      %v8630 = vadd.f32 %v8596, %v8629
      %v8631 = vpop.f32.mrf.mxu0
      %v8632 = vadd.f32 %v8598, %v8631
      %8633 = vmatmul.bf16.gmra.mxu0 %v8085
      %v8634 = vpop.f32.mrf.mxu0
      %v8635 = vadd.f32 %v8601, %v8634
      %v8636 = vpop.f32.mrf.mxu0
      %v8637 = vadd.f32 %v8603, %v8636
      %8638 = vmatmul.bf16.gmra.mxu0 %v8088
      %v8639 = vpop.f32.mrf.mxu0
      %v8640 = vadd.f32 %v8606, %v8639
      %v8641 = vpop.f32.mrf.mxu0
      %v8642 = vadd.f32 %v8608, %v8641
      %8643 = vmatmul.bf16.gmra.mxu0 %v8091
      %v8644 = vpop.f32.mrf.mxu0
      %v8645 = vadd.f32 %v8611, %v8644
      %v8646 = vpop.f32.mrf.mxu0
      %v8647 = vadd.f32 %v8613, %v8646
      %8648 = vdwg.mxu0
      %8649 = vmatpush.bf16.msra.mxu0 %v7648
      %8650 = vmatpush.bf16.msra.mxu0 %v7644
      %8651 = vmatpush.bf16.msra.mxu0 %v7640
      %8652 = vmatpush.bf16.msra.mxu0 %v7636
      %8653 = vmatpush.bf16.msra.mxu0 %v7632
      %8654 = vmatpush.bf16.msra.mxu0 %v7628
      %8655 = vmatpush.bf16.msra.mxu0 %v7624
      %8656 = vmatpush.bf16.msra.mxu0 %v7620
      %8657 = vmatmul.bf16.gmra.mxu0 %v6847
      %v8658 = vpop.f32.mrf.mxu0
      %v8659 = vadd.f32 %v6431, %v8658
      %v8660 = vpop.f32.mrf.mxu0
      %v8661 = vadd.f32 %v6433, %v8660
      %8662 = vmatmul.bf16.gmra.mxu0 %v6855
      %v8663 = vpop.f32.mrf.mxu0
      %v8664 = vadd.f32 %v6436, %v8663
      %v8665 = vpop.f32.mrf.mxu0
      %v8666 = vadd.f32 %v6438, %v8665
      %8667 = vmatmul.bf16.gmra.mxu0 %v6863
      %v8668 = vpop.f32.mrf.mxu0
      %v8669 = vadd.f32 %v6441, %v8668
      %v8670 = vpop.f32.mrf.mxu0
      %v8671 = vadd.f32 %v6443, %v8670
      %8672 = vmatmul.bf16.gmra.mxu0 %v6871
      %v8673 = vpop.f32.mrf.mxu0
      %v8674 = vadd.f32 %v6446, %v8673
      %v8675 = vpop.f32.mrf.mxu0
      %v8676 = vadd.f32 %v6448, %v8675
      %8677 = vmatmul.bf16.gmra.mxu0 %v6879
      %v8678 = vpop.f32.mrf.mxu0
      %v8679 = vadd.f32 %v6451, %v8678
      %v8680 = vpop.f32.mrf.mxu0
      %v8681 = vadd.f32 %v6453, %v8680
      %8682 = vdwg.mxu0
      %8683 = vmatpush.bf16.msra.mxu0 %v7680
      %8684 = vmatpush.bf16.msra.mxu0 %v7676
      %8685 = vmatpush.bf16.msra.mxu0 %v7672
      %8686 = vmatpush.bf16.msra.mxu0 %v7668
      %8687 = vmatpush.bf16.msra.mxu0 %v7664
      %8688 = vmatpush.bf16.msra.mxu0 %v7660
      %8689 = vmatpush.bf16.msra.mxu0 %v7656
      %8690 = vmatpush.bf16.msra.mxu0 %v7652
      %8691 = vmatmul.bf16.gmra.mxu0 %v6848
      %v8692 = vpop.f32.mrf.mxu0
      %v8693 = vadd.f32 %v8659, %v8692
      %v8694 = vpop.f32.mrf.mxu0
      %v8695 = vadd.f32 %v8661, %v8694
      %8696 = vmatmul.bf16.gmra.mxu0 %v6856
      %v8697 = vpop.f32.mrf.mxu0
      %v8698 = vadd.f32 %v8664, %v8697
      %v8699 = vpop.f32.mrf.mxu0
      %v8700 = vadd.f32 %v8666, %v8699
      %8701 = vmatmul.bf16.gmra.mxu0 %v6864
      %v8702 = vpop.f32.mrf.mxu0
      %v8703 = vadd.f32 %v8669, %v8702
      %v8704 = vpop.f32.mrf.mxu0
      %v8705 = vadd.f32 %v8671, %v8704
      %8706 = vmatmul.bf16.gmra.mxu0 %v6872
      %v8707 = vpop.f32.mrf.mxu0
      %v8708 = vadd.f32 %v8674, %v8707
      %v8709 = vpop.f32.mrf.mxu0
      %v8710 = vadd.f32 %v8676, %v8709
      %8711 = vmatmul.bf16.gmra.mxu0 %v6880
      %v8712 = vpop.f32.mrf.mxu0
      %v8713 = vadd.f32 %v8679, %v8712
      %v8714 = vpop.f32.mrf.mxu0
      %v8715 = vadd.f32 %v8681, %v8714
      %8716 = vdwg.mxu0
      %8717 = vmatpush.bf16.msra.mxu0 %v7712
      %8718 = vmatpush.bf16.msra.mxu0 %v7708
      %8719 = vmatpush.bf16.msra.mxu0 %v7704
      %8720 = vmatpush.bf16.msra.mxu0 %v7700
      %8721 = vmatpush.bf16.msra.mxu0 %v7696
      %8722 = vmatpush.bf16.msra.mxu0 %v7692
      %8723 = vmatpush.bf16.msra.mxu0 %v7688
      %8724 = vmatpush.bf16.msra.mxu0 %v7684
      %8725 = vmatmul.bf16.gmra.mxu0 %v6849
      %v8726 = vpop.f32.mrf.mxu0
      %v8727 = vadd.f32 %v8693, %v8726
      %v8728 = vpop.f32.mrf.mxu0
      %v8729 = vadd.f32 %v8695, %v8728
      %8730 = vmatmul.bf16.gmra.mxu0 %v6857
      %v8731 = vpop.f32.mrf.mxu0
      %v8732 = vadd.f32 %v8698, %v8731
      %v8733 = vpop.f32.mrf.mxu0
      %v8734 = vadd.f32 %v8700, %v8733
      %8735 = vmatmul.bf16.gmra.mxu0 %v6865
      %v8736 = vpop.f32.mrf.mxu0
      %v8737 = vadd.f32 %v8703, %v8736
      %v8738 = vpop.f32.mrf.mxu0
      %v8739 = vadd.f32 %v8705, %v8738
      %8740 = vmatmul.bf16.gmra.mxu0 %v6873
      %v8741 = vpop.f32.mrf.mxu0
      %v8742 = vadd.f32 %v8708, %v8741
      %v8743 = vpop.f32.mrf.mxu0
      %v8744 = vadd.f32 %v8710, %v8743
      %8745 = vmatmul.bf16.gmra.mxu0 %v6881
      %v8746 = vpop.f32.mrf.mxu0
      %v8747 = vadd.f32 %v8713, %v8746
      %v8748 = vpop.f32.mrf.mxu0
      %v8749 = vadd.f32 %v8715, %v8748
      %8750 = vdwg.mxu0
      %8751 = vmatpush.bf16.msra.mxu0 %v7744
      %8752 = vmatpush.bf16.msra.mxu0 %v7740
      %8753 = vmatpush.bf16.msra.mxu0 %v7736
      %8754 = vmatpush.bf16.msra.mxu0 %v7732
      %8755 = vmatpush.bf16.msra.mxu0 %v7728
      %8756 = vmatpush.bf16.msra.mxu0 %v7724
      %8757 = vmatpush.bf16.msra.mxu0 %v7720
      %8758 = vmatpush.bf16.msra.mxu0 %v7716
      %8759 = vmatmul.bf16.gmra.mxu0 %v6850
      %v8760 = vpop.f32.mrf.mxu0
      %v8761 = vadd.f32 %v8727, %v8760
      %v8762 = vpop.f32.mrf.mxu0
      %v8763 = vadd.f32 %v8729, %v8762
      %8764 = vmatmul.bf16.gmra.mxu0 %v6858
      %v8765 = vpop.f32.mrf.mxu0
      %v8766 = vadd.f32 %v8732, %v8765
      %v8767 = vpop.f32.mrf.mxu0
      %v8768 = vadd.f32 %v8734, %v8767
      %8769 = vmatmul.bf16.gmra.mxu0 %v6866
      %v8770 = vpop.f32.mrf.mxu0
      %v8771 = vadd.f32 %v8737, %v8770
      %v8772 = vpop.f32.mrf.mxu0
      %v8773 = vadd.f32 %v8739, %v8772
      %8774 = vmatmul.bf16.gmra.mxu0 %v6874
      %v8775 = vpop.f32.mrf.mxu0
      %v8776 = vadd.f32 %v8742, %v8775
      %v8777 = vpop.f32.mrf.mxu0
      %v8778 = vadd.f32 %v8744, %v8777
      %8779 = vmatmul.bf16.gmra.mxu0 %v6882
      %v8780 = vpop.f32.mrf.mxu0
      %v8781 = vadd.f32 %v8747, %v8780
      %v8782 = vpop.f32.mrf.mxu0
      %v8783 = vadd.f32 %v8749, %v8782
      %8784 = vdwg.mxu0
      %8785 = vmatpush.bf16.msra.mxu0 %v7776
      %8786 = vmatpush.bf16.msra.mxu0 %v7772
      %8787 = vmatpush.bf16.msra.mxu0 %v7768
      %8788 = vmatpush.bf16.msra.mxu0 %v7764
      %8789 = vmatpush.bf16.msra.mxu0 %v7760
      %8790 = vmatpush.bf16.msra.mxu0 %v7756
      %8791 = vmatpush.bf16.msra.mxu0 %v7752
      %8792 = vmatpush.bf16.msra.mxu0 %v7748
      %8793 = vmatmul.bf16.gmra.mxu0 %v6851
      %v8794 = vpop.f32.mrf.mxu0
      %v8795 = vadd.f32 %v8761, %v8794
      %v8796 = vpop.f32.mrf.mxu0
      %v8797 = vadd.f32 %v8763, %v8796
      %8798 = vmatmul.bf16.gmra.mxu0 %v6859
      %v8799 = vpop.f32.mrf.mxu0
      %v8800 = vadd.f32 %v8766, %v8799
      %v8801 = vpop.f32.mrf.mxu0
      %v8802 = vadd.f32 %v8768, %v8801
      %8803 = vmatmul.bf16.gmra.mxu0 %v6867
      %v8804 = vpop.f32.mrf.mxu0
      %v8805 = vadd.f32 %v8771, %v8804
      %v8806 = vpop.f32.mrf.mxu0
      %v8807 = vadd.f32 %v8773, %v8806
      %8808 = vmatmul.bf16.gmra.mxu0 %v6875
      %v8809 = vpop.f32.mrf.mxu0
      %v8810 = vadd.f32 %v8776, %v8809
      %v8811 = vpop.f32.mrf.mxu0
      %v8812 = vadd.f32 %v8778, %v8811
      %8813 = vmatmul.bf16.gmra.mxu0 %v6883
      %v8814 = vpop.f32.mrf.mxu0
      %v8815 = vadd.f32 %v8781, %v8814
      %v8816 = vpop.f32.mrf.mxu0
      %v8817 = vadd.f32 %v8783, %v8816
      %8818 = vdwg.mxu0
      %8819 = vmatpush.bf16.msra.mxu0 %v7808
      %8820 = vmatpush.bf16.msra.mxu0 %v7804
      %8821 = vmatpush.bf16.msra.mxu0 %v7800
      %8822 = vmatpush.bf16.msra.mxu0 %v7796
      %8823 = vmatpush.bf16.msra.mxu0 %v7792
      %8824 = vmatpush.bf16.msra.mxu0 %v7788
      %8825 = vmatpush.bf16.msra.mxu0 %v7784
      %8826 = vmatpush.bf16.msra.mxu0 %v7780
      %8827 = vmatmul.bf16.gmra.mxu0 %v6852
      %v8828 = vpop.f32.mrf.mxu0
      %v8829 = vadd.f32 %v8795, %v8828
      %v8830 = vpop.f32.mrf.mxu0
      %v8831 = vadd.f32 %v8797, %v8830
      %8832 = vmatmul.bf16.gmra.mxu0 %v6860
      %v8833 = vpop.f32.mrf.mxu0
      %v8834 = vadd.f32 %v8800, %v8833
      %v8835 = vpop.f32.mrf.mxu0
      %v8836 = vadd.f32 %v8802, %v8835
      %8837 = vmatmul.bf16.gmra.mxu0 %v6868
      %v8838 = vpop.f32.mrf.mxu0
      %v8839 = vadd.f32 %v8805, %v8838
      %v8840 = vpop.f32.mrf.mxu0
      %v8841 = vadd.f32 %v8807, %v8840
      %8842 = vmatmul.bf16.gmra.mxu0 %v6876
      %v8843 = vpop.f32.mrf.mxu0
      %v8844 = vadd.f32 %v8810, %v8843
      %v8845 = vpop.f32.mrf.mxu0
      %v8846 = vadd.f32 %v8812, %v8845
      %8847 = vmatmul.bf16.gmra.mxu0 %v6884
      %v8848 = vpop.f32.mrf.mxu0
      %v8849 = vadd.f32 %v8815, %v8848
      %v8850 = vpop.f32.mrf.mxu0
      %v8851 = vadd.f32 %v8817, %v8850
      %8852 = vdwg.mxu0
      %8853 = vmatpush.bf16.msra.mxu0 %v7840
      %8854 = vmatpush.bf16.msra.mxu0 %v7836
      %8855 = vmatpush.bf16.msra.mxu0 %v7832
      %8856 = vmatpush.bf16.msra.mxu0 %v7828
      %8857 = vmatpush.bf16.msra.mxu0 %v7824
      %8858 = vmatpush.bf16.msra.mxu0 %v7820
      %8859 = vmatpush.bf16.msra.mxu0 %v7816
      %8860 = vmatpush.bf16.msra.mxu0 %v7812
      %8861 = vmatmul.bf16.gmra.mxu0 %v6853
      %v8862 = vpop.f32.mrf.mxu0
      %v8863 = vadd.f32 %v8829, %v8862
      %v8864 = vpop.f32.mrf.mxu0
      %v8865 = vadd.f32 %v8831, %v8864
      %8866 = vmatmul.bf16.gmra.mxu0 %v6861
      %v8867 = vpop.f32.mrf.mxu0
      %v8868 = vadd.f32 %v8834, %v8867
      %v8869 = vpop.f32.mrf.mxu0
      %v8870 = vadd.f32 %v8836, %v8869
      %8871 = vmatmul.bf16.gmra.mxu0 %v6869
      %v8872 = vpop.f32.mrf.mxu0
      %v8873 = vadd.f32 %v8839, %v8872
      %v8874 = vpop.f32.mrf.mxu0
      %v8875 = vadd.f32 %v8841, %v8874
      %8876 = vmatmul.bf16.gmra.mxu0 %v6877
      %v8877 = vpop.f32.mrf.mxu0
      %v8878 = vadd.f32 %v8844, %v8877
      %v8879 = vpop.f32.mrf.mxu0
      %v8880 = vadd.f32 %v8846, %v8879
      %8881 = vmatmul.bf16.gmra.mxu0 %v6885
      %v8882 = vpop.f32.mrf.mxu0
      %v8883 = vadd.f32 %v8849, %v8882
      %v8884 = vpop.f32.mrf.mxu0
      %v8885 = vadd.f32 %v8851, %v8884
      %8886 = vdwg.mxu0
      %8887 = vmatpush.bf16.msra.mxu0 0
      %8888 = vmatpush.bf16.msra.mxu0 0
      %8889 = vmatpush.bf16.msra.mxu0 0
      %8890 = vmatpush.bf16.msra.mxu0 0
      %8891 = vmatpush.bf16.msra.mxu0 0
      %8892 = vmatpush.bf16.msra.mxu0 0
      %8893 = vmatpush.bf16.msra.mxu0 %v8100
      %8894 = vmatpush.bf16.msra.mxu0 %v7844
      %8895 = vmatmul.bf16.gmra.mxu0 %v8079
      %v8896 = vpop.f32.mrf.mxu0
      %v8897 = vadd.f32 %v8863, %v8896
      %v8898 = vpop.f32.mrf.mxu0
      %v8899 = vadd.f32 %v8865, %v8898
      %8900 = vmatmul.bf16.gmra.mxu0 %v8082
      %v8901 = vpop.f32.mrf.mxu0
      %v8902 = vadd.f32 %v8868, %v8901
      %v8903 = vpop.f32.mrf.mxu0
      %v8904 = vadd.f32 %v8870, %v8903
      %8905 = vmatmul.bf16.gmra.mxu0 %v8085
      %v8906 = vpop.f32.mrf.mxu0
      %v8907 = vadd.f32 %v8873, %v8906
      %v8908 = vpop.f32.mrf.mxu0
      %v8909 = vadd.f32 %v8875, %v8908
      %8910 = vmatmul.bf16.gmra.mxu0 %v8088
      %v8911 = vpop.f32.mrf.mxu0
      %v8912 = vadd.f32 %v8878, %v8911
      %v8913 = vpop.f32.mrf.mxu0
      %v8914 = vadd.f32 %v8880, %v8913
      %8915 = vmatmul.bf16.gmra.mxu0 %v8091
      %v8916 = vpop.f32.mrf.mxu0
      %v8917 = vadd.f32 %v8883, %v8916
      %v8918 = vpop.f32.mrf.mxu0
      %v8919 = vadd.f32 %v8885, %v8918
      %8920 = vdwg.mxu0
      %8921 = vmatpush.bf16.msra.mxu0 %v7649
      %8922 = vmatpush.bf16.msra.mxu0 %v7645
      %8923 = vmatpush.bf16.msra.mxu0 %v7641
      %8924 = vmatpush.bf16.msra.mxu0 %v7637
      %8925 = vmatpush.bf16.msra.mxu0 %v7633
      %8926 = vmatpush.bf16.msra.mxu0 %v7629
      %8927 = vmatpush.bf16.msra.mxu0 %v7625
      %8928 = vmatpush.bf16.msra.mxu0 %v7621
      %8929 = vmatmul.bf16.gmra.mxu0 %v6847
      %v8930 = vpop.f32.mrf.mxu0
      %v8931 = vadd.f32 %v6703, %v8930
      %v8932 = vpop.f32.mrf.mxu0
      %v8933 = vadd.f32 %v6705, %v8932
      %8934 = vmatmul.bf16.gmra.mxu0 %v6855
      %v8935 = vpop.f32.mrf.mxu0
      %v8936 = vadd.f32 %v6708, %v8935
      %v8937 = vpop.f32.mrf.mxu0
      %v8938 = vadd.f32 %v6710, %v8937
      %8939 = vmatmul.bf16.gmra.mxu0 %v6863
      %v8940 = vpop.f32.mrf.mxu0
      %v8941 = vadd.f32 %v6713, %v8940
      %v8942 = vpop.f32.mrf.mxu0
      %v8943 = vadd.f32 %v6715, %v8942
      %8944 = vmatmul.bf16.gmra.mxu0 %v6871
      %v8945 = vpop.f32.mrf.mxu0
      %v8946 = vadd.f32 %v6718, %v8945
      %v8947 = vpop.f32.mrf.mxu0
      %v8948 = vadd.f32 %v6720, %v8947
      %8949 = vmatmul.bf16.gmra.mxu0 %v6879
      %v8950 = vpop.f32.mrf.mxu0
      %v8951 = vadd.f32 %v6723, %v8950
      %v8952 = vpop.f32.mrf.mxu0
      %v8953 = vadd.f32 %v6725, %v8952
      %8954 = vdwg.mxu0
      %8955 = vmatpush.bf16.msra.mxu0 %v7681
      %8956 = vmatpush.bf16.msra.mxu0 %v7677
      %8957 = vmatpush.bf16.msra.mxu0 %v7673
      %8958 = vmatpush.bf16.msra.mxu0 %v7669
      %8959 = vmatpush.bf16.msra.mxu0 %v7665
      %8960 = vmatpush.bf16.msra.mxu0 %v7661
      %8961 = vmatpush.bf16.msra.mxu0 %v7657
      %8962 = vmatpush.bf16.msra.mxu0 %v7653
      %8963 = vmatmul.bf16.gmra.mxu0 %v6848
      %v8964 = vpop.f32.mrf.mxu0
      %v8965 = vadd.f32 %v8931, %v8964
      %v8966 = vpop.f32.mrf.mxu0
      %v8967 = vadd.f32 %v8933, %v8966
      %8968 = vmatmul.bf16.gmra.mxu0 %v6856
      %v8969 = vpop.f32.mrf.mxu0
      %v8970 = vadd.f32 %v8936, %v8969
      %v8971 = vpop.f32.mrf.mxu0
      %v8972 = vadd.f32 %v8938, %v8971
      %8973 = vmatmul.bf16.gmra.mxu0 %v6864
      %v8974 = vpop.f32.mrf.mxu0
      %v8975 = vadd.f32 %v8941, %v8974
      %v8976 = vpop.f32.mrf.mxu0
      %v8977 = vadd.f32 %v8943, %v8976
      %8978 = vmatmul.bf16.gmra.mxu0 %v6872
      %v8979 = vpop.f32.mrf.mxu0
      %v8980 = vadd.f32 %v8946, %v8979
      %v8981 = vpop.f32.mrf.mxu0
      %v8982 = vadd.f32 %v8948, %v8981
      %8983 = vmatmul.bf16.gmra.mxu0 %v6880
      %v8984 = vpop.f32.mrf.mxu0
      %v8985 = vadd.f32 %v8951, %v8984
      %v8986 = vpop.f32.mrf.mxu0
      %v8987 = vadd.f32 %v8953, %v8986
      %8988 = vdwg.mxu0
      %8989 = vmatpush.bf16.msra.mxu0 %v7713
      %8990 = vmatpush.bf16.msra.mxu0 %v7709
      %8991 = vmatpush.bf16.msra.mxu0 %v7705
      %8992 = vmatpush.bf16.msra.mxu0 %v7701
      %8993 = vmatpush.bf16.msra.mxu0 %v7697
      %8994 = vmatpush.bf16.msra.mxu0 %v7693
      %8995 = vmatpush.bf16.msra.mxu0 %v7689
      %8996 = vmatpush.bf16.msra.mxu0 %v7685
      %8997 = vmatmul.bf16.gmra.mxu0 %v6849
      %v8998 = vpop.f32.mrf.mxu0
      %v8999 = vadd.f32 %v8965, %v8998
      %v9000 = vpop.f32.mrf.mxu0
      %v9001 = vadd.f32 %v8967, %v9000
      %9002 = vmatmul.bf16.gmra.mxu0 %v6857
      %v9003 = vpop.f32.mrf.mxu0
      %v9004 = vadd.f32 %v8970, %v9003
      %v9005 = vpop.f32.mrf.mxu0
      %v9006 = vadd.f32 %v8972, %v9005
      %9007 = vmatmul.bf16.gmra.mxu0 %v6865
      %v9008 = vpop.f32.mrf.mxu0
      %v9009 = vadd.f32 %v8975, %v9008
      %v9010 = vpop.f32.mrf.mxu0
      %v9011 = vadd.f32 %v8977, %v9010
      %9012 = vmatmul.bf16.gmra.mxu0 %v6873
      %v9013 = vpop.f32.mrf.mxu0
      %v9014 = vadd.f32 %v8980, %v9013
      %v9015 = vpop.f32.mrf.mxu0
      %v9016 = vadd.f32 %v8982, %v9015
      %9017 = vmatmul.bf16.gmra.mxu0 %v6881
      %v9018 = vpop.f32.mrf.mxu0
      %v9019 = vadd.f32 %v8985, %v9018
      %v9020 = vpop.f32.mrf.mxu0
      %v9021 = vadd.f32 %v8987, %v9020
      %9022 = vdwg.mxu0
      %9023 = vmatpush.bf16.msra.mxu0 %v7745
      %9024 = vmatpush.bf16.msra.mxu0 %v7741
      %9025 = vmatpush.bf16.msra.mxu0 %v7737
      %9026 = vmatpush.bf16.msra.mxu0 %v7733
      %9027 = vmatpush.bf16.msra.mxu0 %v7729
      %9028 = vmatpush.bf16.msra.mxu0 %v7725
      %9029 = vmatpush.bf16.msra.mxu0 %v7721
      %9030 = vmatpush.bf16.msra.mxu0 %v7717
      %9031 = vmatmul.bf16.gmra.mxu0 %v6850
      %v9032 = vpop.f32.mrf.mxu0
      %v9033 = vadd.f32 %v8999, %v9032
      %v9034 = vpop.f32.mrf.mxu0
      %v9035 = vadd.f32 %v9001, %v9034
      %9036 = vmatmul.bf16.gmra.mxu0 %v6858
      %v9037 = vpop.f32.mrf.mxu0
      %v9038 = vadd.f32 %v9004, %v9037
      %v9039 = vpop.f32.mrf.mxu0
      %v9040 = vadd.f32 %v9006, %v9039
      %9041 = vmatmul.bf16.gmra.mxu0 %v6866
      %v9042 = vpop.f32.mrf.mxu0
      %v9043 = vadd.f32 %v9009, %v9042
      %v9044 = vpop.f32.mrf.mxu0
      %v9045 = vadd.f32 %v9011, %v9044
      %9046 = vmatmul.bf16.gmra.mxu0 %v6874
      %v9047 = vpop.f32.mrf.mxu0
      %v9048 = vadd.f32 %v9014, %v9047
      %v9049 = vpop.f32.mrf.mxu0
      %v9050 = vadd.f32 %v9016, %v9049
      %9051 = vmatmul.bf16.gmra.mxu0 %v6882
      %v9052 = vpop.f32.mrf.mxu0
      %v9053 = vadd.f32 %v9019, %v9052
      %v9054 = vpop.f32.mrf.mxu0
      %v9055 = vadd.f32 %v9021, %v9054
      %9056 = vdwg.mxu0
      %9057 = vmatpush.bf16.msra.mxu0 %v7777
      %9058 = vmatpush.bf16.msra.mxu0 %v7773
      %9059 = vmatpush.bf16.msra.mxu0 %v7769
      %9060 = vmatpush.bf16.msra.mxu0 %v7765
      %9061 = vmatpush.bf16.msra.mxu0 %v7761
      %9062 = vmatpush.bf16.msra.mxu0 %v7757
      %9063 = vmatpush.bf16.msra.mxu0 %v7753
      %9064 = vmatpush.bf16.msra.mxu0 %v7749
      %9065 = vmatmul.bf16.gmra.mxu0 %v6851
      %v9066 = vpop.f32.mrf.mxu0
      %v9067 = vadd.f32 %v9033, %v9066
      %v9068 = vpop.f32.mrf.mxu0
      %v9069 = vadd.f32 %v9035, %v9068
      %9070 = vmatmul.bf16.gmra.mxu0 %v6859
      %v9071 = vpop.f32.mrf.mxu0
      %v9072 = vadd.f32 %v9038, %v9071
      %v9073 = vpop.f32.mrf.mxu0
      %v9074 = vadd.f32 %v9040, %v9073
      %9075 = vmatmul.bf16.gmra.mxu0 %v6867
      %v9076 = vpop.f32.mrf.mxu0
      %v9077 = vadd.f32 %v9043, %v9076
      %v9078 = vpop.f32.mrf.mxu0
      %v9079 = vadd.f32 %v9045, %v9078
      %9080 = vmatmul.bf16.gmra.mxu0 %v6875
      %v9081 = vpop.f32.mrf.mxu0
      %v9082 = vadd.f32 %v9048, %v9081
      %v9083 = vpop.f32.mrf.mxu0
      %v9084 = vadd.f32 %v9050, %v9083
      %9085 = vmatmul.bf16.gmra.mxu0 %v6883
      %v9086 = vpop.f32.mrf.mxu0
      %v9087 = vadd.f32 %v9053, %v9086
      %v9088 = vpop.f32.mrf.mxu0
      %v9089 = vadd.f32 %v9055, %v9088
      %9090 = vdwg.mxu0
      %9091 = vmatpush.bf16.msra.mxu0 %v7809
      %9092 = vmatpush.bf16.msra.mxu0 %v7805
      %9093 = vmatpush.bf16.msra.mxu0 %v7801
      %9094 = vmatpush.bf16.msra.mxu0 %v7797
      %9095 = vmatpush.bf16.msra.mxu0 %v7793
      %9096 = vmatpush.bf16.msra.mxu0 %v7789
      %9097 = vmatpush.bf16.msra.mxu0 %v7785
      %9098 = vmatpush.bf16.msra.mxu0 %v7781
      %9099 = vmatmul.bf16.gmra.mxu0 %v6852
      %v9100 = vpop.f32.mrf.mxu0
      %v9101 = vadd.f32 %v9067, %v9100
      %v9102 = vpop.f32.mrf.mxu0
      %v9103 = vadd.f32 %v9069, %v9102
      %9104 = vmatmul.bf16.gmra.mxu0 %v6860
      %v9105 = vpop.f32.mrf.mxu0
      %v9106 = vadd.f32 %v9072, %v9105
      %v9107 = vpop.f32.mrf.mxu0
      %v9108 = vadd.f32 %v9074, %v9107
      %9109 = vmatmul.bf16.gmra.mxu0 %v6868
      %v9110 = vpop.f32.mrf.mxu0
      %v9111 = vadd.f32 %v9077, %v9110
      %v9112 = vpop.f32.mrf.mxu0
      %v9113 = vadd.f32 %v9079, %v9112
      %9114 = vmatmul.bf16.gmra.mxu0 %v6876
      %v9115 = vpop.f32.mrf.mxu0
      %v9116 = vadd.f32 %v9082, %v9115
      %v9117 = vpop.f32.mrf.mxu0
      %v9118 = vadd.f32 %v9084, %v9117
      %9119 = vmatmul.bf16.gmra.mxu0 %v6884
      %v9120 = vpop.f32.mrf.mxu0
      %v9121 = vadd.f32 %v9087, %v9120
      %v9122 = vpop.f32.mrf.mxu0
      %v9123 = vadd.f32 %v9089, %v9122
      %9124 = vdwg.mxu0
      %9125 = vmatpush.bf16.msra.mxu0 %v7841
      %9126 = vmatpush.bf16.msra.mxu0 %v7837
      %9127 = vmatpush.bf16.msra.mxu0 %v7833
      %9128 = vmatpush.bf16.msra.mxu0 %v7829
      %9129 = vmatpush.bf16.msra.mxu0 %v7825
      %9130 = vmatpush.bf16.msra.mxu0 %v7821
      %9131 = vmatpush.bf16.msra.mxu0 %v7817
      %9132 = vmatpush.bf16.msra.mxu0 %v7813
      %9133 = vmatmul.bf16.gmra.mxu0 %v6853
      %v9134 = vpop.f32.mrf.mxu0
      %v9135 = vadd.f32 %v9101, %v9134
      %v9136 = vpop.f32.mrf.mxu0
      %v9137 = vadd.f32 %v9103, %v9136
      %9138 = vmatmul.bf16.gmra.mxu0 %v6861
      %v9139 = vpop.f32.mrf.mxu0
      %v9140 = vadd.f32 %v9106, %v9139
      %v9141 = vpop.f32.mrf.mxu0
      %v9142 = vadd.f32 %v9108, %v9141
      %9143 = vmatmul.bf16.gmra.mxu0 %v6869
      %v9144 = vpop.f32.mrf.mxu0
      %v9145 = vadd.f32 %v9111, %v9144
      %v9146 = vpop.f32.mrf.mxu0
      %v9147 = vadd.f32 %v9113, %v9146
      %9148 = vmatmul.bf16.gmra.mxu0 %v6877
      %v9149 = vpop.f32.mrf.mxu0
      %v9150 = vadd.f32 %v9116, %v9149
      %v9151 = vpop.f32.mrf.mxu0
      %v9152 = vadd.f32 %v9118, %v9151
      %9153 = vmatmul.bf16.gmra.mxu0 %v6885
      %v9154 = vpop.f32.mrf.mxu0
      %v9155 = vadd.f32 %v9121, %v9154
      %v9156 = vpop.f32.mrf.mxu0
      %v9157 = vadd.f32 %v9123, %v9156
      %9158 = vdwg.mxu0
      %9159 = vmatpush.bf16.msra.mxu0 0
      %9160 = vmatpush.bf16.msra.mxu0 0
      %9161 = vmatpush.bf16.msra.mxu0 0
      %9162 = vmatpush.bf16.msra.mxu0 0
      %9163 = vmatpush.bf16.msra.mxu0 0
      %9164 = vmatpush.bf16.msra.mxu0 0
      %9165 = vmatpush.bf16.msra.mxu0 %v8103
      %9166 = vmatpush.bf16.msra.mxu0 %v7845
      %9167 = vmatmul.bf16.gmra.mxu0 %v8079
      %v9168 = vpop.f32.mrf.mxu0
      %v9169 = vadd.f32 %v9135, %v9168
      %v9170 = vpop.f32.mrf.mxu0
      %v9171 = vadd.f32 %v9137, %v9170
      %9172 = vmatmul.bf16.gmra.mxu0 %v8082
      %v9173 = vpop.f32.mrf.mxu0
      %v9174 = vadd.f32 %v9140, %v9173
      %v9175 = vpop.f32.mrf.mxu0
      %v9176 = vadd.f32 %v9142, %v9175
      %9177 = vmatmul.bf16.gmra.mxu0 %v8085
      %v9178 = vpop.f32.mrf.mxu0
      %v9179 = vadd.f32 %v9145, %v9178
      %v9180 = vpop.f32.mrf.mxu0
      %v9181 = vadd.f32 %v9147, %v9180
      %9182 = vmatmul.bf16.gmra.mxu0 %v8088
      %v9183 = vpop.f32.mrf.mxu0
      %v9184 = vadd.f32 %v9150, %v9183
      %v9185 = vpop.f32.mrf.mxu0
      %v9186 = vadd.f32 %v9152, %v9185
      %9187 = vmatmul.bf16.gmra.mxu0 %v8091
      %v9188 = vpop.f32.mrf.mxu0
      %v9189 = vadd.f32 %v9155, %v9188
      %v9190 = vpop.f32.mrf.mxu0
      %v9191 = vadd.f32 %v9157, %v9190
      %9192 = vdwg.mxu0
      %s9193 = scalar_lea.vmem %s2, 3712
      %v9194 = vld [vmem:[%s9193] sm:$0xff]
      %v9195 = vld [vmem:[%s9193 + $0x8] sm:$0xff]
      %v9196 = vld [vmem:[%s9193 + $0x10] sm:$0xff]
      %v9197 = vld [vmem:[%s9193 + $0x18] sm:$0xff]
      %v9198 = vld [vmem:[%s9193 + $0x20] sm:$0xff]
      %v9199 = vld [vmem:[%s9193 + $0x28] sm:$0xff]
      %v9200 = vld [vmem:[%s9193 + $0x30] sm:$0xff]
      %v9201 = vld [vmem:[%s9193 + $0x38] sm:$0xff]
      %v9202 = vld [vmem:[%s9193 + $0x40] sm:$0xff]
      %v9203 = vld [vmem:[%s9193 + $0x48] sm:$0xff]
      %v9204 = vld [vmem:[%s9193 + $0x50] sm:$0xff]
      %v9205 = vld [vmem:[%s9193 + $0x58] sm:$0xff]
      %v9206 = vld [vmem:[%s9193 + $0x60] sm:$0xff]
      %v9207 = vld [vmem:[%s9193 + $0x68] sm:$0xff]
      %v9208 = vld [vmem:[%s9193 + $0x70] sm:$0xff]
      %v9209 = vld [vmem:[%s9193 + $0x78] sm:$0xff]
      %v9210 = vld [vmem:[%s9193 + $0x80] sm:$0xff]
      %v9211 = vld [vmem:[%s9193 + $0x88] sm:$0xff]
      %v9212 = vld [vmem:[%s9193 + $0x90] sm:$0xff]
      %v9213 = vld [vmem:[%s9193 + $0x98] sm:$0xff]
      %v9214 = vld [vmem:[%s9193 + $0xa0] sm:$0xff]
      %v9215 = vld [vmem:[%s9193 + $0xa8] sm:$0xff]
      %v9216 = vld [vmem:[%s9193 + $0xb0] sm:$0xff]
      %v9217 = vld [vmem:[%s9193 + $0xb8] sm:$0xff]
      %v9218 = vld [vmem:[%s9193 + $0xc0] sm:$0xff]
      %v9219 = vld [vmem:[%s9193 + $0xc8] sm:$0xff]
      %v9220 = vld [vmem:[%s9193 + $0xd0] sm:$0xff]
      %v9221 = vld [vmem:[%s9193 + $0xd8] sm:$0xff]
      %v9222 = vld [vmem:[%s9193 + $0xe0] sm:$0xff]
      %v9223 = vld [vmem:[%s9193 + $0xe8] sm:$0xff]
      %v9224 = vld [vmem:[%s9193 + $0xf0] sm:$0xff]
      %v9225 = vld [vmem:[%s9193 + $0xf8] sm:$0xff]
      %v9226 = vld [vmem:[%s9193 + $0x100] sm:$0xff]
      %v9227 = vld [vmem:[%s9193 + $0x108] sm:$0xff]
      %v9228 = vld [vmem:[%s9193 + $0x110] sm:$0xff]
      %v9229 = vld [vmem:[%s9193 + $0x118] sm:$0xff]
      %v9230 = vld [vmem:[%s9193 + $0x120] sm:$0xff]
      %v9231 = vld [vmem:[%s9193 + $0x128] sm:$0xff]
      %v9232 = vld [vmem:[%s9193 + $0x130] sm:$0xff]
      %v9233 = vld [vmem:[%s9193 + $0x138] sm:$0xff]
      %v9234 = vld [vmem:[%s9193 + $0x140] sm:$0xff]
      %v9235 = vld [vmem:[%s9193 + $0x148] sm:$0xff]
      %v9236 = vld [vmem:[%s9193 + $0x150] sm:$0xff]
      %v9237 = vld [vmem:[%s9193 + $0x158] sm:$0xff]
      %v9238 = vld [vmem:[%s9193 + $0x160] sm:$0xff]
      %v9239 = vld [vmem:[%s9193 + $0x168] sm:$0xff]
      %v9240 = vld [vmem:[%s9193 + $0x170] sm:$0xff]
      %v9241 = vld [vmem:[%s9193 + $0x178] sm:$0xff]
      %v9242 = vld [vmem:[%s9193 + $0x180] sm:$0xff]
      %v9243 = vld [vmem:[%s9193 + $0x188] sm:$0xff]
      %v9244 = vld [vmem:[%s9193 + $0x190] sm:$0xff]
      %v9245 = vld [vmem:[%s9193 + $0x198] sm:$0xff]
      %v9246 = vld [vmem:[%s9193 + $0x1a0] sm:$0xff]
      %v9247 = vld [vmem:[%s9193 + $0x1a8] sm:$0xff]
      %v9248 = vld [vmem:[%s9193 + $0x1b0] sm:$0xff]
      %v9249 = vld [vmem:[%s9193 + $0x1b8] sm:$0xff]
      %v9250 = vld [vmem:[%s9193 + $0x1c0] sm:$0xff]
      %v9251 = vld [vmem:[%s9193 + $0x1c8] sm:$0xff]
      %v9252 = vld [vmem:[%s9193 + $0x1d0] sm:$0xff]
      %v9253 = vld [vmem:[%s9193 + $0x1d8] sm:$0xff]
      %v9254 = vld [vmem:[%s9193 + $0x1e0] sm:$0xff]
      %v9255 = vld [vmem:[%s9193 + $0x1e8] sm:$0xff]
      %v9256 = vld [vmem:[%s9193 + $0x1f0] sm:$0xff]
      %v9257 = vld [vmem:[%s9193 + $0x1f8] sm:$0xff]
      %v9258 = vld [vmem:[%s9193 + $0x200] sm:$0xff]
      %v9259 = vld [vmem:[%s9193 + $0x208] sm:$0xff]
      %v9260 = vld [vmem:[%s9193 + $0x210] sm:$0xff]
      %v9261 = vld [vmem:[%s9193 + $0x218] sm:$0xff]
      %v9262 = vld [vmem:[%s9193 + $0x220] sm:$0xff]
      %v9263 = vld [vmem:[%s9193 + $0x228] sm:$0xff]
      %v9264 = vld [vmem:[%s9193 + $0x230] sm:$0xff]
      %v9265 = vld [vmem:[%s9193 + $0x238] sm:$0xff]
      %v9266 = vld [vmem:[%s9193 + $0x240] sm:$0xff]
      %v9267 = vld [vmem:[%s9193 + $0x248] sm:$0xff]
      %v9268 = vld [vmem:[%s9193 + $0x250] sm:$0xff]
      %v9269 = vld [vmem:[%s9193 + $0x258] sm:$0xff]
      %v9270 = vld [vmem:[%s9193 + $0x260] sm:$0xff]
      %v9271 = vld [vmem:[%s9193 + $0x268] sm:$0xff]
      %v9272 = vld [vmem:[%s9193 + $0x270] sm:$0xff]
      %v9273 = vld [vmem:[%s9193 + $0x278] sm:$0xff]
      %v9274 = vld [vmem:[%s9193 + $0x280] sm:$0xff]
      %v9275 = vld [vmem:[%s9193 + $0x288] sm:$0xff]
      %v9276 = vld [vmem:[%s9193 + $0x290] sm:$0xff]
      %v9277 = vld [vmem:[%s9193 + $0x298] sm:$0xff]
      %v9278 = vld [vmem:[%s9193 + $0x2a0] sm:$0xff]
      %v9279 = vld [vmem:[%s9193 + $0x2a8] sm:$0xff]
      %v9280 = vld [vmem:[%s9193 + $0x2b0] sm:$0xff]
      %v9281 = vld [vmem:[%s9193 + $0x2b8] sm:$0xff]
      %v9282 = vld [vmem:[%s9193 + $0x2c0] sm:$0xff]
      %v9283 = vld [vmem:[%s9193 + $0x2c8] sm:$0xff]
      %v9284 = vld [vmem:[%s9193 + $0x2d0] sm:$0xff]
      %v9285 = vld [vmem:[%s9193 + $0x2d8] sm:$0xff]
      %v9286 = vld [vmem:[%s9193 + $0x2e0] sm:$0xff]
      %v9287 = vld [vmem:[%s9193 + $0x2e8] sm:$0xff]
      %v9288 = vld [vmem:[%s9193 + $0x2f0] sm:$0xff]
      %v9289 = vld [vmem:[%s9193 + $0x2f8] sm:$0xff]
      %v9290 = vld [vmem:[%s9193 + $0x300] sm:$0xff]
      %v9291 = vld [vmem:[%s9193 + $0x308] sm:$0xff]
      %v9292 = vld [vmem:[%s9193 + $0x310] sm:$0xff]
      %v9293 = vld [vmem:[%s9193 + $0x318] sm:$0xff]
      %v9294 = vld [vmem:[%s9193 + $0x320] sm:$0xff]
      %v9295 = vld [vmem:[%s9193 + $0x328] sm:$0xff]
      %v9296 = vld [vmem:[%s9193 + $0x330] sm:$0xff]
      %v9297 = vld [vmem:[%s9193 + $0x338] sm:$0xff]
      %v9298 = vld [vmem:[%s9193 + $0x340] sm:$0xff]
      %v9299 = vld [vmem:[%s9193 + $0x348] sm:$0xff]
      %v9300 = vld [vmem:[%s9193 + $0x350] sm:$0xff]
      %v9301 = vld [vmem:[%s9193 + $0x358] sm:$0xff]
      %v9302 = vld [vmem:[%s9193 + $0x360] sm:$0xff]
      %v9303 = vld [vmem:[%s9193 + $0x368] sm:$0xff]
      %v9304 = vld [vmem:[%s9193 + $0x370] sm:$0xff]
      %v9305 = vld [vmem:[%s9193 + $0x378] sm:$0xff]
      %v9306 = vld [vmem:[%s9193 + $0x380] sm:$0xff]
      %v9307 = vld [vmem:[%s9193 + $0x388] sm:$0xff]
      %v9308 = vld [vmem:[%s9193 + $0x390] sm:$0xff]
      %v9309 = vld [vmem:[%s9193 + $0x398] sm:$0xff]
      %v9310 = vld [vmem:[%s9193 + $0x3a0] sm:$0xff]
      %v9311 = vld [vmem:[%s9193 + $0x3a8] sm:$0xff]
      %v9312 = vld [vmem:[%s9193 + $0x3b0] sm:$0xff]
      %v9313 = vld [vmem:[%s9193 + $0x3b8] sm:$0xff]
      %v9314 = vld [vmem:[%s9193 + $0x3c0] sm:$0xff]
      %v9315 = vld [vmem:[%s9193 + $0x3c8] sm:$0xff]
      %v9316 = vld [vmem:[%s9193 + $0x3d0] sm:$0xff]
      %v9317 = vld [vmem:[%s9193 + $0x3d8] sm:$0xff]
      %v9318 = vld [vmem:[%s9193 + $0x3e0] sm:$0xff]
      %v9319 = vld [vmem:[%s9193 + $0x3e8] sm:$0xff]
      %v9320 = vld [vmem:[%s9193 + $0x3f0] sm:$0xff]
      %v9321 = vld [vmem:[%s9193 + $0x3f8] sm:$0xff]
      %v9322 = vld [vmem:[%s9193 + $0x400] sm:$0xff]
      %v9323 = vld [vmem:[%s9193 + $0x408] sm:$0xff]
      %v9324 = vld [vmem:[%s9193 + $0x410] sm:$0xff]
      %v9325 = vld [vmem:[%s9193 + $0x418] sm:$0xff]
      %v9326 = vld [vmem:[%s9193 + $0x420] sm:$0xff]
      %v9327 = vld [vmem:[%s9193 + $0x428] sm:$0xff]
      %v9328 = vld [vmem:[%s9193 + $0x430] sm:$0xff]
      %v9329 = vld [vmem:[%s9193 + $0x438] sm:$0xff]
      %v9330 = vld [vmem:[%s9193 + $0x440] sm:$0xff]
      %v9331 = vld [vmem:[%s9193 + $0x448] sm:$0xff]
      %v9332 = vld [vmem:[%s9193 + $0x450] sm:$0xff]
      %v9333 = vld [vmem:[%s9193 + $0x458] sm:$0xff]
      %v9334 = vld [vmem:[%s9193 + $0x460] sm:$0xff]
      %v9335 = vld [vmem:[%s9193 + $0x468] sm:$0xff]
      %v9336 = vld [vmem:[%s9193 + $0x470] sm:$0xff]
      %v9337 = vld [vmem:[%s9193 + $0x478] sm:$0xff]
      %v9338 = vld [vmem:[%s9193 + $0x480] sm:$0xff]
      %v9339 = vld [vmem:[%s9193 + $0x488] sm:$0xff]
      %v9340 = vld [vmem:[%s9193 + $0x490] sm:$0xff]
      %v9341 = vld [vmem:[%s9193 + $0x498] sm:$0xff]
      %v9342 = vld [vmem:[%s9193 + $0x4a0] sm:$0xff]
      %v9343 = vld [vmem:[%s9193 + $0x4a8] sm:$0xff]
      %v9344 = vld [vmem:[%s9193 + $0x4b0] sm:$0xff]
      %v9345 = vld [vmem:[%s9193 + $0x4b8] sm:$0xff]
      %v9346 = vld [vmem:[%s9193 + $0x4c0] sm:$0xff]
      %v9347 = vld [vmem:[%s9193 + $0x4c8] sm:$0xff]
      %v9348 = vld [vmem:[%s9193 + $0x4d0] sm:$0xff]
      %v9349 = vld [vmem:[%s9193 + $0x4d8] sm:$0xff]
      %v9350 = vld [vmem:[%s9193 + $0x4e0] sm:$0xff]
      %v9351 = vld [vmem:[%s9193 + $0x4e8] sm:$0xff]
      %v9352 = vld [vmem:[%s9193 + $0x4f0] sm:$0xff]
      %v9353 = vld [vmem:[%s9193 + $0x4f8] sm:$0xff]
      %v9354 = vld [vmem:[%s9193 + $0x500] sm:$0xff]
      %v9355 = vld [vmem:[%s9193 + $0x508] sm:$0xff]
      %v9356 = vld [vmem:[%s9193 + $0x510] sm:$0xff]
      %v9357 = vld [vmem:[%s9193 + $0x518] sm:$0xff]
      %v9358 = vld [vmem:[%s9193 + $0x520] sm:$0xff]
      %v9359 = vld [vmem:[%s9193 + $0x528] sm:$0xff]
      %v9360 = vld [vmem:[%s9193 + $0x530] sm:$0xff]
      %v9361 = vld [vmem:[%s9193 + $0x538] sm:$0xff]
      %v9362 = vld [vmem:[%s9193 + $0x540] sm:$0xff]
      %v9363 = vld [vmem:[%s9193 + $0x548] sm:$0xff]
      %v9364 = vld [vmem:[%s9193 + $0x550] sm:$0xff]
      %v9365 = vld [vmem:[%s9193 + $0x558] sm:$0xff]
      %v9366 = vld [vmem:[%s9193 + $0x560] sm:$0xff]
      %v9367 = vld [vmem:[%s9193 + $0x568] sm:$0xff]
      %v9368 = vld [vmem:[%s9193 + $0x570] sm:$0xff]
      %v9369 = vld [vmem:[%s9193 + $0x578] sm:$0xff]
      %v9370 = vld [vmem:[%s9193 + $0x580] sm:$0xff]
      %v9371 = vld [vmem:[%s9193 + $0x588] sm:$0xff]
      %v9372 = vld [vmem:[%s9193 + $0x590] sm:$0xff]
      %v9373 = vld [vmem:[%s9193 + $0x598] sm:$0xff]
      %v9374 = vld [vmem:[%s9193 + $0x5a0] sm:$0xff]
      %v9375 = vld [vmem:[%s9193 + $0x5a8] sm:$0xff]
      %v9376 = vld [vmem:[%s9193 + $0x5b0] sm:$0xff]
      %v9377 = vld [vmem:[%s9193 + $0x5b8] sm:$0xff]
      %v9378 = vld [vmem:[%s9193 + $0x5c0] sm:$0xff]
      %v9379 = vld [vmem:[%s9193 + $0x5c8] sm:$0xff]
      %v9380 = vld [vmem:[%s9193 + $0x5d0] sm:$0xff]
      %v9381 = vld [vmem:[%s9193 + $0x5d8] sm:$0xff]
      %v9382 = vld [vmem:[%s9193 + $0x5e0] sm:$0xff]
      %v9383 = vld [vmem:[%s9193 + $0x5e8] sm:$0xff]
      %v9384 = vld [vmem:[%s9193 + $0x5f0] sm:$0xff]
      %v9385 = vld [vmem:[%s9193 + $0x5f8] sm:$0xff]
      %v9386 = vld [vmem:[%s9193 + $0x600] sm:$0xff]
      %v9387 = vld [vmem:[%s9193 + $0x608] sm:$0xff]
      %v9388 = vld [vmem:[%s9193 + $0x610] sm:$0xff]
      %v9389 = vld [vmem:[%s9193 + $0x618] sm:$0xff]
      %v9390 = vld [vmem:[%s9193 + $0x620] sm:$0xff]
      %v9391 = vld [vmem:[%s9193 + $0x628] sm:$0xff]
      %v9392 = vld [vmem:[%s9193 + $0x630] sm:$0xff]
      %v9393 = vld [vmem:[%s9193 + $0x638] sm:$0xff]
      %v9394 = vld [vmem:[%s9193 + $0x640] sm:$0xff]
      %v9395 = vld [vmem:[%s9193 + $0x648] sm:$0xff]
      %v9396 = vld [vmem:[%s9193 + $0x650] sm:$0xff]
      %v9397 = vld [vmem:[%s9193 + $0x658] sm:$0xff]
      %v9398 = vld [vmem:[%s9193 + $0x660] sm:$0xff]
      %v9399 = vld [vmem:[%s9193 + $0x668] sm:$0xff]
      %v9400 = vld [vmem:[%s9193 + $0x670] sm:$0xff]
      %v9401 = vld [vmem:[%s9193 + $0x678] sm:$0xff]
      %v9402 = vld [vmem:[%s9193 + $0x680] sm:$0xff]
      %v9403 = vld [vmem:[%s9193 + $0x688] sm:$0xff]
      %v9404 = vld [vmem:[%s9193 + $0x690] sm:$0xff]
      %v9405 = vld [vmem:[%s9193 + $0x698] sm:$0xff]
      %v9406 = vld [vmem:[%s9193 + $0x6a0] sm:$0xff]
      %v9407 = vld [vmem:[%s9193 + $0x6a8] sm:$0xff]
      %v9408 = vld [vmem:[%s9193 + $0x6b0] sm:$0xff]
      %v9409 = vld [vmem:[%s9193 + $0x6b8] sm:$0xff]
      %v9410 = vld [vmem:[%s9193 + $0x6c0] sm:$0xff]
      %v9411 = vld [vmem:[%s9193 + $0x6c8] sm:$0xff]
      %v9412 = vld [vmem:[%s9193 + $0x6d0] sm:$0xff]
      %v9413 = vld [vmem:[%s9193 + $0x6d8] sm:$0xff]
      %v9414 = vld [vmem:[%s9193 + $0x6e0] sm:$0xff]
      %v9415 = vld [vmem:[%s9193 + $0x6e8] sm:$0xff]
      %v9416 = vld [vmem:[%s9193 + $0x6f0] sm:$0xff]
      %v9417 = vld [vmem:[%s9193 + $0x6f8] sm:$0xff]
      %v9418 = vld [vmem:[%s9193 + $0x700] sm:$0xff]
      %v9419 = vld [vmem:[%s9193 + $0x708] sm:$0xff]
      %v9420 = vld [vmem:[%s9193 + $0x710] sm:$0xff]
      %v9421 = vld [vmem:[%s9193 + $0x718] sm:$0xff]
      %v9422 = vld [vmem:[%s9193 + $0x720] sm:$0xff]
      %v9423 = vld [vmem:[%s9193 + $0x728] sm:$0xff]
      %v9424 = vld [vmem:[%s9193 + $0x730] sm:$0x33]
      %v9425 = vld [vmem:[%s9193 + $0x738] sm:$0x33]
      %v9466 = vunpack.c.l.b16 %v3754
      %v9467 = vunpack.c.h.b16 %v3754
      %v9468 = vunpack.c.l.b16 %v3755
      %v9469 = vunpack.c.h.b16 %v3755
      %v9470 = vunpack.c.l.b16 %v3756
      %v9471 = vunpack.c.h.b16 %v3756
      %v9472 = vunpack.c.l.b16 %v3757
      %v9473 = vunpack.c.h.b16 %v3757
      %v9474 = vunpack.c.l.b16 %v3758
      %v9475 = vunpack.c.h.b16 %v3758
      %v9476 = vunpack.c.l.b16 %v3759
      %v9477 = vunpack.c.h.b16 %v3759
      %v9478 = vunpack.c.l.b16 %v3760
      %v9479 = vunpack.c.h.b16 %v3760
      %v9480 = vunpack.c.l.b16 %v3761
      %v9481 = vunpack.c.h.b16 %v3761
      %v9482 = vunpack.c.l.b16 %v3762
      %v9483 = vunpack.c.h.b16 %v3762
      %v9484 = vunpack.c.l.b16 %v3763
      %v9485 = vunpack.c.h.b16 %v3763
      %v9486 = vunpack.c.l.b16 %v3764
      %v9487 = vunpack.c.h.b16 %v3764
      %v9488 = vunpack.c.l.b16 %v3765
      %v9489 = vunpack.c.h.b16 %v3765
      %v9490 = vunpack.c.l.b16 %v3766
      %v9491 = vunpack.c.h.b16 %v3766
      %v9492 = vunpack.c.l.b16 %v3767
      %v9493 = vunpack.c.h.b16 %v3767
      %v9494 = vunpack.c.l.b16 %v3768
      %v9495 = vunpack.c.h.b16 %v3768
      %v9496 = vunpack.c.l.b16 %v3769
      %v9497 = vunpack.c.h.b16 %v3769
      %v9498 = vunpack.c.l.b16 %v3770
      %v9499 = vunpack.c.h.b16 %v3770
      %v9500 = vunpack.c.l.b16 %v3771
      %v9501 = vunpack.c.h.b16 %v3771
      %v9502 = vunpack.c.l.b16 %v3772
      %v9503 = vunpack.c.h.b16 %v3772
      %v9504 = vunpack.c.l.b16 %v3773
      %v9505 = vunpack.c.h.b16 %v3773
      %v9506 = vunpack.c.l.b16 %v3774
      %v9507 = vunpack.c.h.b16 %v3774
      %v9508 = vunpack.c.l.b16 %v3775
      %v9509 = vunpack.c.h.b16 %v3775
      %v9510 = vunpack.c.l.b16 %v3776
      %v9511 = vunpack.c.h.b16 %v3776
      %v9512 = vunpack.c.l.b16 %v3777
      %v9513 = vunpack.c.h.b16 %v3777
      %v9514 = vunpack.c.l.b16 %v3778
      %v9515 = vunpack.c.h.b16 %v3778
      %v9516 = vunpack.c.l.b16 %v3779
      %v9517 = vunpack.c.h.b16 %v3779
      %v9518 = vunpack.c.l.b16 %v3780
      %v9519 = vunpack.c.h.b16 %v3780
      %v9520 = vunpack.c.l.b16 %v3781
      %v9521 = vunpack.c.h.b16 %v3781
      %v9522 = vunpack.c.l.b16 %v3782
      %v9523 = vunpack.c.h.b16 %v3782
      %v9524 = vunpack.c.l.b16 %v3783
      %v9525 = vunpack.c.h.b16 %v3783
      %v9526 = vunpack.c.l.b16 %v3784
      %v9527 = vunpack.c.h.b16 %v3784
      %v9528 = vunpack.c.l.b16 %v3785
      %v9529 = vunpack.c.h.b16 %v3785
      %v9530 = vunpack.c.l.b16 %v3786
      %v9531 = vunpack.c.h.b16 %v3786
      %v9532 = vunpack.c.l.b16 %v3787
      %v9533 = vunpack.c.h.b16 %v3787
      %v9534 = vunpack.c.l.b16 %v3788
      %v9535 = vunpack.c.h.b16 %v3788
      %v9536 = vunpack.c.l.b16 %v3789
      %v9537 = vunpack.c.h.b16 %v3789
      %v9538 = vunpack.c.l.b16 %v3790
      %v9539 = vunpack.c.h.b16 %v3790
      %v9540 = vunpack.c.l.b16 %v3791
      %v9541 = vunpack.c.h.b16 %v3791
      %v9542 = vunpack.c.l.b16 %v3792
      %v9543 = vunpack.c.h.b16 %v3792
      %v9544 = vunpack.c.l.b16 %v3793
      %v9545 = vunpack.c.h.b16 %v3793
      %v9546 = vpack.c.b16 %v9474, %v9466
      %v9547 = vpack.c.b16 %v9475, %v9467
      %v9548 = vpack.c.b16 %v9476, %v9468
      %v9549 = vpack.c.b16 %v9477, %v9469
      %v9550 = vpack.c.b16 %v9478, %v9470
      %v9551 = vpack.c.b16 %v9479, %v9471
      %v9552 = vpack.c.b16 %v9480, %v9472
      %v9553 = vpack.c.b16 %v9481, %v9473
      %v9554 = vpack.c.b16 %v9490, %v9482
      %v9555 = vpack.c.b16 %v9491, %v9483
      %v9556 = vpack.c.b16 %v9492, %v9484
      %v9557 = vpack.c.b16 %v9493, %v9485
      %v9558 = vpack.c.b16 %v9494, %v9486
      %v9559 = vpack.c.b16 %v9495, %v9487
      %v9560 = vpack.c.b16 %v9496, %v9488
      %v9561 = vpack.c.b16 %v9497, %v9489
      %v9562 = vpack.c.b16 %v9506, %v9498
      %v9563 = vpack.c.b16 %v9507, %v9499
      %v9564 = vpack.c.b16 %v9508, %v9500
      %v9565 = vpack.c.b16 %v9509, %v9501
      %v9566 = vpack.c.b16 %v9510, %v9502
      %v9567 = vpack.c.b16 %v9511, %v9503
      %v9568 = vpack.c.b16 %v9512, %v9504
      %v9569 = vpack.c.b16 %v9513, %v9505
      %v9570 = vpack.c.b16 %v9522, %v9514
      %v9571 = vpack.c.b16 %v9523, %v9515
      %v9572 = vpack.c.b16 %v9524, %v9516
      %v9573 = vpack.c.b16 %v9525, %v9517
      %v9574 = vpack.c.b16 %v9526, %v9518
      %v9575 = vpack.c.b16 %v9527, %v9519
      %v9576 = vpack.c.b16 %v9528, %v9520
      %v9577 = vpack.c.b16 %v9529, %v9521
      %v9578 = vpack.c.b16 %v9538, %v9530
      %v9579 = vpack.c.b16 %v9539, %v9531
      %v9580 = vpack.c.b16 %v9540, %v9532
      %v9581 = vpack.c.b16 %v9541, %v9533
      %v9582 = vpack.c.b16 %v9542, %v9534
      %v9583 = vpack.c.b16 %v9543, %v9535
      %v9584 = vpack.c.b16 %v9544, %v9536
      %v9585 = vpack.c.b16 %v9545, %v9537
      %v9853 = vunpack.c.l.b16 %v9194
      %v9854 = vunpack.c.h.b16 %v9194
      %v9855 = vunpack.c.l.b16 %v9195
      %v9856 = vunpack.c.h.b16 %v9195
      %v9857 = vunpack.c.l.b16 %v9196
      %v9858 = vunpack.c.h.b16 %v9196
      %v9859 = vunpack.c.l.b16 %v9197
      %v9860 = vunpack.c.h.b16 %v9197
      %v9861 = vunpack.c.l.b16 %v9198
      %v9862 = vunpack.c.h.b16 %v9198
      %v9863 = vunpack.c.l.b16 %v9199
      %v9864 = vunpack.c.h.b16 %v9199
      %v9865 = vunpack.c.l.b16 %v9200
      %v9866 = vunpack.c.h.b16 %v9200
      %v9867 = vunpack.c.l.b16 %v9201
      %v9868 = vunpack.c.h.b16 %v9201
      %v9869 = vunpack.c.l.b16 %v9202
      %v9870 = vunpack.c.h.b16 %v9202
      %v9871 = vunpack.c.l.b16 %v9203
      %v9872 = vunpack.c.h.b16 %v9203
      %v9873 = vunpack.c.l.b16 %v9204
      %v9874 = vunpack.c.h.b16 %v9204
      %v9875 = vunpack.c.l.b16 %v9205
      %v9876 = vunpack.c.h.b16 %v9205
      %v9877 = vunpack.c.l.b16 %v9206
      %v9878 = vunpack.c.h.b16 %v9206
      %v9879 = vunpack.c.l.b16 %v9207
      %v9880 = vunpack.c.h.b16 %v9207
      %v9881 = vunpack.c.l.b16 %v9208
      %v9882 = vunpack.c.h.b16 %v9208
      %v9883 = vunpack.c.l.b16 %v9209
      %v9884 = vunpack.c.h.b16 %v9209
      %v9885 = vunpack.c.l.b16 %v9210
      %v9886 = vunpack.c.h.b16 %v9210
      %v9887 = vunpack.c.l.b16 %v9211
      %v9888 = vunpack.c.h.b16 %v9211
      %v9889 = vunpack.c.l.b16 %v9212
      %v9890 = vunpack.c.h.b16 %v9212
      %v9891 = vunpack.c.l.b16 %v9213
      %v9892 = vunpack.c.h.b16 %v9213
      %v9893 = vunpack.c.l.b16 %v9214
      %v9894 = vunpack.c.h.b16 %v9214
      %v9895 = vunpack.c.l.b16 %v9215
      %v9896 = vunpack.c.h.b16 %v9215
      %v9897 = vunpack.c.l.b16 %v9216
      %v9898 = vunpack.c.h.b16 %v9216
      %v9899 = vunpack.c.l.b16 %v9217
      %v9900 = vunpack.c.h.b16 %v9217
      %v9901 = vunpack.c.l.b16 %v9218
      %v9902 = vunpack.c.h.b16 %v9218
      %v9903 = vunpack.c.l.b16 %v9219
      %v9904 = vunpack.c.h.b16 %v9219
      %v9905 = vunpack.c.l.b16 %v9220
      %v9906 = vunpack.c.h.b16 %v9220
      %v9907 = vunpack.c.l.b16 %v9221
      %v9908 = vunpack.c.h.b16 %v9221
      %v9909 = vunpack.c.l.b16 %v9222
      %v9910 = vunpack.c.h.b16 %v9222
      %v9911 = vunpack.c.l.b16 %v9223
      %v9912 = vunpack.c.h.b16 %v9223
      %v9913 = vunpack.c.l.b16 %v9224
      %v9914 = vunpack.c.h.b16 %v9224
      %v9915 = vunpack.c.l.b16 %v9225
      %v9916 = vunpack.c.h.b16 %v9225
      %v9917 = vunpack.c.l.b16 %v9226
      %v9918 = vunpack.c.h.b16 %v9226
      %v9919 = vunpack.c.l.b16 %v9227
      %v9920 = vunpack.c.h.b16 %v9227
      %v9921 = vunpack.c.l.b16 %v9228
      %v9922 = vunpack.c.h.b16 %v9228
      %v9923 = vunpack.c.l.b16 %v9229
      %v9924 = vunpack.c.h.b16 %v9229
      %v9925 = vunpack.c.l.b16 %v9230
      %v9926 = vunpack.c.h.b16 %v9230
      %v9927 = vunpack.c.l.b16 %v9231
      %v9928 = vunpack.c.h.b16 %v9231
      %v9929 = vunpack.c.l.b16 %v9232
      %v9930 = vunpack.c.h.b16 %v9232
      %v9931 = vunpack.c.l.b16 %v9233
      %v9932 = vunpack.c.h.b16 %v9233
      %v9933 = vunpack.c.l.b16 %v9234
      %v9934 = vunpack.c.h.b16 %v9234
      %v9935 = vunpack.c.l.b16 %v9235
      %v9936 = vunpack.c.h.b16 %v9235
      %v9937 = vunpack.c.l.b16 %v9236
      %v9938 = vunpack.c.h.b16 %v9236
      %v9939 = vunpack.c.l.b16 %v9237
      %v9940 = vunpack.c.h.b16 %v9237
      %v9941 = vunpack.c.l.b16 %v9238
      %v9942 = vunpack.c.h.b16 %v9238
      %v9943 = vunpack.c.l.b16 %v9239
      %v9944 = vunpack.c.h.b16 %v9239
      %v9945 = vunpack.c.l.b16 %v9240
      %v9946 = vunpack.c.h.b16 %v9240
      %v9947 = vunpack.c.l.b16 %v9241
      %v9948 = vunpack.c.h.b16 %v9241
      %v9949 = vunpack.c.l.b16 %v9242
      %v9950 = vunpack.c.h.b16 %v9242
      %v9951 = vunpack.c.l.b16 %v9243
      %v9952 = vunpack.c.h.b16 %v9243
      %v9953 = vunpack.c.l.b16 %v9244
      %v9954 = vunpack.c.h.b16 %v9244
      %v9955 = vunpack.c.l.b16 %v9245
      %v9956 = vunpack.c.h.b16 %v9245
      %v9957 = vunpack.c.l.b16 %v9246
      %v9958 = vunpack.c.h.b16 %v9246
      %v9959 = vunpack.c.l.b16 %v9247
      %v9960 = vunpack.c.h.b16 %v9247
      %v9961 = vunpack.c.l.b16 %v9248
      %v9962 = vunpack.c.h.b16 %v9248
      %v9963 = vunpack.c.l.b16 %v9249
      %v9964 = vunpack.c.h.b16 %v9249
      %v9965 = vunpack.c.l.b16 %v9250
      %v9966 = vunpack.c.h.b16 %v9250
      %v9967 = vunpack.c.l.b16 %v9251
      %v9968 = vunpack.c.h.b16 %v9251
      %v9969 = vunpack.c.l.b16 %v9252
      %v9970 = vunpack.c.h.b16 %v9252
      %v9971 = vunpack.c.l.b16 %v9253
      %v9972 = vunpack.c.h.b16 %v9253
      %v9973 = vunpack.c.l.b16 %v9254
      %v9974 = vunpack.c.h.b16 %v9254
      %v9975 = vunpack.c.l.b16 %v9255
      %v9976 = vunpack.c.h.b16 %v9255
      %v9977 = vunpack.c.l.b16 %v9256
      %v9978 = vunpack.c.h.b16 %v9256
      %v9979 = vunpack.c.l.b16 %v9257
      %v9980 = vunpack.c.h.b16 %v9257
      %v9981 = vunpack.c.l.b16 %v9258
      %v9982 = vunpack.c.h.b16 %v9258
      %v9983 = vunpack.c.l.b16 %v9259
      %v9984 = vunpack.c.h.b16 %v9259
      %v9985 = vunpack.c.l.b16 %v9260
      %v9986 = vunpack.c.h.b16 %v9260
      %v9987 = vunpack.c.l.b16 %v9261
      %v9988 = vunpack.c.h.b16 %v9261
      %v9989 = vunpack.c.l.b16 %v9262
      %v9990 = vunpack.c.h.b16 %v9262
      %v9991 = vunpack.c.l.b16 %v9263
      %v9992 = vunpack.c.h.b16 %v9263
      %v9993 = vunpack.c.l.b16 %v9264
      %v9994 = vunpack.c.h.b16 %v9264
      %v9995 = vunpack.c.l.b16 %v9265
      %v9996 = vunpack.c.h.b16 %v9265
      %v9997 = vunpack.c.l.b16 %v9266
      %v9998 = vunpack.c.h.b16 %v9266
      %v9999 = vunpack.c.l.b16 %v9267
      %v10000 = vunpack.c.h.b16 %v9267
      %v10001 = vunpack.c.l.b16 %v9268
      %v10002 = vunpack.c.h.b16 %v9268
      %v10003 = vunpack.c.l.b16 %v9269
      %v10004 = vunpack.c.h.b16 %v9269
      %v10005 = vunpack.c.l.b16 %v9270
      %v10006 = vunpack.c.h.b16 %v9270
      %v10007 = vunpack.c.l.b16 %v9271
      %v10008 = vunpack.c.h.b16 %v9271
      %v10009 = vunpack.c.l.b16 %v9272
      %v10010 = vunpack.c.h.b16 %v9272
      %v10011 = vunpack.c.l.b16 %v9273
      %v10012 = vunpack.c.h.b16 %v9273
      %v10013 = vunpack.c.l.b16 %v9274
      %v10014 = vunpack.c.h.b16 %v9274
      %v10015 = vunpack.c.l.b16 %v9275
      %v10016 = vunpack.c.h.b16 %v9275
      %v10017 = vunpack.c.l.b16 %v9276
      %v10018 = vunpack.c.h.b16 %v9276
      %v10019 = vunpack.c.l.b16 %v9277
      %v10020 = vunpack.c.h.b16 %v9277
      %v10021 = vunpack.c.l.b16 %v9278
      %v10022 = vunpack.c.h.b16 %v9278
      %v10023 = vunpack.c.l.b16 %v9279
      %v10024 = vunpack.c.h.b16 %v9279
      %v10025 = vunpack.c.l.b16 %v9280
      %v10026 = vunpack.c.h.b16 %v9280
      %v10027 = vunpack.c.l.b16 %v9281
      %v10028 = vunpack.c.h.b16 %v9281
      %v10029 = vunpack.c.l.b16 %v9282
      %v10030 = vunpack.c.h.b16 %v9282
      %v10031 = vunpack.c.l.b16 %v9283
      %v10032 = vunpack.c.h.b16 %v9283
      %v10033 = vunpack.c.l.b16 %v9284
      %v10034 = vunpack.c.h.b16 %v9284
      %v10035 = vunpack.c.l.b16 %v9285
      %v10036 = vunpack.c.h.b16 %v9285
      %v10037 = vunpack.c.l.b16 %v9286
      %v10038 = vunpack.c.h.b16 %v9286
      %v10039 = vunpack.c.l.b16 %v9287
      %v10040 = vunpack.c.h.b16 %v9287
      %v10041 = vunpack.c.l.b16 %v9288
      %v10042 = vunpack.c.h.b16 %v9288
      %v10043 = vunpack.c.l.b16 %v9289
      %v10044 = vunpack.c.h.b16 %v9289
      %v10045 = vunpack.c.l.b16 %v9290
      %v10046 = vunpack.c.h.b16 %v9290
      %v10047 = vunpack.c.l.b16 %v9291
      %v10048 = vunpack.c.h.b16 %v9291
      %v10049 = vunpack.c.l.b16 %v9292
      %v10050 = vunpack.c.h.b16 %v9292
      %v10051 = vunpack.c.l.b16 %v9293
      %v10052 = vunpack.c.h.b16 %v9293
      %v10053 = vunpack.c.l.b16 %v9294
      %v10054 = vunpack.c.h.b16 %v9294
      %v10055 = vunpack.c.l.b16 %v9295
      %v10056 = vunpack.c.h.b16 %v9295
      %v10057 = vunpack.c.l.b16 %v9296
      %v10058 = vunpack.c.h.b16 %v9296
      %v10059 = vunpack.c.l.b16 %v9297
      %v10060 = vunpack.c.h.b16 %v9297
      %v10061 = vunpack.c.l.b16 %v9298
      %v10062 = vunpack.c.h.b16 %v9298
      %v10063 = vunpack.c.l.b16 %v9299
      %v10064 = vunpack.c.h.b16 %v9299
      %v10065 = vunpack.c.l.b16 %v9300
      %v10066 = vunpack.c.h.b16 %v9300
      %v10067 = vunpack.c.l.b16 %v9301
      %v10068 = vunpack.c.h.b16 %v9301
      %v10069 = vunpack.c.l.b16 %v9302
      %v10070 = vunpack.c.h.b16 %v9302
      %v10071 = vunpack.c.l.b16 %v9303
      %v10072 = vunpack.c.h.b16 %v9303
      %v10073 = vunpack.c.l.b16 %v9304
      %v10074 = vunpack.c.h.b16 %v9304
      %v10075 = vunpack.c.l.b16 %v9305
      %v10076 = vunpack.c.h.b16 %v9305
      %v10077 = vunpack.c.l.b16 %v9306
      %v10078 = vunpack.c.h.b16 %v9306
      %v10079 = vunpack.c.l.b16 %v9307
      %v10080 = vunpack.c.h.b16 %v9307
      %v10081 = vunpack.c.l.b16 %v9308
      %v10082 = vunpack.c.h.b16 %v9308
      %v10083 = vunpack.c.l.b16 %v9309
      %v10084 = vunpack.c.h.b16 %v9309
      %v10085 = vunpack.c.l.b16 %v9310
      %v10086 = vunpack.c.h.b16 %v9310
      %v10087 = vunpack.c.l.b16 %v9311
      %v10088 = vunpack.c.h.b16 %v9311
      %v10089 = vunpack.c.l.b16 %v9312
      %v10090 = vunpack.c.h.b16 %v9312
      %v10091 = vunpack.c.l.b16 %v9313
      %v10092 = vunpack.c.h.b16 %v9313
      %v10093 = vunpack.c.l.b16 %v9314
      %v10094 = vunpack.c.h.b16 %v9314
      %v10095 = vunpack.c.l.b16 %v9315
      %v10096 = vunpack.c.h.b16 %v9315
      %v10097 = vunpack.c.l.b16 %v9316
      %v10098 = vunpack.c.h.b16 %v9316
      %v10099 = vunpack.c.l.b16 %v9317
      %v10100 = vunpack.c.h.b16 %v9317
      %v10101 = vunpack.c.l.b16 %v9318
      %v10102 = vunpack.c.h.b16 %v9318
      %v10103 = vunpack.c.l.b16 %v9319
      %v10104 = vunpack.c.h.b16 %v9319
      %v10105 = vunpack.c.l.b16 %v9320
      %v10106 = vunpack.c.h.b16 %v9320
      %v10107 = vunpack.c.l.b16 %v9321
      %v10108 = vunpack.c.h.b16 %v9321
      %v10109 = vunpack.c.l.b16 %v9322
      %v10110 = vunpack.c.h.b16 %v9322
      %v10111 = vunpack.c.l.b16 %v9323
      %v10112 = vunpack.c.h.b16 %v9323
      %v10113 = vunpack.c.l.b16 %v9324
      %v10114 = vunpack.c.h.b16 %v9324
      %v10115 = vunpack.c.l.b16 %v9325
      %v10116 = vunpack.c.h.b16 %v9325
      %v10117 = vunpack.c.l.b16 %v9326
      %v10118 = vunpack.c.h.b16 %v9326
      %v10119 = vunpack.c.l.b16 %v9327
      %v10120 = vunpack.c.h.b16 %v9327
      %v10121 = vunpack.c.l.b16 %v9328
      %v10122 = vunpack.c.h.b16 %v9328
      %v10123 = vunpack.c.l.b16 %v9329
      %v10124 = vunpack.c.h.b16 %v9329
      %v10125 = vunpack.c.l.b16 %v9330
      %v10126 = vunpack.c.h.b16 %v9330
      %v10127 = vunpack.c.l.b16 %v9331
      %v10128 = vunpack.c.h.b16 %v9331
      %v10129 = vunpack.c.l.b16 %v9332
      %v10130 = vunpack.c.h.b16 %v9332
      %v10131 = vunpack.c.l.b16 %v9333
      %v10132 = vunpack.c.h.b16 %v9333
      %v10133 = vunpack.c.l.b16 %v9334
      %v10134 = vunpack.c.h.b16 %v9334
      %v10135 = vunpack.c.l.b16 %v9335
      %v10136 = vunpack.c.h.b16 %v9335
      %v10137 = vunpack.c.l.b16 %v9336
      %v10138 = vunpack.c.h.b16 %v9336
      %v10139 = vunpack.c.l.b16 %v9337
      %v10140 = vunpack.c.h.b16 %v9337
      %v10141 = vunpack.c.l.b16 %v9338
      %v10142 = vunpack.c.h.b16 %v9338
      %v10143 = vunpack.c.l.b16 %v9339
      %v10144 = vunpack.c.h.b16 %v9339
      %v10145 = vunpack.c.l.b16 %v9340
      %v10146 = vunpack.c.h.b16 %v9340
      %v10147 = vunpack.c.l.b16 %v9341
      %v10148 = vunpack.c.h.b16 %v9341
      %v10149 = vunpack.c.l.b16 %v9342
      %v10150 = vunpack.c.h.b16 %v9342
      %v10151 = vunpack.c.l.b16 %v9343
      %v10152 = vunpack.c.h.b16 %v9343
      %v10153 = vunpack.c.l.b16 %v9344
      %v10154 = vunpack.c.h.b16 %v9344
      %v10155 = vunpack.c.l.b16 %v9345
      %v10156 = vunpack.c.h.b16 %v9345
      %v10157 = vunpack.c.l.b16 %v9346
      %v10158 = vunpack.c.h.b16 %v9346
      %v10159 = vunpack.c.l.b16 %v9347
      %v10160 = vunpack.c.h.b16 %v9347
      %v10161 = vunpack.c.l.b16 %v9348
      %v10162 = vunpack.c.h.b16 %v9348
      %v10163 = vunpack.c.l.b16 %v9349
      %v10164 = vunpack.c.h.b16 %v9349
      %v10165 = vunpack.c.l.b16 %v9350
      %v10166 = vunpack.c.h.b16 %v9350
      %v10167 = vunpack.c.l.b16 %v9351
      %v10168 = vunpack.c.h.b16 %v9351
      %v10169 = vunpack.c.l.b16 %v9352
      %v10170 = vunpack.c.h.b16 %v9352
      %v10171 = vunpack.c.l.b16 %v9353
      %v10172 = vunpack.c.h.b16 %v9353
      %v10173 = vunpack.c.l.b16 %v9354
      %v10174 = vunpack.c.h.b16 %v9354
      %v10175 = vunpack.c.l.b16 %v9355
      %v10176 = vunpack.c.h.b16 %v9355
      %v10177 = vunpack.c.l.b16 %v9356
      %v10178 = vunpack.c.h.b16 %v9356
      %v10179 = vunpack.c.l.b16 %v9357
      %v10180 = vunpack.c.h.b16 %v9357
      %v10181 = vunpack.c.l.b16 %v9358
      %v10182 = vunpack.c.h.b16 %v9358
      %v10183 = vunpack.c.l.b16 %v9359
      %v10184 = vunpack.c.h.b16 %v9359
      %v10185 = vunpack.c.l.b16 %v9360
      %v10186 = vunpack.c.h.b16 %v9360
      %v10187 = vunpack.c.l.b16 %v9361
      %v10188 = vunpack.c.h.b16 %v9361
      %v10189 = vunpack.c.l.b16 %v9362
      %v10190 = vunpack.c.h.b16 %v9362
      %v10191 = vunpack.c.l.b16 %v9363
      %v10192 = vunpack.c.h.b16 %v9363
      %v10193 = vunpack.c.l.b16 %v9364
      %v10194 = vunpack.c.h.b16 %v9364
      %v10195 = vunpack.c.l.b16 %v9365
      %v10196 = vunpack.c.h.b16 %v9365
      %v10197 = vunpack.c.l.b16 %v9366
      %v10198 = vunpack.c.h.b16 %v9366
      %v10199 = vunpack.c.l.b16 %v9367
      %v10200 = vunpack.c.h.b16 %v9367
      %v10201 = vunpack.c.l.b16 %v9368
      %v10202 = vunpack.c.h.b16 %v9368
      %v10203 = vunpack.c.l.b16 %v9369
      %v10204 = vunpack.c.h.b16 %v9369
      %v10205 = vunpack.c.l.b16 %v9370
      %v10206 = vunpack.c.h.b16 %v9370
      %v10207 = vunpack.c.l.b16 %v9371
      %v10208 = vunpack.c.h.b16 %v9371
      %v10209 = vunpack.c.l.b16 %v9372
      %v10210 = vunpack.c.h.b16 %v9372
      %v10211 = vunpack.c.l.b16 %v9373
      %v10212 = vunpack.c.h.b16 %v9373
      %v10213 = vunpack.c.l.b16 %v9374
      %v10214 = vunpack.c.h.b16 %v9374
      %v10215 = vunpack.c.l.b16 %v9375
      %v10216 = vunpack.c.h.b16 %v9375
      %v10217 = vunpack.c.l.b16 %v9376
      %v10218 = vunpack.c.h.b16 %v9376
      %v10219 = vunpack.c.l.b16 %v9377
      %v10220 = vunpack.c.h.b16 %v9377
      %v10221 = vunpack.c.l.b16 %v9378
      %v10222 = vunpack.c.h.b16 %v9378
      %v10223 = vunpack.c.l.b16 %v9379
      %v10224 = vunpack.c.h.b16 %v9379
      %v10225 = vunpack.c.l.b16 %v9380
      %v10226 = vunpack.c.h.b16 %v9380
      %v10227 = vunpack.c.l.b16 %v9381
      %v10228 = vunpack.c.h.b16 %v9381
      %v10229 = vunpack.c.l.b16 %v9382
      %v10230 = vunpack.c.h.b16 %v9382
      %v10231 = vunpack.c.l.b16 %v9383
      %v10232 = vunpack.c.h.b16 %v9383
      %v10233 = vunpack.c.l.b16 %v9384
      %v10234 = vunpack.c.h.b16 %v9384
      %v10235 = vunpack.c.l.b16 %v9385
      %v10236 = vunpack.c.h.b16 %v9385
      %v10237 = vunpack.c.l.b16 %v9386
      %v10238 = vunpack.c.h.b16 %v9386
      %v10239 = vunpack.c.l.b16 %v9387
      %v10240 = vunpack.c.h.b16 %v9387
      %v10241 = vunpack.c.l.b16 %v9388
      %v10242 = vunpack.c.h.b16 %v9388
      %v10243 = vunpack.c.l.b16 %v9389
      %v10244 = vunpack.c.h.b16 %v9389
      %v10245 = vunpack.c.l.b16 %v9390
      %v10246 = vunpack.c.h.b16 %v9390
      %v10247 = vunpack.c.l.b16 %v9391
      %v10248 = vunpack.c.h.b16 %v9391
      %v10249 = vunpack.c.l.b16 %v9392
      %v10250 = vunpack.c.h.b16 %v9392
      %v10251 = vunpack.c.l.b16 %v9393
      %v10252 = vunpack.c.h.b16 %v9393
      %v10253 = vunpack.c.l.b16 %v9394
      %v10254 = vunpack.c.h.b16 %v9394
      %v10255 = vunpack.c.l.b16 %v9395
      %v10256 = vunpack.c.h.b16 %v9395
      %v10257 = vunpack.c.l.b16 %v9396
      %v10258 = vunpack.c.h.b16 %v9396
      %v10259 = vunpack.c.l.b16 %v9397
      %v10260 = vunpack.c.h.b16 %v9397
      %v10261 = vunpack.c.l.b16 %v9398
      %v10262 = vunpack.c.h.b16 %v9398
      %v10263 = vunpack.c.l.b16 %v9399
      %v10264 = vunpack.c.h.b16 %v9399
      %v10265 = vunpack.c.l.b16 %v9400
      %v10266 = vunpack.c.h.b16 %v9400
      %v10267 = vunpack.c.l.b16 %v9401
      %v10268 = vunpack.c.h.b16 %v9401
      %v10269 = vunpack.c.l.b16 %v9402
      %v10270 = vunpack.c.h.b16 %v9402
      %v10271 = vunpack.c.l.b16 %v9403
      %v10272 = vunpack.c.h.b16 %v9403
      %v10273 = vunpack.c.l.b16 %v9404
      %v10274 = vunpack.c.h.b16 %v9404
      %v10275 = vunpack.c.l.b16 %v9405
      %v10276 = vunpack.c.h.b16 %v9405
      %v10277 = vunpack.c.l.b16 %v9406
      %v10278 = vunpack.c.h.b16 %v9406
      %v10279 = vunpack.c.l.b16 %v9407
      %v10280 = vunpack.c.h.b16 %v9407
      %v10281 = vunpack.c.l.b16 %v9408
      %v10282 = vunpack.c.h.b16 %v9408
      %v10283 = vunpack.c.l.b16 %v9409
      %v10284 = vunpack.c.h.b16 %v9409
      %v10285 = vunpack.c.l.b16 %v9410
      %v10286 = vunpack.c.h.b16 %v9410
      %v10287 = vunpack.c.l.b16 %v9411
      %v10288 = vunpack.c.h.b16 %v9411
      %v10289 = vunpack.c.l.b16 %v9412
      %v10290 = vunpack.c.h.b16 %v9412
      %v10291 = vunpack.c.l.b16 %v9413
      %v10292 = vunpack.c.h.b16 %v9413
      %v10293 = vunpack.c.l.b16 %v9414
      %v10294 = vunpack.c.h.b16 %v9414
      %v10295 = vunpack.c.l.b16 %v9415
      %v10296 = vunpack.c.h.b16 %v9415
      %v10297 = vunpack.c.l.b16 %v9416
      %v10298 = vunpack.c.h.b16 %v9416
      %v10299 = vunpack.c.l.b16 %v9417
      %v10300 = vunpack.c.h.b16 %v9417
      %v10301 = vunpack.c.l.b16 %v9418
      %v10302 = vunpack.c.h.b16 %v9418
      %v10303 = vunpack.c.l.b16 %v9419
      %v10304 = vunpack.c.h.b16 %v9419
      %v10305 = vunpack.c.l.b16 %v9420
      %v10306 = vunpack.c.h.b16 %v9420
      %v10307 = vunpack.c.l.b16 %v9421
      %v10308 = vunpack.c.h.b16 %v9421
      %v10309 = vunpack.c.l.b16 %v9422
      %v10310 = vunpack.c.h.b16 %v9422
      %v10311 = vunpack.c.l.b16 %v9423
      %v10312 = vunpack.c.h.b16 %v9423
      %v10313 = vunpack.c.l.b16 %v9424
      %v10314 = vunpack.c.h.b16 %v9424
      %v10315 = vunpack.c.l.b16 %v9425
      %v10316 = vunpack.c.h.b16 %v9425
      %v10317 = vpack.c.b16 %v9857, %v9853
      %v10318 = vpack.c.b16 %v9858, %v9854
      %v10319 = vpack.c.b16 %v9859, %v9855
      %v10320 = vpack.c.b16 %v9860, %v9856
      %v10321 = vpack.c.b16 %v9865, %v9861
      %v10322 = vpack.c.b16 %v9866, %v9862
      %v10323 = vpack.c.b16 %v9867, %v9863
      %v10324 = vpack.c.b16 %v9868, %v9864
      %v10325 = vpack.c.b16 %v9873, %v9869
      %v10326 = vpack.c.b16 %v9874, %v9870
      %v10327 = vpack.c.b16 %v9875, %v9871
      %v10328 = vpack.c.b16 %v9876, %v9872
      %v10329 = vpack.c.b16 %v9881, %v9877
      %v10330 = vpack.c.b16 %v9882, %v9878
      %v10331 = vpack.c.b16 %v9883, %v9879
      %v10332 = vpack.c.b16 %v9884, %v9880
      %v10333 = vpack.c.b16 %v9889, %v9885
      %v10334 = vpack.c.b16 %v9890, %v9886
      %v10335 = vpack.c.b16 %v9891, %v9887
      %v10336 = vpack.c.b16 %v9892, %v9888
      %v10337 = vpack.c.b16 %v9897, %v9893
      %v10338 = vpack.c.b16 %v9898, %v9894
      %v10339 = vpack.c.b16 %v9899, %v9895
      %v10340 = vpack.c.b16 %v9900, %v9896
      %v10341 = vpack.c.b16 %v9905, %v9901
      %v10342 = vpack.c.b16 %v9906, %v9902
      %v10343 = vpack.c.b16 %v9907, %v9903
      %v10344 = vpack.c.b16 %v9908, %v9904
      %v10345 = vpack.c.b16 %v9913, %v9909
      %v10346 = vpack.c.b16 %v9914, %v9910
      %v10347 = vpack.c.b16 %v9915, %v9911
      %v10348 = vpack.c.b16 %v9916, %v9912
      %v10349 = vpack.c.b16 %v9921, %v9917
      %v10350 = vpack.c.b16 %v9922, %v9918
      %v10351 = vpack.c.b16 %v9923, %v9919
      %v10352 = vpack.c.b16 %v9924, %v9920
      %v10353 = vpack.c.b16 %v9929, %v9925
      %v10354 = vpack.c.b16 %v9930, %v9926
      %v10355 = vpack.c.b16 %v9931, %v9927
      %v10356 = vpack.c.b16 %v9932, %v9928
      %v10357 = vpack.c.b16 %v9937, %v9933
      %v10358 = vpack.c.b16 %v9938, %v9934
      %v10359 = vpack.c.b16 %v9939, %v9935
      %v10360 = vpack.c.b16 %v9940, %v9936
      %v10361 = vpack.c.b16 %v9945, %v9941
      %v10362 = vpack.c.b16 %v9946, %v9942
      %v10363 = vpack.c.b16 %v9947, %v9943
      %v10364 = vpack.c.b16 %v9948, %v9944
      %v10365 = vpack.c.b16 %v9953, %v9949
      %v10366 = vpack.c.b16 %v9954, %v9950
      %v10367 = vpack.c.b16 %v9955, %v9951
      %v10368 = vpack.c.b16 %v9956, %v9952
      %v10369 = vpack.c.b16 %v9961, %v9957
      %v10370 = vpack.c.b16 %v9962, %v9958
      %v10371 = vpack.c.b16 %v9963, %v9959
      %v10372 = vpack.c.b16 %v9964, %v9960
      %v10373 = vpack.c.b16 %v9969, %v9965
      %v10374 = vpack.c.b16 %v9970, %v9966
      %v10375 = vpack.c.b16 %v9971, %v9967
      %v10376 = vpack.c.b16 %v9972, %v9968
      %v10377 = vpack.c.b16 %v9977, %v9973
      %v10378 = vpack.c.b16 %v9978, %v9974
      %v10379 = vpack.c.b16 %v9979, %v9975
      %v10380 = vpack.c.b16 %v9980, %v9976
      %v10381 = vpack.c.b16 %v9985, %v9981
      %v10382 = vpack.c.b16 %v9986, %v9982
      %v10383 = vpack.c.b16 %v9987, %v9983
      %v10384 = vpack.c.b16 %v9988, %v9984
      %v10385 = vpack.c.b16 %v9993, %v9989
      %v10386 = vpack.c.b16 %v9994, %v9990
      %v10387 = vpack.c.b16 %v9995, %v9991
      %v10388 = vpack.c.b16 %v9996, %v9992
      %v10389 = vpack.c.b16 %v10001, %v9997
      %v10390 = vpack.c.b16 %v10002, %v9998
      %v10391 = vpack.c.b16 %v10003, %v9999
      %v10392 = vpack.c.b16 %v10004, %v10000
      %v10393 = vpack.c.b16 %v10009, %v10005
      %v10394 = vpack.c.b16 %v10010, %v10006
      %v10395 = vpack.c.b16 %v10011, %v10007
      %v10396 = vpack.c.b16 %v10012, %v10008
      %v10397 = vpack.c.b16 %v10017, %v10013
      %v10398 = vpack.c.b16 %v10018, %v10014
      %v10399 = vpack.c.b16 %v10019, %v10015
      %v10400 = vpack.c.b16 %v10020, %v10016
      %v10401 = vpack.c.b16 %v10025, %v10021
      %v10402 = vpack.c.b16 %v10026, %v10022
      %v10403 = vpack.c.b16 %v10027, %v10023
      %v10404 = vpack.c.b16 %v10028, %v10024
      %v10405 = vpack.c.b16 %v10033, %v10029
      %v10406 = vpack.c.b16 %v10034, %v10030
      %v10407 = vpack.c.b16 %v10035, %v10031
      %v10408 = vpack.c.b16 %v10036, %v10032
      %v10409 = vpack.c.b16 %v10041, %v10037
      %v10410 = vpack.c.b16 %v10042, %v10038
      %v10411 = vpack.c.b16 %v10043, %v10039
      %v10412 = vpack.c.b16 %v10044, %v10040
      %v10413 = vpack.c.b16 %v10049, %v10045
      %v10414 = vpack.c.b16 %v10050, %v10046
      %v10415 = vpack.c.b16 %v10051, %v10047
      %v10416 = vpack.c.b16 %v10052, %v10048
      %v10417 = vpack.c.b16 %v10057, %v10053
      %v10418 = vpack.c.b16 %v10058, %v10054
      %v10419 = vpack.c.b16 %v10059, %v10055
      %v10420 = vpack.c.b16 %v10060, %v10056
      %v10421 = vpack.c.b16 %v10065, %v10061
      %v10422 = vpack.c.b16 %v10066, %v10062
      %v10423 = vpack.c.b16 %v10067, %v10063
      %v10424 = vpack.c.b16 %v10068, %v10064
      %v10425 = vpack.c.b16 %v10073, %v10069
      %v10426 = vpack.c.b16 %v10074, %v10070
      %v10427 = vpack.c.b16 %v10075, %v10071
      %v10428 = vpack.c.b16 %v10076, %v10072
      %v10429 = vpack.c.b16 %v10081, %v10077
      %v10430 = vpack.c.b16 %v10082, %v10078
      %v10431 = vpack.c.b16 %v10083, %v10079
      %v10432 = vpack.c.b16 %v10084, %v10080
      %v10433 = vpack.c.b16 %v10089, %v10085
      %v10434 = vpack.c.b16 %v10090, %v10086
      %v10435 = vpack.c.b16 %v10091, %v10087
      %v10436 = vpack.c.b16 %v10092, %v10088
      %v10437 = vpack.c.b16 %v10097, %v10093
      %v10438 = vpack.c.b16 %v10098, %v10094
      %v10439 = vpack.c.b16 %v10099, %v10095
      %v10440 = vpack.c.b16 %v10100, %v10096
      %v10441 = vpack.c.b16 %v10105, %v10101
      %v10442 = vpack.c.b16 %v10106, %v10102
      %v10443 = vpack.c.b16 %v10107, %v10103
      %v10444 = vpack.c.b16 %v10108, %v10104
      %v10445 = vpack.c.b16 %v10113, %v10109
      %v10446 = vpack.c.b16 %v10114, %v10110
      %v10447 = vpack.c.b16 %v10115, %v10111
      %v10448 = vpack.c.b16 %v10116, %v10112
      %v10449 = vpack.c.b16 %v10121, %v10117
      %v10450 = vpack.c.b16 %v10122, %v10118
      %v10451 = vpack.c.b16 %v10123, %v10119
      %v10452 = vpack.c.b16 %v10124, %v10120
      %v10453 = vpack.c.b16 %v10129, %v10125
      %v10454 = vpack.c.b16 %v10130, %v10126
      %v10455 = vpack.c.b16 %v10131, %v10127
      %v10456 = vpack.c.b16 %v10132, %v10128
      %v10457 = vpack.c.b16 %v10137, %v10133
      %v10458 = vpack.c.b16 %v10138, %v10134
      %v10459 = vpack.c.b16 %v10139, %v10135
      %v10460 = vpack.c.b16 %v10140, %v10136
      %v10461 = vpack.c.b16 %v10145, %v10141
      %v10462 = vpack.c.b16 %v10146, %v10142
      %v10463 = vpack.c.b16 %v10147, %v10143
      %v10464 = vpack.c.b16 %v10148, %v10144
      %v10465 = vpack.c.b16 %v10153, %v10149
      %v10466 = vpack.c.b16 %v10154, %v10150
      %v10467 = vpack.c.b16 %v10155, %v10151
      %v10468 = vpack.c.b16 %v10156, %v10152
      %v10469 = vpack.c.b16 %v10161, %v10157
      %v10470 = vpack.c.b16 %v10162, %v10158
      %v10471 = vpack.c.b16 %v10163, %v10159
      %v10472 = vpack.c.b16 %v10164, %v10160
      %v10473 = vpack.c.b16 %v10169, %v10165
      %v10474 = vpack.c.b16 %v10170, %v10166
      %v10475 = vpack.c.b16 %v10171, %v10167
      %v10476 = vpack.c.b16 %v10172, %v10168
      %v10477 = vpack.c.b16 %v10177, %v10173
      %v10478 = vpack.c.b16 %v10178, %v10174
      %v10479 = vpack.c.b16 %v10179, %v10175
      %v10480 = vpack.c.b16 %v10180, %v10176
      %v10481 = vpack.c.b16 %v10185, %v10181
      %v10482 = vpack.c.b16 %v10186, %v10182
      %v10483 = vpack.c.b16 %v10187, %v10183
      %v10484 = vpack.c.b16 %v10188, %v10184
      %v10485 = vpack.c.b16 %v10193, %v10189
      %v10486 = vpack.c.b16 %v10194, %v10190
      %v10487 = vpack.c.b16 %v10195, %v10191
      %v10488 = vpack.c.b16 %v10196, %v10192
      %v10489 = vpack.c.b16 %v10201, %v10197
      %v10490 = vpack.c.b16 %v10202, %v10198
      %v10491 = vpack.c.b16 %v10203, %v10199
      %v10492 = vpack.c.b16 %v10204, %v10200
      %v10493 = vpack.c.b16 %v10209, %v10205
      %v10494 = vpack.c.b16 %v10210, %v10206
      %v10495 = vpack.c.b16 %v10211, %v10207
      %v10496 = vpack.c.b16 %v10212, %v10208
      %v10497 = vpack.c.b16 %v10217, %v10213
      %v10498 = vpack.c.b16 %v10218, %v10214
      %v10499 = vpack.c.b16 %v10219, %v10215
      %v10500 = vpack.c.b16 %v10220, %v10216
      %v10501 = vpack.c.b16 %v10225, %v10221
      %v10502 = vpack.c.b16 %v10226, %v10222
      %v10503 = vpack.c.b16 %v10227, %v10223
      %v10504 = vpack.c.b16 %v10228, %v10224
      %v10505 = vpack.c.b16 %v10233, %v10229
      %v10506 = vpack.c.b16 %v10234, %v10230
      %v10507 = vpack.c.b16 %v10235, %v10231
      %v10508 = vpack.c.b16 %v10236, %v10232
      %v10509 = vpack.c.b16 %v10241, %v10237
      %v10510 = vpack.c.b16 %v10242, %v10238
      %v10511 = vpack.c.b16 %v10243, %v10239
      %v10512 = vpack.c.b16 %v10244, %v10240
      %v10513 = vpack.c.b16 %v10249, %v10245
      %v10514 = vpack.c.b16 %v10250, %v10246
      %v10515 = vpack.c.b16 %v10251, %v10247
      %v10516 = vpack.c.b16 %v10252, %v10248
      %v10517 = vpack.c.b16 %v10257, %v10253
      %v10518 = vpack.c.b16 %v10258, %v10254
      %v10519 = vpack.c.b16 %v10259, %v10255
      %v10520 = vpack.c.b16 %v10260, %v10256
      %v10521 = vpack.c.b16 %v10265, %v10261
      %v10522 = vpack.c.b16 %v10266, %v10262
      %v10523 = vpack.c.b16 %v10267, %v10263
      %v10524 = vpack.c.b16 %v10268, %v10264
      %v10525 = vpack.c.b16 %v10273, %v10269
      %v10526 = vpack.c.b16 %v10274, %v10270
      %v10527 = vpack.c.b16 %v10275, %v10271
      %v10528 = vpack.c.b16 %v10276, %v10272
      %v10529 = vpack.c.b16 %v10281, %v10277
      %v10530 = vpack.c.b16 %v10282, %v10278
      %v10531 = vpack.c.b16 %v10283, %v10279
      %v10532 = vpack.c.b16 %v10284, %v10280
      %v10533 = vpack.c.b16 %v10289, %v10285
      %v10534 = vpack.c.b16 %v10290, %v10286
      %v10535 = vpack.c.b16 %v10291, %v10287
      %v10536 = vpack.c.b16 %v10292, %v10288
      %v10537 = vpack.c.b16 %v10297, %v10293
      %v10538 = vpack.c.b16 %v10298, %v10294
      %v10539 = vpack.c.b16 %v10299, %v10295
      %v10540 = vpack.c.b16 %v10300, %v10296
      %v10541 = vpack.c.b16 %v10305, %v10301
      %v10542 = vpack.c.b16 %v10306, %v10302
      %v10543 = vpack.c.b16 %v10307, %v10303
      %v10544 = vpack.c.b16 %v10308, %v10304
      %v10545 = vpack.c.b16 %v10313, %v10309
      %v10546 = vpack.c.b16 %v10314, %v10310
      %v10547 = vpack.c.b16 %v10315, %v10311
      %v10548 = vpack.c.b16 %v10316, %v10312
      %v10778 = vsel %vm5610, %v9553, 0
      %v10781 = vsel %vm5610, %v9561, 0
      %v10784 = vsel %vm5610, %v9569, 0
      %v10787 = vsel %vm5610, %v9577, 0
      %v10790 = vsel %vm5610, %v9585, 0
      %v10793 = vsel %vm5626, %v10545, 0
      %v10796 = vsel %vm5626, %v10546, 0
      %v10799 = vsel %vm5626, %v10547, 0
      %v10802 = vsel %vm5626, %v10548, 0
      %10804 = vmatpush.bf16.msra.mxu0 %v10345
      %10805 = vmatpush.bf16.msra.mxu0 %v10341
      %10806 = vmatpush.bf16.msra.mxu0 %v10337
      %10807 = vmatpush.bf16.msra.mxu0 %v10333
      %10808 = vmatpush.bf16.msra.mxu0 %v10329
      %10809 = vmatpush.bf16.msra.mxu0 %v10325
      %10810 = vmatpush.bf16.msra.mxu0 %v10321
      %10811 = vmatpush.bf16.msra.mxu0 %v10317
      %10812 = vmatmul.bf16.gmra.mxu0 %v9546
      %v10813 = vpop.f32.mrf.mxu0
      %v10814 = vadd.f32 0.0, %v10813
      %v10815 = vpop.f32.mrf.mxu0
      %v10816 = vadd.f32 0.0, %v10815
      %10817 = vmatmul.bf16.gmra.mxu0 %v9554
      %v10818 = vpop.f32.mrf.mxu0
      %v10819 = vadd.f32 0.0, %v10818
      %v10820 = vpop.f32.mrf.mxu0
      %v10821 = vadd.f32 0.0, %v10820
      %10822 = vmatmul.bf16.gmra.mxu0 %v9562
      %v10823 = vpop.f32.mrf.mxu0
      %v10824 = vadd.f32 0.0, %v10823
      %v10825 = vpop.f32.mrf.mxu0
      %v10826 = vadd.f32 0.0, %v10825
      %10827 = vmatmul.bf16.gmra.mxu0 %v9570
      %v10828 = vpop.f32.mrf.mxu0
      %v10829 = vadd.f32 0.0, %v10828
      %v10830 = vpop.f32.mrf.mxu0
      %v10831 = vadd.f32 0.0, %v10830
      %10832 = vmatmul.bf16.gmra.mxu0 %v9578
      %v10833 = vpop.f32.mrf.mxu0
      %v10834 = vadd.f32 0.0, %v10833
      %v10835 = vpop.f32.mrf.mxu0
      %v10836 = vadd.f32 0.0, %v10835
      %10837 = vdwg.mxu0
      %10838 = vmatpush.bf16.msra.mxu0 %v10377
      %10839 = vmatpush.bf16.msra.mxu0 %v10373
      %10840 = vmatpush.bf16.msra.mxu0 %v10369
      %10841 = vmatpush.bf16.msra.mxu0 %v10365
      %10842 = vmatpush.bf16.msra.mxu0 %v10361
      %10843 = vmatpush.bf16.msra.mxu0 %v10357
      %10844 = vmatpush.bf16.msra.mxu0 %v10353
      %10845 = vmatpush.bf16.msra.mxu0 %v10349
      %10846 = vmatmul.bf16.gmra.mxu0 %v9547
      %v10847 = vpop.f32.mrf.mxu0
      %v10848 = vadd.f32 %v10814, %v10847
      %v10849 = vpop.f32.mrf.mxu0
      %v10850 = vadd.f32 %v10816, %v10849
      %10851 = vmatmul.bf16.gmra.mxu0 %v9555
      %v10852 = vpop.f32.mrf.mxu0
      %v10853 = vadd.f32 %v10819, %v10852
      %v10854 = vpop.f32.mrf.mxu0
      %v10855 = vadd.f32 %v10821, %v10854
      %10856 = vmatmul.bf16.gmra.mxu0 %v9563
      %v10857 = vpop.f32.mrf.mxu0
      %v10858 = vadd.f32 %v10824, %v10857
      %v10859 = vpop.f32.mrf.mxu0
      %v10860 = vadd.f32 %v10826, %v10859
      %10861 = vmatmul.bf16.gmra.mxu0 %v9571
      %v10862 = vpop.f32.mrf.mxu0
      %v10863 = vadd.f32 %v10829, %v10862
      %v10864 = vpop.f32.mrf.mxu0
      %v10865 = vadd.f32 %v10831, %v10864
      %10866 = vmatmul.bf16.gmra.mxu0 %v9579
      %v10867 = vpop.f32.mrf.mxu0
      %v10868 = vadd.f32 %v10834, %v10867
      %v10869 = vpop.f32.mrf.mxu0
      %v10870 = vadd.f32 %v10836, %v10869
      %10871 = vdwg.mxu0
      %10872 = vmatpush.bf16.msra.mxu0 %v10409
      %10873 = vmatpush.bf16.msra.mxu0 %v10405
      %10874 = vmatpush.bf16.msra.mxu0 %v10401
      %10875 = vmatpush.bf16.msra.mxu0 %v10397
      %10876 = vmatpush.bf16.msra.mxu0 %v10393
      %10877 = vmatpush.bf16.msra.mxu0 %v10389
      %10878 = vmatpush.bf16.msra.mxu0 %v10385
      %10879 = vmatpush.bf16.msra.mxu0 %v10381
      %10880 = vmatmul.bf16.gmra.mxu0 %v9548
      %v10881 = vpop.f32.mrf.mxu0
      %v10882 = vadd.f32 %v10848, %v10881
      %v10883 = vpop.f32.mrf.mxu0
      %v10884 = vadd.f32 %v10850, %v10883
      %10885 = vmatmul.bf16.gmra.mxu0 %v9556
      %v10886 = vpop.f32.mrf.mxu0
      %v10887 = vadd.f32 %v10853, %v10886
      %v10888 = vpop.f32.mrf.mxu0
      %v10889 = vadd.f32 %v10855, %v10888
      %10890 = vmatmul.bf16.gmra.mxu0 %v9564
      %v10891 = vpop.f32.mrf.mxu0
      %v10892 = vadd.f32 %v10858, %v10891
      %v10893 = vpop.f32.mrf.mxu0
      %v10894 = vadd.f32 %v10860, %v10893
      %10895 = vmatmul.bf16.gmra.mxu0 %v9572
      %v10896 = vpop.f32.mrf.mxu0
      %v10897 = vadd.f32 %v10863, %v10896
      %v10898 = vpop.f32.mrf.mxu0
      %v10899 = vadd.f32 %v10865, %v10898
      %10900 = vmatmul.bf16.gmra.mxu0 %v9580
      %v10901 = vpop.f32.mrf.mxu0
      %v10902 = vadd.f32 %v10868, %v10901
      %v10903 = vpop.f32.mrf.mxu0
      %v10904 = vadd.f32 %v10870, %v10903
      %10905 = vdwg.mxu0
      %10906 = vmatpush.bf16.msra.mxu0 %v10441
      %10907 = vmatpush.bf16.msra.mxu0 %v10437
      %10908 = vmatpush.bf16.msra.mxu0 %v10433
      %10909 = vmatpush.bf16.msra.mxu0 %v10429
      %10910 = vmatpush.bf16.msra.mxu0 %v10425
      %10911 = vmatpush.bf16.msra.mxu0 %v10421
      %10912 = vmatpush.bf16.msra.mxu0 %v10417
      %10913 = vmatpush.bf16.msra.mxu0 %v10413
      %10914 = vmatmul.bf16.gmra.mxu0 %v9549
      %v10915 = vpop.f32.mrf.mxu0
      %v10916 = vadd.f32 %v10882, %v10915
      %v10917 = vpop.f32.mrf.mxu0
      %v10918 = vadd.f32 %v10884, %v10917
      %10919 = vmatmul.bf16.gmra.mxu0 %v9557
      %v10920 = vpop.f32.mrf.mxu0
      %v10921 = vadd.f32 %v10887, %v10920
      %v10922 = vpop.f32.mrf.mxu0
      %v10923 = vadd.f32 %v10889, %v10922
      %10924 = vmatmul.bf16.gmra.mxu0 %v9565
      %v10925 = vpop.f32.mrf.mxu0
      %v10926 = vadd.f32 %v10892, %v10925
      %v10927 = vpop.f32.mrf.mxu0
      %v10928 = vadd.f32 %v10894, %v10927
      %10929 = vmatmul.bf16.gmra.mxu0 %v9573
      %v10930 = vpop.f32.mrf.mxu0
      %v10931 = vadd.f32 %v10897, %v10930
      %v10932 = vpop.f32.mrf.mxu0
      %v10933 = vadd.f32 %v10899, %v10932
      %10934 = vmatmul.bf16.gmra.mxu0 %v9581
      %v10935 = vpop.f32.mrf.mxu0
      %v10936 = vadd.f32 %v10902, %v10935
      %v10937 = vpop.f32.mrf.mxu0
      %v10938 = vadd.f32 %v10904, %v10937
      %10939 = vdwg.mxu0
      %10940 = vmatpush.bf16.msra.mxu0 %v10473
      %10941 = vmatpush.bf16.msra.mxu0 %v10469
      %10942 = vmatpush.bf16.msra.mxu0 %v10465
      %10943 = vmatpush.bf16.msra.mxu0 %v10461
      %10944 = vmatpush.bf16.msra.mxu0 %v10457
      %10945 = vmatpush.bf16.msra.mxu0 %v10453
      %10946 = vmatpush.bf16.msra.mxu0 %v10449
      %10947 = vmatpush.bf16.msra.mxu0 %v10445
      %10948 = vmatmul.bf16.gmra.mxu0 %v9550
      %v10949 = vpop.f32.mrf.mxu0
      %v10950 = vadd.f32 %v10916, %v10949
      %v10951 = vpop.f32.mrf.mxu0
      %v10952 = vadd.f32 %v10918, %v10951
      %10953 = vmatmul.bf16.gmra.mxu0 %v9558
      %v10954 = vpop.f32.mrf.mxu0
      %v10955 = vadd.f32 %v10921, %v10954
      %v10956 = vpop.f32.mrf.mxu0
      %v10957 = vadd.f32 %v10923, %v10956
      %10958 = vmatmul.bf16.gmra.mxu0 %v9566
      %v10959 = vpop.f32.mrf.mxu0
      %v10960 = vadd.f32 %v10926, %v10959
      %v10961 = vpop.f32.mrf.mxu0
      %v10962 = vadd.f32 %v10928, %v10961
      %10963 = vmatmul.bf16.gmra.mxu0 %v9574
      %v10964 = vpop.f32.mrf.mxu0
      %v10965 = vadd.f32 %v10931, %v10964
      %v10966 = vpop.f32.mrf.mxu0
      %v10967 = vadd.f32 %v10933, %v10966
      %10968 = vmatmul.bf16.gmra.mxu0 %v9582
      %v10969 = vpop.f32.mrf.mxu0
      %v10970 = vadd.f32 %v10936, %v10969
      %v10971 = vpop.f32.mrf.mxu0
      %v10972 = vadd.f32 %v10938, %v10971
      %10973 = vdwg.mxu0
      %10974 = vmatpush.bf16.msra.mxu0 %v10505
      %10975 = vmatpush.bf16.msra.mxu0 %v10501
      %10976 = vmatpush.bf16.msra.mxu0 %v10497
      %10977 = vmatpush.bf16.msra.mxu0 %v10493
      %10978 = vmatpush.bf16.msra.mxu0 %v10489
      %10979 = vmatpush.bf16.msra.mxu0 %v10485
      %10980 = vmatpush.bf16.msra.mxu0 %v10481
      %10981 = vmatpush.bf16.msra.mxu0 %v10477
      %10982 = vmatmul.bf16.gmra.mxu0 %v9551
      %v10983 = vpop.f32.mrf.mxu0
      %v10984 = vadd.f32 %v10950, %v10983
      %v10985 = vpop.f32.mrf.mxu0
      %v10986 = vadd.f32 %v10952, %v10985
      %10987 = vmatmul.bf16.gmra.mxu0 %v9559
      %v10988 = vpop.f32.mrf.mxu0
      %v10989 = vadd.f32 %v10955, %v10988
      %v10990 = vpop.f32.mrf.mxu0
      %v10991 = vadd.f32 %v10957, %v10990
      %10992 = vmatmul.bf16.gmra.mxu0 %v9567
      %v10993 = vpop.f32.mrf.mxu0
      %v10994 = vadd.f32 %v10960, %v10993
      %v10995 = vpop.f32.mrf.mxu0
      %v10996 = vadd.f32 %v10962, %v10995
      %10997 = vmatmul.bf16.gmra.mxu0 %v9575
      %v10998 = vpop.f32.mrf.mxu0
      %v10999 = vadd.f32 %v10965, %v10998
      %v11000 = vpop.f32.mrf.mxu0
      %v11001 = vadd.f32 %v10967, %v11000
      %11002 = vmatmul.bf16.gmra.mxu0 %v9583
      %v11003 = vpop.f32.mrf.mxu0
      %v11004 = vadd.f32 %v10970, %v11003
      %v11005 = vpop.f32.mrf.mxu0
      %v11006 = vadd.f32 %v10972, %v11005
      %11007 = vdwg.mxu0
      %11008 = vmatpush.bf16.msra.mxu0 %v10537
      %11009 = vmatpush.bf16.msra.mxu0 %v10533
      %11010 = vmatpush.bf16.msra.mxu0 %v10529
      %11011 = vmatpush.bf16.msra.mxu0 %v10525
      %11012 = vmatpush.bf16.msra.mxu0 %v10521
      %11013 = vmatpush.bf16.msra.mxu0 %v10517
      %11014 = vmatpush.bf16.msra.mxu0 %v10513
      %11015 = vmatpush.bf16.msra.mxu0 %v10509
      %11016 = vmatmul.bf16.gmra.mxu0 %v9552
      %v11017 = vpop.f32.mrf.mxu0
      %v11018 = vadd.f32 %v10984, %v11017
      %v11019 = vpop.f32.mrf.mxu0
      %v11020 = vadd.f32 %v10986, %v11019
      %11021 = vmatmul.bf16.gmra.mxu0 %v9560
      %v11022 = vpop.f32.mrf.mxu0
      %v11023 = vadd.f32 %v10989, %v11022
      %v11024 = vpop.f32.mrf.mxu0
      %v11025 = vadd.f32 %v10991, %v11024
      %11026 = vmatmul.bf16.gmra.mxu0 %v9568
      %v11027 = vpop.f32.mrf.mxu0
      %v11028 = vadd.f32 %v10994, %v11027
      %v11029 = vpop.f32.mrf.mxu0
      %v11030 = vadd.f32 %v10996, %v11029
      %11031 = vmatmul.bf16.gmra.mxu0 %v9576
      %v11032 = vpop.f32.mrf.mxu0
      %v11033 = vadd.f32 %v10999, %v11032
      %v11034 = vpop.f32.mrf.mxu0
      %v11035 = vadd.f32 %v11001, %v11034
      %11036 = vmatmul.bf16.gmra.mxu0 %v9584
      %v11037 = vpop.f32.mrf.mxu0
      %v11038 = vadd.f32 %v11004, %v11037
      %v11039 = vpop.f32.mrf.mxu0
      %v11040 = vadd.f32 %v11006, %v11039
      %11041 = vdwg.mxu0
      %11042 = vmatpush.bf16.msra.mxu0 0
      %11043 = vmatpush.bf16.msra.mxu0 0
      %11044 = vmatpush.bf16.msra.mxu0 0
      %11045 = vmatpush.bf16.msra.mxu0 0
      %11046 = vmatpush.bf16.msra.mxu0 0
      %11047 = vmatpush.bf16.msra.mxu0 0
      %11048 = vmatpush.bf16.msra.mxu0 %v10793
      %11049 = vmatpush.bf16.msra.mxu0 %v10541
      %11050 = vmatmul.bf16.gmra.mxu0 %v10778
      %v11051 = vpop.f32.mrf.mxu0
      %v11052 = vadd.f32 %v11018, %v11051
      %v11053 = vpop.f32.mrf.mxu0
      %v11054 = vadd.f32 %v11020, %v11053
      %11055 = vmatmul.bf16.gmra.mxu0 %v10781
      %v11056 = vpop.f32.mrf.mxu0
      %v11057 = vadd.f32 %v11023, %v11056
      %v11058 = vpop.f32.mrf.mxu0
      %v11059 = vadd.f32 %v11025, %v11058
      %11060 = vmatmul.bf16.gmra.mxu0 %v10784
      %v11061 = vpop.f32.mrf.mxu0
      %v11062 = vadd.f32 %v11028, %v11061
      %v11063 = vpop.f32.mrf.mxu0
      %v11064 = vadd.f32 %v11030, %v11063
      %11065 = vmatmul.bf16.gmra.mxu0 %v10787
      %v11066 = vpop.f32.mrf.mxu0
      %v11067 = vadd.f32 %v11033, %v11066
      %v11068 = vpop.f32.mrf.mxu0
      %v11069 = vadd.f32 %v11035, %v11068
      %11070 = vmatmul.bf16.gmra.mxu0 %v10790
      %v11071 = vpop.f32.mrf.mxu0
      %v11072 = vadd.f32 %v11038, %v11071
      %v11073 = vpop.f32.mrf.mxu0
      %v11074 = vadd.f32 %v11040, %v11073
      %11075 = vdwg.mxu0
      %11076 = vmatpush.bf16.msra.mxu0 %v10346
      %11077 = vmatpush.bf16.msra.mxu0 %v10342
      %11078 = vmatpush.bf16.msra.mxu0 %v10338
      %11079 = vmatpush.bf16.msra.mxu0 %v10334
      %11080 = vmatpush.bf16.msra.mxu0 %v10330
      %11081 = vmatpush.bf16.msra.mxu0 %v10326
      %11082 = vmatpush.bf16.msra.mxu0 %v10322
      %11083 = vmatpush.bf16.msra.mxu0 %v10318
      %11084 = vmatmul.bf16.gmra.mxu0 %v9546
      %v11085 = vpop.f32.mrf.mxu0
      %v11086 = vadd.f32 0.0, %v11085
      %v11087 = vpop.f32.mrf.mxu0
      %v11088 = vadd.f32 0.0, %v11087
      %11089 = vmatmul.bf16.gmra.mxu0 %v9554
      %v11090 = vpop.f32.mrf.mxu0
      %v11091 = vadd.f32 0.0, %v11090
      %v11092 = vpop.f32.mrf.mxu0
      %v11093 = vadd.f32 0.0, %v11092
      %11094 = vmatmul.bf16.gmra.mxu0 %v9562
      %v11095 = vpop.f32.mrf.mxu0
      %v11096 = vadd.f32 0.0, %v11095
      %v11097 = vpop.f32.mrf.mxu0
      %v11098 = vadd.f32 0.0, %v11097
      %11099 = vmatmul.bf16.gmra.mxu0 %v9570
      %v11100 = vpop.f32.mrf.mxu0
      %v11101 = vadd.f32 0.0, %v11100
      %v11102 = vpop.f32.mrf.mxu0
      %v11103 = vadd.f32 0.0, %v11102
      %11104 = vmatmul.bf16.gmra.mxu0 %v9578
      %v11105 = vpop.f32.mrf.mxu0
      %v11106 = vadd.f32 0.0, %v11105
      %v11107 = vpop.f32.mrf.mxu0
      %v11108 = vadd.f32 0.0, %v11107
      %11109 = vdwg.mxu0
      %11110 = vmatpush.bf16.msra.mxu0 %v10378
      %11111 = vmatpush.bf16.msra.mxu0 %v10374
      %11112 = vmatpush.bf16.msra.mxu0 %v10370
      %11113 = vmatpush.bf16.msra.mxu0 %v10366
      %11114 = vmatpush.bf16.msra.mxu0 %v10362
      %11115 = vmatpush.bf16.msra.mxu0 %v10358
      %11116 = vmatpush.bf16.msra.mxu0 %v10354
      %11117 = vmatpush.bf16.msra.mxu0 %v10350
      %11118 = vmatmul.bf16.gmra.mxu0 %v9547
      %v11119 = vpop.f32.mrf.mxu0
      %v11120 = vadd.f32 %v11086, %v11119
      %v11121 = vpop.f32.mrf.mxu0
      %v11122 = vadd.f32 %v11088, %v11121
      %11123 = vmatmul.bf16.gmra.mxu0 %v9555
      %v11124 = vpop.f32.mrf.mxu0
      %v11125 = vadd.f32 %v11091, %v11124
      %v11126 = vpop.f32.mrf.mxu0
      %v11127 = vadd.f32 %v11093, %v11126
      %11128 = vmatmul.bf16.gmra.mxu0 %v9563
      %v11129 = vpop.f32.mrf.mxu0
      %v11130 = vadd.f32 %v11096, %v11129
      %v11131 = vpop.f32.mrf.mxu0
      %v11132 = vadd.f32 %v11098, %v11131
      %11133 = vmatmul.bf16.gmra.mxu0 %v9571
      %v11134 = vpop.f32.mrf.mxu0
      %v11135 = vadd.f32 %v11101, %v11134
      %v11136 = vpop.f32.mrf.mxu0
      %v11137 = vadd.f32 %v11103, %v11136
      %11138 = vmatmul.bf16.gmra.mxu0 %v9579
      %v11139 = vpop.f32.mrf.mxu0
      %v11140 = vadd.f32 %v11106, %v11139
      %v11141 = vpop.f32.mrf.mxu0
      %v11142 = vadd.f32 %v11108, %v11141
      %11143 = vdwg.mxu0
      %11144 = vmatpush.bf16.msra.mxu0 %v10410
      %11145 = vmatpush.bf16.msra.mxu0 %v10406
      %11146 = vmatpush.bf16.msra.mxu0 %v10402
      %11147 = vmatpush.bf16.msra.mxu0 %v10398
      %11148 = vmatpush.bf16.msra.mxu0 %v10394
      %11149 = vmatpush.bf16.msra.mxu0 %v10390
      %11150 = vmatpush.bf16.msra.mxu0 %v10386
      %11151 = vmatpush.bf16.msra.mxu0 %v10382
      %11152 = vmatmul.bf16.gmra.mxu0 %v9548
      %v11153 = vpop.f32.mrf.mxu0
      %v11154 = vadd.f32 %v11120, %v11153
      %v11155 = vpop.f32.mrf.mxu0
      %v11156 = vadd.f32 %v11122, %v11155
      %11157 = vmatmul.bf16.gmra.mxu0 %v9556
      %v11158 = vpop.f32.mrf.mxu0
      %v11159 = vadd.f32 %v11125, %v11158
      %v11160 = vpop.f32.mrf.mxu0
      %v11161 = vadd.f32 %v11127, %v11160
      %11162 = vmatmul.bf16.gmra.mxu0 %v9564
      %v11163 = vpop.f32.mrf.mxu0
      %v11164 = vadd.f32 %v11130, %v11163
      %v11165 = vpop.f32.mrf.mxu0
      %v11166 = vadd.f32 %v11132, %v11165
      %11167 = vmatmul.bf16.gmra.mxu0 %v9572
      %v11168 = vpop.f32.mrf.mxu0
      %v11169 = vadd.f32 %v11135, %v11168
      %v11170 = vpop.f32.mrf.mxu0
      %v11171 = vadd.f32 %v11137, %v11170
      %11172 = vmatmul.bf16.gmra.mxu0 %v9580
      %v11173 = vpop.f32.mrf.mxu0
      %v11174 = vadd.f32 %v11140, %v11173
      %v11175 = vpop.f32.mrf.mxu0
      %v11176 = vadd.f32 %v11142, %v11175
      %11177 = vdwg.mxu0
      %11178 = vmatpush.bf16.msra.mxu0 %v10442
      %11179 = vmatpush.bf16.msra.mxu0 %v10438
      %11180 = vmatpush.bf16.msra.mxu0 %v10434
      %11181 = vmatpush.bf16.msra.mxu0 %v10430
      %11182 = vmatpush.bf16.msra.mxu0 %v10426
      %11183 = vmatpush.bf16.msra.mxu0 %v10422
      %11184 = vmatpush.bf16.msra.mxu0 %v10418
      %11185 = vmatpush.bf16.msra.mxu0 %v10414
      %11186 = vmatmul.bf16.gmra.mxu0 %v9549
      %v11187 = vpop.f32.mrf.mxu0
      %v11188 = vadd.f32 %v11154, %v11187
      %v11189 = vpop.f32.mrf.mxu0
      %v11190 = vadd.f32 %v11156, %v11189
      %11191 = vmatmul.bf16.gmra.mxu0 %v9557
      %v11192 = vpop.f32.mrf.mxu0
      %v11193 = vadd.f32 %v11159, %v11192
      %v11194 = vpop.f32.mrf.mxu0
      %v11195 = vadd.f32 %v11161, %v11194
      %11196 = vmatmul.bf16.gmra.mxu0 %v9565
      %v11197 = vpop.f32.mrf.mxu0
      %v11198 = vadd.f32 %v11164, %v11197
      %v11199 = vpop.f32.mrf.mxu0
      %v11200 = vadd.f32 %v11166, %v11199
      %11201 = vmatmul.bf16.gmra.mxu0 %v9573
      %v11202 = vpop.f32.mrf.mxu0
      %v11203 = vadd.f32 %v11169, %v11202
      %v11204 = vpop.f32.mrf.mxu0
      %v11205 = vadd.f32 %v11171, %v11204
      %11206 = vmatmul.bf16.gmra.mxu0 %v9581
      %v11207 = vpop.f32.mrf.mxu0
      %v11208 = vadd.f32 %v11174, %v11207
      %v11209 = vpop.f32.mrf.mxu0
      %v11210 = vadd.f32 %v11176, %v11209
      %11211 = vdwg.mxu0
      %11212 = vmatpush.bf16.msra.mxu0 %v10474
      %11213 = vmatpush.bf16.msra.mxu0 %v10470
      %11214 = vmatpush.bf16.msra.mxu0 %v10466
      %11215 = vmatpush.bf16.msra.mxu0 %v10462
      %11216 = vmatpush.bf16.msra.mxu0 %v10458
      %11217 = vmatpush.bf16.msra.mxu0 %v10454
      %11218 = vmatpush.bf16.msra.mxu0 %v10450
      %11219 = vmatpush.bf16.msra.mxu0 %v10446
      %11220 = vmatmul.bf16.gmra.mxu0 %v9550
      %v11221 = vpop.f32.mrf.mxu0
      %v11222 = vadd.f32 %v11188, %v11221
      %v11223 = vpop.f32.mrf.mxu0
      %v11224 = vadd.f32 %v11190, %v11223
      %11225 = vmatmul.bf16.gmra.mxu0 %v9558
      %v11226 = vpop.f32.mrf.mxu0
      %v11227 = vadd.f32 %v11193, %v11226
      %v11228 = vpop.f32.mrf.mxu0
      %v11229 = vadd.f32 %v11195, %v11228
      %11230 = vmatmul.bf16.gmra.mxu0 %v9566
      %v11231 = vpop.f32.mrf.mxu0
      %v11232 = vadd.f32 %v11198, %v11231
      %v11233 = vpop.f32.mrf.mxu0
      %v11234 = vadd.f32 %v11200, %v11233
      %11235 = vmatmul.bf16.gmra.mxu0 %v9574
      %v11236 = vpop.f32.mrf.mxu0
      %v11237 = vadd.f32 %v11203, %v11236
      %v11238 = vpop.f32.mrf.mxu0
      %v11239 = vadd.f32 %v11205, %v11238
      %11240 = vmatmul.bf16.gmra.mxu0 %v9582
      %v11241 = vpop.f32.mrf.mxu0
      %v11242 = vadd.f32 %v11208, %v11241
      %v11243 = vpop.f32.mrf.mxu0
      %v11244 = vadd.f32 %v11210, %v11243
      %11245 = vdwg.mxu0
      %11246 = vmatpush.bf16.msra.mxu0 %v10506
      %11247 = vmatpush.bf16.msra.mxu0 %v10502
      %11248 = vmatpush.bf16.msra.mxu0 %v10498
      %11249 = vmatpush.bf16.msra.mxu0 %v10494
      %11250 = vmatpush.bf16.msra.mxu0 %v10490
      %11251 = vmatpush.bf16.msra.mxu0 %v10486
      %11252 = vmatpush.bf16.msra.mxu0 %v10482
      %11253 = vmatpush.bf16.msra.mxu0 %v10478
      %11254 = vmatmul.bf16.gmra.mxu0 %v9551
      %v11255 = vpop.f32.mrf.mxu0
      %v11256 = vadd.f32 %v11222, %v11255
      %v11257 = vpop.f32.mrf.mxu0
      %v11258 = vadd.f32 %v11224, %v11257
      %11259 = vmatmul.bf16.gmra.mxu0 %v9559
      %v11260 = vpop.f32.mrf.mxu0
      %v11261 = vadd.f32 %v11227, %v11260
      %v11262 = vpop.f32.mrf.mxu0
      %v11263 = vadd.f32 %v11229, %v11262
      %11264 = vmatmul.bf16.gmra.mxu0 %v9567
      %v11265 = vpop.f32.mrf.mxu0
      %v11266 = vadd.f32 %v11232, %v11265
      %v11267 = vpop.f32.mrf.mxu0
      %v11268 = vadd.f32 %v11234, %v11267
      %11269 = vmatmul.bf16.gmra.mxu0 %v9575
      %v11270 = vpop.f32.mrf.mxu0
      %v11271 = vadd.f32 %v11237, %v11270
      %v11272 = vpop.f32.mrf.mxu0
      %v11273 = vadd.f32 %v11239, %v11272
      %11274 = vmatmul.bf16.gmra.mxu0 %v9583
      %v11275 = vpop.f32.mrf.mxu0
      %v11276 = vadd.f32 %v11242, %v11275
      %v11277 = vpop.f32.mrf.mxu0
      %v11278 = vadd.f32 %v11244, %v11277
      %11279 = vdwg.mxu0
      %11280 = vmatpush.bf16.msra.mxu0 %v10538
      %11281 = vmatpush.bf16.msra.mxu0 %v10534
      %11282 = vmatpush.bf16.msra.mxu0 %v10530
      %11283 = vmatpush.bf16.msra.mxu0 %v10526
      %11284 = vmatpush.bf16.msra.mxu0 %v10522
      %11285 = vmatpush.bf16.msra.mxu0 %v10518
      %11286 = vmatpush.bf16.msra.mxu0 %v10514
      %11287 = vmatpush.bf16.msra.mxu0 %v10510
      %11288 = vmatmul.bf16.gmra.mxu0 %v9552
      %v11289 = vpop.f32.mrf.mxu0
      %v11290 = vadd.f32 %v11256, %v11289
      %v11291 = vpop.f32.mrf.mxu0
      %v11292 = vadd.f32 %v11258, %v11291
      %11293 = vmatmul.bf16.gmra.mxu0 %v9560
      %v11294 = vpop.f32.mrf.mxu0
      %v11295 = vadd.f32 %v11261, %v11294
      %v11296 = vpop.f32.mrf.mxu0
      %v11297 = vadd.f32 %v11263, %v11296
      %11298 = vmatmul.bf16.gmra.mxu0 %v9568
      %v11299 = vpop.f32.mrf.mxu0
      %v11300 = vadd.f32 %v11266, %v11299
      %v11301 = vpop.f32.mrf.mxu0
      %v11302 = vadd.f32 %v11268, %v11301
      %11303 = vmatmul.bf16.gmra.mxu0 %v9576
      %v11304 = vpop.f32.mrf.mxu0
      %v11305 = vadd.f32 %v11271, %v11304
      %v11306 = vpop.f32.mrf.mxu0
      %v11307 = vadd.f32 %v11273, %v11306
      %11308 = vmatmul.bf16.gmra.mxu0 %v9584
      %v11309 = vpop.f32.mrf.mxu0
      %v11310 = vadd.f32 %v11276, %v11309
      %v11311 = vpop.f32.mrf.mxu0
      %v11312 = vadd.f32 %v11278, %v11311
      %11313 = vdwg.mxu0
      %11314 = vmatpush.bf16.msra.mxu0 0
      %11315 = vmatpush.bf16.msra.mxu0 0
      %11316 = vmatpush.bf16.msra.mxu0 0
      %11317 = vmatpush.bf16.msra.mxu0 0
      %11318 = vmatpush.bf16.msra.mxu0 0
      %11319 = vmatpush.bf16.msra.mxu0 0
      %11320 = vmatpush.bf16.msra.mxu0 %v10796
      %11321 = vmatpush.bf16.msra.mxu0 %v10542
      %11322 = vmatmul.bf16.gmra.mxu0 %v10778
      %v11323 = vpop.f32.mrf.mxu0
      %v11324 = vadd.f32 %v11290, %v11323
      %v11325 = vpop.f32.mrf.mxu0
      %v11326 = vadd.f32 %v11292, %v11325
      %11327 = vmatmul.bf16.gmra.mxu0 %v10781
      %v11328 = vpop.f32.mrf.mxu0
      %v11329 = vadd.f32 %v11295, %v11328
      %v11330 = vpop.f32.mrf.mxu0
      %v11331 = vadd.f32 %v11297, %v11330
      %11332 = vmatmul.bf16.gmra.mxu0 %v10784
      %v11333 = vpop.f32.mrf.mxu0
      %v11334 = vadd.f32 %v11300, %v11333
      %v11335 = vpop.f32.mrf.mxu0
      %v11336 = vadd.f32 %v11302, %v11335
      %11337 = vmatmul.bf16.gmra.mxu0 %v10787
      %v11338 = vpop.f32.mrf.mxu0
      %v11339 = vadd.f32 %v11305, %v11338
      %v11340 = vpop.f32.mrf.mxu0
      %v11341 = vadd.f32 %v11307, %v11340
      %11342 = vmatmul.bf16.gmra.mxu0 %v10790
      %v11343 = vpop.f32.mrf.mxu0
      %v11344 = vadd.f32 %v11310, %v11343
      %v11345 = vpop.f32.mrf.mxu0
      %v11346 = vadd.f32 %v11312, %v11345
      %11347 = vdwg.mxu0
      %11348 = vmatpush.bf16.msra.mxu0 %v10347
      %11349 = vmatpush.bf16.msra.mxu0 %v10343
      %11350 = vmatpush.bf16.msra.mxu0 %v10339
      %11351 = vmatpush.bf16.msra.mxu0 %v10335
      %11352 = vmatpush.bf16.msra.mxu0 %v10331
      %11353 = vmatpush.bf16.msra.mxu0 %v10327
      %11354 = vmatpush.bf16.msra.mxu0 %v10323
      %11355 = vmatpush.bf16.msra.mxu0 %v10319
      %11356 = vmatmul.bf16.gmra.mxu0 %v9546
      %v11357 = vpop.f32.mrf.mxu0
      %v11358 = vadd.f32 0.0, %v11357
      %v11359 = vpop.f32.mrf.mxu0
      %v11360 = vadd.f32 0.0, %v11359
      %11361 = vmatmul.bf16.gmra.mxu0 %v9554
      %v11362 = vpop.f32.mrf.mxu0
      %v11363 = vadd.f32 0.0, %v11362
      %v11364 = vpop.f32.mrf.mxu0
      %v11365 = vadd.f32 0.0, %v11364
      %11366 = vmatmul.bf16.gmra.mxu0 %v9562
      %v11367 = vpop.f32.mrf.mxu0
      %v11368 = vadd.f32 0.0, %v11367
      %v11369 = vpop.f32.mrf.mxu0
      %v11370 = vadd.f32 0.0, %v11369
      %11371 = vmatmul.bf16.gmra.mxu0 %v9570
      %v11372 = vpop.f32.mrf.mxu0
      %v11373 = vadd.f32 0.0, %v11372
      %v11374 = vpop.f32.mrf.mxu0
      %v11375 = vadd.f32 0.0, %v11374
      %11376 = vmatmul.bf16.gmra.mxu0 %v9578
      %v11377 = vpop.f32.mrf.mxu0
      %v11378 = vadd.f32 0.0, %v11377
      %v11379 = vpop.f32.mrf.mxu0
      %v11380 = vadd.f32 0.0, %v11379
      %11381 = vdwg.mxu0
      %11382 = vmatpush.bf16.msra.mxu0 %v10379
      %11383 = vmatpush.bf16.msra.mxu0 %v10375
      %11384 = vmatpush.bf16.msra.mxu0 %v10371
      %11385 = vmatpush.bf16.msra.mxu0 %v10367
      %11386 = vmatpush.bf16.msra.mxu0 %v10363
      %11387 = vmatpush.bf16.msra.mxu0 %v10359
      %11388 = vmatpush.bf16.msra.mxu0 %v10355
      %11389 = vmatpush.bf16.msra.mxu0 %v10351
      %11390 = vmatmul.bf16.gmra.mxu0 %v9547
      %v11391 = vpop.f32.mrf.mxu0
      %v11392 = vadd.f32 %v11358, %v11391
      %v11393 = vpop.f32.mrf.mxu0
      %v11394 = vadd.f32 %v11360, %v11393
      %11395 = vmatmul.bf16.gmra.mxu0 %v9555
      %v11396 = vpop.f32.mrf.mxu0
      %v11397 = vadd.f32 %v11363, %v11396
      %v11398 = vpop.f32.mrf.mxu0
      %v11399 = vadd.f32 %v11365, %v11398
      %11400 = vmatmul.bf16.gmra.mxu0 %v9563
      %v11401 = vpop.f32.mrf.mxu0
      %v11402 = vadd.f32 %v11368, %v11401
      %v11403 = vpop.f32.mrf.mxu0
      %v11404 = vadd.f32 %v11370, %v11403
      %11405 = vmatmul.bf16.gmra.mxu0 %v9571
      %v11406 = vpop.f32.mrf.mxu0
      %v11407 = vadd.f32 %v11373, %v11406
      %v11408 = vpop.f32.mrf.mxu0
      %v11409 = vadd.f32 %v11375, %v11408
      %11410 = vmatmul.bf16.gmra.mxu0 %v9579
      %v11411 = vpop.f32.mrf.mxu0
      %v11412 = vadd.f32 %v11378, %v11411
      %v11413 = vpop.f32.mrf.mxu0
      %v11414 = vadd.f32 %v11380, %v11413
      %11415 = vdwg.mxu0
      %11416 = vmatpush.bf16.msra.mxu0 %v10411
      %11417 = vmatpush.bf16.msra.mxu0 %v10407
      %11418 = vmatpush.bf16.msra.mxu0 %v10403
      %11419 = vmatpush.bf16.msra.mxu0 %v10399
      %11420 = vmatpush.bf16.msra.mxu0 %v10395
      %11421 = vmatpush.bf16.msra.mxu0 %v10391
      %11422 = vmatpush.bf16.msra.mxu0 %v10387
      %11423 = vmatpush.bf16.msra.mxu0 %v10383
      %11424 = vmatmul.bf16.gmra.mxu0 %v9548
      %v11425 = vpop.f32.mrf.mxu0
      %v11426 = vadd.f32 %v11392, %v11425
      %v11427 = vpop.f32.mrf.mxu0
      %v11428 = vadd.f32 %v11394, %v11427
      %11429 = vmatmul.bf16.gmra.mxu0 %v9556
      %v11430 = vpop.f32.mrf.mxu0
      %v11431 = vadd.f32 %v11397, %v11430
      %v11432 = vpop.f32.mrf.mxu0
      %v11433 = vadd.f32 %v11399, %v11432
      %11434 = vmatmul.bf16.gmra.mxu0 %v9564
      %v11435 = vpop.f32.mrf.mxu0
      %v11436 = vadd.f32 %v11402, %v11435
      %v11437 = vpop.f32.mrf.mxu0
      %v11438 = vadd.f32 %v11404, %v11437
      %11439 = vmatmul.bf16.gmra.mxu0 %v9572
      %v11440 = vpop.f32.mrf.mxu0
      %v11441 = vadd.f32 %v11407, %v11440
      %v11442 = vpop.f32.mrf.mxu0
      %v11443 = vadd.f32 %v11409, %v11442
      %11444 = vmatmul.bf16.gmra.mxu0 %v9580
      %v11445 = vpop.f32.mrf.mxu0
      %v11446 = vadd.f32 %v11412, %v11445
      %v11447 = vpop.f32.mrf.mxu0
      %v11448 = vadd.f32 %v11414, %v11447
      %11449 = vdwg.mxu0
      %11450 = vmatpush.bf16.msra.mxu0 %v10443
      %11451 = vmatpush.bf16.msra.mxu0 %v10439
      %11452 = vmatpush.bf16.msra.mxu0 %v10435
      %11453 = vmatpush.bf16.msra.mxu0 %v10431
      %11454 = vmatpush.bf16.msra.mxu0 %v10427
      %11455 = vmatpush.bf16.msra.mxu0 %v10423
      %11456 = vmatpush.bf16.msra.mxu0 %v10419
      %11457 = vmatpush.bf16.msra.mxu0 %v10415
      %11458 = vmatmul.bf16.gmra.mxu0 %v9549
      %v11459 = vpop.f32.mrf.mxu0
      %v11460 = vadd.f32 %v11426, %v11459
      %v11461 = vpop.f32.mrf.mxu0
      %v11462 = vadd.f32 %v11428, %v11461
      %11463 = vmatmul.bf16.gmra.mxu0 %v9557
      %v11464 = vpop.f32.mrf.mxu0
      %v11465 = vadd.f32 %v11431, %v11464
      %v11466 = vpop.f32.mrf.mxu0
      %v11467 = vadd.f32 %v11433, %v11466
      %11468 = vmatmul.bf16.gmra.mxu0 %v9565
      %v11469 = vpop.f32.mrf.mxu0
      %v11470 = vadd.f32 %v11436, %v11469
      %v11471 = vpop.f32.mrf.mxu0
      %v11472 = vadd.f32 %v11438, %v11471
      %11473 = vmatmul.bf16.gmra.mxu0 %v9573
      %v11474 = vpop.f32.mrf.mxu0
      %v11475 = vadd.f32 %v11441, %v11474
      %v11476 = vpop.f32.mrf.mxu0
      %v11477 = vadd.f32 %v11443, %v11476
      %11478 = vmatmul.bf16.gmra.mxu0 %v9581
      %v11479 = vpop.f32.mrf.mxu0
      %v11480 = vadd.f32 %v11446, %v11479
      %v11481 = vpop.f32.mrf.mxu0
      %v11482 = vadd.f32 %v11448, %v11481
      %11483 = vdwg.mxu0
      %11484 = vmatpush.bf16.msra.mxu0 %v10475
      %11485 = vmatpush.bf16.msra.mxu0 %v10471
      %11486 = vmatpush.bf16.msra.mxu0 %v10467
      %11487 = vmatpush.bf16.msra.mxu0 %v10463
      %11488 = vmatpush.bf16.msra.mxu0 %v10459
      %11489 = vmatpush.bf16.msra.mxu0 %v10455
      %11490 = vmatpush.bf16.msra.mxu0 %v10451
      %11491 = vmatpush.bf16.msra.mxu0 %v10447
      %11492 = vmatmul.bf16.gmra.mxu0 %v9550
      %v11493 = vpop.f32.mrf.mxu0
      %v11494 = vadd.f32 %v11460, %v11493
      %v11495 = vpop.f32.mrf.mxu0
      %v11496 = vadd.f32 %v11462, %v11495
      %11497 = vmatmul.bf16.gmra.mxu0 %v9558
      %v11498 = vpop.f32.mrf.mxu0
      %v11499 = vadd.f32 %v11465, %v11498
      %v11500 = vpop.f32.mrf.mxu0
      %v11501 = vadd.f32 %v11467, %v11500
      %11502 = vmatmul.bf16.gmra.mxu0 %v9566
      %v11503 = vpop.f32.mrf.mxu0
      %v11504 = vadd.f32 %v11470, %v11503
      %v11505 = vpop.f32.mrf.mxu0
      %v11506 = vadd.f32 %v11472, %v11505
      %11507 = vmatmul.bf16.gmra.mxu0 %v9574
      %v11508 = vpop.f32.mrf.mxu0
      %v11509 = vadd.f32 %v11475, %v11508
      %v11510 = vpop.f32.mrf.mxu0
      %v11511 = vadd.f32 %v11477, %v11510
      %11512 = vmatmul.bf16.gmra.mxu0 %v9582
      %v11513 = vpop.f32.mrf.mxu0
      %v11514 = vadd.f32 %v11480, %v11513
      %v11515 = vpop.f32.mrf.mxu0
      %v11516 = vadd.f32 %v11482, %v11515
      %11517 = vdwg.mxu0
      %11518 = vmatpush.bf16.msra.mxu0 %v10507
      %11519 = vmatpush.bf16.msra.mxu0 %v10503
      %11520 = vmatpush.bf16.msra.mxu0 %v10499
      %11521 = vmatpush.bf16.msra.mxu0 %v10495
      %11522 = vmatpush.bf16.msra.mxu0 %v10491
      %11523 = vmatpush.bf16.msra.mxu0 %v10487
      %11524 = vmatpush.bf16.msra.mxu0 %v10483
      %11525 = vmatpush.bf16.msra.mxu0 %v10479
      %11526 = vmatmul.bf16.gmra.mxu0 %v9551
      %v11527 = vpop.f32.mrf.mxu0
      %v11528 = vadd.f32 %v11494, %v11527
      %v11529 = vpop.f32.mrf.mxu0
      %v11530 = vadd.f32 %v11496, %v11529
      %11531 = vmatmul.bf16.gmra.mxu0 %v9559
      %v11532 = vpop.f32.mrf.mxu0
      %v11533 = vadd.f32 %v11499, %v11532
      %v11534 = vpop.f32.mrf.mxu0
      %v11535 = vadd.f32 %v11501, %v11534
      %11536 = vmatmul.bf16.gmra.mxu0 %v9567
      %v11537 = vpop.f32.mrf.mxu0
      %v11538 = vadd.f32 %v11504, %v11537
      %v11539 = vpop.f32.mrf.mxu0
      %v11540 = vadd.f32 %v11506, %v11539
      %11541 = vmatmul.bf16.gmra.mxu0 %v9575
      %v11542 = vpop.f32.mrf.mxu0
      %v11543 = vadd.f32 %v11509, %v11542
      %v11544 = vpop.f32.mrf.mxu0
      %v11545 = vadd.f32 %v11511, %v11544
      %11546 = vmatmul.bf16.gmra.mxu0 %v9583
      %v11547 = vpop.f32.mrf.mxu0
      %v11548 = vadd.f32 %v11514, %v11547
      %v11549 = vpop.f32.mrf.mxu0
      %v11550 = vadd.f32 %v11516, %v11549
      %11551 = vdwg.mxu0
      %11552 = vmatpush.bf16.msra.mxu0 %v10539
      %11553 = vmatpush.bf16.msra.mxu0 %v10535
      %11554 = vmatpush.bf16.msra.mxu0 %v10531
      %11555 = vmatpush.bf16.msra.mxu0 %v10527
      %11556 = vmatpush.bf16.msra.mxu0 %v10523
      %11557 = vmatpush.bf16.msra.mxu0 %v10519
      %11558 = vmatpush.bf16.msra.mxu0 %v10515
      %11559 = vmatpush.bf16.msra.mxu0 %v10511
      %11560 = vmatmul.bf16.gmra.mxu0 %v9552
      %v11561 = vpop.f32.mrf.mxu0
      %v11562 = vadd.f32 %v11528, %v11561
      %v11563 = vpop.f32.mrf.mxu0
      %v11564 = vadd.f32 %v11530, %v11563
      %11565 = vmatmul.bf16.gmra.mxu0 %v9560
      %v11566 = vpop.f32.mrf.mxu0
      %v11567 = vadd.f32 %v11533, %v11566
      %v11568 = vpop.f32.mrf.mxu0
      %v11569 = vadd.f32 %v11535, %v11568
      %11570 = vmatmul.bf16.gmra.mxu0 %v9568
      %v11571 = vpop.f32.mrf.mxu0
      %v11572 = vadd.f32 %v11538, %v11571
      %v11573 = vpop.f32.mrf.mxu0
      %v11574 = vadd.f32 %v11540, %v11573
      %11575 = vmatmul.bf16.gmra.mxu0 %v9576
      %v11576 = vpop.f32.mrf.mxu0
      %v11577 = vadd.f32 %v11543, %v11576
      %v11578 = vpop.f32.mrf.mxu0
      %v11579 = vadd.f32 %v11545, %v11578
      %11580 = vmatmul.bf16.gmra.mxu0 %v9584
      %v11581 = vpop.f32.mrf.mxu0
      %v11582 = vadd.f32 %v11548, %v11581
      %v11583 = vpop.f32.mrf.mxu0
      %v11584 = vadd.f32 %v11550, %v11583
      %11585 = vdwg.mxu0
      %11586 = vmatpush.bf16.msra.mxu0 0
      %11587 = vmatpush.bf16.msra.mxu0 0
      %11588 = vmatpush.bf16.msra.mxu0 0
      %11589 = vmatpush.bf16.msra.mxu0 0
      %11590 = vmatpush.bf16.msra.mxu0 0
      %11591 = vmatpush.bf16.msra.mxu0 0
      %11592 = vmatpush.bf16.msra.mxu0 %v10799
      %11593 = vmatpush.bf16.msra.mxu0 %v10543
      %11594 = vmatmul.bf16.gmra.mxu0 %v10778
      %v11595 = vpop.f32.mrf.mxu0
      %v11596 = vadd.f32 %v11562, %v11595
      %v11597 = vpop.f32.mrf.mxu0
      %v11598 = vadd.f32 %v11564, %v11597
      %11599 = vmatmul.bf16.gmra.mxu0 %v10781
      %v11600 = vpop.f32.mrf.mxu0
      %v11601 = vadd.f32 %v11567, %v11600
      %v11602 = vpop.f32.mrf.mxu0
      %v11603 = vadd.f32 %v11569, %v11602
      %11604 = vmatmul.bf16.gmra.mxu0 %v10784
      %v11605 = vpop.f32.mrf.mxu0
      %v11606 = vadd.f32 %v11572, %v11605
      %v11607 = vpop.f32.mrf.mxu0
      %v11608 = vadd.f32 %v11574, %v11607
      %11609 = vmatmul.bf16.gmra.mxu0 %v10787
      %v11610 = vpop.f32.mrf.mxu0
      %v11611 = vadd.f32 %v11577, %v11610
      %v11612 = vpop.f32.mrf.mxu0
      %v11613 = vadd.f32 %v11579, %v11612
      %11614 = vmatmul.bf16.gmra.mxu0 %v10790
      %v11615 = vpop.f32.mrf.mxu0
      %v11616 = vadd.f32 %v11582, %v11615
      %v11617 = vpop.f32.mrf.mxu0
      %v11618 = vadd.f32 %v11584, %v11617
      %11619 = vdwg.mxu0
      %11620 = vmatpush.bf16.msra.mxu0 %v10348
      %11621 = vmatpush.bf16.msra.mxu0 %v10344
      %11622 = vmatpush.bf16.msra.mxu0 %v10340
      %11623 = vmatpush.bf16.msra.mxu0 %v10336
      %11624 = vmatpush.bf16.msra.mxu0 %v10332
      %11625 = vmatpush.bf16.msra.mxu0 %v10328
      %11626 = vmatpush.bf16.msra.mxu0 %v10324
      %11627 = vmatpush.bf16.msra.mxu0 %v10320
      %11628 = vmatmul.bf16.gmra.mxu0 %v9546
      %v11629 = vpop.f32.mrf.mxu0
      %v11630 = vadd.f32 0.0, %v11629
      %v11631 = vpop.f32.mrf.mxu0
      %v11632 = vadd.f32 0.0, %v11631
      %11633 = vmatmul.bf16.gmra.mxu0 %v9554
      %v11634 = vpop.f32.mrf.mxu0
      %v11635 = vadd.f32 0.0, %v11634
      %v11636 = vpop.f32.mrf.mxu0
      %v11637 = vadd.f32 0.0, %v11636
      %11638 = vmatmul.bf16.gmra.mxu0 %v9562
      %v11639 = vpop.f32.mrf.mxu0
      %v11640 = vadd.f32 0.0, %v11639
      %v11641 = vpop.f32.mrf.mxu0
      %v11642 = vadd.f32 0.0, %v11641
      %11643 = vmatmul.bf16.gmra.mxu0 %v9570
      %v11644 = vpop.f32.mrf.mxu0
      %v11645 = vadd.f32 0.0, %v11644
      %v11646 = vpop.f32.mrf.mxu0
      %v11647 = vadd.f32 0.0, %v11646
      %11648 = vmatmul.bf16.gmra.mxu0 %v9578
      %v11649 = vpop.f32.mrf.mxu0
      %v11650 = vadd.f32 0.0, %v11649
      %v11651 = vpop.f32.mrf.mxu0
      %v11652 = vadd.f32 0.0, %v11651
      %11653 = vdwg.mxu0
      %11654 = vmatpush.bf16.msra.mxu0 %v10380
      %11655 = vmatpush.bf16.msra.mxu0 %v10376
      %11656 = vmatpush.bf16.msra.mxu0 %v10372
      %11657 = vmatpush.bf16.msra.mxu0 %v10368
      %11658 = vmatpush.bf16.msra.mxu0 %v10364
      %11659 = vmatpush.bf16.msra.mxu0 %v10360
      %11660 = vmatpush.bf16.msra.mxu0 %v10356
      %11661 = vmatpush.bf16.msra.mxu0 %v10352
      %11662 = vmatmul.bf16.gmra.mxu0 %v9547
      %v11663 = vpop.f32.mrf.mxu0
      %v11664 = vadd.f32 %v11630, %v11663
      %v11665 = vpop.f32.mrf.mxu0
      %v11666 = vadd.f32 %v11632, %v11665
      %11667 = vmatmul.bf16.gmra.mxu0 %v9555
      %v11668 = vpop.f32.mrf.mxu0
      %v11669 = vadd.f32 %v11635, %v11668
      %v11670 = vpop.f32.mrf.mxu0
      %v11671 = vadd.f32 %v11637, %v11670
      %11672 = vmatmul.bf16.gmra.mxu0 %v9563
      %v11673 = vpop.f32.mrf.mxu0
      %v11674 = vadd.f32 %v11640, %v11673
      %v11675 = vpop.f32.mrf.mxu0
      %v11676 = vadd.f32 %v11642, %v11675
      %11677 = vmatmul.bf16.gmra.mxu0 %v9571
      %v11678 = vpop.f32.mrf.mxu0
      %v11679 = vadd.f32 %v11645, %v11678
      %v11680 = vpop.f32.mrf.mxu0
      %v11681 = vadd.f32 %v11647, %v11680
      %11682 = vmatmul.bf16.gmra.mxu0 %v9579
      %v11683 = vpop.f32.mrf.mxu0
      %v11684 = vadd.f32 %v11650, %v11683
      %v11685 = vpop.f32.mrf.mxu0
      %v11686 = vadd.f32 %v11652, %v11685
      %11687 = vdwg.mxu0
      %11688 = vmatpush.bf16.msra.mxu0 %v10412
      %11689 = vmatpush.bf16.msra.mxu0 %v10408
      %11690 = vmatpush.bf16.msra.mxu0 %v10404
      %11691 = vmatpush.bf16.msra.mxu0 %v10400
      %11692 = vmatpush.bf16.msra.mxu0 %v10396
      %11693 = vmatpush.bf16.msra.mxu0 %v10392
      %11694 = vmatpush.bf16.msra.mxu0 %v10388
      %11695 = vmatpush.bf16.msra.mxu0 %v10384
      %11696 = vmatmul.bf16.gmra.mxu0 %v9548
      %v11697 = vpop.f32.mrf.mxu0
      %v11698 = vadd.f32 %v11664, %v11697
      %v11699 = vpop.f32.mrf.mxu0
      %v11700 = vadd.f32 %v11666, %v11699
      %11701 = vmatmul.bf16.gmra.mxu0 %v9556
      %v11702 = vpop.f32.mrf.mxu0
      %v11703 = vadd.f32 %v11669, %v11702
      %v11704 = vpop.f32.mrf.mxu0
      %v11705 = vadd.f32 %v11671, %v11704
      %11706 = vmatmul.bf16.gmra.mxu0 %v9564
      %v11707 = vpop.f32.mrf.mxu0
      %v11708 = vadd.f32 %v11674, %v11707
      %v11709 = vpop.f32.mrf.mxu0
      %v11710 = vadd.f32 %v11676, %v11709
      %11711 = vmatmul.bf16.gmra.mxu0 %v9572
      %v11712 = vpop.f32.mrf.mxu0
      %v11713 = vadd.f32 %v11679, %v11712
      %v11714 = vpop.f32.mrf.mxu0
      %v11715 = vadd.f32 %v11681, %v11714
      %11716 = vmatmul.bf16.gmra.mxu0 %v9580
      %v11717 = vpop.f32.mrf.mxu0
      %v11718 = vadd.f32 %v11684, %v11717
      %v11719 = vpop.f32.mrf.mxu0
      %v11720 = vadd.f32 %v11686, %v11719
      %11721 = vdwg.mxu0
      %11722 = vmatpush.bf16.msra.mxu0 %v10444
      %11723 = vmatpush.bf16.msra.mxu0 %v10440
      %11724 = vmatpush.bf16.msra.mxu0 %v10436
      %11725 = vmatpush.bf16.msra.mxu0 %v10432
      %11726 = vmatpush.bf16.msra.mxu0 %v10428
      %11727 = vmatpush.bf16.msra.mxu0 %v10424
      %11728 = vmatpush.bf16.msra.mxu0 %v10420
      %11729 = vmatpush.bf16.msra.mxu0 %v10416
      %11730 = vmatmul.bf16.gmra.mxu0 %v9549
      %v11731 = vpop.f32.mrf.mxu0
      %v11732 = vadd.f32 %v11698, %v11731
      %v11733 = vpop.f32.mrf.mxu0
      %v11734 = vadd.f32 %v11700, %v11733
      %11735 = vmatmul.bf16.gmra.mxu0 %v9557
      %v11736 = vpop.f32.mrf.mxu0
      %v11737 = vadd.f32 %v11703, %v11736
      %v11738 = vpop.f32.mrf.mxu0
      %v11739 = vadd.f32 %v11705, %v11738
      %11740 = vmatmul.bf16.gmra.mxu0 %v9565
      %v11741 = vpop.f32.mrf.mxu0
      %v11742 = vadd.f32 %v11708, %v11741
      %v11743 = vpop.f32.mrf.mxu0
      %v11744 = vadd.f32 %v11710, %v11743
      %11745 = vmatmul.bf16.gmra.mxu0 %v9573
      %v11746 = vpop.f32.mrf.mxu0
      %v11747 = vadd.f32 %v11713, %v11746
      %v11748 = vpop.f32.mrf.mxu0
      %v11749 = vadd.f32 %v11715, %v11748
      %11750 = vmatmul.bf16.gmra.mxu0 %v9581
      %v11751 = vpop.f32.mrf.mxu0
      %v11752 = vadd.f32 %v11718, %v11751
      %v11753 = vpop.f32.mrf.mxu0
      %v11754 = vadd.f32 %v11720, %v11753
      %11755 = vdwg.mxu0
      %11756 = vmatpush.bf16.msra.mxu0 %v10476
      %11757 = vmatpush.bf16.msra.mxu0 %v10472
      %11758 = vmatpush.bf16.msra.mxu0 %v10468
      %11759 = vmatpush.bf16.msra.mxu0 %v10464
      %11760 = vmatpush.bf16.msra.mxu0 %v10460
      %11761 = vmatpush.bf16.msra.mxu0 %v10456
      %11762 = vmatpush.bf16.msra.mxu0 %v10452
      %11763 = vmatpush.bf16.msra.mxu0 %v10448
      %11764 = vmatmul.bf16.gmra.mxu0 %v9550
      %v11765 = vpop.f32.mrf.mxu0
      %v11766 = vadd.f32 %v11732, %v11765
      %v11767 = vpop.f32.mrf.mxu0
      %v11768 = vadd.f32 %v11734, %v11767
      %11769 = vmatmul.bf16.gmra.mxu0 %v9558
      %v11770 = vpop.f32.mrf.mxu0
      %v11771 = vadd.f32 %v11737, %v11770
      %v11772 = vpop.f32.mrf.mxu0
      %v11773 = vadd.f32 %v11739, %v11772
      %11774 = vmatmul.bf16.gmra.mxu0 %v9566
      %v11775 = vpop.f32.mrf.mxu0
      %v11776 = vadd.f32 %v11742, %v11775
      %v11777 = vpop.f32.mrf.mxu0
      %v11778 = vadd.f32 %v11744, %v11777
      %11779 = vmatmul.bf16.gmra.mxu0 %v9574
      %v11780 = vpop.f32.mrf.mxu0
      %v11781 = vadd.f32 %v11747, %v11780
      %v11782 = vpop.f32.mrf.mxu0
      %v11783 = vadd.f32 %v11749, %v11782
      %11784 = vmatmul.bf16.gmra.mxu0 %v9582
      %v11785 = vpop.f32.mrf.mxu0
      %v11786 = vadd.f32 %v11752, %v11785
      %v11787 = vpop.f32.mrf.mxu0
      %v11788 = vadd.f32 %v11754, %v11787
      %11789 = vdwg.mxu0
      %11790 = vmatpush.bf16.msra.mxu0 %v10508
      %11791 = vmatpush.bf16.msra.mxu0 %v10504
      %11792 = vmatpush.bf16.msra.mxu0 %v10500
      %11793 = vmatpush.bf16.msra.mxu0 %v10496
      %11794 = vmatpush.bf16.msra.mxu0 %v10492
      %11795 = vmatpush.bf16.msra.mxu0 %v10488
      %11796 = vmatpush.bf16.msra.mxu0 %v10484
      %11797 = vmatpush.bf16.msra.mxu0 %v10480
      %11798 = vmatmul.bf16.gmra.mxu0 %v9551
      %v11799 = vpop.f32.mrf.mxu0
      %v11800 = vadd.f32 %v11766, %v11799
      %v11801 = vpop.f32.mrf.mxu0
      %v11802 = vadd.f32 %v11768, %v11801
      %11803 = vmatmul.bf16.gmra.mxu0 %v9559
      %v11804 = vpop.f32.mrf.mxu0
      %v11805 = vadd.f32 %v11771, %v11804
      %v11806 = vpop.f32.mrf.mxu0
      %v11807 = vadd.f32 %v11773, %v11806
      %11808 = vmatmul.bf16.gmra.mxu0 %v9567
      %v11809 = vpop.f32.mrf.mxu0
      %v11810 = vadd.f32 %v11776, %v11809
      %v11811 = vpop.f32.mrf.mxu0
      %v11812 = vadd.f32 %v11778, %v11811
      %11813 = vmatmul.bf16.gmra.mxu0 %v9575
      %v11814 = vpop.f32.mrf.mxu0
      %v11815 = vadd.f32 %v11781, %v11814
      %v11816 = vpop.f32.mrf.mxu0
      %v11817 = vadd.f32 %v11783, %v11816
      %11818 = vmatmul.bf16.gmra.mxu0 %v9583
      %v11819 = vpop.f32.mrf.mxu0
      %v11820 = vadd.f32 %v11786, %v11819
      %v11821 = vpop.f32.mrf.mxu0
      %v11822 = vadd.f32 %v11788, %v11821
      %11823 = vdwg.mxu0
      %11824 = vmatpush.bf16.msra.mxu0 %v10540
      %11825 = vmatpush.bf16.msra.mxu0 %v10536
      %11826 = vmatpush.bf16.msra.mxu0 %v10532
      %11827 = vmatpush.bf16.msra.mxu0 %v10528
      %11828 = vmatpush.bf16.msra.mxu0 %v10524
      %11829 = vmatpush.bf16.msra.mxu0 %v10520
      %11830 = vmatpush.bf16.msra.mxu0 %v10516
      %11831 = vmatpush.bf16.msra.mxu0 %v10512
      %11832 = vmatmul.bf16.gmra.mxu0 %v9552
      %v11833 = vpop.f32.mrf.mxu0
      %v11834 = vadd.f32 %v11800, %v11833
      %v11835 = vpop.f32.mrf.mxu0
      %v11836 = vadd.f32 %v11802, %v11835
      %11837 = vmatmul.bf16.gmra.mxu0 %v9560
      %v11838 = vpop.f32.mrf.mxu0
      %v11839 = vadd.f32 %v11805, %v11838
      %v11840 = vpop.f32.mrf.mxu0
      %v11841 = vadd.f32 %v11807, %v11840
      %11842 = vmatmul.bf16.gmra.mxu0 %v9568
      %v11843 = vpop.f32.mrf.mxu0
      %v11844 = vadd.f32 %v11810, %v11843
      %v11845 = vpop.f32.mrf.mxu0
      %v11846 = vadd.f32 %v11812, %v11845
      %11847 = vmatmul.bf16.gmra.mxu0 %v9576
      %v11848 = vpop.f32.mrf.mxu0
      %v11849 = vadd.f32 %v11815, %v11848
      %v11850 = vpop.f32.mrf.mxu0
      %v11851 = vadd.f32 %v11817, %v11850
      %11852 = vmatmul.bf16.gmra.mxu0 %v9584
      %v11853 = vpop.f32.mrf.mxu0
      %v11854 = vadd.f32 %v11820, %v11853
      %v11855 = vpop.f32.mrf.mxu0
      %v11856 = vadd.f32 %v11822, %v11855
      %11857 = vdwg.mxu0
      %11858 = vmatpush.bf16.msra.mxu0 0
      %11859 = vmatpush.bf16.msra.mxu0 0
      %11860 = vmatpush.bf16.msra.mxu0 0
      %11861 = vmatpush.bf16.msra.mxu0 0
      %11862 = vmatpush.bf16.msra.mxu0 0
      %11863 = vmatpush.bf16.msra.mxu0 0
      %11864 = vmatpush.bf16.msra.mxu0 %v10802
      %11865 = vmatpush.bf16.msra.mxu0 %v10544
      %11866 = vmatmul.bf16.gmra.mxu0 %v10778
      %v11867 = vpop.f32.mrf.mxu0
      %v11868 = vadd.f32 %v11834, %v11867
      %v11869 = vpop.f32.mrf.mxu0
      %v11870 = vadd.f32 %v11836, %v11869
      %11871 = vmatmul.bf16.gmra.mxu0 %v10781
      %v11872 = vpop.f32.mrf.mxu0
      %v11873 = vadd.f32 %v11839, %v11872
      %v11874 = vpop.f32.mrf.mxu0
      %v11875 = vadd.f32 %v11841, %v11874
      %11876 = vmatmul.bf16.gmra.mxu0 %v10784
      %v11877 = vpop.f32.mrf.mxu0
      %v11878 = vadd.f32 %v11844, %v11877
      %v11879 = vpop.f32.mrf.mxu0
      %v11880 = vadd.f32 %v11846, %v11879
      %11881 = vmatmul.bf16.gmra.mxu0 %v10787
      %v11882 = vpop.f32.mrf.mxu0
      %v11883 = vadd.f32 %v11849, %v11882
      %v11884 = vpop.f32.mrf.mxu0
      %v11885 = vadd.f32 %v11851, %v11884
      %11886 = vmatmul.bf16.gmra.mxu0 %v10790
      %v11887 = vpop.f32.mrf.mxu0
      %v11888 = vadd.f32 %v11854, %v11887
      %v11889 = vpop.f32.mrf.mxu0
      %v11890 = vadd.f32 %v11856, %v11889
      %11891 = vdwg.mxu0
      %v11892 = vadd.f32 %v8353, %v11052
      %v11893 = vadd.f32 %v8625, %v11324
      %v11894 = vadd.f32 %v8897, %v11596
      %v11895 = vadd.f32 %v9169, %v11868
      %v11896 = vadd.f32 %v8355, %v11054
      %v11897 = vadd.f32 %v8627, %v11326
      %v11898 = vadd.f32 %v8899, %v11598
      %v11899 = vadd.f32 %v9171, %v11870
      %v11900 = vadd.f32 %v8358, %v11057
      %v11901 = vadd.f32 %v8630, %v11329
      %v11902 = vadd.f32 %v8902, %v11601
      %v11903 = vadd.f32 %v9174, %v11873
      %v11904 = vadd.f32 %v8360, %v11059
      %v11905 = vadd.f32 %v8632, %v11331
      %v11906 = vadd.f32 %v8904, %v11603
      %v11907 = vadd.f32 %v9176, %v11875
      %v11908 = vadd.f32 %v8363, %v11062
      %v11909 = vadd.f32 %v8635, %v11334
      %v11910 = vadd.f32 %v8907, %v11606
      %v11911 = vadd.f32 %v9179, %v11878
      %v11912 = vadd.f32 %v8365, %v11064
      %v11913 = vadd.f32 %v8637, %v11336
      %v11914 = vadd.f32 %v8909, %v11608
      %v11915 = vadd.f32 %v9181, %v11880
      %v11916 = vadd.f32 %v8368, %v11067
      %v11917 = vadd.f32 %v8640, %v11339
      %v11918 = vadd.f32 %v8912, %v11611
      %v11919 = vadd.f32 %v9184, %v11883
      %v11920 = vadd.f32 %v8370, %v11069
      %v11921 = vadd.f32 %v8642, %v11341
      %v11922 = vadd.f32 %v8914, %v11613
      %v11923 = vadd.f32 %v9186, %v11885
      %v11924 = vadd.f32 %v8373, %v11072
      %v11925 = vadd.f32 %v8645, %v11344
      %v11926 = vadd.f32 %v8917, %v11616
      %v11927 = vadd.f32 %v9189, %v11888
      %v11928 = vadd.f32 %v8375, %v11074
      %v11929 = vadd.f32 %v8647, %v11346
      %v11930 = vadd.f32 %v8919, %v11618
      %v11931 = vadd.f32 %v9191, %v11890
      %v11932 = vld [vmem:[%s3] sm:$0xf]
      %v11934 = vperm.slane %v11932, 0
      %v11935 = vperm.slane %v11932, 1
      %v11936 = vperm.slane %v11932, 2
      %v11937 = vperm.slane %v11932, 3
      %v11942 = vadd.f32 %v11892, %v11934
      %v11943 = vadd.f32 %v11893, %v11935
      %v11944 = vadd.f32 %v11894, %v11936
      %v11945 = vadd.f32 %v11895, %v11937
      %v11946 = vadd.f32 %v11896, %v11934
      %v11947 = vadd.f32 %v11897, %v11935
      %v11948 = vadd.f32 %v11898, %v11936
      %v11949 = vadd.f32 %v11899, %v11937
      %v11950 = vadd.f32 %v11900, %v11934
      %v11951 = vadd.f32 %v11901, %v11935
      %v11952 = vadd.f32 %v11902, %v11936
      %v11953 = vadd.f32 %v11903, %v11937
      %v11954 = vadd.f32 %v11904, %v11934
      %v11955 = vadd.f32 %v11905, %v11935
      %v11956 = vadd.f32 %v11906, %v11936
      %v11957 = vadd.f32 %v11907, %v11937
      %v11958 = vadd.f32 %v11908, %v11934
      %v11959 = vadd.f32 %v11909, %v11935
      %v11960 = vadd.f32 %v11910, %v11936
      %v11961 = vadd.f32 %v11911, %v11937
      %v11962 = vadd.f32 %v11912, %v11934
      %v11963 = vadd.f32 %v11913, %v11935
      %v11964 = vadd.f32 %v11914, %v11936
      %v11965 = vadd.f32 %v11915, %v11937
      %v11966 = vadd.f32 %v11916, %v11934
      %v11967 = vadd.f32 %v11917, %v11935
      %v11968 = vadd.f32 %v11918, %v11936
      %v11969 = vadd.f32 %v11919, %v11937
      %v11970 = vadd.f32 %v11920, %v11934
      %v11971 = vadd.f32 %v11921, %v11935
      %v11972 = vadd.f32 %v11922, %v11936
      %v11973 = vadd.f32 %v11923, %v11937
      %v11974 = vadd.f32 %v11924, %v11934
      %v11975 = vadd.f32 %v11925, %v11935
      %v11976 = vadd.f32 %v11926, %v11936
      %v11977 = vadd.f32 %v11927, %v11937
      %v11978 = vadd.f32 %v11928, %v11934
      %v11979 = vadd.f32 %v11929, %v11935
      %v11980 = vadd.f32 %v11930, %v11936
      %v11981 = vadd.f32 %v11931, %v11937
      %v11982 = vmax.f32 %v11942, 0.0
      %v11983 = vmax.f32 %v11943, 0.0
      %v11984 = vmax.f32 %v11944, 0.0
      %v11985 = vmax.f32 %v11945, 0.0
      %v11986 = vmax.f32 %v11946, 0.0
      %v11987 = vmax.f32 %v11947, 0.0
      %v11988 = vmax.f32 %v11948, 0.0
      %v11989 = vmax.f32 %v11949, 0.0
      %v11990 = vmax.f32 %v11950, 0.0
      %v11991 = vmax.f32 %v11951, 0.0
      %v11992 = vmax.f32 %v11952, 0.0
      %v11993 = vmax.f32 %v11953, 0.0
      %v11994 = vmax.f32 %v11954, 0.0
      %v11995 = vmax.f32 %v11955, 0.0
      %v11996 = vmax.f32 %v11956, 0.0
      %v11997 = vmax.f32 %v11957, 0.0
      %v11998 = vmax.f32 %v11958, 0.0
      %v11999 = vmax.f32 %v11959, 0.0
      %v12000 = vmax.f32 %v11960, 0.0
      %v12001 = vmax.f32 %v11961, 0.0
      %v12002 = vmax.f32 %v11962, 0.0
      %v12003 = vmax.f32 %v11963, 0.0
      %v12004 = vmax.f32 %v11964, 0.0
      %v12005 = vmax.f32 %v11965, 0.0
      %v12006 = vmax.f32 %v11966, 0.0
      %v12007 = vmax.f32 %v11967, 0.0
      %v12008 = vmax.f32 %v11968, 0.0
      %v12009 = vmax.f32 %v11969, 0.0
      %v12010 = vmax.f32 %v11970, 0.0
      %v12011 = vmax.f32 %v11971, 0.0
      %v12012 = vmax.f32 %v11972, 0.0
      %v12013 = vmax.f32 %v11973, 0.0
      %v12014 = vmax.f32 %v11974, 0.0
      %v12015 = vmax.f32 %v11975, 0.0
      %v12016 = vmax.f32 %v11976, 0.0
      %v12017 = vmax.f32 %v11977, 0.0
      %v12018 = vmax.f32 %v11978, 0.0
      %v12019 = vmax.f32 %v11979, 0.0
      %v12020 = vmax.f32 %v11980, 0.0
      %v12021 = vmax.f32 %v11981, 0.0
      %v12022 = vpack.c.bf16 %v11986, %v11982
      %v12023 = vpack.c.bf16 %v11987, %v11983
      %v12024 = vpack.c.bf16 %v11988, %v11984
      %v12025 = vpack.c.bf16 %v11989, %v11985
      %v12026 = vpack.c.bf16 %v11994, %v11990
      %v12027 = vpack.c.bf16 %v11995, %v11991
      %v12028 = vpack.c.bf16 %v11996, %v11992
      %v12029 = vpack.c.bf16 %v11997, %v11993
      %v12030 = vpack.c.bf16 %v12002, %v11998
      %v12031 = vpack.c.bf16 %v12003, %v11999
      %v12032 = vpack.c.bf16 %v12004, %v12000
      %v12033 = vpack.c.bf16 %v12005, %v12001
      %v12034 = vpack.c.bf16 %v12010, %v12006
      %v12035 = vpack.c.bf16 %v12011, %v12007
      %v12036 = vpack.c.bf16 %v12012, %v12008
      %v12037 = vpack.c.bf16 %v12013, %v12009
      %v12038 = vpack.c.bf16 %v12018, %v12014
      %v12039 = vpack.c.bf16 %v12019, %v12015
      %v12040 = vpack.c.bf16 %v12020, %v12016
      %v12041 = vpack.c.bf16 %v12021, %v12017
      %v12042 = vld [vmem:[%s4] sm:$0xf]
      %v12043 = vld [vmem:[%s4 + $0x4] sm:$0xf]
      %v12044 = vld [vmem:[%s4 + $0x8] sm:$0xf]
      %v12045 = vld [vmem:[%s4 + $0xc] sm:$0xf]
      %v12046 = vld [vmem:[%s4 + $0x10] sm:$0xf]
      %v12047 = vld [vmem:[%s4 + $0x14] sm:$0xf]
      %v12048 = vld [vmem:[%s4 + $0x18] sm:$0xf]
      %v12049 = vld [vmem:[%s4 + $0x1c] sm:$0xf]
      %v12050 = vld [vmem:[%s4 + $0x20] sm:$0xf]
      %v12060 = vunpack.c.l.b16 %v12042
      %v12061 = vunpack.c.l.b16 %v12043
      %v12062 = vunpack.c.l.b16 %v12044
      %v12063 = vunpack.c.l.b16 %v12045
      %v12064 = vunpack.c.l.b16 %v12046
      %v12065 = vunpack.c.l.b16 %v12047
      %v12066 = vunpack.c.l.b16 %v12048
      %v12067 = vunpack.c.l.b16 %v12049
      %v12068 = vunpack.c.l.b16 %v12050
      %v12069 = vpack.c.b16 %v12061, %v12060
      %v12070 = vpack.c.b16 %v12063, %v12062
      %v12071 = vpack.c.b16 %v12065, %v12064
      %v12072 = vpack.c.b16 %v12067, %v12066
      %v12073 = vpack.c.b16 %v12068, %v12068
      %vm12074 = vcmask 654336
      %v12076 = vsel %vm12074, %v12069, 0
      %v12079 = vsel %vm12074, %v12070, 0
      %v12082 = vsel %vm12074, %v12071, 0
      %v12085 = vsel %vm12074, %v12072, 0
      %v12088 = vsel %vm12074, %v12073, 0
      %12090 = vmatpush.bf16.msra.mxu0 0
      %12091 = vmatpush.bf16.msra.mxu0 0
      %12092 = vmatpush.bf16.msra.mxu0 0
      %12093 = vmatpush.bf16.msra.mxu0 %v12038
      %12094 = vmatpush.bf16.msra.mxu0 %v12034
      %12095 = vmatpush.bf16.msra.mxu0 %v12030
      %12096 = vmatpush.bf16.msra.mxu0 %v12026
      %12097 = vmatpush.bf16.msra.mxu0 %v12022
      %12098 = vmatmul.bf16.gmra.mxu0 %v12076
      %v12099 = vpop.f32.mrf.mxu0
      %v12100 = vadd.f32 0.0, %v12099
      %v12101 = vpop.f32.mrf.mxu0
      %v12102 = vadd.f32 0.0, %v12101
      %12103 = vmatmul.bf16.gmra.mxu0 %v12079
      %v12104 = vpop.f32.mrf.mxu0
      %v12105 = vadd.f32 0.0, %v12104
      %v12106 = vpop.f32.mrf.mxu0
      %v12107 = vadd.f32 0.0, %v12106
      %12108 = vmatmul.bf16.gmra.mxu0 %v12082
      %v12109 = vpop.f32.mrf.mxu0
      %v12110 = vadd.f32 0.0, %v12109
      %v12111 = vpop.f32.mrf.mxu0
      %v12112 = vadd.f32 0.0, %v12111
      %12113 = vmatmul.bf16.gmra.mxu0 %v12085
      %v12114 = vpop.f32.mrf.mxu0
      %v12115 = vadd.f32 0.0, %v12114
      %v12116 = vpop.f32.mrf.mxu0
      %v12117 = vadd.f32 0.0, %v12116
      %12118 = vmatmul.bf16.gmra.mxu0 %v12088
      %v12119 = vpop.f32.mrf.mxu0
      %v12120 = vadd.f32 0.0, %v12119
      %v12121 = vpop.f32.mrf.mxu0
      %12122 = vdwg.mxu0
      %12123 = vmatpush.bf16.msra.mxu0 0
      %12124 = vmatpush.bf16.msra.mxu0 0
      %12125 = vmatpush.bf16.msra.mxu0 0
      %12126 = vmatpush.bf16.msra.mxu0 %v12039
      %12127 = vmatpush.bf16.msra.mxu0 %v12035
      %12128 = vmatpush.bf16.msra.mxu0 %v12031
      %12129 = vmatpush.bf16.msra.mxu0 %v12027
      %12130 = vmatpush.bf16.msra.mxu0 %v12023
      %12131 = vmatmul.bf16.gmra.mxu0 %v12076
      %v12132 = vpop.f32.mrf.mxu0
      %v12133 = vadd.f32 0.0, %v12132
      %v12134 = vpop.f32.mrf.mxu0
      %v12135 = vadd.f32 0.0, %v12134
      %12136 = vmatmul.bf16.gmra.mxu0 %v12079
      %v12137 = vpop.f32.mrf.mxu0
      %v12138 = vadd.f32 0.0, %v12137
      %v12139 = vpop.f32.mrf.mxu0
      %v12140 = vadd.f32 0.0, %v12139
      %12141 = vmatmul.bf16.gmra.mxu0 %v12082
      %v12142 = vpop.f32.mrf.mxu0
      %v12143 = vadd.f32 0.0, %v12142
      %v12144 = vpop.f32.mrf.mxu0
      %v12145 = vadd.f32 0.0, %v12144
      %12146 = vmatmul.bf16.gmra.mxu0 %v12085
      %v12147 = vpop.f32.mrf.mxu0
      %v12148 = vadd.f32 0.0, %v12147
      %v12149 = vpop.f32.mrf.mxu0
      %v12150 = vadd.f32 0.0, %v12149
      %12151 = vmatmul.bf16.gmra.mxu0 %v12088
      %v12152 = vpop.f32.mrf.mxu0
      %v12153 = vadd.f32 0.0, %v12152
      %v12154 = vpop.f32.mrf.mxu0
      %12155 = vdwg.mxu0
      %12156 = vmatpush.bf16.msra.mxu0 0
      %12157 = vmatpush.bf16.msra.mxu0 0
      %12158 = vmatpush.bf16.msra.mxu0 0
      %12159 = vmatpush.bf16.msra.mxu0 %v12040
      %12160 = vmatpush.bf16.msra.mxu0 %v12036
      %12161 = vmatpush.bf16.msra.mxu0 %v12032
      %12162 = vmatpush.bf16.msra.mxu0 %v12028
      %12163 = vmatpush.bf16.msra.mxu0 %v12024
      %12164 = vmatmul.bf16.gmra.mxu0 %v12076
      %v12165 = vpop.f32.mrf.mxu0
      %v12166 = vadd.f32 0.0, %v12165
      %v12167 = vpop.f32.mrf.mxu0
      %v12168 = vadd.f32 0.0, %v12167
      %12169 = vmatmul.bf16.gmra.mxu0 %v12079
      %v12170 = vpop.f32.mrf.mxu0
      %v12171 = vadd.f32 0.0, %v12170
      %v12172 = vpop.f32.mrf.mxu0
      %v12173 = vadd.f32 0.0, %v12172
      %12174 = vmatmul.bf16.gmra.mxu0 %v12082
      %v12175 = vpop.f32.mrf.mxu0
      %v12176 = vadd.f32 0.0, %v12175
      %v12177 = vpop.f32.mrf.mxu0
      %v12178 = vadd.f32 0.0, %v12177
      %12179 = vmatmul.bf16.gmra.mxu0 %v12085
      %v12180 = vpop.f32.mrf.mxu0
      %v12181 = vadd.f32 0.0, %v12180
      %v12182 = vpop.f32.mrf.mxu0
      %v12183 = vadd.f32 0.0, %v12182
      %12184 = vmatmul.bf16.gmra.mxu0 %v12088
      %v12185 = vpop.f32.mrf.mxu0
      %v12186 = vadd.f32 0.0, %v12185
      %v12187 = vpop.f32.mrf.mxu0
      %12188 = vdwg.mxu0
      %12189 = vmatpush.bf16.msra.mxu0 0
      %12190 = vmatpush.bf16.msra.mxu0 0
      %12191 = vmatpush.bf16.msra.mxu0 0
      %12192 = vmatpush.bf16.msra.mxu0 %v12041
      %12193 = vmatpush.bf16.msra.mxu0 %v12037
      %12194 = vmatpush.bf16.msra.mxu0 %v12033
      %12195 = vmatpush.bf16.msra.mxu0 %v12029
      %12196 = vmatpush.bf16.msra.mxu0 %v12025
      %12197 = vmatmul.bf16.gmra.mxu0 %v12076
      %v12198 = vpop.f32.mrf.mxu0
      %v12199 = vadd.f32 0.0, %v12198
      %v12200 = vpop.f32.mrf.mxu0
      %v12201 = vadd.f32 0.0, %v12200
      %12202 = vmatmul.bf16.gmra.mxu0 %v12079
      %v12203 = vpop.f32.mrf.mxu0
      %v12204 = vadd.f32 0.0, %v12203
      %v12205 = vpop.f32.mrf.mxu0
      %v12206 = vadd.f32 0.0, %v12205
      %12207 = vmatmul.bf16.gmra.mxu0 %v12082
      %v12208 = vpop.f32.mrf.mxu0
      %v12209 = vadd.f32 0.0, %v12208
      %v12210 = vpop.f32.mrf.mxu0
      %v12211 = vadd.f32 0.0, %v12210
      %12212 = vmatmul.bf16.gmra.mxu0 %v12085
      %v12213 = vpop.f32.mrf.mxu0
      %v12214 = vadd.f32 0.0, %v12213
      %v12215 = vpop.f32.mrf.mxu0
      %v12216 = vadd.f32 0.0, %v12215
      %12217 = vmatmul.bf16.gmra.mxu0 %v12088
      %v12218 = vpop.f32.mrf.mxu0
      %v12219 = vadd.f32 0.0, %v12218
      %v12220 = vpop.f32.mrf.mxu0
      %12221 = vdwg.mxu0
      %v12222 = vpack.c.bf16 %v12133, %v12100
      %v12223 = vpack.c.bf16 %v12199, %v12166
      %v12224 = vpack.c.bf16 %v12135, %v12102
      %v12225 = vpack.c.bf16 %v12201, %v12168
      %v12226 = vpack.c.bf16 %v12138, %v12105
      %v12227 = vpack.c.bf16 %v12204, %v12171
      %v12228 = vpack.c.bf16 %v12140, %v12107
      %v12229 = vpack.c.bf16 %v12206, %v12173
      %v12230 = vpack.c.bf16 %v12143, %v12110
      %v12231 = vpack.c.bf16 %v12209, %v12176
      %v12232 = vpack.c.bf16 %v12145, %v12112
      %v12233 = vpack.c.bf16 %v12211, %v12178
      %v12234 = vpack.c.bf16 %v12148, %v12115
      %v12235 = vpack.c.bf16 %v12214, %v12181
      %v12236 = vpack.c.bf16 %v12150, %v12117
      %v12237 = vpack.c.bf16 %v12216, %v12183
      %v12238 = vpack.c.bf16 %v12153, %v12120
      %v12239 = vpack.c.bf16 %v12219, %v12186
      %v12240 = vld [vmem:[%s5] sm:$0xf]
      %v12241 = vld [vmem:[%s5 + $0x4] sm:$0xf]
      %v12242 = vld [vmem:[%s5 + $0x8] sm:$0xf]
      %v12243 = vld [vmem:[%s5 + $0xc] sm:$0xf]
      %v12244 = vld [vmem:[%s5 + $0x10] sm:$0xf]
      %v12245 = vld [vmem:[%s5 + $0x14] sm:$0xf]
      %v12246 = vld [vmem:[%s5 + $0x18] sm:$0xf]
      %v12247 = vld [vmem:[%s5 + $0x1c] sm:$0xf]
      %v12248 = vld [vmem:[%s5 + $0x20] sm:$0xf]
      %v12249 = vld [vmem:[%s5 + $0x24] sm:$0xf]
      %v12250 = vld [vmem:[%s5 + $0x28] sm:$0xf]
      %v12251 = vld [vmem:[%s5 + $0x2c] sm:$0xf]
      %v12252 = vld [vmem:[%s5 + $0x30] sm:$0xf]
      %v12253 = vld [vmem:[%s5 + $0x34] sm:$0xf]
      %v12254 = vld [vmem:[%s5 + $0x38] sm:$0xf]
      %v12255 = vld [vmem:[%s5 + $0x3c] sm:$0xf]
      %v12256 = vld [vmem:[%s5 + $0x40] sm:$0xf]
      %v12257 = vld [vmem:[%s5 + $0x44] sm:$0xf]
      %v12258 = vld [vmem:[%s5 + $0x48] sm:$0xf]
      %v12259 = vld [vmem:[%s5 + $0x4c] sm:$0xf]
      %v12260 = vld [vmem:[%s5 + $0x50] sm:$0xf]
      %v12261 = vld [vmem:[%s5 + $0x54] sm:$0xf]
      %v12262 = vld [vmem:[%s5 + $0x58] sm:$0xf]
      %v12263 = vld [vmem:[%s5 + $0x5c] sm:$0xf]
      %v12264 = vld [vmem:[%s5 + $0x60] sm:$0xf]
      %v12265 = vld [vmem:[%s5 + $0x64] sm:$0xf]
      %v12266 = vld [vmem:[%s5 + $0x68] sm:$0xf]
      %v12267 = vld [vmem:[%s5 + $0x6c] sm:$0xf]
      %v12268 = vld [vmem:[%s5 + $0x70] sm:$0xf]
      %v12269 = vld [vmem:[%s5 + $0x74] sm:$0xf]
      %v12270 = vld [vmem:[%s5 + $0x78] sm:$0xf]
      %v12271 = vld [vmem:[%s5 + $0x7c] sm:$0xf]
      %v12272 = vld [vmem:[%s5 + $0x80] sm:$0xf]
      %v12273 = vld [vmem:[%s5 + $0x84] sm:$0xf]
      %v12274 = vld [vmem:[%s5 + $0x88] sm:$0xf]
      %v12275 = vld [vmem:[%s5 + $0x8c] sm:$0xf]
      %v12276 = vld [vmem:[%s5 + $0x90] sm:$0xf]
      %v12277 = vld [vmem:[%s5 + $0x94] sm:$0xf]
      %v12278 = vld [vmem:[%s5 + $0x98] sm:$0xf]
      %v12279 = vld [vmem:[%s5 + $0x9c] sm:$0xf]
      %v12280 = vld [vmem:[%s5 + $0xa0] sm:$0xf]
      %v12281 = vld [vmem:[%s5 + $0xa4] sm:$0xf]
      %v12282 = vld [vmem:[%s5 + $0xa8] sm:$0xf]
      %v12283 = vld [vmem:[%s5 + $0xac] sm:$0xf]
      %v12284 = vld [vmem:[%s5 + $0xb0] sm:$0xf]
      %v12285 = vld [vmem:[%s5 + $0xb4] sm:$0xf]
      %v12286 = vld [vmem:[%s5 + $0xb8] sm:$0xf]
      %v12287 = vld [vmem:[%s5 + $0xbc] sm:$0xf]
      %v12288 = vld [vmem:[%s5 + $0xc0] sm:$0xf]
      %v12289 = vld [vmem:[%s5 + $0xc4] sm:$0xf]
      %v12290 = vld [vmem:[%s5 + $0xc8] sm:$0xf]
      %v12291 = vld [vmem:[%s5 + $0xcc] sm:$0xf]
      %v12292 = vld [vmem:[%s5 + $0xd0] sm:$0xf]
      %v12293 = vld [vmem:[%s5 + $0xd4] sm:$0xf]
      %v12294 = vld [vmem:[%s5 + $0xd8] sm:$0xf]
      %v12295 = vld [vmem:[%s5 + $0xdc] sm:$0xf]
      %v12296 = vld [vmem:[%s5 + $0xe0] sm:$0xf]
      %s12297 = scalar_lea.vmem %s5, 228
      %v12298 = vld [vmem:[%s12297] sm:$0xf]
      %v12299 = vld [vmem:[%s12297 + $0x4] sm:$0xf]
      %v12300 = vld [vmem:[%s12297 + $0x8] sm:$0xf]
      %v12301 = vld [vmem:[%s12297 + $0xc] sm:$0xf]
      %v12302 = vld [vmem:[%s12297 + $0x10] sm:$0xf]
      %v12303 = vld [vmem:[%s12297 + $0x14] sm:$0xf]
      %v12304 = vld [vmem:[%s12297 + $0x18] sm:$0xf]
      %v12305 = vld [vmem:[%s12297 + $0x1c] sm:$0xf]
      %v12306 = vld [vmem:[%s12297 + $0x20] sm:$0xf]
      %v12307 = vld [vmem:[%s12297 + $0x24] sm:$0xf]
      %v12308 = vld [vmem:[%s12297 + $0x28] sm:$0xf]
      %v12309 = vld [vmem:[%s12297 + $0x2c] sm:$0xf]
      %v12310 = vld [vmem:[%s12297 + $0x30] sm:$0xf]
      %v12311 = vld [vmem:[%s12297 + $0x34] sm:$0xf]
      %v12312 = vld [vmem:[%s12297 + $0x38] sm:$0xf]
      %v12313 = vld [vmem:[%s12297 + $0x3c] sm:$0xf]
      %v12314 = vld [vmem:[%s12297 + $0x40] sm:$0xf]
      %v12315 = vld [vmem:[%s12297 + $0x44] sm:$0xf]
      %v12316 = vld [vmem:[%s12297 + $0x48] sm:$0xf]
      %v12317 = vld [vmem:[%s12297 + $0x4c] sm:$0xf]
      %v12318 = vld [vmem:[%s12297 + $0x50] sm:$0xf]
      %v12319 = vld [vmem:[%s12297 + $0x54] sm:$0xf]
      %v12320 = vld [vmem:[%s12297 + $0x58] sm:$0xf]
      %v12321 = vld [vmem:[%s12297 + $0x5c] sm:$0xf]
      %v12322 = vld [vmem:[%s12297 + $0x60] sm:$0xf]
      %v12323 = vld [vmem:[%s12297 + $0x64] sm:$0xf]
      %v12324 = vld [vmem:[%s12297 + $0x68] sm:$0xf]
      %v12325 = vld [vmem:[%s12297 + $0x6c] sm:$0xf]
      %v12326 = vld [vmem:[%s12297 + $0x70] sm:$0xf]
      %v12327 = vld [vmem:[%s12297 + $0x74] sm:$0xf]
      %v12328 = vld [vmem:[%s12297 + $0x78] sm:$0xf]
      %v12329 = vld [vmem:[%s12297 + $0x7c] sm:$0xf]
      %v12330 = vld [vmem:[%s12297 + $0x80] sm:$0xf]
      %v12331 = vld [vmem:[%s12297 + $0x84] sm:$0xf]
      %v12332 = vld [vmem:[%s12297 + $0x88] sm:$0xf]
      %v12333 = vld [vmem:[%s12297 + $0x8c] sm:$0xf]
      %v12334 = vld [vmem:[%s12297 + $0x90] sm:$0xf]
      %v12335 = vld [vmem:[%s12297 + $0x94] sm:$0xf]
      %v12336 = vld [vmem:[%s12297 + $0x98] sm:$0xf]
      %v12337 = vld [vmem:[%s12297 + $0x9c] sm:$0xf]
      %v12338 = vld [vmem:[%s12297 + $0xa0] sm:$0xf]
      %v12339 = vld [vmem:[%s12297 + $0xa4] sm:$0xf]
      %v12340 = vld [vmem:[%s12297 + $0xa8] sm:$0xf]
      %v12341 = vld [vmem:[%s12297 + $0xac] sm:$0xf]
      %v12342 = vld [vmem:[%s12297 + $0xb0] sm:$0xf]
      %v12343 = vld [vmem:[%s12297 + $0xb4] sm:$0xf]
      %v12344 = vld [vmem:[%s12297 + $0xb8] sm:$0xf]
      %v12345 = vld [vmem:[%s12297 + $0xbc] sm:$0xf]
      %v12346 = vld [vmem:[%s12297 + $0xc0] sm:$0xf]
      %v12347 = vld [vmem:[%s12297 + $0xc4] sm:$0xf]
      %v12348 = vld [vmem:[%s12297 + $0xc8] sm:$0xf]
      %v12349 = vld [vmem:[%s12297 + $0xcc] sm:$0xf]
      %v12350 = vld [vmem:[%s12297 + $0xd0] sm:$0xf]
      %v12351 = vld [vmem:[%s12297 + $0xd4] sm:$0xf]
      %v12352 = vld [vmem:[%s12297 + $0xd8] sm:$0xf]
      %v12353 = vld [vmem:[%s12297 + $0xdc] sm:$0xf]
      %v12354 = vld [vmem:[%s12297 + $0xe0] sm:$0xf]
      %v12361 = vunpack.c.l.b16 %v12228
      %v12362 = vunpack.c.h.b16 %v12228
      %v12363 = vunpack.c.l.b16 %v12229
      %v12364 = vunpack.c.h.b16 %v12229
      %v12365 = vunpack.c.l.b16 %v12230
      %v12366 = vunpack.c.h.b16 %v12230
      %v12367 = vunpack.c.l.b16 %v12231
      %v12368 = vunpack.c.h.b16 %v12231
      %v12369 = vunpack.c.l.b16 %v12232
      %v12370 = vunpack.c.h.b16 %v12232
      %v12371 = vunpack.c.l.b16 %v12233
      %v12372 = vunpack.c.h.b16 %v12233
      %v12373 = vpack.c.b16 %v12365, %v12361
      %v12374 = vpack.c.b16 %v12366, %v12362
      %v12375 = vpack.c.b16 %v12367, %v12363
      %v12376 = vpack.c.b16 %v12368, %v12364
      %v12377 = vpack.c.b16 %v12369, %v12369
      %v12378 = vpack.c.b16 %v12370, %v12370
      %v12379 = vpack.c.b16 %v12371, %v12371
      %v12380 = vpack.c.b16 %v12372, %v12372
      %v12444 = vunpack.c.l.b16 %v12298
      %v12445 = vunpack.c.l.b16 %v12299
      %v12446 = vunpack.c.l.b16 %v12300
      %v12447 = vunpack.c.l.b16 %v12301
      %v12448 = vunpack.c.l.b16 %v12302
      %v12449 = vunpack.c.l.b16 %v12303
      %v12450 = vunpack.c.l.b16 %v12304
      %v12451 = vunpack.c.l.b16 %v12305
      %v12452 = vunpack.c.l.b16 %v12306
      %v12453 = vunpack.c.l.b16 %v12307
      %v12454 = vunpack.c.l.b16 %v12308
      %v12455 = vunpack.c.l.b16 %v12309
      %v12456 = vunpack.c.l.b16 %v12310
      %v12457 = vunpack.c.l.b16 %v12311
      %v12458 = vunpack.c.l.b16 %v12312
      %v12459 = vunpack.c.l.b16 %v12313
      %v12460 = vunpack.c.l.b16 %v12314
      %v12461 = vunpack.c.l.b16 %v12315
      %v12462 = vunpack.c.l.b16 %v12316
      %v12463 = vunpack.c.l.b16 %v12317
      %v12464 = vunpack.c.l.b16 %v12318
      %v12465 = vunpack.c.l.b16 %v12319
      %v12466 = vunpack.c.l.b16 %v12320
      %v12467 = vunpack.c.l.b16 %v12321
      %v12468 = vunpack.c.l.b16 %v12322
      %v12469 = vunpack.c.l.b16 %v12323
      %v12470 = vunpack.c.l.b16 %v12324
      %v12471 = vunpack.c.l.b16 %v12325
      %v12472 = vunpack.c.l.b16 %v12326
      %v12473 = vunpack.c.l.b16 %v12327
      %v12474 = vunpack.c.l.b16 %v12328
      %v12475 = vunpack.c.l.b16 %v12329
      %v12476 = vunpack.c.l.b16 %v12330
      %v12477 = vunpack.c.l.b16 %v12331
      %v12478 = vunpack.c.l.b16 %v12332
      %v12479 = vunpack.c.l.b16 %v12333
      %v12480 = vunpack.c.l.b16 %v12334
      %v12481 = vunpack.c.l.b16 %v12335
      %v12482 = vunpack.c.l.b16 %v12336
      %v12483 = vunpack.c.l.b16 %v12337
      %v12484 = vunpack.c.l.b16 %v12338
      %v12485 = vunpack.c.l.b16 %v12339
      %v12486 = vunpack.c.l.b16 %v12340
      %v12487 = vunpack.c.l.b16 %v12341
      %v12488 = vunpack.c.l.b16 %v12342
      %v12489 = vunpack.c.l.b16 %v12343
      %v12490 = vunpack.c.l.b16 %v12344
      %v12491 = vunpack.c.l.b16 %v12345
      %v12492 = vunpack.c.l.b16 %v12346
      %v12493 = vunpack.c.l.b16 %v12347
      %v12494 = vunpack.c.l.b16 %v12348
      %v12495 = vunpack.c.l.b16 %v12349
      %v12496 = vunpack.c.l.b16 %v12350
      %v12497 = vunpack.c.l.b16 %v12351
      %v12498 = vunpack.c.l.b16 %v12352
      %v12499 = vunpack.c.l.b16 %v12353
      %v12500 = vunpack.c.l.b16 %v12354
      %v12501 = vpack.c.b16 %v12445, %v12444
      %v12502 = vpack.c.b16 %v12447, %v12446
      %v12503 = vpack.c.b16 %v12449, %v12448
      %v12504 = vpack.c.b16 %v12451, %v12450
      %v12505 = vpack.c.b16 %v12453, %v12452
      %v12506 = vpack.c.b16 %v12455, %v12454
      %v12507 = vpack.c.b16 %v12457, %v12456
      %v12508 = vpack.c.b16 %v12459, %v12458
      %v12509 = vpack.c.b16 %v12461, %v12460
      %v12510 = vpack.c.b16 %v12463, %v12462
      %v12511 = vpack.c.b16 %v12465, %v12464
      %v12512 = vpack.c.b16 %v12467, %v12466
      %v12513 = vpack.c.b16 %v12469, %v12468
      %v12514 = vpack.c.b16 %v12471, %v12470
      %v12515 = vpack.c.b16 %v12473, %v12472
      %v12516 = vpack.c.b16 %v12475, %v12474
      %v12517 = vpack.c.b16 %v12477, %v12476
      %v12518 = vpack.c.b16 %v12479, %v12478
      %v12519 = vpack.c.b16 %v12481, %v12480
      %v12520 = vpack.c.b16 %v12483, %v12482
      %v12521 = vpack.c.b16 %v12485, %v12484
      %v12522 = vpack.c.b16 %v12487, %v12486
      %v12523 = vpack.c.b16 %v12489, %v12488
      %v12524 = vpack.c.b16 %v12491, %v12490
      %v12525 = vpack.c.b16 %v12493, %v12492
      %v12526 = vpack.c.b16 %v12495, %v12494
      %v12527 = vpack.c.b16 %v12497, %v12496
      %v12528 = vpack.c.b16 %v12499, %v12498
      %v12529 = vpack.c.b16 %v12500, %v12500
      %vm12558 = vcmask 588800
      %v12560 = vsel %vm12558, %v12376, 0
      %v12563 = vsel %vm12558, %v12380, 0
      %vm12565 = vcmask 1043456
      %v12567 = vsel %vm12565, %v12529, 0
      %12569 = vmatpush.bf16.msra.mxu0 %v12508
      %12570 = vmatpush.bf16.msra.mxu0 %v12507
      %12571 = vmatpush.bf16.msra.mxu0 %v12506
      %12572 = vmatpush.bf16.msra.mxu0 %v12505
      %12573 = vmatpush.bf16.msra.mxu0 %v12504
      %12574 = vmatpush.bf16.msra.mxu0 %v12503
      %12575 = vmatpush.bf16.msra.mxu0 %v12502
      %12576 = vmatpush.bf16.msra.mxu0 %v12501
      %12577 = vmatmul.bf16.gmra.mxu0 %v12373
      %v12578 = vpop.f32.mrf.mxu0
      %v12579 = vadd.f32 0.0, %v12578
      %v12580 = vpop.f32.mrf.mxu0
      %v12581 = vadd.f32 0.0, %v12580
      %12582 = vmatmul.bf16.gmra.mxu0 %v12377
      %v12583 = vpop.f32.mrf.mxu0
      %v12584 = vadd.f32 0.0, %v12583
      %v12585 = vpop.f32.mrf.mxu0
      %12586 = vdwg.mxu0
      %12587 = vmatpush.bf16.msra.mxu0 %v12516
      %12588 = vmatpush.bf16.msra.mxu0 %v12515
      %12589 = vmatpush.bf16.msra.mxu0 %v12514
      %12590 = vmatpush.bf16.msra.mxu0 %v12513
      %12591 = vmatpush.bf16.msra.mxu0 %v12512
      %12592 = vmatpush.bf16.msra.mxu0 %v12511
      %12593 = vmatpush.bf16.msra.mxu0 %v12510
      %12594 = vmatpush.bf16.msra.mxu0 %v12509
      %12595 = vmatmul.bf16.gmra.mxu0 %v12374
      %v12596 = vpop.f32.mrf.mxu0
      %v12597 = vadd.f32 %v12579, %v12596
      %v12598 = vpop.f32.mrf.mxu0
      %v12599 = vadd.f32 %v12581, %v12598
      %12600 = vmatmul.bf16.gmra.mxu0 %v12378
      %v12601 = vpop.f32.mrf.mxu0
      %v12602 = vadd.f32 %v12584, %v12601
      %v12603 = vpop.f32.mrf.mxu0
      %12604 = vdwg.mxu0
      %12605 = vmatpush.bf16.msra.mxu0 %v12524
      %12606 = vmatpush.bf16.msra.mxu0 %v12523
      %12607 = vmatpush.bf16.msra.mxu0 %v12522
      %12608 = vmatpush.bf16.msra.mxu0 %v12521
      %12609 = vmatpush.bf16.msra.mxu0 %v12520
      %12610 = vmatpush.bf16.msra.mxu0 %v12519
      %12611 = vmatpush.bf16.msra.mxu0 %v12518
      %12612 = vmatpush.bf16.msra.mxu0 %v12517
      %12613 = vmatmul.bf16.gmra.mxu0 %v12375
      %v12614 = vpop.f32.mrf.mxu0
      %v12615 = vadd.f32 %v12597, %v12614
      %v12616 = vpop.f32.mrf.mxu0
      %v12617 = vadd.f32 %v12599, %v12616
      %12618 = vmatmul.bf16.gmra.mxu0 %v12379
      %v12619 = vpop.f32.mrf.mxu0
      %v12620 = vadd.f32 %v12602, %v12619
      %v12621 = vpop.f32.mrf.mxu0
      %12622 = vdwg.mxu0
      %12623 = vmatpush.bf16.msra.mxu0 0
      %12624 = vmatpush.bf16.msra.mxu0 0
      %12625 = vmatpush.bf16.msra.mxu0 0
      %12626 = vmatpush.bf16.msra.mxu0 %v12567
      %12627 = vmatpush.bf16.msra.mxu0 %v12528
      %12628 = vmatpush.bf16.msra.mxu0 %v12527
      %12629 = vmatpush.bf16.msra.mxu0 %v12526
      %12630 = vmatpush.bf16.msra.mxu0 %v12525
      %12631 = vmatmul.bf16.gmra.mxu0 %v12560
      %v12632 = vpop.f32.mrf.mxu0
      %v12633 = vadd.f32 %v12615, %v12632
      %v12634 = vpop.f32.mrf.mxu0
      %v12635 = vadd.f32 %v12617, %v12634
      %12636 = vmatmul.bf16.gmra.mxu0 %v12563
      %v12637 = vpop.f32.mrf.mxu0
      %v12638 = vadd.f32 %v12620, %v12637
      %v12639 = vpop.f32.mrf.mxu0
      %12640 = vdwg.mxu0
      %v12647 = vunpack.c.l.b16 %v12222
      %v12648 = vunpack.c.h.b16 %v12222
      %v12649 = vunpack.c.l.b16 %v12223
      %v12650 = vunpack.c.h.b16 %v12223
      %v12651 = vunpack.c.l.b16 %v12224
      %v12652 = vunpack.c.h.b16 %v12224
      %v12653 = vunpack.c.l.b16 %v12225
      %v12654 = vunpack.c.h.b16 %v12225
      %v12655 = vunpack.c.l.b16 %v12226
      %v12656 = vunpack.c.h.b16 %v12226
      %v12657 = vunpack.c.l.b16 %v12227
      %v12658 = vunpack.c.h.b16 %v12227
      %v12659 = vpack.c.b16 %v12651, %v12647
      %v12660 = vpack.c.b16 %v12652, %v12648
      %v12661 = vpack.c.b16 %v12653, %v12649
      %v12662 = vpack.c.b16 %v12654, %v12650
      %v12663 = vpack.c.b16 %v12655, %v12655
      %v12664 = vpack.c.b16 %v12656, %v12656
      %v12665 = vpack.c.b16 %v12657, %v12657
      %v12666 = vpack.c.b16 %v12658, %v12658
      %v12730 = vunpack.c.l.b16 %v12240
      %v12731 = vunpack.c.l.b16 %v12241
      %v12732 = vunpack.c.l.b16 %v12242
      %v12733 = vunpack.c.l.b16 %v12243
      %v12734 = vunpack.c.l.b16 %v12244
      %v12735 = vunpack.c.l.b16 %v12245
      %v12736 = vunpack.c.l.b16 %v12246
      %v12737 = vunpack.c.l.b16 %v12247
      %v12738 = vunpack.c.l.b16 %v12248
      %v12739 = vunpack.c.l.b16 %v12249
      %v12740 = vunpack.c.l.b16 %v12250
      %v12741 = vunpack.c.l.b16 %v12251
      %v12742 = vunpack.c.l.b16 %v12252
      %v12743 = vunpack.c.l.b16 %v12253
      %v12744 = vunpack.c.l.b16 %v12254
      %v12745 = vunpack.c.l.b16 %v12255
      %v12746 = vunpack.c.l.b16 %v12256
      %v12747 = vunpack.c.l.b16 %v12257
      %v12748 = vunpack.c.l.b16 %v12258
      %v12749 = vunpack.c.l.b16 %v12259
      %v12750 = vunpack.c.l.b16 %v12260
      %v12751 = vunpack.c.l.b16 %v12261
      %v12752 = vunpack.c.l.b16 %v12262
      %v12753 = vunpack.c.l.b16 %v12263
      %v12754 = vunpack.c.l.b16 %v12264
      %v12755 = vunpack.c.l.b16 %v12265
      %v12756 = vunpack.c.l.b16 %v12266
      %v12757 = vunpack.c.l.b16 %v12267
      %v12758 = vunpack.c.l.b16 %v12268
      %v12759 = vunpack.c.l.b16 %v12269
      %v12760 = vunpack.c.l.b16 %v12270
      %v12761 = vunpack.c.l.b16 %v12271
      %v12762 = vunpack.c.l.b16 %v12272
      %v12763 = vunpack.c.l.b16 %v12273
      %v12764 = vunpack.c.l.b16 %v12274
      %v12765 = vunpack.c.l.b16 %v12275
      %v12766 = vunpack.c.l.b16 %v12276
      %v12767 = vunpack.c.l.b16 %v12277
      %v12768 = vunpack.c.l.b16 %v12278
      %v12769 = vunpack.c.l.b16 %v12279
      %v12770 = vunpack.c.l.b16 %v12280
      %v12771 = vunpack.c.l.b16 %v12281
      %v12772 = vunpack.c.l.b16 %v12282
      %v12773 = vunpack.c.l.b16 %v12283
      %v12774 = vunpack.c.l.b16 %v12284
      %v12775 = vunpack.c.l.b16 %v12285
      %v12776 = vunpack.c.l.b16 %v12286
      %v12777 = vunpack.c.l.b16 %v12287
      %v12778 = vunpack.c.l.b16 %v12288
      %v12779 = vunpack.c.l.b16 %v12289
      %v12780 = vunpack.c.l.b16 %v12290
      %v12781 = vunpack.c.l.b16 %v12291
      %v12782 = vunpack.c.l.b16 %v12292
      %v12783 = vunpack.c.l.b16 %v12293
      %v12784 = vunpack.c.l.b16 %v12294
      %v12785 = vunpack.c.l.b16 %v12295
      %v12786 = vunpack.c.l.b16 %v12296
      %v12787 = vpack.c.b16 %v12731, %v12730
      %v12788 = vpack.c.b16 %v12733, %v12732
      %v12789 = vpack.c.b16 %v12735, %v12734
      %v12790 = vpack.c.b16 %v12737, %v12736
      %v12791 = vpack.c.b16 %v12739, %v12738
      %v12792 = vpack.c.b16 %v12741, %v12740
      %v12793 = vpack.c.b16 %v12743, %v12742
      %v12794 = vpack.c.b16 %v12745, %v12744
      %v12795 = vpack.c.b16 %v12747, %v12746
      %v12796 = vpack.c.b16 %v12749, %v12748
      %v12797 = vpack.c.b16 %v12751, %v12750
      %v12798 = vpack.c.b16 %v12753, %v12752
      %v12799 = vpack.c.b16 %v12755, %v12754
      %v12800 = vpack.c.b16 %v12757, %v12756
      %v12801 = vpack.c.b16 %v12759, %v12758
      %v12802 = vpack.c.b16 %v12761, %v12760
      %v12803 = vpack.c.b16 %v12763, %v12762
      %v12804 = vpack.c.b16 %v12765, %v12764
      %v12805 = vpack.c.b16 %v12767, %v12766
      %v12806 = vpack.c.b16 %v12769, %v12768
      %v12807 = vpack.c.b16 %v12771, %v12770
      %v12808 = vpack.c.b16 %v12773, %v12772
      %v12809 = vpack.c.b16 %v12775, %v12774
      %v12810 = vpack.c.b16 %v12777, %v12776
      %v12811 = vpack.c.b16 %v12779, %v12778
      %v12812 = vpack.c.b16 %v12781, %v12780
      %v12813 = vpack.c.b16 %v12783, %v12782
      %v12814 = vpack.c.b16 %v12785, %v12784
      %v12815 = vpack.c.b16 %v12786, %v12786
      %v12845 = vsel %vm12558, %v12662, 0
      %v12848 = vsel %vm12558, %v12666, 0
      %v12851 = vsel %vm12565, %v12815, 0
      %12853 = vmatpush.bf16.msra.mxu0 %v12794
      %12854 = vmatpush.bf16.msra.mxu0 %v12793
      %12855 = vmatpush.bf16.msra.mxu0 %v12792
      %12856 = vmatpush.bf16.msra.mxu0 %v12791
      %12857 = vmatpush.bf16.msra.mxu0 %v12790
      %12858 = vmatpush.bf16.msra.mxu0 %v12789
      %12859 = vmatpush.bf16.msra.mxu0 %v12788
      %12860 = vmatpush.bf16.msra.mxu0 %v12787
      %12861 = vmatmul.bf16.gmra.mxu0 %v12659
      %v12862 = vpop.f32.mrf.mxu0
      %v12863 = vadd.f32 %v12633, %v12862
      %v12864 = vpop.f32.mrf.mxu0
      %v12865 = vadd.f32 %v12635, %v12864
      %12866 = vmatmul.bf16.gmra.mxu0 %v12663
      %v12867 = vpop.f32.mrf.mxu0
      %v12868 = vadd.f32 %v12638, %v12867
      %v12869 = vpop.f32.mrf.mxu0
      %12870 = vdwg.mxu0
      %12871 = vmatpush.bf16.msra.mxu0 %v12802
      %12872 = vmatpush.bf16.msra.mxu0 %v12801
      %12873 = vmatpush.bf16.msra.mxu0 %v12800
      %12874 = vmatpush.bf16.msra.mxu0 %v12799
      %12875 = vmatpush.bf16.msra.mxu0 %v12798
      %12876 = vmatpush.bf16.msra.mxu0 %v12797
      %12877 = vmatpush.bf16.msra.mxu0 %v12796
      %12878 = vmatpush.bf16.msra.mxu0 %v12795
      %12879 = vmatmul.bf16.gmra.mxu0 %v12660
      %v12880 = vpop.f32.mrf.mxu0
      %v12881 = vadd.f32 %v12863, %v12880
      %v12882 = vpop.f32.mrf.mxu0
      %v12883 = vadd.f32 %v12865, %v12882
      %12884 = vmatmul.bf16.gmra.mxu0 %v12664
      %v12885 = vpop.f32.mrf.mxu0
      %v12886 = vadd.f32 %v12868, %v12885
      %v12887 = vpop.f32.mrf.mxu0
      %12888 = vdwg.mxu0
      %12889 = vmatpush.bf16.msra.mxu0 %v12810
      %12890 = vmatpush.bf16.msra.mxu0 %v12809
      %12891 = vmatpush.bf16.msra.mxu0 %v12808
      %12892 = vmatpush.bf16.msra.mxu0 %v12807
      %12893 = vmatpush.bf16.msra.mxu0 %v12806
      %12894 = vmatpush.bf16.msra.mxu0 %v12805
      %12895 = vmatpush.bf16.msra.mxu0 %v12804
      %12896 = vmatpush.bf16.msra.mxu0 %v12803
      %12897 = vmatmul.bf16.gmra.mxu0 %v12661
      %v12898 = vpop.f32.mrf.mxu0
      %v12899 = vadd.f32 %v12881, %v12898
      %v12900 = vpop.f32.mrf.mxu0
      %v12901 = vadd.f32 %v12883, %v12900
      %12902 = vmatmul.bf16.gmra.mxu0 %v12665
      %v12903 = vpop.f32.mrf.mxu0
      %v12904 = vadd.f32 %v12886, %v12903
      %v12905 = vpop.f32.mrf.mxu0
      %12906 = vdwg.mxu0
      %12907 = vmatpush.bf16.msra.mxu0 0
      %12908 = vmatpush.bf16.msra.mxu0 0
      %12909 = vmatpush.bf16.msra.mxu0 0
      %12910 = vmatpush.bf16.msra.mxu0 %v12851
      %12911 = vmatpush.bf16.msra.mxu0 %v12814
      %12912 = vmatpush.bf16.msra.mxu0 %v12813
      %12913 = vmatpush.bf16.msra.mxu0 %v12812
      %12914 = vmatpush.bf16.msra.mxu0 %v12811
      %12915 = vmatmul.bf16.gmra.mxu0 %v12845
      %v12916 = vpop.f32.mrf.mxu0
      %v12917 = vadd.f32 %v12899, %v12916
      %v12918 = vpop.f32.mrf.mxu0
      %v12919 = vadd.f32 %v12901, %v12918
      %12920 = vmatmul.bf16.gmra.mxu0 %v12848
      %v12921 = vpop.f32.mrf.mxu0
      %v12922 = vadd.f32 %v12904, %v12921
      %v12923 = vpop.f32.mrf.mxu0
      %12924 = vdwg.mxu0
      %s12925 = scalar_lea.vmem %s5, 456
      %v12926 = vld [vmem:[%s12925] sm:$0xf]
      %v12927 = vld [vmem:[%s12925 + $0x4] sm:$0xf]
      %v12928 = vld [vmem:[%s12925 + $0x8] sm:$0xf]
      %v12929 = vld [vmem:[%s12925 + $0xc] sm:$0xf]
      %v12930 = vld [vmem:[%s12925 + $0x10] sm:$0xf]
      %v12931 = vld [vmem:[%s12925 + $0x14] sm:$0xf]
      %v12932 = vld [vmem:[%s12925 + $0x18] sm:$0xf]
      %v12933 = vld [vmem:[%s12925 + $0x1c] sm:$0xf]
      %v12934 = vld [vmem:[%s12925 + $0x20] sm:$0xf]
      %v12935 = vld [vmem:[%s12925 + $0x24] sm:$0xf]
      %v12936 = vld [vmem:[%s12925 + $0x28] sm:$0xf]
      %v12937 = vld [vmem:[%s12925 + $0x2c] sm:$0xf]
      %v12938 = vld [vmem:[%s12925 + $0x30] sm:$0xf]
      %v12939 = vld [vmem:[%s12925 + $0x34] sm:$0xf]
      %v12940 = vld [vmem:[%s12925 + $0x38] sm:$0xf]
      %v12941 = vld [vmem:[%s12925 + $0x3c] sm:$0xf]
      %v12942 = vld [vmem:[%s12925 + $0x40] sm:$0xf]
      %v12943 = vld [vmem:[%s12925 + $0x44] sm:$0xf]
      %v12944 = vld [vmem:[%s12925 + $0x48] sm:$0xf]
      %v12945 = vld [vmem:[%s12925 + $0x4c] sm:$0xf]
      %v12946 = vld [vmem:[%s12925 + $0x50] sm:$0xf]
      %v12947 = vld [vmem:[%s12925 + $0x54] sm:$0xf]
      %v12948 = vld [vmem:[%s12925 + $0x58] sm:$0xf]
      %v12949 = vld [vmem:[%s12925 + $0x5c] sm:$0xf]
      %v12950 = vld [vmem:[%s12925 + $0x60] sm:$0xf]
      %v12951 = vld [vmem:[%s12925 + $0x64] sm:$0xf]
      %v12952 = vld [vmem:[%s12925 + $0x68] sm:$0xf]
      %v12953 = vld [vmem:[%s12925 + $0x6c] sm:$0xf]
      %v12954 = vld [vmem:[%s12925 + $0x70] sm:$0xf]
      %v12955 = vld [vmem:[%s12925 + $0x74] sm:$0xf]
      %v12956 = vld [vmem:[%s12925 + $0x78] sm:$0xf]
      %v12957 = vld [vmem:[%s12925 + $0x7c] sm:$0xf]
      %v12958 = vld [vmem:[%s12925 + $0x80] sm:$0xf]
      %v12959 = vld [vmem:[%s12925 + $0x84] sm:$0xf]
      %v12960 = vld [vmem:[%s12925 + $0x88] sm:$0xf]
      %v12961 = vld [vmem:[%s12925 + $0x8c] sm:$0xf]
      %v12962 = vld [vmem:[%s12925 + $0x90] sm:$0xf]
      %v12963 = vld [vmem:[%s12925 + $0x94] sm:$0xf]
      %v12964 = vld [vmem:[%s12925 + $0x98] sm:$0xf]
      %v12965 = vld [vmem:[%s12925 + $0x9c] sm:$0xf]
      %v12966 = vld [vmem:[%s12925 + $0xa0] sm:$0xf]
      %v12967 = vld [vmem:[%s12925 + $0xa4] sm:$0xf]
      %v12968 = vld [vmem:[%s12925 + $0xa8] sm:$0xf]
      %v12969 = vld [vmem:[%s12925 + $0xac] sm:$0xf]
      %v12970 = vld [vmem:[%s12925 + $0xb0] sm:$0xf]
      %v12971 = vld [vmem:[%s12925 + $0xb4] sm:$0xf]
      %v12972 = vld [vmem:[%s12925 + $0xb8] sm:$0xf]
      %v12973 = vld [vmem:[%s12925 + $0xbc] sm:$0xf]
      %v12974 = vld [vmem:[%s12925 + $0xc0] sm:$0xf]
      %v12975 = vld [vmem:[%s12925 + $0xc4] sm:$0xf]
      %v12976 = vld [vmem:[%s12925 + $0xc8] sm:$0xf]
      %v12977 = vld [vmem:[%s12925 + $0xcc] sm:$0xf]
      %v12978 = vld [vmem:[%s12925 + $0xd0] sm:$0xf]
      %v12979 = vld [vmem:[%s12925 + $0xd4] sm:$0xf]
      %v12980 = vld [vmem:[%s12925 + $0xd8] sm:$0xf]
      %v12981 = vld [vmem:[%s12925 + $0xdc] sm:$0xf]
      %v12982 = vld [vmem:[%s12925 + $0xe0] sm:$0xf]
      %v12989 = vunpack.c.l.b16 %v12234
      %v12990 = vunpack.c.h.b16 %v12234
      %v12991 = vunpack.c.l.b16 %v12235
      %v12992 = vunpack.c.h.b16 %v12235
      %v12993 = vunpack.c.l.b16 %v12236
      %v12994 = vunpack.c.h.b16 %v12236
      %v12995 = vunpack.c.l.b16 %v12237
      %v12996 = vunpack.c.h.b16 %v12237
      %v12997 = vunpack.c.l.b16 %v12238
      %v12998 = vunpack.c.h.b16 %v12238
      %v12999 = vunpack.c.l.b16 %v12239
      %v13000 = vunpack.c.h.b16 %v12239
      %v13001 = vpack.c.b16 %v12993, %v12989
      %v13002 = vpack.c.b16 %v12994, %v12990
      %v13003 = vpack.c.b16 %v12995, %v12991
      %v13004 = vpack.c.b16 %v12996, %v12992
      %v13005 = vpack.c.b16 %v12997, %v12997
      %v13006 = vpack.c.b16 %v12998, %v12998
      %v13007 = vpack.c.b16 %v12999, %v12999
      %v13008 = vpack.c.b16 %v13000, %v13000
      %v13072 = vunpack.c.l.b16 %v12926
      %v13073 = vunpack.c.l.b16 %v12927
      %v13074 = vunpack.c.l.b16 %v12928
      %v13075 = vunpack.c.l.b16 %v12929
      %v13076 = vunpack.c.l.b16 %v12930
      %v13077 = vunpack.c.l.b16 %v12931
      %v13078 = vunpack.c.l.b16 %v12932
      %v13079 = vunpack.c.l.b16 %v12933
      %v13080 = vunpack.c.l.b16 %v12934
      %v13081 = vunpack.c.l.b16 %v12935
      %v13082 = vunpack.c.l.b16 %v12936
      %v13083 = vunpack.c.l.b16 %v12937
      %v13084 = vunpack.c.l.b16 %v12938
      %v13085 = vunpack.c.l.b16 %v12939
      %v13086 = vunpack.c.l.b16 %v12940
      %v13087 = vunpack.c.l.b16 %v12941
      %v13088 = vunpack.c.l.b16 %v12942
      %v13089 = vunpack.c.l.b16 %v12943
      %v13090 = vunpack.c.l.b16 %v12944
      %v13091 = vunpack.c.l.b16 %v12945
      %v13092 = vunpack.c.l.b16 %v12946
      %v13093 = vunpack.c.l.b16 %v12947
      %v13094 = vunpack.c.l.b16 %v12948
      %v13095 = vunpack.c.l.b16 %v12949
      %v13096 = vunpack.c.l.b16 %v12950
      %v13097 = vunpack.c.l.b16 %v12951
      %v13098 = vunpack.c.l.b16 %v12952
      %v13099 = vunpack.c.l.b16 %v12953
      %v13100 = vunpack.c.l.b16 %v12954
      %v13101 = vunpack.c.l.b16 %v12955
      %v13102 = vunpack.c.l.b16 %v12956
      %v13103 = vunpack.c.l.b16 %v12957
      %v13104 = vunpack.c.l.b16 %v12958
      %v13105 = vunpack.c.l.b16 %v12959
      %v13106 = vunpack.c.l.b16 %v12960
      %v13107 = vunpack.c.l.b16 %v12961
      %v13108 = vunpack.c.l.b16 %v12962
      %v13109 = vunpack.c.l.b16 %v12963
      %v13110 = vunpack.c.l.b16 %v12964
      %v13111 = vunpack.c.l.b16 %v12965
      %v13112 = vunpack.c.l.b16 %v12966
      %v13113 = vunpack.c.l.b16 %v12967
      %v13114 = vunpack.c.l.b16 %v12968
      %v13115 = vunpack.c.l.b16 %v12969
      %v13116 = vunpack.c.l.b16 %v12970
      %v13117 = vunpack.c.l.b16 %v12971
      %v13118 = vunpack.c.l.b16 %v12972
      %v13119 = vunpack.c.l.b16 %v12973
      %v13120 = vunpack.c.l.b16 %v12974
      %v13121 = vunpack.c.l.b16 %v12975
      %v13122 = vunpack.c.l.b16 %v12976
      %v13123 = vunpack.c.l.b16 %v12977
      %v13124 = vunpack.c.l.b16 %v12978
      %v13125 = vunpack.c.l.b16 %v12979
      %v13126 = vunpack.c.l.b16 %v12980
      %v13127 = vunpack.c.l.b16 %v12981
      %v13128 = vunpack.c.l.b16 %v12982
      %v13129 = vpack.c.b16 %v13073, %v13072
      %v13130 = vpack.c.b16 %v13075, %v13074
      %v13131 = vpack.c.b16 %v13077, %v13076
      %v13132 = vpack.c.b16 %v13079, %v13078
      %v13133 = vpack.c.b16 %v13081, %v13080
      %v13134 = vpack.c.b16 %v13083, %v13082
      %v13135 = vpack.c.b16 %v13085, %v13084
      %v13136 = vpack.c.b16 %v13087, %v13086
      %v13137 = vpack.c.b16 %v13089, %v13088
      %v13138 = vpack.c.b16 %v13091, %v13090
      %v13139 = vpack.c.b16 %v13093, %v13092
      %v13140 = vpack.c.b16 %v13095, %v13094
      %v13141 = vpack.c.b16 %v13097, %v13096
      %v13142 = vpack.c.b16 %v13099, %v13098
      %v13143 = vpack.c.b16 %v13101, %v13100
      %v13144 = vpack.c.b16 %v13103, %v13102
      %v13145 = vpack.c.b16 %v13105, %v13104
      %v13146 = vpack.c.b16 %v13107, %v13106
      %v13147 = vpack.c.b16 %v13109, %v13108
      %v13148 = vpack.c.b16 %v13111, %v13110
      %v13149 = vpack.c.b16 %v13113, %v13112
      %v13150 = vpack.c.b16 %v13115, %v13114
      %v13151 = vpack.c.b16 %v13117, %v13116
      %v13152 = vpack.c.b16 %v13119, %v13118
      %v13153 = vpack.c.b16 %v13121, %v13120
      %v13154 = vpack.c.b16 %v13123, %v13122
      %v13155 = vpack.c.b16 %v13125, %v13124
      %v13156 = vpack.c.b16 %v13127, %v13126
      %v13157 = vpack.c.b16 %v13128, %v13128
      %v13187 = vsel %vm12558, %v13004, 0
      %v13190 = vsel %vm12558, %v13008, 0
      %v13193 = vsel %vm12565, %v13157, 0
      %13195 = vmatpush.bf16.msra.mxu0 %v13136
      %13196 = vmatpush.bf16.msra.mxu0 %v13135
      %13197 = vmatpush.bf16.msra.mxu0 %v13134
      %13198 = vmatpush.bf16.msra.mxu0 %v13133
      %13199 = vmatpush.bf16.msra.mxu0 %v13132
      %13200 = vmatpush.bf16.msra.mxu0 %v13131
      %13201 = vmatpush.bf16.msra.mxu0 %v13130
      %13202 = vmatpush.bf16.msra.mxu0 %v13129
      %13203 = vmatmul.bf16.gmra.mxu0 %v13001
      %v13204 = vpop.f32.mrf.mxu0
      %v13205 = vadd.f32 0.0, %v13204
      %v13206 = vpop.f32.mrf.mxu0
      %v13207 = vadd.f32 0.0, %v13206
      %13208 = vmatmul.bf16.gmra.mxu0 %v13005
      %v13209 = vpop.f32.mrf.mxu0
      %v13210 = vadd.f32 0.0, %v13209
      %v13211 = vpop.f32.mrf.mxu0
      %13212 = vdwg.mxu0
      %13213 = vmatpush.bf16.msra.mxu0 %v13144
      %13214 = vmatpush.bf16.msra.mxu0 %v13143
      %13215 = vmatpush.bf16.msra.mxu0 %v13142
      %13216 = vmatpush.bf16.msra.mxu0 %v13141
      %13217 = vmatpush.bf16.msra.mxu0 %v13140
      %13218 = vmatpush.bf16.msra.mxu0 %v13139
      %13219 = vmatpush.bf16.msra.mxu0 %v13138
      %13220 = vmatpush.bf16.msra.mxu0 %v13137
      %13221 = vmatmul.bf16.gmra.mxu0 %v13002
      %v13222 = vpop.f32.mrf.mxu0
      %v13223 = vadd.f32 %v13205, %v13222
      %v13224 = vpop.f32.mrf.mxu0
      %v13225 = vadd.f32 %v13207, %v13224
      %13226 = vmatmul.bf16.gmra.mxu0 %v13006
      %v13227 = vpop.f32.mrf.mxu0
      %v13228 = vadd.f32 %v13210, %v13227
      %v13229 = vpop.f32.mrf.mxu0
      %13230 = vdwg.mxu0
      %13231 = vmatpush.bf16.msra.mxu0 %v13152
      %13232 = vmatpush.bf16.msra.mxu0 %v13151
      %13233 = vmatpush.bf16.msra.mxu0 %v13150
      %13234 = vmatpush.bf16.msra.mxu0 %v13149
      %13235 = vmatpush.bf16.msra.mxu0 %v13148
      %13236 = vmatpush.bf16.msra.mxu0 %v13147
      %13237 = vmatpush.bf16.msra.mxu0 %v13146
      %13238 = vmatpush.bf16.msra.mxu0 %v13145
      %13239 = vmatmul.bf16.gmra.mxu0 %v13003
      %v13240 = vpop.f32.mrf.mxu0
      %v13241 = vadd.f32 %v13223, %v13240
      %v13242 = vpop.f32.mrf.mxu0
      %v13243 = vadd.f32 %v13225, %v13242
      %13244 = vmatmul.bf16.gmra.mxu0 %v13007
      %v13245 = vpop.f32.mrf.mxu0
      %v13246 = vadd.f32 %v13228, %v13245
      %v13247 = vpop.f32.mrf.mxu0
      %13248 = vdwg.mxu0
      %13249 = vmatpush.bf16.msra.mxu0 0
      %13250 = vmatpush.bf16.msra.mxu0 0
      %13251 = vmatpush.bf16.msra.mxu0 0
      %13252 = vmatpush.bf16.msra.mxu0 %v13193
      %13253 = vmatpush.bf16.msra.mxu0 %v13156
      %13254 = vmatpush.bf16.msra.mxu0 %v13155
      %13255 = vmatpush.bf16.msra.mxu0 %v13154
      %13256 = vmatpush.bf16.msra.mxu0 %v13153
      %13257 = vmatmul.bf16.gmra.mxu0 %v13187
      %v13258 = vpop.f32.mrf.mxu0
      %v13259 = vadd.f32 %v13241, %v13258
      %v13260 = vpop.f32.mrf.mxu0
      %v13261 = vadd.f32 %v13243, %v13260
      %13262 = vmatmul.bf16.gmra.mxu0 %v13190
      %v13263 = vpop.f32.mrf.mxu0
      %v13264 = vadd.f32 %v13246, %v13263
      %v13265 = vpop.f32.mrf.mxu0
      %13266 = vdwg.mxu0
      %v13267 = vadd.f32 %v12917, %v13259
      %v13268 = vadd.f32 %v12919, %v13261
      %v13269 = vadd.f32 %v12922, %v13264
      %v13270 = vld [vmem:[%s6] sm:$0x1]
      %v13272 = vperm.slane %v13270, 0
      %v13274 = vadd.f32 %v13267, %v13272
      %v13275 = vadd.f32 %v13268, %v13272
      %v13276 = vadd.f32 %v13269, %v13272
      %v13277 = vmax.f32 %v13274, 0.0
      %v13278 = vmax.f32 %v13275, 0.0
      %v13279 = vmax.f32 %v13276, 0.0
      %v13280 = vpack.c.bf16 %v13278, %v13277
      %v13281 = vpack.c.bf16 %v13279, %v13279
      %v13282 = vld [vmem:[%s7] sm:$0xf]
      %v13283 = vld [vmem:[%s7 + $0x4] sm:$0xf]
      %v13284 = vld [vmem:[%s7 + $0x8] sm:$0xf]
      %v13288 = vunpack.c.l.b16 %v13282
      %v13289 = vunpack.c.l.b16 %v13283
      %v13290 = vunpack.c.l.b16 %v13284
      %v13291 = vpack.c.b16 %v13289, %v13288
      %v13292 = vpack.c.b16 %v13290, %v13290
      %vm13293 = vcmask 195584
      %v13295 = vsel %vm13293, %v13291, 0
      %v13298 = vsel %vm13293, %v13292, 0
      %v13301 = vsel %vm12565, %v13281, 0
      %13303 = vmatpush.bf16.msra.mxu0 0
      %13304 = vmatpush.bf16.msra.mxu0 0
      %13305 = vmatpush.bf16.msra.mxu0 0
      %13306 = vmatpush.bf16.msra.mxu0 0
      %13307 = vmatpush.bf16.msra.mxu0 0
      %13308 = vmatpush.bf16.msra.mxu0 0
      %13309 = vmatpush.bf16.msra.mxu0 %v13301
      %13310 = vmatpush.bf16.msra.mxu0 %v13280
      %13311 = vmatmul.bf16.gmra.mxu0 %v13295
      %v13312 = vpop.f32.mrf.mxu0
      %v13313 = vadd.f32 0.0, %v13312
      %v13314 = vpop.f32.mrf.mxu0
      %v13315 = vadd.f32 0.0, %v13314
      %13316 = vmatmul.bf16.gmra.mxu0 %v13298
      %v13317 = vpop.f32.mrf.mxu0
      %v13318 = vadd.f32 0.0, %v13317
      %v13319 = vpop.f32.mrf.mxu0
      %13320 = vdwg.mxu0
      %v13321 = vpack.c.bf16 %v13313, %v13313
      %v13322 = vpack.c.bf16 %v13315, %v13315
      %v13323 = vpack.c.bf16 %v13318, %v13318
      %v13324 = vld [vmem:[%s8] sm:$0xf]
      %v13325 = vld [vmem:[%s8 + $0x4] sm:$0xf]
      %v13326 = vld [vmem:[%s8 + $0x8] sm:$0xf]
      %v13327 = vld [vmem:[%s8 + $0xc] sm:$0xf]
      %v13328 = vld [vmem:[%s8 + $0x10] sm:$0xf]
      %v13329 = vld [vmem:[%s8 + $0x14] sm:$0xf]
      %v13330 = vld [vmem:[%s8 + $0x18] sm:$0xf]
      %v13331 = vld [vmem:[%s8 + $0x1c] sm:$0xf]
      %v13332 = vld [vmem:[%s8 + $0x20] sm:$0xf]
      %v13333 = vld [vmem:[%s8 + $0x24] sm:$0xf]
      %v13334 = vld [vmem:[%s8 + $0x28] sm:$0xf]
      %v13335 = vld [vmem:[%s8 + $0x2c] sm:$0xf]
      %v13336 = vld [vmem:[%s8 + $0x30] sm:$0xf]
      %v13337 = vld [vmem:[%s8 + $0x34] sm:$0xf]
      %s13338 = scalar_lea.vmem %s8, 56
      %v13339 = vld [vmem:[%s13338] sm:$0xf]
      %v13340 = vld [vmem:[%s13338 + $0x4] sm:$0xf]
      %v13341 = vld [vmem:[%s13338 + $0x8] sm:$0xf]
      %v13342 = vld [vmem:[%s13338 + $0xc] sm:$0xf]
      %v13343 = vld [vmem:[%s13338 + $0x10] sm:$0xf]
      %v13344 = vld [vmem:[%s13338 + $0x14] sm:$0xf]
      %v13345 = vld [vmem:[%s13338 + $0x18] sm:$0xf]
      %v13346 = vld [vmem:[%s13338 + $0x1c] sm:$0xf]
      %v13347 = vld [vmem:[%s13338 + $0x20] sm:$0xf]
      %v13348 = vld [vmem:[%s13338 + $0x24] sm:$0xf]
      %v13349 = vld [vmem:[%s13338 + $0x28] sm:$0xf]
      %v13350 = vld [vmem:[%s13338 + $0x2c] sm:$0xf]
      %v13351 = vld [vmem:[%s13338 + $0x30] sm:$0xf]
      %v13352 = vld [vmem:[%s13338 + $0x34] sm:$0xf]
      %v13367 = vunpack.c.l.b16 %v13339
      %v13368 = vunpack.c.l.b16 %v13340
      %v13369 = vunpack.c.l.b16 %v13341
      %v13370 = vunpack.c.l.b16 %v13342
      %v13371 = vunpack.c.l.b16 %v13343
      %v13372 = vunpack.c.l.b16 %v13344
      %v13373 = vunpack.c.l.b16 %v13345
      %v13374 = vunpack.c.l.b16 %v13346
      %v13375 = vunpack.c.l.b16 %v13347
      %v13376 = vunpack.c.l.b16 %v13348
      %v13377 = vunpack.c.l.b16 %v13349
      %v13378 = vunpack.c.l.b16 %v13350
      %v13379 = vunpack.c.l.b16 %v13351
      %v13380 = vunpack.c.l.b16 %v13352
      %v13381 = vpack.c.b16 %v13368, %v13367
      %v13382 = vpack.c.b16 %v13370, %v13369
      %v13383 = vpack.c.b16 %v13372, %v13371
      %v13384 = vpack.c.b16 %v13374, %v13373
      %v13385 = vpack.c.b16 %v13376, %v13375
      %v13386 = vpack.c.b16 %v13378, %v13377
      %v13387 = vpack.c.b16 %v13380, %v13379
      %vm13395 = vcmask 916480
      %v13397 = vsel %vm13395, %v13322, 0
      %13399 = vmatpush.bf16.msra.mxu0 0
      %13400 = vmatpush.bf16.msra.mxu0 %v13387
      %13401 = vmatpush.bf16.msra.mxu0 %v13386
      %13402 = vmatpush.bf16.msra.mxu0 %v13385
      %13403 = vmatpush.bf16.msra.mxu0 %v13384
      %13404 = vmatpush.bf16.msra.mxu0 %v13383
      %13405 = vmatpush.bf16.msra.mxu0 %v13382
      %13406 = vmatpush.bf16.msra.mxu0 %v13381
      %13407 = vmatmul.bf16.gmra.mxu0 %v13397
      %v13408 = vpop.f32.mrf.mxu0
      %v13409 = vadd.f32 0.0, %v13408
      %v13410 = vpop.f32.mrf.mxu0
      %13411 = vdwg.mxu0
      %v13426 = vunpack.c.l.b16 %v13324
      %v13427 = vunpack.c.l.b16 %v13325
      %v13428 = vunpack.c.l.b16 %v13326
      %v13429 = vunpack.c.l.b16 %v13327
      %v13430 = vunpack.c.l.b16 %v13328
      %v13431 = vunpack.c.l.b16 %v13329
      %v13432 = vunpack.c.l.b16 %v13330
      %v13433 = vunpack.c.l.b16 %v13331
      %v13434 = vunpack.c.l.b16 %v13332
      %v13435 = vunpack.c.l.b16 %v13333
      %v13436 = vunpack.c.l.b16 %v13334
      %v13437 = vunpack.c.l.b16 %v13335
      %v13438 = vunpack.c.l.b16 %v13336
      %v13439 = vunpack.c.l.b16 %v13337
      %v13440 = vpack.c.b16 %v13427, %v13426
      %v13441 = vpack.c.b16 %v13429, %v13428
      %v13442 = vpack.c.b16 %v13431, %v13430
      %v13443 = vpack.c.b16 %v13433, %v13432
      %v13444 = vpack.c.b16 %v13435, %v13434
      %v13445 = vpack.c.b16 %v13437, %v13436
      %v13446 = vpack.c.b16 %v13439, %v13438
      %v13455 = vsel %vm13395, %v13321, 0
      %13457 = vmatpush.bf16.msra.mxu0 0
      %13458 = vmatpush.bf16.msra.mxu0 %v13446
      %13459 = vmatpush.bf16.msra.mxu0 %v13445
      %13460 = vmatpush.bf16.msra.mxu0 %v13444
      %13461 = vmatpush.bf16.msra.mxu0 %v13443
      %13462 = vmatpush.bf16.msra.mxu0 %v13442
      %13463 = vmatpush.bf16.msra.mxu0 %v13441
      %13464 = vmatpush.bf16.msra.mxu0 %v13440
      %13465 = vmatmul.bf16.gmra.mxu0 %v13455
      %v13466 = vpop.f32.mrf.mxu0
      %v13467 = vadd.f32 %v13409, %v13466
      %v13468 = vpop.f32.mrf.mxu0
      %13469 = vdwg.mxu0
      %s13470 = scalar_lea.vmem %s8, 112
      %v13471 = vld [vmem:[%s13470] sm:$0xf]
      %v13472 = vld [vmem:[%s13470 + $0x4] sm:$0xf]
      %v13473 = vld [vmem:[%s13470 + $0x8] sm:$0xf]
      %v13474 = vld [vmem:[%s13470 + $0xc] sm:$0xf]
      %v13475 = vld [vmem:[%s13470 + $0x10] sm:$0xf]
      %v13476 = vld [vmem:[%s13470 + $0x14] sm:$0xf]
      %v13477 = vld [vmem:[%s13470 + $0x18] sm:$0xf]
      %v13478 = vld [vmem:[%s13470 + $0x1c] sm:$0xf]
      %v13479 = vld [vmem:[%s13470 + $0x20] sm:$0xf]
      %v13480 = vld [vmem:[%s13470 + $0x24] sm:$0xf]
      %v13481 = vld [vmem:[%s13470 + $0x28] sm:$0xf]
      %v13482 = vld [vmem:[%s13470 + $0x2c] sm:$0xf]
      %v13483 = vld [vmem:[%s13470 + $0x30] sm:$0xf]
      %v13484 = vld [vmem:[%s13470 + $0x34] sm:$0xf]
      %v13499 = vunpack.c.l.b16 %v13471
      %v13500 = vunpack.c.l.b16 %v13472
      %v13501 = vunpack.c.l.b16 %v13473
      %v13502 = vunpack.c.l.b16 %v13474
      %v13503 = vunpack.c.l.b16 %v13475
      %v13504 = vunpack.c.l.b16 %v13476
      %v13505 = vunpack.c.l.b16 %v13477
      %v13506 = vunpack.c.l.b16 %v13478
      %v13507 = vunpack.c.l.b16 %v13479
      %v13508 = vunpack.c.l.b16 %v13480
      %v13509 = vunpack.c.l.b16 %v13481
      %v13510 = vunpack.c.l.b16 %v13482
      %v13511 = vunpack.c.l.b16 %v13483
      %v13512 = vunpack.c.l.b16 %v13484
      %v13513 = vpack.c.b16 %v13500, %v13499
      %v13514 = vpack.c.b16 %v13502, %v13501
      %v13515 = vpack.c.b16 %v13504, %v13503
      %v13516 = vpack.c.b16 %v13506, %v13505
      %v13517 = vpack.c.b16 %v13508, %v13507
      %v13518 = vpack.c.b16 %v13510, %v13509
      %v13519 = vpack.c.b16 %v13512, %v13511
      %v13528 = vsel %vm13395, %v13323, 0
      %13530 = vmatpush.bf16.msra.mxu0 0
      %13531 = vmatpush.bf16.msra.mxu0 %v13519
      %13532 = vmatpush.bf16.msra.mxu0 %v13518
      %13533 = vmatpush.bf16.msra.mxu0 %v13517
      %13534 = vmatpush.bf16.msra.mxu0 %v13516
      %13535 = vmatpush.bf16.msra.mxu0 %v13515
      %13536 = vmatpush.bf16.msra.mxu0 %v13514
      %13537 = vmatpush.bf16.msra.mxu0 %v13513
      %13538 = vmatmul.bf16.gmra.mxu0 %v13528
      %v13539 = vpop.f32.mrf.mxu0
      %v13540 = vadd.f32 0.0, %v13539
      %v13541 = vpop.f32.mrf.mxu0
      %13542 = vdwg.mxu0
      %v13543 = vadd.f32 %v13467, %v13540
      %v13544 = vld [vmem:[%s9] sm:$0x1]
      %v13546 = vperm.slane %v13544, 0
      %v13548 = vadd.f32 %v13543, %v13546
      %v13549 = vmax.f32 %v13548, 0.0
      %v13550 = vld [vmem:[%s11] sm:$0x1]
      %v13551 = vld [vmem:[%s10] sm:$0xff]
      %v13552 = vld [vmem:[%s10 + $0x8] sm:$0xff]
      %v13553 = vld [vmem:[%s10 + $0x10] sm:$0xff]
      %v13554 = vld [vmem:[%s10 + $0x18] sm:$0xff]
      %v13555 = vld [vmem:[%s10 + $0x20] sm:$0xff]
      %v13556 = vld [vmem:[%s10 + $0x28] sm:$0xff]
      %vm13557 = vcmask 392192
      %v13559 = vsel %vm13557, %v13549, 0
      %13561 = vmatpush.msra.mxu0 0.0
      %13562 = vmatpush.msra.mxu0 0.0
      %13563 = vmatpush.msra.mxu0 0.0
      %13564 = vmatpush.msra.mxu0 0.0
      %13565 = vmatpush.msra.mxu0 0.0
      %13566 = vmatpush.msra.mxu0 0.0
      %13567 = vmatpush.msra.mxu0 0.0
      %13568 = vmatpush.msra.mxu0 0.0
      %13569 = vmatpush.msra.mxu0 0.0
      %13570 = vmatpush.msra.mxu0 0.0
      %13571 = vmatpush.msra.mxu0 %v13556
      %13572 = vmatpush.msra.mxu0 %v13555
      %13573 = vmatpush.msra.mxu0 %v13554
      %13574 = vmatpush.msra.mxu0 %v13553
      %13575 = vmatpush.msra.mxu0 %v13552
      %13576 = vmatpush.msra.mxu0 %v13551
      %13577 = vmatmul.f32.gmra.mxu0 %v13559
      %v13578 = vpop.f32.mrf.mxu0
      %v13579 = vadd.f32 0.0, %v13578
      %13580 = vdwg.mxu0
      %v13581 = vadd.f32 %v13550, %v13579
      %s13582 = scalar_lea.vmem %s10, 48
      %v13583 = vld [vmem:[%s13582] sm:$0xff]
      %v13584 = vld [vmem:[%s13582 + $0x8] sm:$0xff]
      %v13585 = vld [vmem:[%s13582 + $0x10] sm:$0xff]
      %v13586 = vld [vmem:[%s13582 + $0x18] sm:$0xff]
      %v13587 = vld [vmem:[%s13582 + $0x20] sm:$0xff]
      %v13588 = vld [vmem:[%s13582 + $0x28] sm:$0xff]
      %v13589 = vrot.slane %v13549, 1
      %v13590 = vsel %vm13557, %v13589, 0
      %13592 = vmatpush.msra.mxu0 0.0
      %13593 = vmatpush.msra.mxu0 0.0
      %13594 = vmatpush.msra.mxu0 0.0
      %13595 = vmatpush.msra.mxu0 0.0
      %13596 = vmatpush.msra.mxu0 0.0
      %13597 = vmatpush.msra.mxu0 0.0
      %13598 = vmatpush.msra.mxu0 0.0
      %13599 = vmatpush.msra.mxu0 0.0
      %13600 = vmatpush.msra.mxu0 0.0
      %13601 = vmatpush.msra.mxu0 0.0
      %13602 = vmatpush.msra.mxu0 %v13588
      %13603 = vmatpush.msra.mxu0 %v13587
      %13604 = vmatpush.msra.mxu0 %v13586
      %13605 = vmatpush.msra.mxu0 %v13585
      %13606 = vmatpush.msra.mxu0 %v13584
      %13607 = vmatpush.msra.mxu0 %v13583
      %13608 = vmatmul.f32.gmra.mxu0 %v13590
      %v13609 = vpop.f32.mrf.mxu0
      %v13610 = vadd.f32 0.0, %v13609
      %13611 = vdwg.mxu0
      %v13612 = vadd.f32 %v13581, %v13610
      %s13613 = scalar_lea.vmem %s10, 96
      %v13614 = vld [vmem:[%s13613] sm:$0xff]
      %v13615 = vld [vmem:[%s13613 + $0x8] sm:$0xff]
      %v13616 = vld [vmem:[%s13613 + $0x10] sm:$0xff]
      %v13617 = vld [vmem:[%s13613 + $0x18] sm:$0xff]
      %v13618 = vld [vmem:[%s13613 + $0x20] sm:$0xff]
      %v13619 = vld [vmem:[%s13613 + $0x28] sm:$0xff]
      %v13620 = vrot.slane %v13549, 2
      %v13621 = vsel %vm13557, %v13620, 0
      %13623 = vmatpush.msra.mxu0 0.0
      %13624 = vmatpush.msra.mxu0 0.0
      %13625 = vmatpush.msra.mxu0 0.0
      %13626 = vmatpush.msra.mxu0 0.0
      %13627 = vmatpush.msra.mxu0 0.0
      %13628 = vmatpush.msra.mxu0 0.0
      %13629 = vmatpush.msra.mxu0 0.0
      %13630 = vmatpush.msra.mxu0 0.0
      %13631 = vmatpush.msra.mxu0 0.0
      %13632 = vmatpush.msra.mxu0 0.0
      %13633 = vmatpush.msra.mxu0 %v13619
      %13634 = vmatpush.msra.mxu0 %v13618
      %13635 = vmatpush.msra.mxu0 %v13617
      %13636 = vmatpush.msra.mxu0 %v13616
      %13637 = vmatpush.msra.mxu0 %v13615
      %13638 = vmatpush.msra.mxu0 %v13614
      %13639 = vmatmul.f32.gmra.mxu0 %v13621
      %v13640 = vpop.f32.mrf.mxu0
      %v13641 = vadd.f32 0.0, %v13640
      %13642 = vdwg.mxu0
      %v13643 = vadd.f32 %v13612, %v13641
      %s13644 = scalar_lea.vmem %s10, 144
      %v13645 = vld [vmem:[%s13644] sm:$0xff]
      %v13646 = vld [vmem:[%s13644 + $0x8] sm:$0xff]
      %v13647 = vld [vmem:[%s13644 + $0x10] sm:$0xff]
      %v13648 = vld [vmem:[%s13644 + $0x18] sm:$0xff]
      %v13649 = vld [vmem:[%s13644 + $0x20] sm:$0xff]
      %v13650 = vld [vmem:[%s13644 + $0x28] sm:$0xff]
      %v13651 = vrot.slane %v13549, 3
      %v13652 = vsel %vm13557, %v13651, 0
      %13654 = vmatpush.msra.mxu0 0.0
      %13655 = vmatpush.msra.mxu0 0.0
      %13656 = vmatpush.msra.mxu0 0.0
      %13657 = vmatpush.msra.mxu0 0.0
      %13658 = vmatpush.msra.mxu0 0.0
      %13659 = vmatpush.msra.mxu0 0.0
      %13660 = vmatpush.msra.mxu0 0.0
      %13661 = vmatpush.msra.mxu0 0.0
      %13662 = vmatpush.msra.mxu0 0.0
      %13663 = vmatpush.msra.mxu0 0.0
      %13664 = vmatpush.msra.mxu0 %v13650
      %13665 = vmatpush.msra.mxu0 %v13649
      %13666 = vmatpush.msra.mxu0 %v13648
      %13667 = vmatpush.msra.mxu0 %v13647
      %13668 = vmatpush.msra.mxu0 %v13646
      %13669 = vmatpush.msra.mxu0 %v13645
      %13670 = vmatmul.f32.gmra.mxu0 %v13652
      %v13671 = vpop.f32.mrf.mxu0
      %v13672 = vadd.f32 0.0, %v13671
      %13673 = vdwg.mxu0
      %v13674 = vadd.f32 %v13643, %v13672
      %13675 = vst [vmem:[%s409] sm:$0x1] %v13674
      %p13676 = scmp.lt.s32.totalorder %s23, 1
      %s13677 = scalar_select %p13676, %s23, 1
      %s13678 = scalar_lea.vmem %s12, %s13677
      // Predicated region
      $region69: #{forward.1} parent=67 // pred_check
        %p13679 = pneg %p298
      $region70: #{forward.1} parent=67 // pred_check_branch
        %13681 = sbr.rel (%p13679) target = $region72
      $region71: #{forward.1} parent=67 // pred_region
        _
      $region72: #{forward.1} parent=67 // pred_fallthru
        _
    $region68: #{forward.1} parent=5 // pred_fallthru
      _
    %p13682 = scmp.le.s32.totalorder 2, %s18
    // Predicated region
    $region73: #{forward.1} parent=5 // pred_check
      %p13683 = pneg %p13682
    $region74: #{forward.1} parent=5 // pred_check_branch
      %13685 = sbr.rel (%p13683) target = $region76
    $region75: #{forward.1} parent=5 // pred_region
      %s13686 = ssub.s32 %s18, 2
      // Predicated region
      $region77: #{forward.1} parent=75 // pred_check
        %p13687 = pneg %p304
      $region78: #{forward.1} parent=75 // pred_check_branch
        %13689 = sbr.rel (%p13687) target = $region80
      $region79: #{forward.1} parent=75 // pred_region
        %p13690 = scmp.lt.s32.totalorder %s24, 1
        %s13691 = scalar_select %p13690, %s24, 1
        %s13692 = scalar_lea.vmem %s12, %s13691
      $region80: #{forward.1} parent=75 // pred_fallthru
        _
    $region76: #{forward.1} parent=5 // pred_fallthru
      _
  $region6: #{forward.1} parent=0 // loop_footer
    %s22 = sadd.s32 1, %s18
  $region7: #{forward.1} parent=0 // loop_footer_branch
    %17 = sbr.rel target = $region3
  $region8: #{forward.1} parent=0 // loop_exit
    _

</llo_original>
